<compile_context>
chip_gen: v5e
topology: v5e:2x2
jax: 0.10.0
libtpu: 0.0.40
codegen_flags: <defaults>
</compile_context>

<pallas_src>
import jax
import jax.numpy as jnp
from jax.experimental import pallas as pl
from jax.experimental.pallas import tpu as pltpu

# ---- model dims implied by the module --------------------------------------
C_IN, C_OUT, K, STRIDE = 2, 300, 5, 2
H_IN = W_IN = 100                          # makes Linear(76800, 16) consistent
H_CONV = (H_IN - K) // STRIDE + 1          # 48
W_CONV = (W_IN - K) // STRIDE + 1          # 48
POOL = 3
H_POOL = H_CONV // POOL                    # 16
W_POOL = W_CONV // POOL                    # 16
FEAT = C_IN * K * K                        # 50
SPAT = H_CONV * W_CONV                     # 2304
PSPAT = H_POOL * W_POOL                    # 256
FLAT = C_OUT * PSPAT                       # 76800
DENSE_OUT = 16
LEAK = 0.1

# conv+pool kernel tiling: each grid step handles HP_BLK pooled rows
HP_BLK = 8                                 # pooled rows per step
N_HBLK = H_POOL // HP_BLK                  # 2
SPAT_BLK = HP_BLK * POOL * W_CONV          # 1152 conv-spatial positions / step
PSPAT_BLK = HP_BLK * W_POOL                # 128 pooled positions (lane dense)

# dense kernel tiling: split-K parallel axis + K-tiled accumulation
DENSE_NSPLIT = 2
DENSE_TK = 9600                            # 76800 = 2 * 4 * 9600
DENSE_KPS = FLAT // (DENSE_NSPLIT * DENSE_TK)   # 4 K-tiles per split


# -----------------------------------------------------------------------------
# Kernel 1: conv (matmul) + LeakyReLU + avg-pool (matmul), one H-slab per step
# -----------------------------------------------------------------------------
def conv_pool_kernel(patches_ref, wc_ref, bc_ref, pmat_ref, out_ref):
    # patches_ref: (FEAT, SPAT_BLK)        bf16 im2col slab (HP_BLK*3 conv rows)
    # wc_ref:      (C_OUT, FEAT)           bf16 flattened conv weight
    # bc_ref:      (C_OUT, 1)              f32 conv bias
    # pmat_ref:    (SPAT_BLK, PSPAT_BLK)   bf16 0/1 pool-selection matrix
    # out_ref:     (C_OUT, PSPAT_BLK)      bf16 pooled activations, channel-major
    conv = jnp.dot(wc_ref[...], patches_ref[...],
                   preferred_element_type=jnp.float32) + bc_ref[...]
    # Dropout(p=0.2) is identity in inference mode; bias + LeakyReLU stay in f32.
    act = jnp.where(conv >= 0, conv, LEAK * conv)          # LeakyReLU(0.1)
    # Pool matrix holds exact 0/1 in bf16; apply the 1/9 scale in f32 afterwards.
    pooled = jnp.dot(act.astype(jnp.bfloat16), pmat_ref[...],
                     preferred_element_type=jnp.float32) * (1.0 / (POOL * POOL))
    out_ref[...] = pooled.astype(out_ref.dtype)


def conv_pool(patches_bf16, wc, bc, pmat):
    n = patches_bf16.shape[0]
    return pl.pallas_call(
        conv_pool_kernel,
        out_shape=jax.ShapeDtypeStruct((n, C_OUT, PSPAT), jnp.bfloat16),
        grid=(n, N_HBLK),
        in_specs=[
            pl.BlockSpec((None, FEAT, SPAT_BLK), lambda b, hb: (b, 0, hb)),
            pl.BlockSpec((C_OUT, FEAT), lambda b, hb: (0, 0)),
            pl.BlockSpec((C_OUT, 1), lambda b, hb: (0, 0)),
            pl.BlockSpec((SPAT_BLK, PSPAT_BLK), lambda b, hb: (0, 0)),
        ],
        out_specs=pl.BlockSpec((None, C_OUT, PSPAT_BLK), lambda b, hb: (b, 0, hb)),
        compiler_params=pltpu.CompilerParams(
            dimension_semantics=("parallel", "parallel")),
    )(patches_bf16, wc, bc, pmat)


# -----------------------------------------------------------------------------
# Kernel 2: dense  (N, 76800) @ W.T + b, K-tiled with split-K partial outputs
# -----------------------------------------------------------------------------
def dense_kernel(x_ref, w_ref, o_ref, acc_ref):
    # x_ref: (N, DENSE_TK) bf16, w_ref: (DENSE_OUT, DENSE_TK) bf16 (PyTorch layout)
    # o_ref: (N, DENSE_OUT) f32 partial for this K-split
    @pl.when(pl.program_id(1) == 0)
    def _():
        acc_ref[...] = jnp.zeros_like(acc_ref)

    acc_ref[...] += jnp.dot(x_ref[...], w_ref[...].T,
                            preferred_element_type=jnp.float32)

    @pl.when(pl.program_id(1) == pl.num_programs(1) - 1)
    def _():
        o_ref[...] = acc_ref[...]


def dense_partials(flat_bf16, w_bf16):
    n = flat_bf16.shape[0]
    return pl.pallas_call(
        dense_kernel,
        out_shape=jax.ShapeDtypeStruct((DENSE_NSPLIT, n, DENSE_OUT), jnp.float32),
        grid=(DENSE_NSPLIT, DENSE_KPS),
        in_specs=[
            pl.BlockSpec((n, DENSE_TK), lambda s, k: (0, s * DENSE_KPS + k)),
            pl.BlockSpec((DENSE_OUT, DENSE_TK),
                         lambda s, k: (0, s * DENSE_KPS + k)),
        ],
        out_specs=pl.BlockSpec((None, n, DENSE_OUT), lambda s, k: (s, 0, 0)),
        scratch_shapes=[pltpu.VMEM((n, DENSE_OUT), jnp.float32)],
        compiler_params=pltpu.CompilerParams(
            dimension_semantics=("parallel", "arbitrary")),
    )(flat_bf16, w_bf16)


# -----------------------------------------------------------------------------
# Plain-JAX glue: im2col, pool matrix, parameter packing (hoisted), jitted fwd
# -----------------------------------------------------------------------------
def im2col_transposed(x):
    # x: (N, C_IN, H_IN, W_IN) -> (N, FEAT, SPAT); feature order (c, kh, kw)
    # matches conv weight reshape(C_OUT, -1); spatial order h*W_CONV + w.
    cols = []
    for c in range(C_IN):
        for kh in range(K):
            for kw in range(K):
                cols.append(x[:, c,
                              kh:kh + STRIDE * H_CONV:STRIDE,
                              kw:kw + STRIDE * W_CONV:STRIDE])
    p = jnp.stack(cols, axis=1)                       # (N, FEAT, Hc, Wc)
    return p.reshape(x.shape[0], FEAT, SPAT)


def make_pool_block_matrix():
    # 0/1 selection matrix for one slab of HP_BLK*3 conv rows -> HP_BLK pooled
    # rows; entries are exact in bf16 (the 1/9 scale is applied in-kernel, f32).
    s = jnp.arange(SPAT_BLK)
    h = s // W_CONV
    w = s % W_CONV
    p = (h // POOL) * W_POOL + (w // POOL)
    return (p[:, None] == jnp.arange(PSPAT_BLK)[None, :]).astype(jnp.bfloat16)


def prepare_params(conv_w, conv_b, dense_w, dense_b):
    # One-time packing (kept out of the per-call jitted forward).
    wc = conv_w.reshape(C_OUT, FEAT).astype(jnp.bfloat16)
    bc = conv_b.reshape(C_OUT, 1).astype(jnp.float32)
    wd = dense_w.astype(jnp.bfloat16)      # (16, FLAT): lane-dense, no transpose
    bd = dense_b.astype(jnp.float32)
    pmat = make_pool_block_matrix()
    return wc, bc, wd, bd, pmat


@jax.jit
def net_forward(x, prep):
    wc, bc, wd, bd, pmat = prep
    patches = im2col_transposed(x).astype(jnp.bfloat16)    # fused under jit
    pooled = conv_pool(patches, wc, bc, pmat)              # (N, 300, 256) bf16
    flat = pooled.reshape(x.shape[0], FLAT)                # == Flatten(NCHW)
    # NOTE: self.bn1 is defined in __init__ but never used in forward -> omitted.
    partials = dense_partials(flat, wd)                    # (2, N, 16) f32
    return jnp.sum(partials, axis=0) + bd[None, :]


def reference_forward(x, params):
    conv_w, conv_b, dense_w, dense_b = params
    hi = jax.lax.Precision.HIGHEST
    y = jax.lax.conv_general_dilated(
        x, conv_w, window_strides=(STRIDE, STRIDE), padding="VALID",
        dimension_numbers=("NCHW", "OIHW", "NCHW"), precision=hi)
    y = y + conv_b[None, :, None, None]
    y = jnp.where(y >= 0, y, LEAK * y)
    n = y.shape[0]
    y = y.reshape(n, C_OUT, H_POOL, POOL, W_POOL, POOL).mean(axis=(3, 5))
    y = y.reshape(n, FLAT)
    return jnp.dot(y, dense_w.T, precision=hi) + dense_b[None, :]


if __name__ == "__main__":
    key = jax.random.PRNGKey(0)
    kx, k1, k2, k3, k4 = jax.random.split(key, 5)
    x = jax.random.normal(kx, (2, C_IN, H_IN, W_IN), jnp.float32)
    conv_w = 0.05 * jax.random.normal(k1, (C_OUT, C_IN, K, K), jnp.float32)
    conv_b = 0.05 * jax.random.normal(k2, (C_OUT,), jnp.float32)
    dense_w = 0.01 * jax.random.normal(k3, (DENSE_OUT, FLAT), jnp.float32)
    dense_b = 0.01 * jax.random.normal(k4, (DENSE_OUT,), jnp.float32)

    prep = prepare_params(conv_w, conv_b, dense_w, dense_b)
    out = net_forward(x, prep)
    jax.block_until_ready(out)
    assert out.shape == (2, DENSE_OUT)

    ref = reference_forward(x, (conv_w, conv_b, dense_w, dense_b))
    err = float(jnp.max(jnp.abs(out - ref)))
    assert err < 1e-1, f"max abs error too large: {err}"
    print("KERNEL_OK")
</pallas_src>

<mosaic_0001>
module attributes {stable_mosaic.version = 11 : i64} {
  func.func @conv_pool_kernel(%arg0: i32, %arg1: i32, %arg2: memref<1x50x1152xbf16, #tpu.memory_space<vmem>>, %arg3: memref<300x50xbf16, #tpu.memory_space<vmem>>, %arg4: memref<300x1xf32, #tpu.memory_space<vmem>>, %arg5: memref<1152x128xbf16, #tpu.memory_space<vmem>>, %arg6: memref<1x300x128xbf16, #tpu.memory_space<vmem>>) attributes {dimension_semantics = [#tpu.dimension_semantics<parallel>, #tpu.dimension_semantics<parallel>], iteration_bounds = array<i64: 2, 2>, scalar_prefetch = 0 : i64, scratch_operands = 0 : i64, tpu.core_type = #tpu.core_type<tc>, window_params = [{transform_indices = @transform_0, window_bounds = array<i64: 1, 50, 1152>}, {pipeline_mode = #tpu.pipeline_mode<synchronous>, transform_indices = @transform_1, window_bounds = array<i64: 300, 50>}, {pipeline_mode = #tpu.pipeline_mode<synchronous>, transform_indices = @transform_2, window_bounds = array<i64: 300, 1>}, {pipeline_mode = #tpu.pipeline_mode<synchronous>, transform_indices = @transform_3, window_bounds = array<i64: 1152, 128>}, {transform_indices = @transform_4, window_bounds = array<i64: 1, 300, 128>}]} {
    %c0 = arith.constant 0 : index
    %c0_0 = arith.constant 0 : index
    %0 = vector.load %arg3[%c0, %c0_0] : memref<300x50xbf16, #tpu.memory_space<vmem>>, vector<300x50xbf16>
    %c0_1 = arith.constant 0 : index
    %c0_2 = arith.constant 0 : index
    %c0_3 = arith.constant 0 : index
    %1 = vector.load %arg2[%c0_1, %c0_2, %c0_3] : memref<1x50x1152xbf16, #tpu.memory_space<vmem>>, vector<1x50x1152xbf16>
    %2 = vector.shape_cast %1 : vector<1x50x1152xbf16> to vector<50x1152xbf16>
    %cst = arith.constant dense<0.000000e+00> : vector<300x1152xf32>
    %3 = tpu.matmul %0, %2, %cst {dimension_numbers = #tpu.dot_dimension_numbers<[1], [0], [0], [1], [0, 0, 1, 1], [], []>} : vector<300x50xbf16>, vector<50x1152xbf16>, vector<300x1152xf32> -> vector<300x1152xf32>
    %c0_4 = arith.constant 0 : index
    %c0_5 = arith.constant 0 : index
    %4 = vector.load %arg4[%c0_4, %c0_5] : memref<300x1xf32, #tpu.memory_space<vmem>>, vector<300x1xf32>
    %5 = vector.broadcast %4 : vector<300x1xf32> to vector<300x1152xf32>
    %6 = arith.addf %3, %5 : vector<300x1152xf32>
    %cst_6 = arith.constant 0.000000e+00 : f32
    %7 = vector.broadcast %cst_6 : f32 to vector<300x1152xf32>
    %8 = arith.cmpf oge, %6, %7 : vector<300x1152xf32>
    %cst_7 = arith.constant 1.000000e-01 : f32
    %9 = vector.broadcast %cst_7 : f32 to vector<300x1152xf32>
    %10 = arith.mulf %9, %6 : vector<300x1152xf32>
    %11 = arith.select %8, %6, %10 : vector<300x1152xi1>, vector<300x1152xf32>
    %12 = arith.truncf %11 : vector<300x1152xf32> to vector<300x1152xbf16>
    %c0_8 = arith.constant 0 : index
    %c0_9 = arith.constant 0 : index
    %13 = vector.load %arg5[%c0_8, %c0_9] : memref<1152x128xbf16, #tpu.memory_space<vmem>>, vector<1152x128xbf16>
    %cst_10 = arith.constant dense<0.000000e+00> : vector<300x128xf32>
    %14 = tpu.matmul %12, %13, %cst_10 {dimension_numbers = #tpu.dot_dimension_numbers<[1], [0], [0], [1], [0, 0, 1, 1], [], []>} : vector<300x1152xbf16>, vector<1152x128xbf16>, vector<300x128xf32> -> vector<300x128xf32>
    %cst_11 = arith.constant 0.111111112 : f32
    %15 = vector.broadcast %cst_11 : f32 to vector<300x128xf32>
    %16 = arith.mulf %14, %15 : vector<300x128xf32>
    %17 = arith.truncf %16 : vector<300x128xf32> to vector<300x128xbf16>
    %c0_12 = arith.constant 0 : index
    %c0_13 = arith.constant 0 : index
    %c0_14 = arith.constant 0 : index
    %18 = vector.load %arg6[%c0_12, %c0_13, %c0_14] : memref<1x300x128xbf16, #tpu.memory_space<vmem>>, vector<1x300x128xbf16>
    %19 = vector.shape_cast %18 : vector<1x300x128xbf16> to vector<300x128xbf16>
    %20 = vector.shape_cast %17 : vector<300x128xbf16> to vector<1x300x128xbf16>
    tpu.vector_store %arg6[%c0_12, %c0_13, %c0_14], %20 {strides = array<i32>} : memref<1x300x128xbf16, #tpu.memory_space<vmem>>, vector<1x300x128xbf16>,
    return
  }
  func.func @transform_0(%arg0: i32, %arg1: i32) -> (i32, i32, i32) {
    %c0_i32 = arith.constant 0 : i32
    %c0_i32_0 = arith.constant 0 : i32
    return %arg0, %c0_i32, %arg1 : i32, i32, i32
  }
  func.func @transform_1(%arg0: i32, %arg1: i32) -> (i32, i32) {
    %c0_i32 = arith.constant 0 : i32
    %c0_i32_0 = arith.constant 0 : i32
    %c0_i32_1 = arith.constant 0 : i32
    return %c0_i32, %c0_i32_0 : i32, i32
  }
  func.func @transform_2(%arg0: i32, %arg1: i32) -> (i32, i32) {
    %c0_i32 = arith.constant 0 : i32
    %c0_i32_0 = arith.constant 0 : i32
    %c0_i32_1 = arith.constant 0 : i32
    return %c0_i32, %c0_i32_0 : i32, i32
  }
  func.func @transform_3(%arg0: i32, %arg1: i32) -> (i32, i32) {
    %c0_i32 = arith.constant 0 : i32
    %c0_i32_0 = arith.constant 0 : i32
    %c0_i32_1 = arith.constant 0 : i32
    return %c0_i32, %c0_i32_0 : i32, i32
  }
  func.func @transform_4(%arg0: i32, %arg1: i32) -> (i32, i32, i32) {
    %c0_i32 = arith.constant 0 : i32
    %c0_i32_0 = arith.constant 0 : i32
    return %arg0, %c0_i32, %arg1 : i32, i32, i32
  }
}

module attributes {stable_mosaic.version = 11 : i64} {
  func.func @dense_kernel(%arg0: i32, %arg1: i32, %arg2: memref<2x9600xbf16, #tpu.memory_space<vmem>>, %arg3: memref<16x9600xbf16, #tpu.memory_space<vmem>>, %arg4: memref<1x2x16xf32, #tpu.memory_space<vmem>>, %arg5: memref<2x16xf32, #tpu.memory_space<vmem>>) attributes {dimension_semantics = [#tpu.dimension_semantics<parallel>, #tpu.dimension_semantics<arbitrary>], iteration_bounds = array<i64: 2, 4>, scalar_prefetch = 0 : i64, scratch_operands = 1 : i64, tpu.core_type = #tpu.core_type<tc>, window_params = [{transform_indices = @transform_0, window_bounds = array<i64: 2, 9600>}, {transform_indices = @transform_1, window_bounds = array<i64: 16, 9600>}, {transform_indices = @transform_2, window_bounds = array<i64: 1, 2, 16>}]} {
    %c0_i32 = arith.constant 0 : i32
    %0 = arith.cmpi eq, %arg1, %c0_i32 : i32
    %1 = arith.extui %0 : i1 to i32
    %c0_i32_0 = arith.constant 0 : i32
    %2 = arith.cmpi ne, %1, %c0_i32_0 : i32
    scf.if %2 {
      %cst_9 = arith.constant 0.000000e+00 : f32
      %13 = vector.broadcast %cst_9 : f32 to vector<2x16xf32>
      %c0_10 = arith.constant 0 : index
      %c0_11 = arith.constant 0 : index
      %14 = vector.load %arg5[%c0_10, %c0_11] : memref<2x16xf32, #tpu.memory_space<vmem>>, vector<2x16xf32>
      tpu.vector_store %arg5[%c0_10, %c0_11], %13 {strides = array<i32>} : memref<2x16xf32, #tpu.memory_space<vmem>>, vector<2x16xf32>,
    } else {
    }
    %c0 = arith.constant 0 : index
    %c0_1 = arith.constant 0 : index
    %3 = vector.load %arg5[%c0, %c0_1] : memref<2x16xf32, #tpu.memory_space<vmem>>, vector<2x16xf32>
    %c0_2 = arith.constant 0 : index
    %c0_3 = arith.constant 0 : index
    %4 = vector.load %arg2[%c0_2, %c0_3] : memref<2x9600xbf16, #tpu.memory_space<vmem>>, vector<2x9600xbf16>
    %c0_4 = arith.constant 0 : index
    %c0_5 = arith.constant 0 : index
    %5 = vector.load %arg3[%c0_4, %c0_5] : memref<16x9600xbf16, #tpu.memory_space<vmem>>, vector<16x9600xbf16>
    %6 = tpu.transpose %5, [1, 0] : vector<16x9600xbf16> -> vector<9600x16xbf16>
    %cst = arith.constant dense<0.000000e+00> : vector<2x16xf32>
    %7 = tpu.matmul %4, %6, %cst {dimension_numbers = #tpu.dot_dimension_numbers<[1], [0], [0], [1], [0, 0, 1, 1], [], []>} : vector<2x9600xbf16>, vector<9600x16xbf16>, vector<2x16xf32> -> vector<2x16xf32>
    %8 = arith.addf %3, %7 : vector<2x16xf32>
    %c0_6 = arith.constant 0 : index
    %c0_7 = arith.constant 0 : index
    %9 = vector.load %arg5[%c0_6, %c0_7] : memref<2x16xf32, #tpu.memory_space<vmem>>, vector<2x16xf32>
    tpu.vector_store %arg5[%c0_6, %c0_7], %8 {strides = array<i32>} : memref<2x16xf32, #tpu.memory_space<vmem>>, vector<2x16xf32>,
    %c3_i32 = arith.constant 3 : i32
    %10 = arith.cmpi eq, %arg1, %c3_i32 : i32
    %11 = arith.extui %10 : i1 to i32
    %c0_i32_8 = arith.constant 0 : i32
    %12 = arith.cmpi ne, %11, %c0_i32_8 : i32
    scf.if %12 {
      %c0_9 = arith.constant 0 : index
      %c0_10 = arith.constant 0 : index
      %13 = vector.load %arg5[%c0_9, %c0_10] : memref<2x16xf32, #tpu.memory_space<vmem>>, vector<2x16xf32>
      %c0_11 = arith.constant 0 : index
      %c0_12 = arith.constant 0 : index
      %c0_13 = arith.constant 0 : index
      %14 = vector.load %arg4[%c0_11, %c0_12, %c0_13] : memref<1x2x16xf32, #tpu.memory_space<vmem>>, vector<1x2x16xf32>
      %15 = vector.shape_cast %14 : vector<1x2x16xf32> to vector<2x16xf32>
      %16 = vector.shape_cast %13 : vector<2x16xf32> to vector<1x2x16xf32>
      tpu.vector_store %arg4[%c0_11, %c0_12, %c0_13], %16 {strides = array<i32>} : memref<1x2x16xf32, #tpu.memory_space<vmem>>, vector<1x2x16xf32>,
    } else {
    }
    return
  }
  func.func @transform_0(%arg0: i32, %arg1: i32) -> (i32, i32) {
    %c4_i32 = arith.constant 4 : i32
    %0 = arith.muli %arg0, %c4_i32 : i32
    %1 = arith.addi %0, %arg1 : i32
    %c0_i32 = arith.constant 0 : i32
    %c0_i32_0 = arith.constant 0 : i32
    return %c0_i32, %1 : i32, i32
  }
  func.func @transform_1(%arg0: i32, %arg1: i32) -> (i32, i32) {
    %c4_i32 = arith.constant 4 : i32
    %0 = arith.muli %arg0, %c4_i32 : i32
    %1 = arith.addi %0, %arg1 : i32
    %c0_i32 = arith.constant 0 : i32
    %c0_i32_0 = arith.constant 0 : i32
    return %c0_i32, %1 : i32, i32
  }
  func.func @transform_2(%arg0: i32, %arg1: i32) -> (i32, i32, i32) {
    %c0_i32 = arith.constant 0 : i32
    %c0_i32_0 = arith.constant 0 : i32
    %c0_i32_1 = arith.constant 0 : i32
    return %arg0, %c0_i32, %c0_i32_0 : i32, i32, i32
  }
}

</mosaic_0001>

<llo_original>
// kernel: net_forward.3
$region0: #{net_forward.3}
  #allocation0 [shape = 'u32[]', space=smem, size = 0x4, offset = 0x4, fixed_abs, tag = 'smem constant byte address 0x4 - core index']
  #allocation1 [shape = 'u32[72,128]{1,0:T(1,128)}', space=vmem, size = 0x9000, scoped, tag = 'internal scratch']
  #allocation2 [shape = 'f32[2,16]{1,0:T(2,128)}', space=vmem, size = 0x400, scoped, tag = 'scratch operand']
  %s0 = inlined_call_operand.vmem [shape: bf16[2,76800], index: 0, kind: input, shape index: {}]
  %s1 = inlined_call_operand.vmem [shape: bf16[16,76800], index: 1, kind: input, shape index: {}]
  %s2 = inlined_call_operand.vmem [shape: f32[2,2,16], index: 2, kind: output, shape index: {}]
  %s3 = sld [smem:[#allocation0]]
  $region75: #{net_forward.3} parent=0
    _
  %s5 = ssub.s32 1, %s3
  %s6 = scalar_select 0, %s5, %s3
  $region1: #{net_forward.3} parent=0
    #allocation3 [shape = 'u8[614400]{0}', space=vmem, size = 0x96000, scoped, tag = 'input window, operand 1']
    loop: start=0, step=1, limit=10
    $region2: #{net_forward.3} parent=1 // loop_pre_header
      _
    $region3: #{net_forward.3} parent=1 // loop_header
      %s8 = sphi 0, %s12
      %p9 = scmp.ge.s32.totalorder %s8, 10
      %s15 = sphi 0, %s27
      %s16 = sphi 0, %s23
      %s17 = sphi 0, %s15
      %s18 = sphi 0, %s16
      %s19 = sphi 0, %s17
      %s20 = sphi 0, %s18
      %s34 = sphi 0, %s36
      %s37 = sphi 0, %s34
      %s38 = sphi 0, %s37
      %s54 = sphi 0, %s38
      %s64 = sphi 0, %s66
      %s67 = sphi 0, %s64
      %s68 = sphi 0, %s67
      %s84 = sphi 0, %s68
      %s90 = sphi 0, %s92
      %s93 = sphi 0, %s90
      %s94 = sphi 0, %s93
      %s110 = sphi 0, %s94
    $region4: #{net_forward.3} parent=1 // loop_header_branch
      %11 = sbr.rel (%p9) target = $region8
    $region5: #{net_forward.3} parent=1 // loop_body
      %s13 = ssub.s32 %s8, 1
      %s14 = ssub.s32 %s8, 2
      %s21 = sadd.s32 1, %s16
      %p22 = scmp.ge.s32.totalorder %s21, 4
      %s23 = scalar_select %p22, 0, %s21
      %s24 = sadd.s32 1, %s15
      %s25 = scalar_select %p22, %s24, %s15
      %p26 = scmp.ge.s32.totalorder %s25, 2
      %s27 = scalar_select %p26, 0, %s25
      %s28 = smul.u32 %s15, 4
      %s29 = sadd.s32 %s28, %s16
      %s30 = smul.u32 %s27, 4
      %s31 = sadd.s32 %s30, %s23
      %s32 = ssub.s32 %s29, %s31
      %p33 = scmp.eq.s32.totalorder %s32, 0
      %s35 = sadd.s32 %s34, 1
      %s36 = scalar_select %p33, %s34, %s35
      %p39 = pneg %p33
      %p40 = scmp.eq.s32.totalorder %s8, 7
      %p41 = por %p39, %p40
      %p42 = scmp.ne.s32.totalorder %s34, %s37
      %p43 = scmp.eq.s32.totalorder %s8, 0
      %p44 = por %p42, %p43
      %p45 = scmp.ne.s32.totalorder %s34, %s37
      %p46 = scmp.eq.s32.totalorder %s13, 7
      %p47 = por %p45, %p46
      %p48 = scmp.ne.s32.totalorder %s37, %s38
      %p49 = scmp.eq.s32.totalorder %s13, 0
      %p50 = por %p48, %p49
      %p51 = scmp.ne.s32.totalorder %s37, %s38
      %p52 = scmp.eq.s32.totalorder %s14, 7
      %p53 = por %p51, %p52
      %p55 = scmp.ne.s32.totalorder %s38, %s54
      %p56 = scmp.eq.s32.totalorder %s14, 0
      %p57 = por %p55, %p56
      %s58 = smul.u32 %s15, 4
      %s59 = sadd.s32 %s58, %s16
      %s60 = smul.u32 %s27, 4
      %s61 = sadd.s32 %s60, %s23
      %s62 = ssub.s32 %s59, %s61
      %p63 = scmp.eq.s32.totalorder %s62, 0
      %s65 = sadd.s32 %s64, 1
      %s66 = scalar_select %p63, %s64, %s65
      %p69 = pneg %p63
      %p70 = scmp.eq.s32.totalorder %s8, 7
      %p71 = por %p69, %p70
      %p72 = scmp.ne.s32.totalorder %s64, %s67
      %p73 = scmp.eq.s32.totalorder %s8, 0
      %p74 = por %p72, %p73
      %p75 = scmp.ne.s32.totalorder %s64, %s67
      %p76 = scmp.eq.s32.totalorder %s13, 7
      %p77 = por %p75, %p76
      %p78 = scmp.ne.s32.totalorder %s67, %s68
      %p79 = scmp.eq.s32.totalorder %s13, 0
      %p80 = por %p78, %p79
      %p81 = scmp.ne.s32.totalorder %s67, %s68
      %p82 = scmp.eq.s32.totalorder %s14, 7
      %p83 = por %p81, %p82
      %p85 = scmp.ne.s32.totalorder %s68, %s84
      %p86 = scmp.eq.s32.totalorder %s14, 0
      %p87 = por %p85, %p86
      %s88 = ssub.s32 %s15, %s27
      %p89 = scmp.eq.s32.totalorder %s88, 0
      %s91 = sadd.s32 %s90, 1
      %s92 = scalar_select %p89, %s90, %s91
      %p95 = pneg %p89
      %p96 = scmp.eq.s32.totalorder %s8, 7
      %p97 = por %p95, %p96
      %p98 = scmp.ne.s32.totalorder %s90, %s93
      %p99 = scmp.eq.s32.totalorder %s8, 0
      %p100 = por %p98, %p99
      %p101 = scmp.ne.s32.totalorder %s90, %s93
      %p102 = scmp.eq.s32.totalorder %s13, 7
      %p103 = por %p101, %p102
      %p104 = scmp.ne.s32.totalorder %s93, %s94
      %p105 = scmp.eq.s32.totalorder %s13, 0
      %p106 = por %p104, %p105
      %p107 = scmp.ne.s32.totalorder %s93, %s94
      %p108 = scmp.eq.s32.totalorder %s14, 7
      %p109 = por %p107, %p108
      %p111 = scmp.ne.s32.totalorder %s94, %s110
      %p112 = scmp.eq.s32.totalorder %s14, 0
      %p113 = por %p111, %p112
      %p114 = scmp.le.s32.totalorder 1, %s8
      %p115 = scmp.lt.s32.totalorder %s8, 9
      %p116 = pnand %p114, %p115
      %p117 = pneg %p116
      // Predicated region
      $region9: #{net_forward.3} parent=5 // pred_check
        _
      $region10: #{net_forward.3} parent=5 // pred_check_branch
        %119 = sbr.rel (%p116) target = $region12
      $region11: #{net_forward.3} parent=5 // pred_region
        %s120 = ssub.s32 %s8, 1
      $region12: #{net_forward.3} parent=5 // pred_fallthru
        _
      %p121 = scmp.lt.s32.totalorder %s8, 8
      // Predicated region
      $region13: #{net_forward.3} parent=5 // pred_check
        %p122 = pneg %p121
      $region14: #{net_forward.3} parent=5 // pred_check_branch
        %124 = sbr.rel (%p122) target = $region16
      $region15: #{net_forward.3} parent=5 // pred_region
        // Predicated region
        $region17: #{net_forward.3} parent=15 // pred_check
          %p125 = pneg %p44
        $region18: #{net_forward.3} parent=15 // pred_check_branch
          %127 = sbr.rel (%p125) target = $region20
        $region19: #{net_forward.3} parent=15 // pred_region
          %s128 = smul.u32 %s15, 4
          %s129 = sadd.s32 %s128, %s16
          %s130 = smul.u32 75, %s129
          %p131 = scmp.lt.s32.totalorder %s130, 599
          %s132 = scalar_select %p131, %s130, 599
          %s133 = scalar_lea.vmem %s0, %s132
          %s134 = smul.u32 %s15, 4
          %s135 = sadd.s32 %s134, %s16
          %s136 = smul.u32 75, %s135
        $region20: #{net_forward.3} parent=15 // pred_fallthru
          _
        // Predicated region
        $region21: #{net_forward.3} parent=15 // pred_check
          %p137 = pneg %p74
        $region22: #{net_forward.3} parent=15 // pred_check_branch
          %139 = sbr.rel (%p137) target = $region24
        $region23: #{net_forward.3} parent=15 // pred_region
          %s140 = sand.u32 %s64, 1
          %s141 = sand.u32 %s64, 1
          %s142 = smul.addr %s141, 600
          %s143 = scalar_lea.vmem [#allocation3], %s142
          %s144 = smul.u32 %s15, 4
          %s145 = sadd.s32 %s144, %s16
          %s146 = smul.u32 75, %s145
          %s147 = smul.addr %s146, 4
          %s148 = scalar_lea.vmem %s1, %s147
          // Predicated region
          $region25: #{net_forward.3} parent=23 // pred_check
            _
          $region26: #{net_forward.3} parent=23 // pred_check_branch
            %150 = sbr.rel (0) target = $region28
          $region27: #{net_forward.3} parent=23 // pred_region
            // Predicated region
            $region29: #{net_forward.3} parent=27 // pred_check
              _
            $region30: #{net_forward.3} parent=27 // pred_check_branch
              %152 = sbr.rel (0) target = $region32
            $region31: #{net_forward.3} parent=27 // pred_region
              %s153 = scalar_lea.vmem %s148, 296
              %s154 = scalar_lea.vmem %s143, 296 [#allocation3]
              loop: start=0, step=1, limit=1
              $region33: #{net_forward.3} parent=31 // loop_pre_header
                _
              $region34: #{net_forward.3} parent=31 // loop_header
                %s156 = sphi 0, %s160
                %p157 = scmp.ge.s32.totalorder %s156, 1
                %s161 = sphi %s148, %s148
                %s162 = sphi %s143, %s143
              $region35: #{net_forward.3} parent=31 // loop_header_branch
                %159 = sbr.rel (%p157) target = $region39
              $region36: #{net_forward.3} parent=31 // loop_body
                %v163 = vld [vmem:[%s161] sm:$0xff]
                %164 = vst [vmem:[%s162] sm:$0xff] %v163
                %v165 = vld [vmem:[%s161 + $0x8] sm:$0xff]
                %166 = vst [vmem:[%s162 + $0x8] sm:$0xff] %v165
                %v167 = vld [vmem:[%s161 + $0x10] sm:$0xff]
                %168 = vst [vmem:[%s162 + $0x10] sm:$0xff] %v167
                %v169 = vld [vmem:[%s161 + $0x18] sm:$0xff]
                %170 = vst [vmem:[%s162 + $0x18] sm:$0xff] %v169
                %v171 = vld [vmem:[%s161 + $0x20] sm:$0xff]
                %172 = vst [vmem:[%s162 + $0x20] sm:$0xff] %v171
                %v173 = vld [vmem:[%s161 + $0x28] sm:$0xff]
                %174 = vst [vmem:[%s162 + $0x28] sm:$0xff] %v173
                %v175 = vld [vmem:[%s161 + $0x30] sm:$0xff]
                %176 = vst [vmem:[%s162 + $0x30] sm:$0xff] %v175
                %v177 = vld [vmem:[%s161 + $0x38] sm:$0xff]
                %178 = vst [vmem:[%s162 + $0x38] sm:$0xff] %v177
                %v179 = vld [vmem:[%s161 + $0x40] sm:$0xff]
                %180 = vst [vmem:[%s162 + $0x40] sm:$0xff] %v179
                %v181 = vld [vmem:[%s161 + $0x48] sm:$0xff]
                %182 = vst [vmem:[%s162 + $0x48] sm:$0xff] %v181
                %v183 = vld [vmem:[%s161 + $0x50] sm:$0xff]
                %184 = vst [vmem:[%s162 + $0x50] sm:$0xff] %v183
                %v185 = vld [vmem:[%s161 + $0x58] sm:$0xff]
                %186 = vst [vmem:[%s162 + $0x58] sm:$0xff] %v185
                %v187 = vld [vmem:[%s161 + $0x60] sm:$0xff]
                %188 = vst [vmem:[%s162 + $0x60] sm:$0xff] %v187
                %v189 = vld [vmem:[%s161 + $0x68] sm:$0xff]
                %190 = vst [vmem:[%s162 + $0x68] sm:$0xff] %v189
                %v191 = vld [vmem:[%s161 + $0x70] sm:$0xff]
                %192 = vst [vmem:[%s162 + $0x70] sm:$0xff] %v191
                %v193 = vld [vmem:[%s161 + $0x78] sm:$0xff]
                %194 = vst [vmem:[%s162 + $0x78] sm:$0xff] %v193
                %v195 = vld [vmem:[%s161 + $0x80] sm:$0xff]
                %196 = vst [vmem:[%s162 + $0x80] sm:$0xff] %v195
                %v197 = vld [vmem:[%s161 + $0x88] sm:$0xff]
                %198 = vst [vmem:[%s162 + $0x88] sm:$0xff] %v197
                %v199 = vld [vmem:[%s161 + $0x90] sm:$0xff]
                %200 = vst [vmem:[%s162 + $0x90] sm:$0xff] %v199
                %v201 = vld [vmem:[%s161 + $0x98] sm:$0xff]
                %202 = vst [vmem:[%s162 + $0x98] sm:$0xff] %v201
                %v203 = vld [vmem:[%s161 + $0xa0] sm:$0xff]
                %204 = vst [vmem:[%s162 + $0xa0] sm:$0xff] %v203
                %v205 = vld [vmem:[%s161 + $0xa8] sm:$0xff]
                %206 = vst [vmem:[%s162 + $0xa8] sm:$0xff] %v205
                %v207 = vld [vmem:[%s161 + $0xb0] sm:$0xff]
                %208 = vst [vmem:[%s162 + $0xb0] sm:$0xff] %v207
                %v209 = vld [vmem:[%s161 + $0xb8] sm:$0xff]
                %210 = vst [vmem:[%s162 + $0xb8] sm:$0xff] %v209
                %v211 = vld [vmem:[%s161 + $0xc0] sm:$0xff]
                %212 = vst [vmem:[%s162 + $0xc0] sm:$0xff] %v211
                %v213 = vld [vmem:[%s161 + $0xc8] sm:$0xff]
                %214 = vst [vmem:[%s162 + $0xc8] sm:$0xff] %v213
                %v215 = vld [vmem:[%s161 + $0xd0] sm:$0xff]
                %216 = vst [vmem:[%s162 + $0xd0] sm:$0xff] %v215
                %v217 = vld [vmem:[%s161 + $0xd8] sm:$0xff]
                %218 = vst [vmem:[%s162 + $0xd8] sm:$0xff] %v217
                %v219 = vld [vmem:[%s161 + $0xe0] sm:$0xff]
                %220 = vst [vmem:[%s162 + $0xe0] sm:$0xff] %v219
                %v221 = vld [vmem:[%s161 + $0xe8] sm:$0xff]
                %222 = vst [vmem:[%s162 + $0xe8] sm:$0xff] %v221
                %v223 = vld [vmem:[%s161 + $0xf0] sm:$0xff]
                %224 = vst [vmem:[%s162 + $0xf0] sm:$0xff] %v223
                %v225 = vld [vmem:[%s161 + $0xf8] sm:$0xff]
                %226 = vst [vmem:[%s162 + $0xf8] sm:$0xff] %v225
                %v227 = vld [vmem:[%s161 + $0x100] sm:$0xff]
                %228 = vst [vmem:[%s162 + $0x100] sm:$0xff] %v227
                %v229 = vld [vmem:[%s161 + $0x108] sm:$0xff]
                %230 = vst [vmem:[%s162 + $0x108] sm:$0xff] %v229
                %v231 = vld [vmem:[%s161 + $0x110] sm:$0xff]
                %232 = vst [vmem:[%s162 + $0x110] sm:$0xff] %v231
                %v233 = vld [vmem:[%s161 + $0x118] sm:$0xff]
                %234 = vst [vmem:[%s162 + $0x118] sm:$0xff] %v233
                %v235 = vld [vmem:[%s161 + $0x120] sm:$0xff]
                %236 = vst [vmem:[%s162 + $0x120] sm:$0xff] %v235
                %v237 = vld [vmem:[%s161 + $0x960] sm:$0xff]
                %238 = vst [vmem:[%s162 + $0x12c] sm:$0xff] %v237
                %v239 = vld [vmem:[%s161 + $0x968] sm:$0xff]
                %240 = vst [vmem:[%s162 + $0x134] sm:$0xff] %v239
                %v241 = vld [vmem:[%s161 + $0x970] sm:$0xff]
                %242 = vst [vmem:[%s162 + $0x13c] sm:$0xff] %v241
                %v243 = vld [vmem:[%s161 + $0x978] sm:$0xff]
                %244 = vst [vmem:[%s162 + $0x144] sm:$0xff] %v243
                %v245 = vld [vmem:[%s161 + $0x980] sm:$0xff]
                %246 = vst [vmem:[%s162 + $0x14c] sm:$0xff] %v245
                %v247 = vld [vmem:[%s161 + $0x988] sm:$0xff]
                %248 = vst [vmem:[%s162 + $0x154] sm:$0xff] %v247
                %v249 = vld [vmem:[%s161 + $0x990] sm:$0xff]
                %250 = vst [vmem:[%s162 + $0x15c] sm:$0xff] %v249
                %v251 = vld [vmem:[%s161 + $0x998] sm:$0xff]
                %252 = vst [vmem:[%s162 + $0x164] sm:$0xff] %v251
                %v253 = vld [vmem:[%s161 + $0x9a0] sm:$0xff]
                %254 = vst [vmem:[%s162 + $0x16c] sm:$0xff] %v253
                %v255 = vld [vmem:[%s161 + $0x9a8] sm:$0xff]
                %256 = vst [vmem:[%s162 + $0x174] sm:$0xff] %v255
                %v257 = vld [vmem:[%s161 + $0x9b0] sm:$0xff]
                %258 = vst [vmem:[%s162 + $0x17c] sm:$0xff] %v257
                %v259 = vld [vmem:[%s161 + $0x9b8] sm:$0xff]
                %260 = vst [vmem:[%s162 + $0x184] sm:$0xff] %v259
                %v261 = vld [vmem:[%s161 + $0x9c0] sm:$0xff]
                %262 = vst [vmem:[%s162 + $0x18c] sm:$0xff] %v261
                %v263 = vld [vmem:[%s161 + $0x9c8] sm:$0xff]
                %264 = vst [vmem:[%s162 + $0x194] sm:$0xff] %v263
                %v265 = vld [vmem:[%s161 + $0x9d0] sm:$0xff]
                %266 = vst [vmem:[%s162 + $0x19c] sm:$0xff] %v265
                %v267 = vld [vmem:[%s161 + $0x9d8] sm:$0xff]
                %268 = vst [vmem:[%s162 + $0x1a4] sm:$0xff] %v267
                %v269 = vld [vmem:[%s161 + $0x9e0] sm:$0xff]
                %270 = vst [vmem:[%s162 + $0x1ac] sm:$0xff] %v269
                %v271 = vld [vmem:[%s161 + $0x9e8] sm:$0xff]
                %272 = vst [vmem:[%s162 + $0x1b4] sm:$0xff] %v271
                %v273 = vld [vmem:[%s161 + $0x9f0] sm:$0xff]
                %274 = vst [vmem:[%s162 + $0x1bc] sm:$0xff] %v273
                %v275 = vld [vmem:[%s161 + $0x9f8] sm:$0xff]
                %276 = vst [vmem:[%s162 + $0x1c4] sm:$0xff] %v275
                %v277 = vld [vmem:[%s161 + $0xa00] sm:$0xff]
                %278 = vst [vmem:[%s162 + $0x1cc] sm:$0xff] %v277
                %v279 = vld [vmem:[%s161 + $0xa08] sm:$0xff]
                %280 = vst [vmem:[%s162 + $0x1d4] sm:$0xff] %v279
                %v281 = vld [vmem:[%s161 + $0xa10] sm:$0xff]
                %282 = vst [vmem:[%s162 + $0x1dc] sm:$0xff] %v281
                %v283 = vld [vmem:[%s161 + $0xa18] sm:$0xff]
                %284 = vst [vmem:[%s162 + $0x1e4] sm:$0xff] %v283
                %v285 = vld [vmem:[%s161 + $0xa20] sm:$0xff]
                %286 = vst [vmem:[%s162 + $0x1ec] sm:$0xff] %v285
                %v287 = vld [vmem:[%s161 + $0xa28] sm:$0xff]
                %288 = vst [vmem:[%s162 + $0x1f4] sm:$0xff] %v287
                %v289 = vld [vmem:[%s161 + $0xa30] sm:$0xff]
                %290 = vst [vmem:[%s162 + $0x1fc] sm:$0xff] %v289
                %v291 = vld [vmem:[%s161 + $0xa38] sm:$0xff]
                %292 = vst [vmem:[%s162 + $0x204] sm:$0xff] %v291
                %v293 = vld [vmem:[%s161 + $0xa40] sm:$0xff]
                %294 = vst [vmem:[%s162 + $0x20c] sm:$0xff] %v293
                %v295 = vld [vmem:[%s161 + $0xa48] sm:$0xff]
                %296 = vst [vmem:[%s162 + $0x214] sm:$0xff] %v295
                %v297 = vld [vmem:[%s161 + $0xa50] sm:$0xff]
                %298 = vst [vmem:[%s162 + $0x21c] sm:$0xff] %v297
                %v299 = vld [vmem:[%s161 + $0xa58] sm:$0xff]
                %300 = vst [vmem:[%s162 + $0x224] sm:$0xff] %v299
                %v301 = vld [vmem:[%s161 + $0xa60] sm:$0xff]
                %302 = vst [vmem:[%s162 + $0x22c] sm:$0xff] %v301
                %v303 = vld [vmem:[%s161 + $0xa68] sm:$0xff]
                %304 = vst [vmem:[%s162 + $0x234] sm:$0xff] %v303
                %v305 = vld [vmem:[%s161 + $0xa70] sm:$0xff]
                %306 = vst [vmem:[%s162 + $0x23c] sm:$0xff] %v305
                %v307 = vld [vmem:[%s161 + $0xa78] sm:$0xff]
                %308 = vst [vmem:[%s162 + $0x244] sm:$0xff] %v307
                %v309 = vld [vmem:[%s161 + $0xa80] sm:$0xff]
                %310 = vst [vmem:[%s162 + $0x24c] sm:$0xff] %v309
              $region37: #{net_forward.3} parent=31 // loop_footer
                %s160 = sadd.s32 1, %s156
              $region38: #{net_forward.3} parent=31 // loop_footer_branch
                %155 = sbr.rel target = $region34
              $region39: #{net_forward.3} parent=31 // loop_exit
                _
              %s312 = ssub.s32 16, 1
              loop: start=0, step=1, limit=1
              $region40: #{net_forward.3} parent=31 // loop_pre_header
                _
              $region41: #{net_forward.3} parent=31 // loop_header
                %s314 = sphi 0, %s318
                %p315 = scmp.ge.s32.totalorder %s314, 1
                %s319 = sphi %s153, %s153
                %s320 = sphi %s154, %s154
              $region42: #{net_forward.3} parent=31 // loop_header_branch
                %317 = sbr.rel (%p315) target = $region46
              $region43: #{net_forward.3} parent=31 // loop_body
                %v321 = vld [vmem:[%s319] sm:%s312]
                %322 = vst [vmem:[%s320] sm:%s312] %v321
                %v323 = vld [vmem:[%s319 + $0x960] sm:%s312]
                %324 = vst [vmem:[%s320 + $0x12c] sm:%s312] %v323
              $region44: #{net_forward.3} parent=31 // loop_footer
                %s318 = sadd.s32 1, %s314
              $region45: #{net_forward.3} parent=31 // loop_footer_branch
                %313 = sbr.rel target = $region41
              $region46: #{net_forward.3} parent=31 // loop_exit
                _
            $region32: #{net_forward.3} parent=27 // pred_fallthru
              _
          $region28: #{net_forward.3} parent=23 // pred_fallthru
            _
          %325 = vnop
        $region24: #{net_forward.3} parent=15 // pred_fallthru
          _
      $region16: #{net_forward.3} parent=5 // pred_fallthru
        _
      %p326 = scmp.le.s32.totalorder 1, %s8
      %p327 = scmp.lt.s32.totalorder %s8, 9
      %p328 = pnand %p326, %p327
      %p329 = pneg %p328
      // Predicated region
      $region47: #{net_forward.3} parent=5 // pred_check
        _
      $region48: #{net_forward.3} parent=5 // pred_check_branch
        %331 = sbr.rel (%p328) target = $region50
      $region49: #{net_forward.3} parent=5 // pred_region
        %s332 = ssub.s32 %s8, 1
        %s333 = sand.u32 %s67, 1
        %s334 = sand.u32 %s67, 1
        %s335 = smul.addr %s334, 600
        %s336 = scalar_lea.vmem [#allocation3], %s335
        // Predicated region
        $region51: #{net_forward.3} parent=49 // pred_check
          %p337 = pneg %p80
        $region52: #{net_forward.3} parent=49 // pred_check_branch
          %339 = sbr.rel (%p337) target = $region54
        $region53: #{net_forward.3} parent=49 // pred_region
          _
        $region54: #{net_forward.3} parent=49 // pred_fallthru
          _
        %s340 = smul.u32 %s17, 4
        %s341 = sadd.s32 %s340, %s18
        %s342 = smul.u32 75, %s341
        %p343 = scmp.lt.s32.totalorder %s342, 599
        %s344 = scalar_select %p343, %s342, 599
        %s345 = scalar_lea.vmem %s0, %s344
        %p346 = pneg %p50
        %p347 = pneg %p47
        %s348 = sand.u32 %s67, 1
        %s349 = sand.u32 %s67, 1
        %s350 = smul.addr %s349, 600
        %s351 = scalar_lea.vmem [#allocation3], %s350
        %p352 = pneg %p80
        %p353 = pneg %p77
        %p354 = pneg %p106
        %p355 = pneg %p103
        %p356 = scmp.lt.s32.totalorder %s17, 1
        %s357 = scalar_select %p356, %s17, 1
        %s358 = smul.addr %s357, 2
        %s359 = scalar_lea.vmem %s2, %s358
        %s360 = smul.u32 %s17, 4
        %s361 = sadd.s32 %s360, %s18
        %s362 = smul.u32 75, %s361
        %p363 = scmp.lt.s32.totalorder %s362, 599
        %s364 = scalar_select %p363, %s362, 599
        %s365 = scalar_lea.vmem %s0, %s364
        %s366 = smul.u32 %s17, 4
        %s367 = sadd.s32 %s366, %s18
        %s368 = smul.u32 75, %s367
        %s369 = smul.u32 %s17, 4
        %s370 = sadd.s32 %s369, %s18
        %s371 = smul.u32 75, %s370
        %p372 = scmp.lt.s32.totalorder %s17, 1
        %s373 = scalar_select %p372, %s17, 1
        %s374 = smul.addr %s373, 2
        %s375 = scalar_lea.vmem %s2, %s374
        %p377 = scmp.eq.s32.totalorder %s18, 0
        // Predicated region
        $region55: #{net_forward.3} parent=49 // pred_check
          %p378 = pneg %p377
        $region56: #{net_forward.3} parent=49 // pred_check_branch
          %380 = sbr.rel (%p378) target = $region58
        $region57: #{net_forward.3} parent=49 // pred_region
          %vm381 = vcmask 123904
          %382 = vst.msk [vmem:[#allocation2] sm:$0x3] %vm381, 0.0
        $region58: #{net_forward.3} parent=49 // pred_fallthru
          _
        %v383 = vld [vmem:[#allocation2] sm:$0x3]
        %v384 = vld [vmem:[%s365] sm:$0xff]
        %v385 = vld [vmem:[%s365 + $0x8] sm:$0xff]
        %v386 = vld [vmem:[%s365 + $0x10] sm:$0xff]
        %v387 = vld [vmem:[%s365 + $0x18] sm:$0xff]
        %v388 = vld [vmem:[%s365 + $0x20] sm:$0xff]
        %v389 = vld [vmem:[%s365 + $0x28] sm:$0xff]
        %v390 = vld [vmem:[%s365 + $0x30] sm:$0xff]
        %v391 = vld [vmem:[%s365 + $0x38] sm:$0xff]
        %v392 = vld [vmem:[%s365 + $0x40] sm:$0xff]
        %v393 = vld [vmem:[%s365 + $0x48] sm:$0x7]
        %v394 = vld [vmem:[%s336] sm:$0xff]
        %v395 = vld [vmem:[%s336 + $0x8] sm:$0xff]
        %v396 = vld [vmem:[%s336 + $0x10] sm:$0xff]
        %v397 = vld [vmem:[%s336 + $0x18] sm:$0xff]
        %v398 = vld [vmem:[%s336 + $0x20] sm:$0xff]
        %v399 = vld [vmem:[%s336 + $0x28] sm:$0xff]
        %v400 = vld [vmem:[%s336 + $0x30] sm:$0xff]
        %v401 = vld [vmem:[%s336 + $0x38] sm:$0xff]
        %v402 = vld [vmem:[%s336 + $0x40] sm:$0xff]
        %v403 = vld [vmem:[%s336 + $0x48] sm:$0xff]
        %v404 = vld [vmem:[%s336 + $0x50] sm:$0xff]
        %v405 = vld [vmem:[%s336 + $0x58] sm:$0xff]
        %v406 = vld [vmem:[%s336 + $0x60] sm:$0xff]
        %v407 = vld [vmem:[%s336 + $0x68] sm:$0xff]
        %v408 = vld [vmem:[%s336 + $0x70] sm:$0xff]
        %v409 = vld [vmem:[%s336 + $0x78] sm:$0xff]
        %v410 = vld [vmem:[%s336 + $0x80] sm:$0xff]
        %v411 = vld [vmem:[%s336 + $0x88] sm:$0xff]
        %v412 = vld [vmem:[%s336 + $0x90] sm:$0xff]
        %v413 = vld [vmem:[%s336 + $0x98] sm:$0xff]
        %v414 = vld [vmem:[%s336 + $0xa0] sm:$0xff]
        %v415 = vld [vmem:[%s336 + $0xa8] sm:$0xff]
        %v416 = vld [vmem:[%s336 + $0xb0] sm:$0xff]
        %v417 = vld [vmem:[%s336 + $0xb8] sm:$0xff]
        %v418 = vld [vmem:[%s336 + $0xc0] sm:$0xff]
        %v419 = vld [vmem:[%s336 + $0xc8] sm:$0xff]
        %v420 = vld [vmem:[%s336 + $0xd0] sm:$0xff]
        %v421 = vld [vmem:[%s336 + $0xd8] sm:$0xff]
        %v422 = vld [vmem:[%s336 + $0xe0] sm:$0xff]
        %v423 = vld [vmem:[%s336 + $0xe8] sm:$0xff]
        %v424 = vld [vmem:[%s336 + $0xf0] sm:$0xff]
        %v425 = vld [vmem:[%s336 + $0xf8] sm:$0xff]
        %v426 = vld [vmem:[%s336 + $0x100] sm:$0xff]
        %v427 = vld [vmem:[%s336 + $0x108] sm:$0xff]
        %v428 = vld [vmem:[%s336 + $0x110] sm:$0xff]
        %v429 = vld [vmem:[%s336 + $0x118] sm:$0xff]
        %v430 = vld [vmem:[%s336 + $0x120] sm:$0xff]
        %v431 = vld [vmem:[%s336 + $0x128] sm:$0xf]
        %v432 = vld [vmem:[%s336 + $0x12c] sm:$0xff]
        %v433 = vld [vmem:[%s336 + $0x134] sm:$0xff]
        %v434 = vld [vmem:[%s336 + $0x13c] sm:$0xff]
        %v435 = vld [vmem:[%s336 + $0x144] sm:$0xff]
        %v436 = vld [vmem:[%s336 + $0x14c] sm:$0xff]
        %v437 = vld [vmem:[%s336 + $0x154] sm:$0xff]
        %v438 = vld [vmem:[%s336 + $0x15c] sm:$0xff]
        %v439 = vld [vmem:[%s336 + $0x164] sm:$0xff]
        %v440 = vld [vmem:[%s336 + $0x16c] sm:$0xff]
        %v441 = vld [vmem:[%s336 + $0x174] sm:$0xff]
        %v442 = vld [vmem:[%s336 + $0x17c] sm:$0xff]
        %v443 = vld [vmem:[%s336 + $0x184] sm:$0xff]
        %v444 = vld [vmem:[%s336 + $0x18c] sm:$0xff]
        %v445 = vld [vmem:[%s336 + $0x194] sm:$0xff]
        %v446 = vld [vmem:[%s336 + $0x19c] sm:$0xff]
        %v447 = vld [vmem:[%s336 + $0x1a4] sm:$0xff]
        %v448 = vld [vmem:[%s336 + $0x1ac] sm:$0xff]
        %v449 = vld [vmem:[%s336 + $0x1b4] sm:$0xff]
        %v450 = vld [vmem:[%s336 + $0x1bc] sm:$0xff]
        %v451 = vld [vmem:[%s336 + $0x1c4] sm:$0xff]
        %v452 = vld [vmem:[%s336 + $0x1cc] sm:$0xff]
        %v453 = vld [vmem:[%s336 + $0x1d4] sm:$0xff]
        %v454 = vld [vmem:[%s336 + $0x1dc] sm:$0xff]
        %v455 = vld [vmem:[%s336 + $0x1e4] sm:$0xff]
        %v456 = vld [vmem:[%s336 + $0x1ec] sm:$0xff]
        %v457 = vld [vmem:[%s336 + $0x1f4] sm:$0xff]
        %v458 = vld [vmem:[%s336 + $0x1fc] sm:$0xff]
        %v459 = vld [vmem:[%s336 + $0x204] sm:$0xff]
        %v460 = vld [vmem:[%s336 + $0x20c] sm:$0xff]
        %v461 = vld [vmem:[%s336 + $0x214] sm:$0xff]
        %v462 = vld [vmem:[%s336 + $0x21c] sm:$0xff]
        %v463 = vld [vmem:[%s336 + $0x224] sm:$0xff]
        %v464 = vld [vmem:[%s336 + $0x22c] sm:$0xff]
        %v465 = vld [vmem:[%s336 + $0x234] sm:$0xff]
        %v466 = vld [vmem:[%s336 + $0x23c] sm:$0xff]
        %v467 = vld [vmem:[%s336 + $0x244] sm:$0xff]
        %v468 = vld [vmem:[%s336 + $0x24c] sm:$0xff]
        %v469 = vld [vmem:[%s336 + $0x254] sm:$0xf]
        %471 = vst [vmem:[#allocation1] ss:$9 sm:$0xff] %v384
        %v472 = vld [vmem:[#allocation1] sm:$0xff]
        %v473 = vld [vmem:[#allocation1 + $0x9] sm:$0xff]
        %v474 = vld [vmem:[#allocation1 + $0x12] sm:$0xff]
        %v475 = vld [vmem:[#allocation1 + $0x1b] sm:$0xff]
        %v476 = vld [vmem:[#allocation1 + $0x24] sm:$0xff]
        %v477 = vld [vmem:[#allocation1 + $0x2d] sm:$0xff]
        %v478 = vld [vmem:[#allocation1 + $0x36] sm:$0xff]
        %v479 = vld [vmem:[#allocation1 + $0x3f] sm:$0xff]
        %481 = vst [vmem:[#allocation1] ss:$9 sm:$0xff] %v385
        %v482 = vld [vmem:[#allocation1] sm:$0xff]
        %v483 = vld [vmem:[#allocation1 + $0x9] sm:$0xff]
        %v484 = vld [vmem:[#allocation1 + $0x12] sm:$0xff]
        %v485 = vld [vmem:[#allocation1 + $0x1b] sm:$0xff]
        %v486 = vld [vmem:[#allocation1 + $0x24] sm:$0xff]
        %v487 = vld [vmem:[#allocation1 + $0x2d] sm:$0xff]
        %v488 = vld [vmem:[#allocation1 + $0x36] sm:$0xff]
        %v489 = vld [vmem:[#allocation1 + $0x3f] sm:$0xff]
        %491 = vst [vmem:[#allocation1] ss:$9 sm:$0xff] %v386
        %v492 = vld [vmem:[#allocation1] sm:$0xff]
        %v493 = vld [vmem:[#allocation1 + $0x9] sm:$0xff]
        %v494 = vld [vmem:[#allocation1 + $0x12] sm:$0xff]
        %v495 = vld [vmem:[#allocation1 + $0x1b] sm:$0xff]
        %v496 = vld [vmem:[#allocation1 + $0x24] sm:$0xff]
        %v497 = vld [vmem:[#allocation1 + $0x2d] sm:$0xff]
        %v498 = vld [vmem:[#allocation1 + $0x36] sm:$0xff]
        %v499 = vld [vmem:[#allocation1 + $0x3f] sm:$0xff]
        %501 = vst [vmem:[#allocation1] ss:$9 sm:$0xff] %v387
        %v502 = vld [vmem:[#allocation1] sm:$0xff]
        %v503 = vld [vmem:[#allocation1 + $0x9] sm:$0xff]
        %v504 = vld [vmem:[#allocation1 + $0x12] sm:$0xff]
        %v505 = vld [vmem:[#allocation1 + $0x1b] sm:$0xff]
        %v506 = vld [vmem:[#allocation1 + $0x24] sm:$0xff]
        %v507 = vld [vmem:[#allocation1 + $0x2d] sm:$0xff]
        %v508 = vld [vmem:[#allocation1 + $0x36] sm:$0xff]
        %v509 = vld [vmem:[#allocation1 + $0x3f] sm:$0xff]
        %511 = vst [vmem:[#allocation1] ss:$9 sm:$0xff] %v388
        %v512 = vld [vmem:[#allocation1] sm:$0xff]
        %v513 = vld [vmem:[#allocation1 + $0x9] sm:$0xff]
        %v514 = vld [vmem:[#allocation1 + $0x12] sm:$0xff]
        %v515 = vld [vmem:[#allocation1 + $0x1b] sm:$0xff]
        %v516 = vld [vmem:[#allocation1 + $0x24] sm:$0xff]
        %v517 = vld [vmem:[#allocation1 + $0x2d] sm:$0xff]
        %v518 = vld [vmem:[#allocation1 + $0x36] sm:$0xff]
        %v519 = vld [vmem:[#allocation1 + $0x3f] sm:$0xff]
        %521 = vst [vmem:[#allocation1] ss:$9 sm:$0xff] %v389
        %v522 = vld [vmem:[#allocation1] sm:$0xff]
        %v523 = vld [vmem:[#allocation1 + $0x9] sm:$0xff]
        %v524 = vld [vmem:[#allocation1 + $0x12] sm:$0xff]
        %v525 = vld [vmem:[#allocation1 + $0x1b] sm:$0xff]
        %v526 = vld [vmem:[#allocation1 + $0x24] sm:$0xff]
        %v527 = vld [vmem:[#allocation1 + $0x2d] sm:$0xff]
        %v528 = vld [vmem:[#allocation1 + $0x36] sm:$0xff]
        %v529 = vld [vmem:[#allocation1 + $0x3f] sm:$0xff]
        %531 = vst [vmem:[#allocation1] ss:$9 sm:$0xff] %v390
        %v532 = vld [vmem:[#allocation1] sm:$0xff]
        %v533 = vld [vmem:[#allocation1 + $0x9] sm:$0xff]
        %v534 = vld [vmem:[#allocation1 + $0x12] sm:$0xff]
        %v535 = vld [vmem:[#allocation1 + $0x1b] sm:$0xff]
        %v536 = vld [vmem:[#allocation1 + $0x24] sm:$0xff]
        %v537 = vld [vmem:[#allocation1 + $0x2d] sm:$0xff]
        %v538 = vld [vmem:[#allocation1 + $0x36] sm:$0xff]
        %v539 = vld [vmem:[#allocation1 + $0x3f] sm:$0xff]
        %541 = vst [vmem:[#allocation1] ss:$9 sm:$0xff] %v391
        %v542 = vld [vmem:[#allocation1] sm:$0xff]
        %v543 = vld [vmem:[#allocation1 + $0x9] sm:$0xff]
        %v544 = vld [vmem:[#allocation1 + $0x12] sm:$0xff]
        %v545 = vld [vmem:[#allocation1 + $0x1b] sm:$0xff]
        %v546 = vld [vmem:[#allocation1 + $0x24] sm:$0xff]
        %v547 = vld [vmem:[#allocation1 + $0x2d] sm:$0xff]
        %v548 = vld [vmem:[#allocation1 + $0x36] sm:$0xff]
        %v549 = vld [vmem:[#allocation1 + $0x3f] sm:$0xff]
        %551 = vst [vmem:[#allocation1] ss:$9 sm:$0xff] %v392
        %v552 = vld [vmem:[#allocation1] sm:$0xff]
        %v553 = vld [vmem:[#allocation1 + $0x9] sm:$0xff]
        %v554 = vld [vmem:[#allocation1 + $0x12] sm:$0xff]
        %v555 = vld [vmem:[#allocation1 + $0x1b] sm:$0xff]
        %v556 = vld [vmem:[#allocation1 + $0x24] sm:$0xff]
        %v557 = vld [vmem:[#allocation1 + $0x2d] sm:$0xff]
        %v558 = vld [vmem:[#allocation1 + $0x36] sm:$0xff]
        %v559 = vld [vmem:[#allocation1 + $0x3f] sm:$0xff]
        %561 = vst [vmem:[#allocation1] ss:$9 sm:$0xff] %v393
        %v562 = vld [vmem:[#allocation1] sm:$0xff]
        %v563 = vld [vmem:[#allocation1 + $0x9] sm:$0xff]
        %v564 = vld [vmem:[#allocation1 + $0x12] sm:$0xff]
        %v716 = vunpack.c.l.b16 %v394
        %v717 = vunpack.c.h.b16 %v394
        %v718 = vunpack.c.l.b16 %v395
        %v719 = vunpack.c.h.b16 %v395
        %v720 = vunpack.c.l.b16 %v396
        %v721 = vunpack.c.h.b16 %v396
        %v722 = vunpack.c.l.b16 %v397
        %v723 = vunpack.c.h.b16 %v397
        %v724 = vunpack.c.l.b16 %v398
        %v725 = vunpack.c.h.b16 %v398
        %v726 = vunpack.c.l.b16 %v399
        %v727 = vunpack.c.h.b16 %v399
        %v728 = vunpack.c.l.b16 %v400
        %v729 = vunpack.c.h.b16 %v400
        %v730 = vunpack.c.l.b16 %v401
        %v731 = vunpack.c.h.b16 %v401
        %v732 = vunpack.c.l.b16 %v402
        %v733 = vunpack.c.h.b16 %v402
        %v734 = vunpack.c.l.b16 %v403
        %v735 = vunpack.c.h.b16 %v403
        %v736 = vunpack.c.l.b16 %v404
        %v737 = vunpack.c.h.b16 %v404
        %v738 = vunpack.c.l.b16 %v405
        %v739 = vunpack.c.h.b16 %v405
        %v740 = vunpack.c.l.b16 %v406
        %v741 = vunpack.c.h.b16 %v406
        %v742 = vunpack.c.l.b16 %v407
        %v743 = vunpack.c.h.b16 %v407
        %v744 = vunpack.c.l.b16 %v408
        %v745 = vunpack.c.h.b16 %v408
        %v746 = vunpack.c.l.b16 %v409
        %v747 = vunpack.c.h.b16 %v409
        %v748 = vunpack.c.l.b16 %v410
        %v749 = vunpack.c.h.b16 %v410
        %v750 = vunpack.c.l.b16 %v411
        %v751 = vunpack.c.h.b16 %v411
        %v752 = vunpack.c.l.b16 %v412
        %v753 = vunpack.c.h.b16 %v412
        %v754 = vunpack.c.l.b16 %v413
        %v755 = vunpack.c.h.b16 %v413
        %v756 = vunpack.c.l.b16 %v414
        %v757 = vunpack.c.h.b16 %v414
        %v758 = vunpack.c.l.b16 %v415
        %v759 = vunpack.c.h.b16 %v415
        %v760 = vunpack.c.l.b16 %v416
        %v761 = vunpack.c.h.b16 %v416
        %v762 = vunpack.c.l.b16 %v417
        %v763 = vunpack.c.h.b16 %v417
        %v764 = vunpack.c.l.b16 %v418
        %v765 = vunpack.c.h.b16 %v418
        %v766 = vunpack.c.l.b16 %v419
        %v767 = vunpack.c.h.b16 %v419
        %v768 = vunpack.c.l.b16 %v420
        %v769 = vunpack.c.h.b16 %v420
        %v770 = vunpack.c.l.b16 %v421
        %v771 = vunpack.c.h.b16 %v421
        %v772 = vunpack.c.l.b16 %v422
        %v773 = vunpack.c.h.b16 %v422
        %v774 = vunpack.c.l.b16 %v423
        %v775 = vunpack.c.h.b16 %v423
        %v776 = vunpack.c.l.b16 %v424
        %v777 = vunpack.c.h.b16 %v424
        %v778 = vunpack.c.l.b16 %v425
        %v779 = vunpack.c.h.b16 %v425
        %v780 = vunpack.c.l.b16 %v426
        %v781 = vunpack.c.h.b16 %v426
        %v782 = vunpack.c.l.b16 %v427
        %v783 = vunpack.c.h.b16 %v427
        %v784 = vunpack.c.l.b16 %v428
        %v785 = vunpack.c.h.b16 %v428
        %v786 = vunpack.c.l.b16 %v429
        %v787 = vunpack.c.h.b16 %v429
        %v788 = vunpack.c.l.b16 %v430
        %v789 = vunpack.c.h.b16 %v430
        %v790 = vunpack.c.l.b16 %v431
        %v791 = vunpack.c.l.b16 %v432
        %v792 = vunpack.c.h.b16 %v432
        %v793 = vunpack.c.l.b16 %v433
        %v794 = vunpack.c.h.b16 %v433
        %v795 = vunpack.c.l.b16 %v434
        %v796 = vunpack.c.h.b16 %v434
        %v797 = vunpack.c.l.b16 %v435
        %v798 = vunpack.c.h.b16 %v435
        %v799 = vunpack.c.l.b16 %v436
        %v800 = vunpack.c.h.b16 %v436
        %v801 = vunpack.c.l.b16 %v437
        %v802 = vunpack.c.h.b16 %v437
        %v803 = vunpack.c.l.b16 %v438
        %v804 = vunpack.c.h.b16 %v438
        %v805 = vunpack.c.l.b16 %v439
        %v806 = vunpack.c.h.b16 %v439
        %v807 = vunpack.c.l.b16 %v440
        %v808 = vunpack.c.h.b16 %v440
        %v809 = vunpack.c.l.b16 %v441
        %v810 = vunpack.c.h.b16 %v441
        %v811 = vunpack.c.l.b16 %v442
        %v812 = vunpack.c.h.b16 %v442
        %v813 = vunpack.c.l.b16 %v443
        %v814 = vunpack.c.h.b16 %v443
        %v815 = vunpack.c.l.b16 %v444
        %v816 = vunpack.c.h.b16 %v444
        %v817 = vunpack.c.l.b16 %v445
        %v818 = vunpack.c.h.b16 %v445
        %v819 = vunpack.c.l.b16 %v446
        %v820 = vunpack.c.h.b16 %v446
        %v821 = vunpack.c.l.b16 %v447
        %v822 = vunpack.c.h.b16 %v447
        %v823 = vunpack.c.l.b16 %v448
        %v824 = vunpack.c.h.b16 %v448
        %v825 = vunpack.c.l.b16 %v449
        %v826 = vunpack.c.h.b16 %v449
        %v827 = vunpack.c.l.b16 %v450
        %v828 = vunpack.c.h.b16 %v450
        %v829 = vunpack.c.l.b16 %v451
        %v830 = vunpack.c.h.b16 %v451
        %v831 = vunpack.c.l.b16 %v452
        %v832 = vunpack.c.h.b16 %v452
        %v833 = vunpack.c.l.b16 %v453
        %v834 = vunpack.c.h.b16 %v453
        %v835 = vunpack.c.l.b16 %v454
        %v836 = vunpack.c.h.b16 %v454
        %v837 = vunpack.c.l.b16 %v455
        %v838 = vunpack.c.h.b16 %v455
        %v839 = vunpack.c.l.b16 %v456
        %v840 = vunpack.c.h.b16 %v456
        %v841 = vunpack.c.l.b16 %v457
        %v842 = vunpack.c.h.b16 %v457
        %v843 = vunpack.c.l.b16 %v458
        %v844 = vunpack.c.h.b16 %v458
        %v845 = vunpack.c.l.b16 %v459
        %v846 = vunpack.c.h.b16 %v459
        %v847 = vunpack.c.l.b16 %v460
        %v848 = vunpack.c.h.b16 %v460
        %v849 = vunpack.c.l.b16 %v461
        %v850 = vunpack.c.h.b16 %v461
        %v851 = vunpack.c.l.b16 %v462
        %v852 = vunpack.c.h.b16 %v462
        %v853 = vunpack.c.l.b16 %v463
        %v854 = vunpack.c.h.b16 %v463
        %v855 = vunpack.c.l.b16 %v464
        %v856 = vunpack.c.h.b16 %v464
        %v857 = vunpack.c.l.b16 %v465
        %v858 = vunpack.c.h.b16 %v465
        %v859 = vunpack.c.l.b16 %v466
        %v860 = vunpack.c.h.b16 %v466
        %v861 = vunpack.c.l.b16 %v467
        %v862 = vunpack.c.h.b16 %v467
        %v863 = vunpack.c.l.b16 %v468
        %v864 = vunpack.c.h.b16 %v468
        %v865 = vunpack.c.l.b16 %v469
        %v866 = vpack.c.b16 %v791, %v716
        %v867 = vpack.c.b16 %v792, %v717
        %v868 = vpack.c.b16 %v793, %v718
        %v869 = vpack.c.b16 %v794, %v719
        %v870 = vpack.c.b16 %v795, %v720
        %v871 = vpack.c.b16 %v796, %v721
        %v872 = vpack.c.b16 %v797, %v722
        %v873 = vpack.c.b16 %v798, %v723
        %v874 = vpack.c.b16 %v799, %v724
        %v875 = vpack.c.b16 %v800, %v725
        %v876 = vpack.c.b16 %v801, %v726
        %v877 = vpack.c.b16 %v802, %v727
        %v878 = vpack.c.b16 %v803, %v728
        %v879 = vpack.c.b16 %v804, %v729
        %v880 = vpack.c.b16 %v805, %v730
        %v881 = vpack.c.b16 %v806, %v731
        %v882 = vpack.c.b16 %v807, %v732
        %v883 = vpack.c.b16 %v808, %v733
        %v884 = vpack.c.b16 %v809, %v734
        %v885 = vpack.c.b16 %v810, %v735
        %v886 = vpack.c.b16 %v811, %v736
        %v887 = vpack.c.b16 %v812, %v737
        %v888 = vpack.c.b16 %v813, %v738
        %v889 = vpack.c.b16 %v814, %v739
        %v890 = vpack.c.b16 %v815, %v740
        %v891 = vpack.c.b16 %v816, %v741
        %v892 = vpack.c.b16 %v817, %v742
        %v893 = vpack.c.b16 %v818, %v743
        %v894 = vpack.c.b16 %v819, %v744
        %v895 = vpack.c.b16 %v820, %v745
        %v896 = vpack.c.b16 %v821, %v746
        %v897 = vpack.c.b16 %v822, %v747
        %v898 = vpack.c.b16 %v823, %v748
        %v899 = vpack.c.b16 %v824, %v749
        %v900 = vpack.c.b16 %v825, %v750
        %v901 = vpack.c.b16 %v826, %v751
        %v902 = vpack.c.b16 %v827, %v752
        %v903 = vpack.c.b16 %v828, %v753
        %v904 = vpack.c.b16 %v829, %v754
        %v905 = vpack.c.b16 %v830, %v755
        %v906 = vpack.c.b16 %v831, %v756
        %v907 = vpack.c.b16 %v832, %v757
        %v908 = vpack.c.b16 %v833, %v758
        %v909 = vpack.c.b16 %v834, %v759
        %v910 = vpack.c.b16 %v835, %v760
        %v911 = vpack.c.b16 %v836, %v761
        %v912 = vpack.c.b16 %v837, %v762
        %v913 = vpack.c.b16 %v838, %v763
        %v914 = vpack.c.b16 %v839, %v764
        %v915 = vpack.c.b16 %v840, %v765
        %v916 = vpack.c.b16 %v841, %v766
        %v917 = vpack.c.b16 %v842, %v767
        %v918 = vpack.c.b16 %v843, %v768
        %v919 = vpack.c.b16 %v844, %v769
        %v920 = vpack.c.b16 %v845, %v770
        %v921 = vpack.c.b16 %v846, %v771
        %v922 = vpack.c.b16 %v847, %v772
        %v923 = vpack.c.b16 %v848, %v773
        %v924 = vpack.c.b16 %v849, %v774
        %v925 = vpack.c.b16 %v850, %v775
        %v926 = vpack.c.b16 %v851, %v776
        %v927 = vpack.c.b16 %v852, %v777
        %v928 = vpack.c.b16 %v853, %v778
        %v929 = vpack.c.b16 %v854, %v779
        %v930 = vpack.c.b16 %v855, %v780
        %v931 = vpack.c.b16 %v856, %v781
        %v932 = vpack.c.b16 %v857, %v782
        %v933 = vpack.c.b16 %v858, %v783
        %v934 = vpack.c.b16 %v859, %v784
        %v935 = vpack.c.b16 %v860, %v785
        %v936 = vpack.c.b16 %v861, %v786
        %v937 = vpack.c.b16 %v862, %v787
        %v938 = vpack.c.b16 %v863, %v788
        %v939 = vpack.c.b16 %v864, %v789
        %v940 = vpack.c.b16 %v865, %v790
        %1016 = vmatpush.bf16.xpose.msra.mxu0 0
        %1017 = vmatpush.bf16.xpose.msra.mxu0 0
        %1018 = vmatpush.bf16.xpose.msra.mxu0 0
        %1019 = vmatpush.bf16.xpose.msra.mxu0 0
        %1020 = vmatpush.bf16.xpose.msra.mxu0 0
        %1021 = vmatpush.bf16.xpose.msra.mxu0 0
        %1022 = vmatpush.bf16.xpose.msra.mxu0 0
        %1023 = vmatpush.bf16.xpose.msra.mxu0 %v866
        %1024 = vmatmul.bf16.gmra.mxu0 %v472
        %v1025 = vpop.f32.mrf.mxu0
        %v1026 = vadd.f32 0.0, %v1025
        %v1027 = vpop.f32.mrf.mxu0
        %1028 = vdwg.mxu0
        %1029 = vmatpush.bf16.xpose.msra.mxu0 0
        %1030 = vmatpush.bf16.xpose.msra.mxu0 0
        %1031 = vmatpush.bf16.xpose.msra.mxu0 0
        %1032 = vmatpush.bf16.xpose.msra.mxu0 0
        %1033 = vmatpush.bf16.xpose.msra.mxu0 0
        %1034 = vmatpush.bf16.xpose.msra.mxu0 0
        %1035 = vmatpush.bf16.xpose.msra.mxu0 0
        %1036 = vmatpush.bf16.xpose.msra.mxu0 %v867
        %1037 = vmatmul.bf16.gmra.mxu0 %v473
        %v1038 = vpop.f32.mrf.mxu0
        %v1039 = vadd.f32 %v1026, %v1038
        %v1040 = vpop.f32.mrf.mxu0
        %1041 = vdwg.mxu0
        %1042 = vmatpush.bf16.xpose.msra.mxu0 0
        %1043 = vmatpush.bf16.xpose.msra.mxu0 0
        %1044 = vmatpush.bf16.xpose.msra.mxu0 0
        %1045 = vmatpush.bf16.xpose.msra.mxu0 0
        %1046 = vmatpush.bf16.xpose.msra.mxu0 0
        %1047 = vmatpush.bf16.xpose.msra.mxu0 0
        %1048 = vmatpush.bf16.xpose.msra.mxu0 0
        %1049 = vmatpush.bf16.xpose.msra.mxu0 %v868
        %1050 = vmatmul.bf16.gmra.mxu0 %v474
        %v1051 = vpop.f32.mrf.mxu0
        %v1052 = vadd.f32 %v1039, %v1051
        %v1053 = vpop.f32.mrf.mxu0
        %1054 = vdwg.mxu0
        %1055 = vmatpush.bf16.xpose.msra.mxu0 0
        %1056 = vmatpush.bf16.xpose.msra.mxu0 0
        %1057 = vmatpush.bf16.xpose.msra.mxu0 0
        %1058 = vmatpush.bf16.xpose.msra.mxu0 0
        %1059 = vmatpush.bf16.xpose.msra.mxu0 0
        %1060 = vmatpush.bf16.xpose.msra.mxu0 0
        %1061 = vmatpush.bf16.xpose.msra.mxu0 0
        %1062 = vmatpush.bf16.xpose.msra.mxu0 %v869
        %1063 = vmatmul.bf16.gmra.mxu0 %v475
        %v1064 = vpop.f32.mrf.mxu0
        %v1065 = vadd.f32 %v1052, %v1064
        %v1066 = vpop.f32.mrf.mxu0
        %1067 = vdwg.mxu0
        %1068 = vmatpush.bf16.xpose.msra.mxu0 0
        %1069 = vmatpush.bf16.xpose.msra.mxu0 0
        %1070 = vmatpush.bf16.xpose.msra.mxu0 0
        %1071 = vmatpush.bf16.xpose.msra.mxu0 0
        %1072 = vmatpush.bf16.xpose.msra.mxu0 0
        %1073 = vmatpush.bf16.xpose.msra.mxu0 0
        %1074 = vmatpush.bf16.xpose.msra.mxu0 0
        %1075 = vmatpush.bf16.xpose.msra.mxu0 %v870
        %1076 = vmatmul.bf16.gmra.mxu0 %v476
        %v1077 = vpop.f32.mrf.mxu0
        %v1078 = vadd.f32 %v1065, %v1077
        %v1079 = vpop.f32.mrf.mxu0
        %1080 = vdwg.mxu0
        %1081 = vmatpush.bf16.xpose.msra.mxu0 0
        %1082 = vmatpush.bf16.xpose.msra.mxu0 0
        %1083 = vmatpush.bf16.xpose.msra.mxu0 0
        %1084 = vmatpush.bf16.xpose.msra.mxu0 0
        %1085 = vmatpush.bf16.xpose.msra.mxu0 0
        %1086 = vmatpush.bf16.xpose.msra.mxu0 0
        %1087 = vmatpush.bf16.xpose.msra.mxu0 0
        %1088 = vmatpush.bf16.xpose.msra.mxu0 %v871
        %1089 = vmatmul.bf16.gmra.mxu0 %v477
        %v1090 = vpop.f32.mrf.mxu0
        %v1091 = vadd.f32 %v1078, %v1090
        %v1092 = vpop.f32.mrf.mxu0
        %1093 = vdwg.mxu0
        %1094 = vmatpush.bf16.xpose.msra.mxu0 0
        %1095 = vmatpush.bf16.xpose.msra.mxu0 0
        %1096 = vmatpush.bf16.xpose.msra.mxu0 0
        %1097 = vmatpush.bf16.xpose.msra.mxu0 0
        %1098 = vmatpush.bf16.xpose.msra.mxu0 0
        %1099 = vmatpush.bf16.xpose.msra.mxu0 0
        %1100 = vmatpush.bf16.xpose.msra.mxu0 0
        %1101 = vmatpush.bf16.xpose.msra.mxu0 %v872
        %1102 = vmatmul.bf16.gmra.mxu0 %v478
        %v1103 = vpop.f32.mrf.mxu0
        %v1104 = vadd.f32 %v1091, %v1103
        %v1105 = vpop.f32.mrf.mxu0
        %1106 = vdwg.mxu0
        %1107 = vmatpush.bf16.xpose.msra.mxu0 0
        %1108 = vmatpush.bf16.xpose.msra.mxu0 0
        %1109 = vmatpush.bf16.xpose.msra.mxu0 0
        %1110 = vmatpush.bf16.xpose.msra.mxu0 0
        %1111 = vmatpush.bf16.xpose.msra.mxu0 0
        %1112 = vmatpush.bf16.xpose.msra.mxu0 0
        %1113 = vmatpush.bf16.xpose.msra.mxu0 0
        %1114 = vmatpush.bf16.xpose.msra.mxu0 %v873
        %1115 = vmatmul.bf16.gmra.mxu0 %v479
        %v1116 = vpop.f32.mrf.mxu0
        %v1117 = vadd.f32 %v1104, %v1116
        %v1118 = vpop.f32.mrf.mxu0
        %1119 = vdwg.mxu0
        %1120 = vmatpush.bf16.xpose.msra.mxu0 0
        %1121 = vmatpush.bf16.xpose.msra.mxu0 0
        %1122 = vmatpush.bf16.xpose.msra.mxu0 0
        %1123 = vmatpush.bf16.xpose.msra.mxu0 0
        %1124 = vmatpush.bf16.xpose.msra.mxu0 0
        %1125 = vmatpush.bf16.xpose.msra.mxu0 0
        %1126 = vmatpush.bf16.xpose.msra.mxu0 0
        %1127 = vmatpush.bf16.xpose.msra.mxu0 %v874
        %1128 = vmatmul.bf16.gmra.mxu0 %v482
        %v1129 = vpop.f32.mrf.mxu0
        %v1130 = vadd.f32 %v1117, %v1129
        %v1131 = vpop.f32.mrf.mxu0
        %1132 = vdwg.mxu0
        %1133 = vmatpush.bf16.xpose.msra.mxu0 0
        %1134 = vmatpush.bf16.xpose.msra.mxu0 0
        %1135 = vmatpush.bf16.xpose.msra.mxu0 0
        %1136 = vmatpush.bf16.xpose.msra.mxu0 0
        %1137 = vmatpush.bf16.xpose.msra.mxu0 0
        %1138 = vmatpush.bf16.xpose.msra.mxu0 0
        %1139 = vmatpush.bf16.xpose.msra.mxu0 0
        %1140 = vmatpush.bf16.xpose.msra.mxu0 %v875
        %1141 = vmatmul.bf16.gmra.mxu0 %v483
        %v1142 = vpop.f32.mrf.mxu0
        %v1143 = vadd.f32 %v1130, %v1142
        %v1144 = vpop.f32.mrf.mxu0
        %1145 = vdwg.mxu0
        %1146 = vmatpush.bf16.xpose.msra.mxu0 0
        %1147 = vmatpush.bf16.xpose.msra.mxu0 0
        %1148 = vmatpush.bf16.xpose.msra.mxu0 0
        %1149 = vmatpush.bf16.xpose.msra.mxu0 0
        %1150 = vmatpush.bf16.xpose.msra.mxu0 0
        %1151 = vmatpush.bf16.xpose.msra.mxu0 0
        %1152 = vmatpush.bf16.xpose.msra.mxu0 0
        %1153 = vmatpush.bf16.xpose.msra.mxu0 %v876
        %1154 = vmatmul.bf16.gmra.mxu0 %v484
        %v1155 = vpop.f32.mrf.mxu0
        %v1156 = vadd.f32 %v1143, %v1155
        %v1157 = vpop.f32.mrf.mxu0
        %1158 = vdwg.mxu0
        %1159 = vmatpush.bf16.xpose.msra.mxu0 0
        %1160 = vmatpush.bf16.xpose.msra.mxu0 0
        %1161 = vmatpush.bf16.xpose.msra.mxu0 0
        %1162 = vmatpush.bf16.xpose.msra.mxu0 0
        %1163 = vmatpush.bf16.xpose.msra.mxu0 0
        %1164 = vmatpush.bf16.xpose.msra.mxu0 0
        %1165 = vmatpush.bf16.xpose.msra.mxu0 0
        %1166 = vmatpush.bf16.xpose.msra.mxu0 %v877
        %1167 = vmatmul.bf16.gmra.mxu0 %v485
        %v1168 = vpop.f32.mrf.mxu0
        %v1169 = vadd.f32 %v1156, %v1168
        %v1170 = vpop.f32.mrf.mxu0
        %1171 = vdwg.mxu0
        %1172 = vmatpush.bf16.xpose.msra.mxu0 0
        %1173 = vmatpush.bf16.xpose.msra.mxu0 0
        %1174 = vmatpush.bf16.xpose.msra.mxu0 0
        %1175 = vmatpush.bf16.xpose.msra.mxu0 0
        %1176 = vmatpush.bf16.xpose.msra.mxu0 0
        %1177 = vmatpush.bf16.xpose.msra.mxu0 0
        %1178 = vmatpush.bf16.xpose.msra.mxu0 0
        %1179 = vmatpush.bf16.xpose.msra.mxu0 %v878
        %1180 = vmatmul.bf16.gmra.mxu0 %v486
        %v1181 = vpop.f32.mrf.mxu0
        %v1182 = vadd.f32 %v1169, %v1181
        %v1183 = vpop.f32.mrf.mxu0
        %1184 = vdwg.mxu0
        %1185 = vmatpush.bf16.xpose.msra.mxu0 0
        %1186 = vmatpush.bf16.xpose.msra.mxu0 0
        %1187 = vmatpush.bf16.xpose.msra.mxu0 0
        %1188 = vmatpush.bf16.xpose.msra.mxu0 0
        %1189 = vmatpush.bf16.xpose.msra.mxu0 0
        %1190 = vmatpush.bf16.xpose.msra.mxu0 0
        %1191 = vmatpush.bf16.xpose.msra.mxu0 0
        %1192 = vmatpush.bf16.xpose.msra.mxu0 %v879
        %1193 = vmatmul.bf16.gmra.mxu0 %v487
        %v1194 = vpop.f32.mrf.mxu0
        %v1195 = vadd.f32 %v1182, %v1194
        %v1196 = vpop.f32.mrf.mxu0
        %1197 = vdwg.mxu0
        %1198 = vmatpush.bf16.xpose.msra.mxu0 0
        %1199 = vmatpush.bf16.xpose.msra.mxu0 0
        %1200 = vmatpush.bf16.xpose.msra.mxu0 0
        %1201 = vmatpush.bf16.xpose.msra.mxu0 0
        %1202 = vmatpush.bf16.xpose.msra.mxu0 0
        %1203 = vmatpush.bf16.xpose.msra.mxu0 0
        %1204 = vmatpush.bf16.xpose.msra.mxu0 0
        %1205 = vmatpush.bf16.xpose.msra.mxu0 %v880
        %1206 = vmatmul.bf16.gmra.mxu0 %v488
        %v1207 = vpop.f32.mrf.mxu0
        %v1208 = vadd.f32 %v1195, %v1207
        %v1209 = vpop.f32.mrf.mxu0
        %1210 = vdwg.mxu0
        %1211 = vmatpush.bf16.xpose.msra.mxu0 0
        %1212 = vmatpush.bf16.xpose.msra.mxu0 0
        %1213 = vmatpush.bf16.xpose.msra.mxu0 0
        %1214 = vmatpush.bf16.xpose.msra.mxu0 0
        %1215 = vmatpush.bf16.xpose.msra.mxu0 0
        %1216 = vmatpush.bf16.xpose.msra.mxu0 0
        %1217 = vmatpush.bf16.xpose.msra.mxu0 0
        %1218 = vmatpush.bf16.xpose.msra.mxu0 %v881
        %1219 = vmatmul.bf16.gmra.mxu0 %v489
        %v1220 = vpop.f32.mrf.mxu0
        %v1221 = vadd.f32 %v1208, %v1220
        %v1222 = vpop.f32.mrf.mxu0
        %1223 = vdwg.mxu0
        %1224 = vmatpush.bf16.xpose.msra.mxu0 0
        %1225 = vmatpush.bf16.xpose.msra.mxu0 0
        %1226 = vmatpush.bf16.xpose.msra.mxu0 0
        %1227 = vmatpush.bf16.xpose.msra.mxu0 0
        %1228 = vmatpush.bf16.xpose.msra.mxu0 0
        %1229 = vmatpush.bf16.xpose.msra.mxu0 0
        %1230 = vmatpush.bf16.xpose.msra.mxu0 0
        %1231 = vmatpush.bf16.xpose.msra.mxu0 %v882
        %1232 = vmatmul.bf16.gmra.mxu0 %v492
        %v1233 = vpop.f32.mrf.mxu0
        %v1234 = vadd.f32 %v1221, %v1233
        %v1235 = vpop.f32.mrf.mxu0
        %1236 = vdwg.mxu0
        %1237 = vmatpush.bf16.xpose.msra.mxu0 0
        %1238 = vmatpush.bf16.xpose.msra.mxu0 0
        %1239 = vmatpush.bf16.xpose.msra.mxu0 0
        %1240 = vmatpush.bf16.xpose.msra.mxu0 0
        %1241 = vmatpush.bf16.xpose.msra.mxu0 0
        %1242 = vmatpush.bf16.xpose.msra.mxu0 0
        %1243 = vmatpush.bf16.xpose.msra.mxu0 0
        %1244 = vmatpush.bf16.xpose.msra.mxu0 %v883
        %1245 = vmatmul.bf16.gmra.mxu0 %v493
        %v1246 = vpop.f32.mrf.mxu0
        %v1247 = vadd.f32 %v1234, %v1246
        %v1248 = vpop.f32.mrf.mxu0
        %1249 = vdwg.mxu0
        %1250 = vmatpush.bf16.xpose.msra.mxu0 0
        %1251 = vmatpush.bf16.xpose.msra.mxu0 0
        %1252 = vmatpush.bf16.xpose.msra.mxu0 0
        %1253 = vmatpush.bf16.xpose.msra.mxu0 0
        %1254 = vmatpush.bf16.xpose.msra.mxu0 0
        %1255 = vmatpush.bf16.xpose.msra.mxu0 0
        %1256 = vmatpush.bf16.xpose.msra.mxu0 0
        %1257 = vmatpush.bf16.xpose.msra.mxu0 %v884
        %1258 = vmatmul.bf16.gmra.mxu0 %v494
        %v1259 = vpop.f32.mrf.mxu0
        %v1260 = vadd.f32 %v1247, %v1259
        %v1261 = vpop.f32.mrf.mxu0
        %1262 = vdwg.mxu0
        %1263 = vmatpush.bf16.xpose.msra.mxu0 0
        %1264 = vmatpush.bf16.xpose.msra.mxu0 0
        %1265 = vmatpush.bf16.xpose.msra.mxu0 0
        %1266 = vmatpush.bf16.xpose.msra.mxu0 0
        %1267 = vmatpush.bf16.xpose.msra.mxu0 0
        %1268 = vmatpush.bf16.xpose.msra.mxu0 0
        %1269 = vmatpush.bf16.xpose.msra.mxu0 0
        %1270 = vmatpush.bf16.xpose.msra.mxu0 %v885
        %1271 = vmatmul.bf16.gmra.mxu0 %v495
        %v1272 = vpop.f32.mrf.mxu0
        %v1273 = vadd.f32 %v1260, %v1272
        %v1274 = vpop.f32.mrf.mxu0
        %1275 = vdwg.mxu0
        %1276 = vmatpush.bf16.xpose.msra.mxu0 0
        %1277 = vmatpush.bf16.xpose.msra.mxu0 0
        %1278 = vmatpush.bf16.xpose.msra.mxu0 0
        %1279 = vmatpush.bf16.xpose.msra.mxu0 0
        %1280 = vmatpush.bf16.xpose.msra.mxu0 0
        %1281 = vmatpush.bf16.xpose.msra.mxu0 0
        %1282 = vmatpush.bf16.xpose.msra.mxu0 0
        %1283 = vmatpush.bf16.xpose.msra.mxu0 %v886
        %1284 = vmatmul.bf16.gmra.mxu0 %v496
        %v1285 = vpop.f32.mrf.mxu0
        %v1286 = vadd.f32 %v1273, %v1285
        %v1287 = vpop.f32.mrf.mxu0
        %1288 = vdwg.mxu0
        %1289 = vmatpush.bf16.xpose.msra.mxu0 0
        %1290 = vmatpush.bf16.xpose.msra.mxu0 0
        %1291 = vmatpush.bf16.xpose.msra.mxu0 0
        %1292 = vmatpush.bf16.xpose.msra.mxu0 0
        %1293 = vmatpush.bf16.xpose.msra.mxu0 0
        %1294 = vmatpush.bf16.xpose.msra.mxu0 0
        %1295 = vmatpush.bf16.xpose.msra.mxu0 0
        %1296 = vmatpush.bf16.xpose.msra.mxu0 %v887
        %1297 = vmatmul.bf16.gmra.mxu0 %v497
        %v1298 = vpop.f32.mrf.mxu0
        %v1299 = vadd.f32 %v1286, %v1298
        %v1300 = vpop.f32.mrf.mxu0
        %1301 = vdwg.mxu0
        %1302 = vmatpush.bf16.xpose.msra.mxu0 0
        %1303 = vmatpush.bf16.xpose.msra.mxu0 0
        %1304 = vmatpush.bf16.xpose.msra.mxu0 0
        %1305 = vmatpush.bf16.xpose.msra.mxu0 0
        %1306 = vmatpush.bf16.xpose.msra.mxu0 0
        %1307 = vmatpush.bf16.xpose.msra.mxu0 0
        %1308 = vmatpush.bf16.xpose.msra.mxu0 0
        %1309 = vmatpush.bf16.xpose.msra.mxu0 %v888
        %1310 = vmatmul.bf16.gmra.mxu0 %v498
        %v1311 = vpop.f32.mrf.mxu0
        %v1312 = vadd.f32 %v1299, %v1311
        %v1313 = vpop.f32.mrf.mxu0
        %1314 = vdwg.mxu0
        %1315 = vmatpush.bf16.xpose.msra.mxu0 0
        %1316 = vmatpush.bf16.xpose.msra.mxu0 0
        %1317 = vmatpush.bf16.xpose.msra.mxu0 0
        %1318 = vmatpush.bf16.xpose.msra.mxu0 0
        %1319 = vmatpush.bf16.xpose.msra.mxu0 0
        %1320 = vmatpush.bf16.xpose.msra.mxu0 0
        %1321 = vmatpush.bf16.xpose.msra.mxu0 0
        %1322 = vmatpush.bf16.xpose.msra.mxu0 %v889
        %1323 = vmatmul.bf16.gmra.mxu0 %v499
        %v1324 = vpop.f32.mrf.mxu0
        %v1325 = vadd.f32 %v1312, %v1324
        %v1326 = vpop.f32.mrf.mxu0
        %1327 = vdwg.mxu0
        %1328 = vmatpush.bf16.xpose.msra.mxu0 0
        %1329 = vmatpush.bf16.xpose.msra.mxu0 0
        %1330 = vmatpush.bf16.xpose.msra.mxu0 0
        %1331 = vmatpush.bf16.xpose.msra.mxu0 0
        %1332 = vmatpush.bf16.xpose.msra.mxu0 0
        %1333 = vmatpush.bf16.xpose.msra.mxu0 0
        %1334 = vmatpush.bf16.xpose.msra.mxu0 0
        %1335 = vmatpush.bf16.xpose.msra.mxu0 %v890
        %1336 = vmatmul.bf16.gmra.mxu0 %v502
        %v1337 = vpop.f32.mrf.mxu0
        %v1338 = vadd.f32 %v1325, %v1337
        %v1339 = vpop.f32.mrf.mxu0
        %1340 = vdwg.mxu0
        %1341 = vmatpush.bf16.xpose.msra.mxu0 0
        %1342 = vmatpush.bf16.xpose.msra.mxu0 0
        %1343 = vmatpush.bf16.xpose.msra.mxu0 0
        %1344 = vmatpush.bf16.xpose.msra.mxu0 0
        %1345 = vmatpush.bf16.xpose.msra.mxu0 0
        %1346 = vmatpush.bf16.xpose.msra.mxu0 0
        %1347 = vmatpush.bf16.xpose.msra.mxu0 0
        %1348 = vmatpush.bf16.xpose.msra.mxu0 %v891
        %1349 = vmatmul.bf16.gmra.mxu0 %v503
        %v1350 = vpop.f32.mrf.mxu0
        %v1351 = vadd.f32 %v1338, %v1350
        %v1352 = vpop.f32.mrf.mxu0
        %1353 = vdwg.mxu0
        %1354 = vmatpush.bf16.xpose.msra.mxu0 0
        %1355 = vmatpush.bf16.xpose.msra.mxu0 0
        %1356 = vmatpush.bf16.xpose.msra.mxu0 0
        %1357 = vmatpush.bf16.xpose.msra.mxu0 0
        %1358 = vmatpush.bf16.xpose.msra.mxu0 0
        %1359 = vmatpush.bf16.xpose.msra.mxu0 0
        %1360 = vmatpush.bf16.xpose.msra.mxu0 0
        %1361 = vmatpush.bf16.xpose.msra.mxu0 %v892
        %1362 = vmatmul.bf16.gmra.mxu0 %v504
        %v1363 = vpop.f32.mrf.mxu0
        %v1364 = vadd.f32 %v1351, %v1363
        %v1365 = vpop.f32.mrf.mxu0
        %1366 = vdwg.mxu0
        %1367 = vmatpush.bf16.xpose.msra.mxu0 0
        %1368 = vmatpush.bf16.xpose.msra.mxu0 0
        %1369 = vmatpush.bf16.xpose.msra.mxu0 0
        %1370 = vmatpush.bf16.xpose.msra.mxu0 0
        %1371 = vmatpush.bf16.xpose.msra.mxu0 0
        %1372 = vmatpush.bf16.xpose.msra.mxu0 0
        %1373 = vmatpush.bf16.xpose.msra.mxu0 0
        %1374 = vmatpush.bf16.xpose.msra.mxu0 %v893
        %1375 = vmatmul.bf16.gmra.mxu0 %v505
        %v1376 = vpop.f32.mrf.mxu0
        %v1377 = vadd.f32 %v1364, %v1376
        %v1378 = vpop.f32.mrf.mxu0
        %1379 = vdwg.mxu0
        %1380 = vmatpush.bf16.xpose.msra.mxu0 0
        %1381 = vmatpush.bf16.xpose.msra.mxu0 0
        %1382 = vmatpush.bf16.xpose.msra.mxu0 0
        %1383 = vmatpush.bf16.xpose.msra.mxu0 0
        %1384 = vmatpush.bf16.xpose.msra.mxu0 0
        %1385 = vmatpush.bf16.xpose.msra.mxu0 0
        %1386 = vmatpush.bf16.xpose.msra.mxu0 0
        %1387 = vmatpush.bf16.xpose.msra.mxu0 %v894
        %1388 = vmatmul.bf16.gmra.mxu0 %v506
        %v1389 = vpop.f32.mrf.mxu0
        %v1390 = vadd.f32 %v1377, %v1389
        %v1391 = vpop.f32.mrf.mxu0
        %1392 = vdwg.mxu0
        %1393 = vmatpush.bf16.xpose.msra.mxu0 0
        %1394 = vmatpush.bf16.xpose.msra.mxu0 0
        %1395 = vmatpush.bf16.xpose.msra.mxu0 0
        %1396 = vmatpush.bf16.xpose.msra.mxu0 0
        %1397 = vmatpush.bf16.xpose.msra.mxu0 0
        %1398 = vmatpush.bf16.xpose.msra.mxu0 0
        %1399 = vmatpush.bf16.xpose.msra.mxu0 0
        %1400 = vmatpush.bf16.xpose.msra.mxu0 %v895
        %1401 = vmatmul.bf16.gmra.mxu0 %v507
        %v1402 = vpop.f32.mrf.mxu0
        %v1403 = vadd.f32 %v1390, %v1402
        %v1404 = vpop.f32.mrf.mxu0
        %1405 = vdwg.mxu0
        %1406 = vmatpush.bf16.xpose.msra.mxu0 0
        %1407 = vmatpush.bf16.xpose.msra.mxu0 0
        %1408 = vmatpush.bf16.xpose.msra.mxu0 0
        %1409 = vmatpush.bf16.xpose.msra.mxu0 0
        %1410 = vmatpush.bf16.xpose.msra.mxu0 0
        %1411 = vmatpush.bf16.xpose.msra.mxu0 0
        %1412 = vmatpush.bf16.xpose.msra.mxu0 0
        %1413 = vmatpush.bf16.xpose.msra.mxu0 %v896
        %1414 = vmatmul.bf16.gmra.mxu0 %v508
        %v1415 = vpop.f32.mrf.mxu0
        %v1416 = vadd.f32 %v1403, %v1415
        %v1417 = vpop.f32.mrf.mxu0
        %1418 = vdwg.mxu0
        %1419 = vmatpush.bf16.xpose.msra.mxu0 0
        %1420 = vmatpush.bf16.xpose.msra.mxu0 0
        %1421 = vmatpush.bf16.xpose.msra.mxu0 0
        %1422 = vmatpush.bf16.xpose.msra.mxu0 0
        %1423 = vmatpush.bf16.xpose.msra.mxu0 0
        %1424 = vmatpush.bf16.xpose.msra.mxu0 0
        %1425 = vmatpush.bf16.xpose.msra.mxu0 0
        %1426 = vmatpush.bf16.xpose.msra.mxu0 %v897
        %1427 = vmatmul.bf16.gmra.mxu0 %v509
        %v1428 = vpop.f32.mrf.mxu0
        %v1429 = vadd.f32 %v1416, %v1428
        %v1430 = vpop.f32.mrf.mxu0
        %1431 = vdwg.mxu0
        %1432 = vmatpush.bf16.xpose.msra.mxu0 0
        %1433 = vmatpush.bf16.xpose.msra.mxu0 0
        %1434 = vmatpush.bf16.xpose.msra.mxu0 0
        %1435 = vmatpush.bf16.xpose.msra.mxu0 0
        %1436 = vmatpush.bf16.xpose.msra.mxu0 0
        %1437 = vmatpush.bf16.xpose.msra.mxu0 0
        %1438 = vmatpush.bf16.xpose.msra.mxu0 0
        %1439 = vmatpush.bf16.xpose.msra.mxu0 %v898
        %1440 = vmatmul.bf16.gmra.mxu0 %v512
        %v1441 = vpop.f32.mrf.mxu0
        %v1442 = vadd.f32 %v1429, %v1441
        %v1443 = vpop.f32.mrf.mxu0
        %1444 = vdwg.mxu0
        %1445 = vmatpush.bf16.xpose.msra.mxu0 0
        %1446 = vmatpush.bf16.xpose.msra.mxu0 0
        %1447 = vmatpush.bf16.xpose.msra.mxu0 0
        %1448 = vmatpush.bf16.xpose.msra.mxu0 0
        %1449 = vmatpush.bf16.xpose.msra.mxu0 0
        %1450 = vmatpush.bf16.xpose.msra.mxu0 0
        %1451 = vmatpush.bf16.xpose.msra.mxu0 0
        %1452 = vmatpush.bf16.xpose.msra.mxu0 %v899
        %1453 = vmatmul.bf16.gmra.mxu0 %v513
        %v1454 = vpop.f32.mrf.mxu0
        %v1455 = vadd.f32 %v1442, %v1454
        %v1456 = vpop.f32.mrf.mxu0
        %1457 = vdwg.mxu0
        %1458 = vmatpush.bf16.xpose.msra.mxu0 0
        %1459 = vmatpush.bf16.xpose.msra.mxu0 0
        %1460 = vmatpush.bf16.xpose.msra.mxu0 0
        %1461 = vmatpush.bf16.xpose.msra.mxu0 0
        %1462 = vmatpush.bf16.xpose.msra.mxu0 0
        %1463 = vmatpush.bf16.xpose.msra.mxu0 0
        %1464 = vmatpush.bf16.xpose.msra.mxu0 0
        %1465 = vmatpush.bf16.xpose.msra.mxu0 %v900
        %1466 = vmatmul.bf16.gmra.mxu0 %v514
        %v1467 = vpop.f32.mrf.mxu0
        %v1468 = vadd.f32 %v1455, %v1467
        %v1469 = vpop.f32.mrf.mxu0
        %1470 = vdwg.mxu0
        %1471 = vmatpush.bf16.xpose.msra.mxu0 0
        %1472 = vmatpush.bf16.xpose.msra.mxu0 0
        %1473 = vmatpush.bf16.xpose.msra.mxu0 0
        %1474 = vmatpush.bf16.xpose.msra.mxu0 0
        %1475 = vmatpush.bf16.xpose.msra.mxu0 0
        %1476 = vmatpush.bf16.xpose.msra.mxu0 0
        %1477 = vmatpush.bf16.xpose.msra.mxu0 0
        %1478 = vmatpush.bf16.xpose.msra.mxu0 %v901
        %1479 = vmatmul.bf16.gmra.mxu0 %v515
        %v1480 = vpop.f32.mrf.mxu0
        %v1481 = vadd.f32 %v1468, %v1480
        %v1482 = vpop.f32.mrf.mxu0
        %1483 = vdwg.mxu0
        %1484 = vmatpush.bf16.xpose.msra.mxu0 0
        %1485 = vmatpush.bf16.xpose.msra.mxu0 0
        %1486 = vmatpush.bf16.xpose.msra.mxu0 0
        %1487 = vmatpush.bf16.xpose.msra.mxu0 0
        %1488 = vmatpush.bf16.xpose.msra.mxu0 0
        %1489 = vmatpush.bf16.xpose.msra.mxu0 0
        %1490 = vmatpush.bf16.xpose.msra.mxu0 0
        %1491 = vmatpush.bf16.xpose.msra.mxu0 %v902
        %1492 = vmatmul.bf16.gmra.mxu0 %v516
        %v1493 = vpop.f32.mrf.mxu0
        %v1494 = vadd.f32 %v1481, %v1493
        %v1495 = vpop.f32.mrf.mxu0
        %1496 = vdwg.mxu0
        %1497 = vmatpush.bf16.xpose.msra.mxu0 0
        %1498 = vmatpush.bf16.xpose.msra.mxu0 0
        %1499 = vmatpush.bf16.xpose.msra.mxu0 0
        %1500 = vmatpush.bf16.xpose.msra.mxu0 0
        %1501 = vmatpush.bf16.xpose.msra.mxu0 0
        %1502 = vmatpush.bf16.xpose.msra.mxu0 0
        %1503 = vmatpush.bf16.xpose.msra.mxu0 0
        %1504 = vmatpush.bf16.xpose.msra.mxu0 %v903
        %1505 = vmatmul.bf16.gmra.mxu0 %v517
        %v1506 = vpop.f32.mrf.mxu0
        %v1507 = vadd.f32 %v1494, %v1506
        %v1508 = vpop.f32.mrf.mxu0
        %1509 = vdwg.mxu0
        %1510 = vmatpush.bf16.xpose.msra.mxu0 0
        %1511 = vmatpush.bf16.xpose.msra.mxu0 0
        %1512 = vmatpush.bf16.xpose.msra.mxu0 0
        %1513 = vmatpush.bf16.xpose.msra.mxu0 0
        %1514 = vmatpush.bf16.xpose.msra.mxu0 0
        %1515 = vmatpush.bf16.xpose.msra.mxu0 0
        %1516 = vmatpush.bf16.xpose.msra.mxu0 0
        %1517 = vmatpush.bf16.xpose.msra.mxu0 %v904
        %1518 = vmatmul.bf16.gmra.mxu0 %v518
        %v1519 = vpop.f32.mrf.mxu0
        %v1520 = vadd.f32 %v1507, %v1519
        %v1521 = vpop.f32.mrf.mxu0
        %1522 = vdwg.mxu0
        %1523 = vmatpush.bf16.xpose.msra.mxu0 0
        %1524 = vmatpush.bf16.xpose.msra.mxu0 0
        %1525 = vmatpush.bf16.xpose.msra.mxu0 0
        %1526 = vmatpush.bf16.xpose.msra.mxu0 0
        %1527 = vmatpush.bf16.xpose.msra.mxu0 0
        %1528 = vmatpush.bf16.xpose.msra.mxu0 0
        %1529 = vmatpush.bf16.xpose.msra.mxu0 0
        %1530 = vmatpush.bf16.xpose.msra.mxu0 %v905
        %1531 = vmatmul.bf16.gmra.mxu0 %v519
        %v1532 = vpop.f32.mrf.mxu0
        %v1533 = vadd.f32 %v1520, %v1532
        %v1534 = vpop.f32.mrf.mxu0
        %1535 = vdwg.mxu0
        %1536 = vmatpush.bf16.xpose.msra.mxu0 0
        %1537 = vmatpush.bf16.xpose.msra.mxu0 0
        %1538 = vmatpush.bf16.xpose.msra.mxu0 0
        %1539 = vmatpush.bf16.xpose.msra.mxu0 0
        %1540 = vmatpush.bf16.xpose.msra.mxu0 0
        %1541 = vmatpush.bf16.xpose.msra.mxu0 0
        %1542 = vmatpush.bf16.xpose.msra.mxu0 0
        %1543 = vmatpush.bf16.xpose.msra.mxu0 %v906
        %1544 = vmatmul.bf16.gmra.mxu0 %v522
        %v1545 = vpop.f32.mrf.mxu0
        %v1546 = vadd.f32 %v1533, %v1545
        %v1547 = vpop.f32.mrf.mxu0
        %1548 = vdwg.mxu0
        %1549 = vmatpush.bf16.xpose.msra.mxu0 0
        %1550 = vmatpush.bf16.xpose.msra.mxu0 0
        %1551 = vmatpush.bf16.xpose.msra.mxu0 0
        %1552 = vmatpush.bf16.xpose.msra.mxu0 0
        %1553 = vmatpush.bf16.xpose.msra.mxu0 0
        %1554 = vmatpush.bf16.xpose.msra.mxu0 0
        %1555 = vmatpush.bf16.xpose.msra.mxu0 0
        %1556 = vmatpush.bf16.xpose.msra.mxu0 %v907
        %1557 = vmatmul.bf16.gmra.mxu0 %v523
        %v1558 = vpop.f32.mrf.mxu0
        %v1559 = vadd.f32 %v1546, %v1558
        %v1560 = vpop.f32.mrf.mxu0
        %1561 = vdwg.mxu0
        %1562 = vmatpush.bf16.xpose.msra.mxu0 0
        %1563 = vmatpush.bf16.xpose.msra.mxu0 0
        %1564 = vmatpush.bf16.xpose.msra.mxu0 0
        %1565 = vmatpush.bf16.xpose.msra.mxu0 0
        %1566 = vmatpush.bf16.xpose.msra.mxu0 0
        %1567 = vmatpush.bf16.xpose.msra.mxu0 0
        %1568 = vmatpush.bf16.xpose.msra.mxu0 0
        %1569 = vmatpush.bf16.xpose.msra.mxu0 %v908
        %1570 = vmatmul.bf16.gmra.mxu0 %v524
        %v1571 = vpop.f32.mrf.mxu0
        %v1572 = vadd.f32 %v1559, %v1571
        %v1573 = vpop.f32.mrf.mxu0
        %1574 = vdwg.mxu0
        %1575 = vmatpush.bf16.xpose.msra.mxu0 0
        %1576 = vmatpush.bf16.xpose.msra.mxu0 0
        %1577 = vmatpush.bf16.xpose.msra.mxu0 0
        %1578 = vmatpush.bf16.xpose.msra.mxu0 0
        %1579 = vmatpush.bf16.xpose.msra.mxu0 0
        %1580 = vmatpush.bf16.xpose.msra.mxu0 0
        %1581 = vmatpush.bf16.xpose.msra.mxu0 0
        %1582 = vmatpush.bf16.xpose.msra.mxu0 %v909
        %1583 = vmatmul.bf16.gmra.mxu0 %v525
        %v1584 = vpop.f32.mrf.mxu0
        %v1585 = vadd.f32 %v1572, %v1584
        %v1586 = vpop.f32.mrf.mxu0
        %1587 = vdwg.mxu0
        %1588 = vmatpush.bf16.xpose.msra.mxu0 0
        %1589 = vmatpush.bf16.xpose.msra.mxu0 0
        %1590 = vmatpush.bf16.xpose.msra.mxu0 0
        %1591 = vmatpush.bf16.xpose.msra.mxu0 0
        %1592 = vmatpush.bf16.xpose.msra.mxu0 0
        %1593 = vmatpush.bf16.xpose.msra.mxu0 0
        %1594 = vmatpush.bf16.xpose.msra.mxu0 0
        %1595 = vmatpush.bf16.xpose.msra.mxu0 %v910
        %1596 = vmatmul.bf16.gmra.mxu0 %v526
        %v1597 = vpop.f32.mrf.mxu0
        %v1598 = vadd.f32 %v1585, %v1597
        %v1599 = vpop.f32.mrf.mxu0
        %1600 = vdwg.mxu0
        %1601 = vmatpush.bf16.xpose.msra.mxu0 0
        %1602 = vmatpush.bf16.xpose.msra.mxu0 0
        %1603 = vmatpush.bf16.xpose.msra.mxu0 0
        %1604 = vmatpush.bf16.xpose.msra.mxu0 0
        %1605 = vmatpush.bf16.xpose.msra.mxu0 0
        %1606 = vmatpush.bf16.xpose.msra.mxu0 0
        %1607 = vmatpush.bf16.xpose.msra.mxu0 0
        %1608 = vmatpush.bf16.xpose.msra.mxu0 %v911
        %1609 = vmatmul.bf16.gmra.mxu0 %v527
        %v1610 = vpop.f32.mrf.mxu0
        %v1611 = vadd.f32 %v1598, %v1610
        %v1612 = vpop.f32.mrf.mxu0
        %1613 = vdwg.mxu0
        %1614 = vmatpush.bf16.xpose.msra.mxu0 0
        %1615 = vmatpush.bf16.xpose.msra.mxu0 0
        %1616 = vmatpush.bf16.xpose.msra.mxu0 0
        %1617 = vmatpush.bf16.xpose.msra.mxu0 0
        %1618 = vmatpush.bf16.xpose.msra.mxu0 0
        %1619 = vmatpush.bf16.xpose.msra.mxu0 0
        %1620 = vmatpush.bf16.xpose.msra.mxu0 0
        %1621 = vmatpush.bf16.xpose.msra.mxu0 %v912
        %1622 = vmatmul.bf16.gmra.mxu0 %v528
        %v1623 = vpop.f32.mrf.mxu0
        %v1624 = vadd.f32 %v1611, %v1623
        %v1625 = vpop.f32.mrf.mxu0
        %1626 = vdwg.mxu0
        %1627 = vmatpush.bf16.xpose.msra.mxu0 0
        %1628 = vmatpush.bf16.xpose.msra.mxu0 0
        %1629 = vmatpush.bf16.xpose.msra.mxu0 0
        %1630 = vmatpush.bf16.xpose.msra.mxu0 0
        %1631 = vmatpush.bf16.xpose.msra.mxu0 0
        %1632 = vmatpush.bf16.xpose.msra.mxu0 0
        %1633 = vmatpush.bf16.xpose.msra.mxu0 0
        %1634 = vmatpush.bf16.xpose.msra.mxu0 %v913
        %1635 = vmatmul.bf16.gmra.mxu0 %v529
        %v1636 = vpop.f32.mrf.mxu0
        %v1637 = vadd.f32 %v1624, %v1636
        %v1638 = vpop.f32.mrf.mxu0
        %1639 = vdwg.mxu0
        %1640 = vmatpush.bf16.xpose.msra.mxu0 0
        %1641 = vmatpush.bf16.xpose.msra.mxu0 0
        %1642 = vmatpush.bf16.xpose.msra.mxu0 0
        %1643 = vmatpush.bf16.xpose.msra.mxu0 0
        %1644 = vmatpush.bf16.xpose.msra.mxu0 0
        %1645 = vmatpush.bf16.xpose.msra.mxu0 0
        %1646 = vmatpush.bf16.xpose.msra.mxu0 0
        %1647 = vmatpush.bf16.xpose.msra.mxu0 %v914
        %1648 = vmatmul.bf16.gmra.mxu0 %v532
        %v1649 = vpop.f32.mrf.mxu0
        %v1650 = vadd.f32 %v1637, %v1649
        %v1651 = vpop.f32.mrf.mxu0
        %1652 = vdwg.mxu0
        %1653 = vmatpush.bf16.xpose.msra.mxu0 0
        %1654 = vmatpush.bf16.xpose.msra.mxu0 0
        %1655 = vmatpush.bf16.xpose.msra.mxu0 0
        %1656 = vmatpush.bf16.xpose.msra.mxu0 0
        %1657 = vmatpush.bf16.xpose.msra.mxu0 0
        %1658 = vmatpush.bf16.xpose.msra.mxu0 0
        %1659 = vmatpush.bf16.xpose.msra.mxu0 0
        %1660 = vmatpush.bf16.xpose.msra.mxu0 %v915
        %1661 = vmatmul.bf16.gmra.mxu0 %v533
        %v1662 = vpop.f32.mrf.mxu0
        %v1663 = vadd.f32 %v1650, %v1662
        %v1664 = vpop.f32.mrf.mxu0
        %1665 = vdwg.mxu0
        %1666 = vmatpush.bf16.xpose.msra.mxu0 0
        %1667 = vmatpush.bf16.xpose.msra.mxu0 0
        %1668 = vmatpush.bf16.xpose.msra.mxu0 0
        %1669 = vmatpush.bf16.xpose.msra.mxu0 0
        %1670 = vmatpush.bf16.xpose.msra.mxu0 0
        %1671 = vmatpush.bf16.xpose.msra.mxu0 0
        %1672 = vmatpush.bf16.xpose.msra.mxu0 0
        %1673 = vmatpush.bf16.xpose.msra.mxu0 %v916
        %1674 = vmatmul.bf16.gmra.mxu0 %v534
        %v1675 = vpop.f32.mrf.mxu0
        %v1676 = vadd.f32 %v1663, %v1675
        %v1677 = vpop.f32.mrf.mxu0
        %1678 = vdwg.mxu0
        %1679 = vmatpush.bf16.xpose.msra.mxu0 0
        %1680 = vmatpush.bf16.xpose.msra.mxu0 0
        %1681 = vmatpush.bf16.xpose.msra.mxu0 0
        %1682 = vmatpush.bf16.xpose.msra.mxu0 0
        %1683 = vmatpush.bf16.xpose.msra.mxu0 0
        %1684 = vmatpush.bf16.xpose.msra.mxu0 0
        %1685 = vmatpush.bf16.xpose.msra.mxu0 0
        %1686 = vmatpush.bf16.xpose.msra.mxu0 %v917
        %1687 = vmatmul.bf16.gmra.mxu0 %v535
        %v1688 = vpop.f32.mrf.mxu0
        %v1689 = vadd.f32 %v1676, %v1688
        %v1690 = vpop.f32.mrf.mxu0
        %1691 = vdwg.mxu0
        %1692 = vmatpush.bf16.xpose.msra.mxu0 0
        %1693 = vmatpush.bf16.xpose.msra.mxu0 0
        %1694 = vmatpush.bf16.xpose.msra.mxu0 0
        %1695 = vmatpush.bf16.xpose.msra.mxu0 0
        %1696 = vmatpush.bf16.xpose.msra.mxu0 0
        %1697 = vmatpush.bf16.xpose.msra.mxu0 0
        %1698 = vmatpush.bf16.xpose.msra.mxu0 0
        %1699 = vmatpush.bf16.xpose.msra.mxu0 %v918
        %1700 = vmatmul.bf16.gmra.mxu0 %v536
        %v1701 = vpop.f32.mrf.mxu0
        %v1702 = vadd.f32 %v1689, %v1701
        %v1703 = vpop.f32.mrf.mxu0
        %1704 = vdwg.mxu0
        %1705 = vmatpush.bf16.xpose.msra.mxu0 0
        %1706 = vmatpush.bf16.xpose.msra.mxu0 0
        %1707 = vmatpush.bf16.xpose.msra.mxu0 0
        %1708 = vmatpush.bf16.xpose.msra.mxu0 0
        %1709 = vmatpush.bf16.xpose.msra.mxu0 0
        %1710 = vmatpush.bf16.xpose.msra.mxu0 0
        %1711 = vmatpush.bf16.xpose.msra.mxu0 0
        %1712 = vmatpush.bf16.xpose.msra.mxu0 %v919
        %1713 = vmatmul.bf16.gmra.mxu0 %v537
        %v1714 = vpop.f32.mrf.mxu0
        %v1715 = vadd.f32 %v1702, %v1714
        %v1716 = vpop.f32.mrf.mxu0
        %1717 = vdwg.mxu0
        %1718 = vmatpush.bf16.xpose.msra.mxu0 0
        %1719 = vmatpush.bf16.xpose.msra.mxu0 0
        %1720 = vmatpush.bf16.xpose.msra.mxu0 0
        %1721 = vmatpush.bf16.xpose.msra.mxu0 0
        %1722 = vmatpush.bf16.xpose.msra.mxu0 0
        %1723 = vmatpush.bf16.xpose.msra.mxu0 0
        %1724 = vmatpush.bf16.xpose.msra.mxu0 0
        %1725 = vmatpush.bf16.xpose.msra.mxu0 %v920
        %1726 = vmatmul.bf16.gmra.mxu0 %v538
        %v1727 = vpop.f32.mrf.mxu0
        %v1728 = vadd.f32 %v1715, %v1727
        %v1729 = vpop.f32.mrf.mxu0
        %1730 = vdwg.mxu0
        %1731 = vmatpush.bf16.xpose.msra.mxu0 0
        %1732 = vmatpush.bf16.xpose.msra.mxu0 0
        %1733 = vmatpush.bf16.xpose.msra.mxu0 0
        %1734 = vmatpush.bf16.xpose.msra.mxu0 0
        %1735 = vmatpush.bf16.xpose.msra.mxu0 0
        %1736 = vmatpush.bf16.xpose.msra.mxu0 0
        %1737 = vmatpush.bf16.xpose.msra.mxu0 0
        %1738 = vmatpush.bf16.xpose.msra.mxu0 %v921
        %1739 = vmatmul.bf16.gmra.mxu0 %v539
        %v1740 = vpop.f32.mrf.mxu0
        %v1741 = vadd.f32 %v1728, %v1740
        %v1742 = vpop.f32.mrf.mxu0
        %1743 = vdwg.mxu0
        %1744 = vmatpush.bf16.xpose.msra.mxu0 0
        %1745 = vmatpush.bf16.xpose.msra.mxu0 0
        %1746 = vmatpush.bf16.xpose.msra.mxu0 0
        %1747 = vmatpush.bf16.xpose.msra.mxu0 0
        %1748 = vmatpush.bf16.xpose.msra.mxu0 0
        %1749 = vmatpush.bf16.xpose.msra.mxu0 0
        %1750 = vmatpush.bf16.xpose.msra.mxu0 0
        %1751 = vmatpush.bf16.xpose.msra.mxu0 %v922
        %1752 = vmatmul.bf16.gmra.mxu0 %v542
        %v1753 = vpop.f32.mrf.mxu0
        %v1754 = vadd.f32 %v1741, %v1753
        %v1755 = vpop.f32.mrf.mxu0
        %1756 = vdwg.mxu0
        %1757 = vmatpush.bf16.xpose.msra.mxu0 0
        %1758 = vmatpush.bf16.xpose.msra.mxu0 0
        %1759 = vmatpush.bf16.xpose.msra.mxu0 0
        %1760 = vmatpush.bf16.xpose.msra.mxu0 0
        %1761 = vmatpush.bf16.xpose.msra.mxu0 0
        %1762 = vmatpush.bf16.xpose.msra.mxu0 0
        %1763 = vmatpush.bf16.xpose.msra.mxu0 0
        %1764 = vmatpush.bf16.xpose.msra.mxu0 %v923
        %1765 = vmatmul.bf16.gmra.mxu0 %v543
        %v1766 = vpop.f32.mrf.mxu0
        %v1767 = vadd.f32 %v1754, %v1766
        %v1768 = vpop.f32.mrf.mxu0
        %1769 = vdwg.mxu0
        %1770 = vmatpush.bf16.xpose.msra.mxu0 0
        %1771 = vmatpush.bf16.xpose.msra.mxu0 0
        %1772 = vmatpush.bf16.xpose.msra.mxu0 0
        %1773 = vmatpush.bf16.xpose.msra.mxu0 0
        %1774 = vmatpush.bf16.xpose.msra.mxu0 0
        %1775 = vmatpush.bf16.xpose.msra.mxu0 0
        %1776 = vmatpush.bf16.xpose.msra.mxu0 0
        %1777 = vmatpush.bf16.xpose.msra.mxu0 %v924
        %1778 = vmatmul.bf16.gmra.mxu0 %v544
        %v1779 = vpop.f32.mrf.mxu0
        %v1780 = vadd.f32 %v1767, %v1779
        %v1781 = vpop.f32.mrf.mxu0
        %1782 = vdwg.mxu0
        %1783 = vmatpush.bf16.xpose.msra.mxu0 0
        %1784 = vmatpush.bf16.xpose.msra.mxu0 0
        %1785 = vmatpush.bf16.xpose.msra.mxu0 0
        %1786 = vmatpush.bf16.xpose.msra.mxu0 0
        %1787 = vmatpush.bf16.xpose.msra.mxu0 0
        %1788 = vmatpush.bf16.xpose.msra.mxu0 0
        %1789 = vmatpush.bf16.xpose.msra.mxu0 0
        %1790 = vmatpush.bf16.xpose.msra.mxu0 %v925
        %1791 = vmatmul.bf16.gmra.mxu0 %v545
        %v1792 = vpop.f32.mrf.mxu0
        %v1793 = vadd.f32 %v1780, %v1792
        %v1794 = vpop.f32.mrf.mxu0
        %1795 = vdwg.mxu0
        %1796 = vmatpush.bf16.xpose.msra.mxu0 0
        %1797 = vmatpush.bf16.xpose.msra.mxu0 0
        %1798 = vmatpush.bf16.xpose.msra.mxu0 0
        %1799 = vmatpush.bf16.xpose.msra.mxu0 0
        %1800 = vmatpush.bf16.xpose.msra.mxu0 0
        %1801 = vmatpush.bf16.xpose.msra.mxu0 0
        %1802 = vmatpush.bf16.xpose.msra.mxu0 0
        %1803 = vmatpush.bf16.xpose.msra.mxu0 %v926
        %1804 = vmatmul.bf16.gmra.mxu0 %v546
        %v1805 = vpop.f32.mrf.mxu0
        %v1806 = vadd.f32 %v1793, %v1805
        %v1807 = vpop.f32.mrf.mxu0
        %1808 = vdwg.mxu0
        %1809 = vmatpush.bf16.xpose.msra.mxu0 0
        %1810 = vmatpush.bf16.xpose.msra.mxu0 0
        %1811 = vmatpush.bf16.xpose.msra.mxu0 0
        %1812 = vmatpush.bf16.xpose.msra.mxu0 0
        %1813 = vmatpush.bf16.xpose.msra.mxu0 0
        %1814 = vmatpush.bf16.xpose.msra.mxu0 0
        %1815 = vmatpush.bf16.xpose.msra.mxu0 0
        %1816 = vmatpush.bf16.xpose.msra.mxu0 %v927
        %1817 = vmatmul.bf16.gmra.mxu0 %v547
        %v1818 = vpop.f32.mrf.mxu0
        %v1819 = vadd.f32 %v1806, %v1818
        %v1820 = vpop.f32.mrf.mxu0
        %1821 = vdwg.mxu0
        %1822 = vmatpush.bf16.xpose.msra.mxu0 0
        %1823 = vmatpush.bf16.xpose.msra.mxu0 0
        %1824 = vmatpush.bf16.xpose.msra.mxu0 0
        %1825 = vmatpush.bf16.xpose.msra.mxu0 0
        %1826 = vmatpush.bf16.xpose.msra.mxu0 0
        %1827 = vmatpush.bf16.xpose.msra.mxu0 0
        %1828 = vmatpush.bf16.xpose.msra.mxu0 0
        %1829 = vmatpush.bf16.xpose.msra.mxu0 %v928
        %1830 = vmatmul.bf16.gmra.mxu0 %v548
        %v1831 = vpop.f32.mrf.mxu0
        %v1832 = vadd.f32 %v1819, %v1831
        %v1833 = vpop.f32.mrf.mxu0
        %1834 = vdwg.mxu0
        %1835 = vmatpush.bf16.xpose.msra.mxu0 0
        %1836 = vmatpush.bf16.xpose.msra.mxu0 0
        %1837 = vmatpush.bf16.xpose.msra.mxu0 0
        %1838 = vmatpush.bf16.xpose.msra.mxu0 0
        %1839 = vmatpush.bf16.xpose.msra.mxu0 0
        %1840 = vmatpush.bf16.xpose.msra.mxu0 0
        %1841 = vmatpush.bf16.xpose.msra.mxu0 0
        %1842 = vmatpush.bf16.xpose.msra.mxu0 %v929
        %1843 = vmatmul.bf16.gmra.mxu0 %v549
        %v1844 = vpop.f32.mrf.mxu0
        %v1845 = vadd.f32 %v1832, %v1844
        %v1846 = vpop.f32.mrf.mxu0
        %1847 = vdwg.mxu0
        %1848 = vmatpush.bf16.xpose.msra.mxu0 0
        %1849 = vmatpush.bf16.xpose.msra.mxu0 0
        %1850 = vmatpush.bf16.xpose.msra.mxu0 0
        %1851 = vmatpush.bf16.xpose.msra.mxu0 0
        %1852 = vmatpush.bf16.xpose.msra.mxu0 0
        %1853 = vmatpush.bf16.xpose.msra.mxu0 0
        %1854 = vmatpush.bf16.xpose.msra.mxu0 0
        %1855 = vmatpush.bf16.xpose.msra.mxu0 %v930
        %1856 = vmatmul.bf16.gmra.mxu0 %v552
        %v1857 = vpop.f32.mrf.mxu0
        %v1858 = vadd.f32 %v1845, %v1857
        %v1859 = vpop.f32.mrf.mxu0
        %1860 = vdwg.mxu0
        %1861 = vmatpush.bf16.xpose.msra.mxu0 0
        %1862 = vmatpush.bf16.xpose.msra.mxu0 0
        %1863 = vmatpush.bf16.xpose.msra.mxu0 0
        %1864 = vmatpush.bf16.xpose.msra.mxu0 0
        %1865 = vmatpush.bf16.xpose.msra.mxu0 0
        %1866 = vmatpush.bf16.xpose.msra.mxu0 0
        %1867 = vmatpush.bf16.xpose.msra.mxu0 0
        %1868 = vmatpush.bf16.xpose.msra.mxu0 %v931
        %1869 = vmatmul.bf16.gmra.mxu0 %v553
        %v1870 = vpop.f32.mrf.mxu0
        %v1871 = vadd.f32 %v1858, %v1870
        %v1872 = vpop.f32.mrf.mxu0
        %1873 = vdwg.mxu0
        %1874 = vmatpush.bf16.xpose.msra.mxu0 0
        %1875 = vmatpush.bf16.xpose.msra.mxu0 0
        %1876 = vmatpush.bf16.xpose.msra.mxu0 0
        %1877 = vmatpush.bf16.xpose.msra.mxu0 0
        %1878 = vmatpush.bf16.xpose.msra.mxu0 0
        %1879 = vmatpush.bf16.xpose.msra.mxu0 0
        %1880 = vmatpush.bf16.xpose.msra.mxu0 0
        %1881 = vmatpush.bf16.xpose.msra.mxu0 %v932
        %1882 = vmatmul.bf16.gmra.mxu0 %v554
        %v1883 = vpop.f32.mrf.mxu0
        %v1884 = vadd.f32 %v1871, %v1883
        %v1885 = vpop.f32.mrf.mxu0
        %1886 = vdwg.mxu0
        %1887 = vmatpush.bf16.xpose.msra.mxu0 0
        %1888 = vmatpush.bf16.xpose.msra.mxu0 0
        %1889 = vmatpush.bf16.xpose.msra.mxu0 0
        %1890 = vmatpush.bf16.xpose.msra.mxu0 0
        %1891 = vmatpush.bf16.xpose.msra.mxu0 0
        %1892 = vmatpush.bf16.xpose.msra.mxu0 0
        %1893 = vmatpush.bf16.xpose.msra.mxu0 0
        %1894 = vmatpush.bf16.xpose.msra.mxu0 %v933
        %1895 = vmatmul.bf16.gmra.mxu0 %v555
        %v1896 = vpop.f32.mrf.mxu0
        %v1897 = vadd.f32 %v1884, %v1896
        %v1898 = vpop.f32.mrf.mxu0
        %1899 = vdwg.mxu0
        %1900 = vmatpush.bf16.xpose.msra.mxu0 0
        %1901 = vmatpush.bf16.xpose.msra.mxu0 0
        %1902 = vmatpush.bf16.xpose.msra.mxu0 0
        %1903 = vmatpush.bf16.xpose.msra.mxu0 0
        %1904 = vmatpush.bf16.xpose.msra.mxu0 0
        %1905 = vmatpush.bf16.xpose.msra.mxu0 0
        %1906 = vmatpush.bf16.xpose.msra.mxu0 0
        %1907 = vmatpush.bf16.xpose.msra.mxu0 %v934
        %1908 = vmatmul.bf16.gmra.mxu0 %v556
        %v1909 = vpop.f32.mrf.mxu0
        %v1910 = vadd.f32 %v1897, %v1909
        %v1911 = vpop.f32.mrf.mxu0
        %1912 = vdwg.mxu0
        %1913 = vmatpush.bf16.xpose.msra.mxu0 0
        %1914 = vmatpush.bf16.xpose.msra.mxu0 0
        %1915 = vmatpush.bf16.xpose.msra.mxu0 0
        %1916 = vmatpush.bf16.xpose.msra.mxu0 0
        %1917 = vmatpush.bf16.xpose.msra.mxu0 0
        %1918 = vmatpush.bf16.xpose.msra.mxu0 0
        %1919 = vmatpush.bf16.xpose.msra.mxu0 0
        %1920 = vmatpush.bf16.xpose.msra.mxu0 %v935
        %1921 = vmatmul.bf16.gmra.mxu0 %v557
        %v1922 = vpop.f32.mrf.mxu0
        %v1923 = vadd.f32 %v1910, %v1922
        %v1924 = vpop.f32.mrf.mxu0
        %1925 = vdwg.mxu0
        %1926 = vmatpush.bf16.xpose.msra.mxu0 0
        %1927 = vmatpush.bf16.xpose.msra.mxu0 0
        %1928 = vmatpush.bf16.xpose.msra.mxu0 0
        %1929 = vmatpush.bf16.xpose.msra.mxu0 0
        %1930 = vmatpush.bf16.xpose.msra.mxu0 0
        %1931 = vmatpush.bf16.xpose.msra.mxu0 0
        %1932 = vmatpush.bf16.xpose.msra.mxu0 0
        %1933 = vmatpush.bf16.xpose.msra.mxu0 %v936
        %1934 = vmatmul.bf16.gmra.mxu0 %v558
        %v1935 = vpop.f32.mrf.mxu0
        %v1936 = vadd.f32 %v1923, %v1935
        %v1937 = vpop.f32.mrf.mxu0
        %1938 = vdwg.mxu0
        %1939 = vmatpush.bf16.xpose.msra.mxu0 0
        %1940 = vmatpush.bf16.xpose.msra.mxu0 0
        %1941 = vmatpush.bf16.xpose.msra.mxu0 0
        %1942 = vmatpush.bf16.xpose.msra.mxu0 0
        %1943 = vmatpush.bf16.xpose.msra.mxu0 0
        %1944 = vmatpush.bf16.xpose.msra.mxu0 0
        %1945 = vmatpush.bf16.xpose.msra.mxu0 0
        %1946 = vmatpush.bf16.xpose.msra.mxu0 %v937
        %1947 = vmatmul.bf16.gmra.mxu0 %v559
        %v1948 = vpop.f32.mrf.mxu0
        %v1949 = vadd.f32 %v1936, %v1948
        %v1950 = vpop.f32.mrf.mxu0
        %1951 = vdwg.mxu0
        %1952 = vmatpush.bf16.xpose.msra.mxu0 0
        %1953 = vmatpush.bf16.xpose.msra.mxu0 0
        %1954 = vmatpush.bf16.xpose.msra.mxu0 0
        %1955 = vmatpush.bf16.xpose.msra.mxu0 0
        %1956 = vmatpush.bf16.xpose.msra.mxu0 0
        %1957 = vmatpush.bf16.xpose.msra.mxu0 0
        %1958 = vmatpush.bf16.xpose.msra.mxu0 0
        %1959 = vmatpush.bf16.xpose.msra.mxu0 %v938
        %1960 = vmatmul.bf16.gmra.mxu0 %v562
        %v1961 = vpop.f32.mrf.mxu0
        %v1962 = vadd.f32 %v1949, %v1961
        %v1963 = vpop.f32.mrf.mxu0
        %1964 = vdwg.mxu0
        %1965 = vmatpush.bf16.xpose.msra.mxu0 0
        %1966 = vmatpush.bf16.xpose.msra.mxu0 0
        %1967 = vmatpush.bf16.xpose.msra.mxu0 0
        %1968 = vmatpush.bf16.xpose.msra.mxu0 0
        %1969 = vmatpush.bf16.xpose.msra.mxu0 0
        %1970 = vmatpush.bf16.xpose.msra.mxu0 0
        %1971 = vmatpush.bf16.xpose.msra.mxu0 0
        %1972 = vmatpush.bf16.xpose.msra.mxu0 %v939
        %1973 = vmatmul.bf16.gmra.mxu0 %v563
        %v1974 = vpop.f32.mrf.mxu0
        %v1975 = vadd.f32 %v1962, %v1974
        %v1976 = vpop.f32.mrf.mxu0
        %1977 = vdwg.mxu0
        %1978 = vmatpush.bf16.xpose.msra.mxu0 0
        %1979 = vmatpush.bf16.xpose.msra.mxu0 0
        %1980 = vmatpush.bf16.xpose.msra.mxu0 0
        %1981 = vmatpush.bf16.xpose.msra.mxu0 0
        %1982 = vmatpush.bf16.xpose.msra.mxu0 0
        %1983 = vmatpush.bf16.xpose.msra.mxu0 0
        %1984 = vmatpush.bf16.xpose.msra.mxu0 0
        %1985 = vmatpush.bf16.xpose.msra.mxu0 %v940
        %1986 = vmatmul.bf16.gmra.mxu0 %v564
        %v1987 = vpop.f32.mrf.mxu0
        %v1988 = vadd.f32 %v1975, %v1987
        %v1989 = vpop.f32.mrf.mxu0
        %1990 = vdwg.mxu0
        %v1991 = vadd.f32 %v383, %v1988
        %vm1992 = vcmask 123904
        %1993 = vst.msk [vmem:[#allocation2] sm:$0x3] %vm1992, %v1991
        %p1994 = scmp.eq.s32.totalorder %s18, 3
        // Predicated region
        $region59: #{net_forward.3} parent=49 // pred_check
          %p1995 = pneg %p1994
        $region60: #{net_forward.3} parent=49 // pred_check_branch
          %1997 = sbr.rel (%p1995) target = $region62
        $region61: #{net_forward.3} parent=49 // pred_region
          %v1998 = vld [vmem:[#allocation2] sm:$0x3]
          %1999 = vst.msk [vmem:[%s375] sm:$0x3] %vm1992, %v1998
        $region62: #{net_forward.3} parent=49 // pred_fallthru
          _
        %p2000 = scmp.lt.s32.totalorder %s17, 1
        %s2001 = scalar_select %p2000, %s17, 1
        %s2002 = smul.addr %s2001, 2
        %s2003 = scalar_lea.vmem %s2, %s2002
        // Predicated region
        $region63: #{net_forward.3} parent=49 // pred_check
          %p2004 = pneg %p103
        $region64: #{net_forward.3} parent=49 // pred_check_branch
          %2006 = sbr.rel (%p2004) target = $region66
        $region65: #{net_forward.3} parent=49 // pred_region
          _
        $region66: #{net_forward.3} parent=49 // pred_fallthru
          _
      $region50: #{net_forward.3} parent=5 // pred_fallthru
        _
      %p2007 = scmp.le.s32.totalorder 2, %s8
      // Predicated region
      $region67: #{net_forward.3} parent=5 // pred_check
        %p2008 = pneg %p2007
      $region68: #{net_forward.3} parent=5 // pred_check_branch
        %2010 = sbr.rel (%p2008) target = $region70
      $region69: #{net_forward.3} parent=5 // pred_region
        %s2011 = ssub.s32 %s8, 2
        // Predicated region
        $region71: #{net_forward.3} parent=69 // pred_check
          %p2012 = pneg %p109
        $region72: #{net_forward.3} parent=69 // pred_check_branch
          %2014 = sbr.rel (%p2012) target = $region74
        $region73: #{net_forward.3} parent=69 // pred_region
          %p2015 = scmp.lt.s32.totalorder %s19, 1
          %s2016 = scalar_select %p2015, %s19, 1
          %s2017 = smul.addr %s2016, 2
          %s2018 = scalar_lea.vmem %s2, %s2017
        $region74: #{net_forward.3} parent=69 // pred_fallthru
          _
      $region70: #{net_forward.3} parent=5 // pred_fallthru
        _
    $region6: #{net_forward.3} parent=1 // loop_footer
      %s12 = sadd.s32 1, %s8
    $region7: #{net_forward.3} parent=1 // loop_footer_branch
      %7 = sbr.rel target = $region3
    $region8: #{net_forward.3} parent=1 // loop_exit
      _

// kernel: net_forward.2
$region0: #{net_forward.2}
  #allocation0 [shape = 'u32[]', space=smem, size = 0x4, offset = 0x4, fixed_abs, tag = 'smem constant byte address 0x4 - core index']
  #allocation1 [shape = 'u32[72,128]{1,0:T(1,128)}', space=vmem, size = 0x9000, scoped, tag = 'internal scratch']
  %s0 = inlined_call_operand.vmem [shape: bf16[2,50,2304], index: 0, kind: input, shape index: {}]
  %s1 = inlined_call_operand.vmem [shape: bf16[300,50], index: 1, kind: input, shape index: {}]
  %s2 = inlined_call_operand.vmem [shape: f32[300,1], index: 2, kind: input, shape index: {}]
  %s3 = inlined_call_operand.vmem [shape: bf16[1152,128], index: 3, kind: input, shape index: {}]
  %s4 = inlined_call_operand.vmem [shape: bf16[2,300,256], index: 4, kind: output, shape index: {}]
  %s5 = sld [smem:[#allocation0]]
  $region112: #{net_forward.2} parent=0
    _
  %s7 = ssub.s32 1, %s5
  %s8 = scalar_select 0, %s7, %s5
  $region1: #{net_forward.2} parent=0
    #allocation2 [shape = 'u8[258048]{0}', space=vmem, size = 0x3f000, scoped, tag = 'input window, operand 0']
    #allocation3 [shape = 'u8[155648]{0}', space=vmem, size = 0x26000, scoped, tag = 'output window, operand 0']
    loop: start=0, step=1, limit=6
    $region2: #{net_forward.2} parent=1 // loop_pre_header
      _
    $region3: #{net_forward.2} parent=1 // loop_header
      %s10 = sphi 0, %s14
      %p11 = scmp.ge.s32.totalorder %s10, 6
      %s17 = sphi 0, %s29
      %s18 = sphi 0, %s25
      %s19 = sphi 0, %s17
      %s20 = sphi 0, %s18
      %s21 = sphi 0, %s19
      %s22 = sphi 0, %s20
      %s34 = sphi 0, %s36
      %s37 = sphi 0, %s34
      %s38 = sphi 0, %s37
      %s54 = sphi 0, %s38
      %s58 = sphi 0, %s58
      %s60 = sphi 0, %s58
      %s61 = sphi 0, %s60
      %s75 = sphi 0, %s61
      %s79 = sphi 0, %s79
      %s81 = sphi 0, %s79
      %s82 = sphi 0, %s81
      %s96 = sphi 0, %s82
      %s100 = sphi 0, %s100
      %s102 = sphi 0, %s100
      %s103 = sphi 0, %s102
      %s117 = sphi 0, %s103
      %s125 = sphi 0, %s127
      %s128 = sphi 0, %s125
      %s129 = sphi 0, %s128
      %s145 = sphi 0, %s129
    $region4: #{net_forward.2} parent=1 // loop_header_branch
      %13 = sbr.rel (%p11) target = $region8
    $region5: #{net_forward.2} parent=1 // loop_body
      %s15 = ssub.s32 %s10, 1
      %s16 = ssub.s32 %s10, 2
      %s23 = sadd.s32 1, %s18
      %p24 = scmp.ge.s32.totalorder %s23, 2
      %s25 = scalar_select %p24, 0, %s23
      %s26 = sadd.s32 1, %s17
      %s27 = scalar_select %p24, %s26, %s17
      %p28 = scmp.ge.s32.totalorder %s27, 2
      %s29 = scalar_select %p28, 0, %s27
      %s30 = ssub.s32 %s17, %s29
      %s31 = ssub.s32 %s18, %s25
      %s32 = sor.u32 %s30, %s31
      %p33 = scmp.eq.s32.totalorder %s32, 0
      %s35 = sadd.s32 %s34, 1
      %s36 = scalar_select %p33, %s34, %s35
      %p39 = pneg %p33
      %p40 = scmp.eq.s32.totalorder %s10, 3
      %p41 = por %p39, %p40
      %p42 = scmp.ne.s32.totalorder %s34, %s37
      %p43 = scmp.eq.s32.totalorder %s10, 0
      %p44 = por %p42, %p43
      %p45 = scmp.ne.s32.totalorder %s34, %s37
      %p46 = scmp.eq.s32.totalorder %s15, 3
      %p47 = por %p45, %p46
      %p48 = scmp.ne.s32.totalorder %s37, %s38
      %p49 = scmp.eq.s32.totalorder %s15, 0
      %p50 = por %p48, %p49
      %p51 = scmp.ne.s32.totalorder %s37, %s38
      %p52 = scmp.eq.s32.totalorder %s16, 3
      %p53 = por %p51, %p52
      %p55 = scmp.ne.s32.totalorder %s38, %s54
      %p56 = scmp.eq.s32.totalorder %s16, 0
      %p57 = por %p55, %p56
      %s59 = sadd.s32 %s58, 1
      %p62 = scmp.eq.s32.totalorder %s10, 3
      %p63 = scmp.ne.s32.totalorder %s58, %s60
      %p64 = scmp.eq.s32.totalorder %s10, 0
      %p65 = por %p63, %p64
      %p66 = scmp.ne.s32.totalorder %s58, %s60
      %p67 = scmp.eq.s32.totalorder %s15, 3
      %p68 = por %p66, %p67
      %p69 = scmp.ne.s32.totalorder %s60, %s61
      %p70 = scmp.eq.s32.totalorder %s15, 0
      %p71 = por %p69, %p70
      %p72 = scmp.ne.s32.totalorder %s60, %s61
      %p73 = scmp.eq.s32.totalorder %s16, 3
      %p74 = por %p72, %p73
      %p76 = scmp.ne.s32.totalorder %s61, %s75
      %p77 = scmp.eq.s32.totalorder %s16, 0
      %p78 = por %p76, %p77
      %s80 = sadd.s32 %s79, 1
      %p83 = scmp.eq.s32.totalorder %s10, 3
      %p84 = scmp.ne.s32.totalorder %s79, %s81
      %p85 = scmp.eq.s32.totalorder %s10, 0
      %p86 = por %p84, %p85
      %p87 = scmp.ne.s32.totalorder %s79, %s81
      %p88 = scmp.eq.s32.totalorder %s15, 3
      %p89 = por %p87, %p88
      %p90 = scmp.ne.s32.totalorder %s81, %s82
      %p91 = scmp.eq.s32.totalorder %s15, 0
      %p92 = por %p90, %p91
      %p93 = scmp.ne.s32.totalorder %s81, %s82
      %p94 = scmp.eq.s32.totalorder %s16, 3
      %p95 = por %p93, %p94
      %p97 = scmp.ne.s32.totalorder %s82, %s96
      %p98 = scmp.eq.s32.totalorder %s16, 0
      %p99 = por %p97, %p98
      %s101 = sadd.s32 %s100, 1
      %p104 = scmp.eq.s32.totalorder %s10, 3
      %p105 = scmp.ne.s32.totalorder %s100, %s102
      %p106 = scmp.eq.s32.totalorder %s10, 0
      %p107 = por %p105, %p106
      %p108 = scmp.ne.s32.totalorder %s100, %s102
      %p109 = scmp.eq.s32.totalorder %s15, 3
      %p110 = por %p108, %p109
      %p111 = scmp.ne.s32.totalorder %s102, %s103
      %p112 = scmp.eq.s32.totalorder %s15, 0
      %p113 = por %p111, %p112
      %p114 = scmp.ne.s32.totalorder %s102, %s103
      %p115 = scmp.eq.s32.totalorder %s16, 3
      %p116 = por %p114, %p115
      %p118 = scmp.ne.s32.totalorder %s103, %s117
      %p119 = scmp.eq.s32.totalorder %s16, 0
      %p120 = por %p118, %p119
      %s121 = ssub.s32 %s17, %s29
      %s122 = ssub.s32 %s18, %s25
      %s123 = sor.u32 %s121, %s122
      %p124 = scmp.eq.s32.totalorder %s123, 0
      %s126 = sadd.s32 %s125, 1
      %s127 = scalar_select %p124, %s125, %s126
      %p130 = pneg %p124
      %p131 = scmp.eq.s32.totalorder %s10, 3
      %p132 = por %p130, %p131
      %p133 = scmp.ne.s32.totalorder %s125, %s128
      %p134 = scmp.eq.s32.totalorder %s10, 0
      %p135 = por %p133, %p134
      %p136 = scmp.ne.s32.totalorder %s125, %s128
      %p137 = scmp.eq.s32.totalorder %s15, 3
      %p138 = por %p136, %p137
      %p139 = scmp.ne.s32.totalorder %s128, %s129
      %p140 = scmp.eq.s32.totalorder %s15, 0
      %p141 = por %p139, %p140
      %p142 = scmp.ne.s32.totalorder %s128, %s129
      %p143 = scmp.eq.s32.totalorder %s16, 3
      %p144 = por %p142, %p143
      %p146 = scmp.ne.s32.totalorder %s129, %s145
      %p147 = scmp.eq.s32.totalorder %s16, 0
      %p148 = por %p146, %p147
      %p149 = scmp.le.s32.totalorder 1, %s10
      %p150 = scmp.lt.s32.totalorder %s10, 5
      %p151 = pnand %p149, %p150
      %p152 = pneg %p151
      // Predicated region
      $region9: #{net_forward.2} parent=5 // pred_check
        _
      $region10: #{net_forward.2} parent=5 // pred_check_branch
        %154 = sbr.rel (%p151) target = $region12
      $region11: #{net_forward.2} parent=5 // pred_region
        %s155 = ssub.s32 %s10, 1
        // Predicated region
        $region13: #{net_forward.2} parent=11 // pred_check
          %p156 = pneg %p71
        $region14: #{net_forward.2} parent=11 // pred_check_branch
          %158 = sbr.rel (%p156) target = $region16
        $region15: #{net_forward.2} parent=11 // pred_region
          _
        $region16: #{net_forward.2} parent=11 // pred_fallthru
          _
        // Predicated region
        $region17: #{net_forward.2} parent=11 // pred_check
          %p159 = pneg %p92
        $region18: #{net_forward.2} parent=11 // pred_check_branch
          %161 = sbr.rel (%p159) target = $region20
        $region19: #{net_forward.2} parent=11 // pred_region
          _
        $region20: #{net_forward.2} parent=11 // pred_fallthru
          _
        // Predicated region
        $region21: #{net_forward.2} parent=11 // pred_check
          %p162 = pneg %p113
        $region22: #{net_forward.2} parent=11 // pred_check_branch
          %164 = sbr.rel (%p162) target = $region24
        $region23: #{net_forward.2} parent=11 // pred_region
          _
        $region24: #{net_forward.2} parent=11 // pred_fallthru
          _
      $region12: #{net_forward.2} parent=5 // pred_fallthru
        _
      %p165 = scmp.lt.s32.totalorder %s10, 4
      // Predicated region
      $region25: #{net_forward.2} parent=5 // pred_check
        %p166 = pneg %p165
      $region26: #{net_forward.2} parent=5 // pred_check_branch
        %168 = sbr.rel (%p166) target = $region28
      $region27: #{net_forward.2} parent=5 // pred_region
        // Predicated region
        $region29: #{net_forward.2} parent=27 // pred_check
          %p169 = pneg %p44
        $region30: #{net_forward.2} parent=27 // pred_check_branch
          %171 = sbr.rel (%p169) target = $region32
        $region31: #{net_forward.2} parent=27 // pred_region
          %s172 = sand.u32 %s34, 1
          %s173 = sand.u32 %s34, 1
          %s174 = smul.addr %s173, 252
          %s175 = scalar_lea.vmem [#allocation2], %s174
          %s176 = smul.u32 9, %s18
          %s177 = smul.addr %s17, 126
          %s178 = sadd.s32 %s176, %s177
          %s179 = smul.addr %s178, 4
          %s180 = scalar_lea.vmem %s0, %s179
          // Predicated region
          $region33: #{net_forward.2} parent=31 // pred_check
            _
          $region34: #{net_forward.2} parent=31 // pred_check_branch
            %182 = sbr.rel (0) target = $region36
          $region35: #{net_forward.2} parent=31 // pred_region
            // Predicated region
            $region37: #{net_forward.2} parent=35 // pred_check
              _
            $region38: #{net_forward.2} parent=35 // pred_check_branch
              %184 = sbr.rel (0) target = $region40
            $region39: #{net_forward.2} parent=35 // pred_region
              %s185 = scalar_lea.vmem %s180, 32
              %s186 = scalar_lea.vmem %s175, 32 [#allocation2]
              loop: start=0, step=1, limit=1
              $region41: #{net_forward.2} parent=39 // loop_pre_header
                _
              $region42: #{net_forward.2} parent=39 // loop_header
                %s188 = sphi 0, %s192
                %p189 = scmp.ge.s32.totalorder %s188, 1
                %s193 = sphi %s180, %s180
                %s194 = sphi %s175, %s175
              $region43: #{net_forward.2} parent=39 // loop_header_branch
                %191 = sbr.rel (%p189) target = $region47
              $region44: #{net_forward.2} parent=39 // loop_body
                %v195 = vld [vmem:[%s193] sm:$0xff]
                %196 = vst [vmem:[%s194] sm:$0xff] %v195
                %v197 = vld [vmem:[%s193 + $0x8] sm:$0xff]
                %198 = vst [vmem:[%s194 + $0x8] sm:$0xff] %v197
                %v199 = vld [vmem:[%s193 + $0x10] sm:$0xff]
                %200 = vst [vmem:[%s194 + $0x10] sm:$0xff] %v199
                %v201 = vld [vmem:[%s193 + $0x18] sm:$0xff]
                %202 = vst [vmem:[%s194 + $0x18] sm:$0xff] %v201
                %v203 = vld [vmem:[%s193 + $0x48] sm:$0xff]
                %204 = vst [vmem:[%s194 + $0x24] sm:$0xff] %v203
                %v205 = vld [vmem:[%s193 + $0x50] sm:$0xff]
                %206 = vst [vmem:[%s194 + $0x2c] sm:$0xff] %v205
                %v207 = vld [vmem:[%s193 + $0x58] sm:$0xff]
                %208 = vst [vmem:[%s194 + $0x34] sm:$0xff] %v207
                %v209 = vld [vmem:[%s193 + $0x60] sm:$0xff]
                %210 = vst [vmem:[%s194 + $0x3c] sm:$0xff] %v209
                %v211 = vld [vmem:[%s193 + $0x90] sm:$0xff]
                %212 = vst [vmem:[%s194 + $0x48] sm:$0xff] %v211
                %v213 = vld [vmem:[%s193 + $0x98] sm:$0xff]
                %214 = vst [vmem:[%s194 + $0x50] sm:$0xff] %v213
                %v215 = vld [vmem:[%s193 + $0xa0] sm:$0xff]
                %216 = vst [vmem:[%s194 + $0x58] sm:$0xff] %v215
                %v217 = vld [vmem:[%s193 + $0xa8] sm:$0xff]
                %218 = vst [vmem:[%s194 + $0x60] sm:$0xff] %v217
                %v219 = vld [vmem:[%s193 + $0xd8] sm:$0xff]
                %220 = vst [vmem:[%s194 + $0x6c] sm:$0xff] %v219
                %v221 = vld [vmem:[%s193 + $0xe0] sm:$0xff]
                %222 = vst [vmem:[%s194 + $0x74] sm:$0xff] %v221
                %v223 = vld [vmem:[%s193 + $0xe8] sm:$0xff]
                %224 = vst [vmem:[%s194 + $0x7c] sm:$0xff] %v223
                %v225 = vld [vmem:[%s193 + $0xf0] sm:$0xff]
                %226 = vst [vmem:[%s194 + $0x84] sm:$0xff] %v225
                %v227 = vld [vmem:[%s193 + $0x120] sm:$0xff]
                %228 = vst [vmem:[%s194 + $0x90] sm:$0xff] %v227
                %v229 = vld [vmem:[%s193 + $0x128] sm:$0xff]
                %230 = vst [vmem:[%s194 + $0x98] sm:$0xff] %v229
                %v231 = vld [vmem:[%s193 + $0x130] sm:$0xff]
                %232 = vst [vmem:[%s194 + $0xa0] sm:$0xff] %v231
                %v233 = vld [vmem:[%s193 + $0x138] sm:$0xff]
                %234 = vst [vmem:[%s194 + $0xa8] sm:$0xff] %v233
                %v235 = vld [vmem:[%s193 + $0x168] sm:$0xff]
                %236 = vst [vmem:[%s194 + $0xb4] sm:$0xff] %v235
                %v237 = vld [vmem:[%s193 + $0x170] sm:$0xff]
                %238 = vst [vmem:[%s194 + $0xbc] sm:$0xff] %v237
                %v239 = vld [vmem:[%s193 + $0x178] sm:$0xff]
                %240 = vst [vmem:[%s194 + $0xc4] sm:$0xff] %v239
                %v241 = vld [vmem:[%s193 + $0x180] sm:$0xff]
                %242 = vst [vmem:[%s194 + $0xcc] sm:$0xff] %v241
                %v243 = vld [vmem:[%s193 + $0x1b0] sm:$0xff]
                %244 = vst [vmem:[%s194 + $0xd8] sm:$0xff] %v243
                %v245 = vld [vmem:[%s193 + $0x1b8] sm:$0xff]
                %246 = vst [vmem:[%s194 + $0xe0] sm:$0xff] %v245
                %v247 = vld [vmem:[%s193 + $0x1c0] sm:$0xff]
                %248 = vst [vmem:[%s194 + $0xe8] sm:$0xff] %v247
                %v249 = vld [vmem:[%s193 + $0x1c8] sm:$0xff]
                %250 = vst [vmem:[%s194 + $0xf0] sm:$0xff] %v249
              $region45: #{net_forward.2} parent=39 // loop_footer
                %s192 = sadd.s32 1, %s188
              $region46: #{net_forward.2} parent=39 // loop_footer_branch
                %187 = sbr.rel target = $region42
              $region47: #{net_forward.2} parent=39 // loop_exit
                _
              %s252 = ssub.s32 16, 1
              loop: start=0, step=1, limit=1
              $region48: #{net_forward.2} parent=39 // loop_pre_header
                _
              $region49: #{net_forward.2} parent=39 // loop_header
                %s254 = sphi 0, %s258
                %p255 = scmp.ge.s32.totalorder %s254, 1
                %s259 = sphi %s185, %s185
                %s260 = sphi %s186, %s186
              $region50: #{net_forward.2} parent=39 // loop_header_branch
                %257 = sbr.rel (%p255) target = $region54
              $region51: #{net_forward.2} parent=39 // loop_body
                %v261 = vld [vmem:[%s259] sm:%s252]
                %262 = vst [vmem:[%s260] sm:%s252] %v261
                %v263 = vld [vmem:[%s259 + $0x48] sm:%s252]
                %264 = vst [vmem:[%s260 + $0x24] sm:%s252] %v263
                %v265 = vld [vmem:[%s259 + $0x90] sm:%s252]
                %266 = vst [vmem:[%s260 + $0x48] sm:%s252] %v265
                %v267 = vld [vmem:[%s259 + $0xd8] sm:%s252]
                %268 = vst [vmem:[%s260 + $0x6c] sm:%s252] %v267
                %v269 = vld [vmem:[%s259 + $0x120] sm:%s252]
                %270 = vst [vmem:[%s260 + $0x90] sm:%s252] %v269
                %v271 = vld [vmem:[%s259 + $0x168] sm:%s252]
                %272 = vst [vmem:[%s260 + $0xb4] sm:%s252] %v271
                %v273 = vld [vmem:[%s259 + $0x1b0] sm:%s252]
                %274 = vst [vmem:[%s260 + $0xd8] sm:%s252] %v273
              $region52: #{net_forward.2} parent=39 // loop_footer
                %s258 = sadd.s32 1, %s254
              $region53: #{net_forward.2} parent=39 // loop_footer_branch
                %253 = sbr.rel target = $region49
              $region54: #{net_forward.2} parent=39 // loop_exit
                _
            $region40: #{net_forward.2} parent=35 // pred_fallthru
              _
          $region36: #{net_forward.2} parent=31 // pred_fallthru
            _
          %275 = vnop
        $region32: #{net_forward.2} parent=27 // pred_fallthru
          _
      $region28: #{net_forward.2} parent=5 // pred_fallthru
        _
      %p276 = scmp.le.s32.totalorder 1, %s10
      %p277 = scmp.lt.s32.totalorder %s10, 5
      %p278 = pnand %p276, %p277
      %p279 = pneg %p278
      // Predicated region
      $region55: #{net_forward.2} parent=5 // pred_check
        _
      $region56: #{net_forward.2} parent=5 // pred_check_branch
        %281 = sbr.rel (%p278) target = $region58
      $region57: #{net_forward.2} parent=5 // pred_region
        %s282 = ssub.s32 %s10, 1
        %s283 = sand.u32 %s37, 1
        %s284 = sand.u32 %s37, 1
        %s285 = smul.addr %s284, 252
        %s286 = scalar_lea.vmem [#allocation2], %s285
        // Predicated region
        $region59: #{net_forward.2} parent=57 // pred_check
          %p287 = pneg %p50
        $region60: #{net_forward.2} parent=57 // pred_check_branch
          %289 = sbr.rel (%p287) target = $region62
        $region61: #{net_forward.2} parent=57 // pred_region
          _
        $region62: #{net_forward.2} parent=57 // pred_fallthru
          _
        %s290 = sand.u32 %s37, 1
        %s291 = sand.u32 %s37, 1
        %s292 = smul.addr %s291, 252
        %s293 = scalar_lea.vmem [#allocation2], %s292
        %p294 = pneg %p50
        %p295 = pneg %p47
        %p296 = pneg %p71
        %p297 = pneg %p68
        %p298 = pneg %p92
        %p299 = pneg %p89
        %p300 = pneg %p113
        %p301 = pneg %p110
        %p302 = pneg %p141
        %p303 = pneg %p138
        %s304 = sand.u32 %s128, 1
        %s305 = sand.u32 %s128, 1
        %s306 = smul.addr %s305, 152
        %s307 = scalar_lea.vmem [#allocation3], %s306
        %s308 = smul.u32 9, %s20
        %v310 = vld [vmem:[%s1] sm:$0xf]
        %v311 = vld [vmem:[%s1 + $0x4] sm:$0xf]
        %v312 = vld [vmem:[%s1 + $0x8] sm:$0xf]
        %v313 = vld [vmem:[%s1 + $0xc] sm:$0xf]
        %v314 = vld [vmem:[%s1 + $0x10] sm:$0xf]
        %v315 = vld [vmem:[%s1 + $0x14] sm:$0xf]
        %v316 = vld [vmem:[%s1 + $0x18] sm:$0xf]
        %v317 = vld [vmem:[%s1 + $0x1c] sm:$0xf]
        %v318 = vld [vmem:[%s1 + $0x20] sm:$0xf]
        %v319 = vld [vmem:[%s1 + $0x24] sm:$0xf]
        %v320 = vld [vmem:[%s1 + $0x28] sm:$0xf]
        %v321 = vld [vmem:[%s1 + $0x2c] sm:$0xf]
        %v322 = vld [vmem:[%s1 + $0x30] sm:$0xf]
        %v323 = vld [vmem:[%s1 + $0x34] sm:$0xf]
        %v324 = vld [vmem:[%s1 + $0x38] sm:$0xf]
        %v325 = vld [vmem:[%s1 + $0x3c] sm:$0xf]
        %v326 = vld [vmem:[%s1 + $0x40] sm:$0xf]
        %v327 = vld [vmem:[%s1 + $0x44] sm:$0xf]
        %v328 = vld [vmem:[%s1 + $0x48] sm:$0xf]
        %v329 = vld [vmem:[%s1 + $0x4c] sm:$0xf]
        %v330 = vld [vmem:[%s1 + $0x50] sm:$0xf]
        %v331 = vld [vmem:[%s1 + $0x54] sm:$0xf]
        %v332 = vld [vmem:[%s1 + $0x58] sm:$0xf]
        %v333 = vld [vmem:[%s1 + $0x5c] sm:$0xf]
        %v334 = vld [vmem:[%s1 + $0x60] sm:$0xf]
        %v335 = vld [vmem:[%s1 + $0x64] sm:$0xf]
        %v336 = vld [vmem:[%s1 + $0x68] sm:$0xf]
        %v337 = vld [vmem:[%s1 + $0x6c] sm:$0xf]
        %v338 = vld [vmem:[%s1 + $0x70] sm:$0xf]
        %v339 = vld [vmem:[%s1 + $0x74] sm:$0xf]
        %v340 = vld [vmem:[%s1 + $0x78] sm:$0xf]
        %v341 = vld [vmem:[%s1 + $0x7c] sm:$0xf]
        %v342 = vld [vmem:[%s1 + $0x80] sm:$0xf]
        %v343 = vld [vmem:[%s1 + $0x84] sm:$0xf]
        %v344 = vld [vmem:[%s1 + $0x88] sm:$0xf]
        %v345 = vld [vmem:[%s1 + $0x8c] sm:$0xf]
        %v346 = vld [vmem:[%s1 + $0x90] sm:$0xf]
        %v347 = vld [vmem:[%s1 + $0x94] sm:$0x3]
        %v348 = vld [vmem:[%s286] sm:$0xff]
        %v349 = vld [vmem:[%s286 + $0x8] sm:$0xff]
        %v350 = vld [vmem:[%s286 + $0x10] sm:$0xff]
        %v351 = vld [vmem:[%s286 + $0x18] sm:$0xff]
        %v352 = vld [vmem:[%s286 + $0x20] sm:$0xf]
        %v353 = vld [vmem:[%s286 + $0x24] sm:$0xff]
        %v354 = vld [vmem:[%s286 + $0x2c] sm:$0xff]
        %v355 = vld [vmem:[%s286 + $0x34] sm:$0xff]
        %v356 = vld [vmem:[%s286 + $0x3c] sm:$0xff]
        %v357 = vld [vmem:[%s286 + $0x44] sm:$0xf]
        %v358 = vld [vmem:[%s286 + $0x48] sm:$0xff]
        %v359 = vld [vmem:[%s286 + $0x50] sm:$0xff]
        %v360 = vld [vmem:[%s286 + $0x58] sm:$0xff]
        %v361 = vld [vmem:[%s286 + $0x60] sm:$0xff]
        %v362 = vld [vmem:[%s286 + $0x68] sm:$0xf]
        %v363 = vld [vmem:[%s286 + $0x6c] sm:$0xff]
        %v364 = vld [vmem:[%s286 + $0x74] sm:$0xff]
        %v365 = vld [vmem:[%s286 + $0x7c] sm:$0xff]
        %v366 = vld [vmem:[%s286 + $0x84] sm:$0xff]
        %v367 = vld [vmem:[%s286 + $0x8c] sm:$0xf]
        %v368 = vld [vmem:[%s286 + $0x90] sm:$0xff]
        %v369 = vld [vmem:[%s286 + $0x98] sm:$0xff]
        %v370 = vld [vmem:[%s286 + $0xa0] sm:$0xff]
        %v371 = vld [vmem:[%s286 + $0xa8] sm:$0xff]
        %v372 = vld [vmem:[%s286 + $0xb0] sm:$0xf]
        %v373 = vld [vmem:[%s286 + $0xb4] sm:$0xff]
        %v374 = vld [vmem:[%s286 + $0xbc] sm:$0xff]
        %v375 = vld [vmem:[%s286 + $0xc4] sm:$0xff]
        %v376 = vld [vmem:[%s286 + $0xcc] sm:$0xff]
        %v377 = vld [vmem:[%s286 + $0xd4] sm:$0xf]
        %v378 = vld [vmem:[%s286 + $0xd8] sm:$0x11]
        %v379 = vld [vmem:[%s286 + $0xe0] sm:$0x11]
        %v380 = vld [vmem:[%s286 + $0xe8] sm:$0x11]
        %v381 = vld [vmem:[%s286 + $0xf0] sm:$0x11]
        %v382 = vld [vmem:[%s286 + $0xf8] sm:$0x1]
        %v383 = vld [vmem:[%s2] sm:$0xff]
        %v384 = vld [vmem:[%s2 + $0x8] sm:$0xff]
        %v385 = vld [vmem:[%s2 + $0x10] sm:$0xff]
        %v386 = vld [vmem:[%s2 + $0x18] sm:$0xff]
        %v387 = vld [vmem:[%s2 + $0x20] sm:$0xff]
        %v388 = vld [vmem:[%s2 + $0x28] sm:$0xff]
        %v389 = vld [vmem:[%s2 + $0x30] sm:$0xff]
        %v390 = vld [vmem:[%s2 + $0x38] sm:$0xff]
        %v391 = vld [vmem:[%s2 + $0x40] sm:$0xff]
        %v392 = vld [vmem:[%s2 + $0x48] sm:$0xff]
        %v393 = vld [vmem:[%s2 + $0x50] sm:$0xff]
        %v394 = vld [vmem:[%s2 + $0x58] sm:$0xff]
        %v395 = vld [vmem:[%s2 + $0x60] sm:$0xff]
        %v396 = vld [vmem:[%s2 + $0x68] sm:$0xff]
        %v397 = vld [vmem:[%s2 + $0x70] sm:$0xff]
        %v398 = vld [vmem:[%s2 + $0x78] sm:$0xff]
        %v399 = vld [vmem:[%s2 + $0x80] sm:$0xff]
        %v400 = vld [vmem:[%s2 + $0x88] sm:$0xff]
        %v401 = vld [vmem:[%s2 + $0x90] sm:$0xff]
        %v402 = vld [vmem:[%s2 + $0x98] sm:$0xff]
        %v403 = vld [vmem:[%s2 + $0xa0] sm:$0xff]
        %v404 = vld [vmem:[%s2 + $0xa8] sm:$0xff]
        %v405 = vld [vmem:[%s2 + $0xb0] sm:$0xff]
        %v406 = vld [vmem:[%s2 + $0xb8] sm:$0xff]
        %v407 = vld [vmem:[%s2 + $0xc0] sm:$0xff]
        %v408 = vld [vmem:[%s2 + $0xc8] sm:$0xff]
        %v409 = vld [vmem:[%s2 + $0xd0] sm:$0xff]
        %v410 = vld [vmem:[%s2 + $0xd8] sm:$0xff]
        %v411 = vld [vmem:[%s2 + $0xe0] sm:$0xff]
        %v412 = vld [vmem:[%s2 + $0xe8] sm:$0xff]
        %v413 = vld [vmem:[%s2 + $0xf0] sm:$0xff]
        %v414 = vld [vmem:[%s2 + $0xf8] sm:$0xff]
        %v415 = vld [vmem:[%s2 + $0x100] sm:$0xff]
        %v416 = vld [vmem:[%s2 + $0x108] sm:$0xff]
        %v417 = vld [vmem:[%s2 + $0x110] sm:$0xff]
        %v418 = vld [vmem:[%s2 + $0x118] sm:$0xff]
        %v419 = vld [vmem:[%s2 + $0x120] sm:$0xff]
        %v420 = vld [vmem:[%s2 + $0x128] sm:$0xf]
        %422 = vset.pattern.permute.xlu0 0
        %423 = vperm.xlu0 %422, %v383
        %v424 = vpop.permute.xlu0 %423
        %427 = vset.pattern.permute.xlu0 0
        %428 = vperm.xlu0 %427, %v384
        %v429 = vpop.permute.xlu0 %428
        %432 = vset.pattern.permute.xlu0 0
        %433 = vperm.xlu0 %432, %v385
        %v434 = vpop.permute.xlu0 %433
        %437 = vset.pattern.permute.xlu0 0
        %438 = vperm.xlu0 %437, %v386
        %v439 = vpop.permute.xlu0 %438
        %442 = vset.pattern.permute.xlu0 0
        %443 = vperm.xlu0 %442, %v387
        %v444 = vpop.permute.xlu0 %443
        %447 = vset.pattern.permute.xlu0 0
        %448 = vperm.xlu0 %447, %v388
        %v449 = vpop.permute.xlu0 %448
        %452 = vset.pattern.permute.xlu0 0
        %453 = vperm.xlu0 %452, %v389
        %v454 = vpop.permute.xlu0 %453
        %457 = vset.pattern.permute.xlu0 0
        %458 = vperm.xlu0 %457, %v390
        %v459 = vpop.permute.xlu0 %458
        %462 = vset.pattern.permute.xlu0 0
        %463 = vperm.xlu0 %462, %v391
        %v464 = vpop.permute.xlu0 %463
        %467 = vset.pattern.permute.xlu0 0
        %468 = vperm.xlu0 %467, %v392
        %v469 = vpop.permute.xlu0 %468
        %472 = vset.pattern.permute.xlu0 0
        %473 = vperm.xlu0 %472, %v393
        %v474 = vpop.permute.xlu0 %473
        %477 = vset.pattern.permute.xlu0 0
        %478 = vperm.xlu0 %477, %v394
        %v479 = vpop.permute.xlu0 %478
        %482 = vset.pattern.permute.xlu0 0
        %483 = vperm.xlu0 %482, %v395
        %v484 = vpop.permute.xlu0 %483
        %487 = vset.pattern.permute.xlu0 0
        %488 = vperm.xlu0 %487, %v396
        %v489 = vpop.permute.xlu0 %488
        %492 = vset.pattern.permute.xlu0 0
        %493 = vperm.xlu0 %492, %v397
        %v494 = vpop.permute.xlu0 %493
        %497 = vset.pattern.permute.xlu0 0
        %498 = vperm.xlu0 %497, %v398
        %v499 = vpop.permute.xlu0 %498
        %502 = vset.pattern.permute.xlu0 0
        %503 = vperm.xlu0 %502, %v399
        %v504 = vpop.permute.xlu0 %503
        %507 = vset.pattern.permute.xlu0 0
        %508 = vperm.xlu0 %507, %v400
        %v509 = vpop.permute.xlu0 %508
        %512 = vset.pattern.permute.xlu0 0
        %513 = vperm.xlu0 %512, %v401
        %v514 = vpop.permute.xlu0 %513
        %517 = vset.pattern.permute.xlu0 0
        %518 = vperm.xlu0 %517, %v402
        %v519 = vpop.permute.xlu0 %518
        %522 = vset.pattern.permute.xlu0 0
        %523 = vperm.xlu0 %522, %v403
        %v524 = vpop.permute.xlu0 %523
        %527 = vset.pattern.permute.xlu0 0
        %528 = vperm.xlu0 %527, %v404
        %v529 = vpop.permute.xlu0 %528
        %532 = vset.pattern.permute.xlu0 0
        %533 = vperm.xlu0 %532, %v405
        %v534 = vpop.permute.xlu0 %533
        %537 = vset.pattern.permute.xlu0 0
        %538 = vperm.xlu0 %537, %v406
        %v539 = vpop.permute.xlu0 %538
        %542 = vset.pattern.permute.xlu0 0
        %543 = vperm.xlu0 %542, %v407
        %v544 = vpop.permute.xlu0 %543
        %547 = vset.pattern.permute.xlu0 0
        %548 = vperm.xlu0 %547, %v408
        %v549 = vpop.permute.xlu0 %548
        %552 = vset.pattern.permute.xlu0 0
        %553 = vperm.xlu0 %552, %v409
        %v554 = vpop.permute.xlu0 %553
        %557 = vset.pattern.permute.xlu0 0
        %558 = vperm.xlu0 %557, %v410
        %v559 = vpop.permute.xlu0 %558
        %562 = vset.pattern.permute.xlu0 0
        %563 = vperm.xlu0 %562, %v411
        %v564 = vpop.permute.xlu0 %563
        %567 = vset.pattern.permute.xlu0 0
        %568 = vperm.xlu0 %567, %v412
        %v569 = vpop.permute.xlu0 %568
        %572 = vset.pattern.permute.xlu0 0
        %573 = vperm.xlu0 %572, %v413
        %v574 = vpop.permute.xlu0 %573
        %577 = vset.pattern.permute.xlu0 0
        %578 = vperm.xlu0 %577, %v414
        %v579 = vpop.permute.xlu0 %578
        %582 = vset.pattern.permute.xlu0 0
        %583 = vperm.xlu0 %582, %v415
        %v584 = vpop.permute.xlu0 %583
        %587 = vset.pattern.permute.xlu0 0
        %588 = vperm.xlu0 %587, %v416
        %v589 = vpop.permute.xlu0 %588
        %592 = vset.pattern.permute.xlu0 0
        %593 = vperm.xlu0 %592, %v417
        %v594 = vpop.permute.xlu0 %593
        %597 = vset.pattern.permute.xlu0 0
        %598 = vperm.xlu0 %597, %v418
        %v599 = vpop.permute.xlu0 %598
        %602 = vset.pattern.permute.xlu0 0
        %603 = vperm.xlu0 %602, %v419
        %v604 = vpop.permute.xlu0 %603
        %607 = vset.pattern.permute.xlu0 0
        %608 = vperm.xlu0 %607, %v420
        %v609 = vpop.permute.xlu0 %608
        %v649 = vunpack.c.l.b16 %v310
        %v650 = vunpack.c.l.b16 %v311
        %v651 = vunpack.c.l.b16 %v312
        %v652 = vunpack.c.l.b16 %v313
        %v653 = vunpack.c.l.b16 %v314
        %v654 = vunpack.c.l.b16 %v315
        %v655 = vunpack.c.l.b16 %v316
        %v656 = vunpack.c.l.b16 %v317
        %v657 = vunpack.c.l.b16 %v318
        %v658 = vunpack.c.l.b16 %v319
        %v659 = vunpack.c.l.b16 %v320
        %v660 = vunpack.c.l.b16 %v321
        %v661 = vunpack.c.l.b16 %v322
        %v662 = vunpack.c.l.b16 %v323
        %v663 = vunpack.c.l.b16 %v324
        %v664 = vunpack.c.l.b16 %v325
        %v665 = vunpack.c.l.b16 %v326
        %v666 = vunpack.c.l.b16 %v327
        %v667 = vunpack.c.l.b16 %v328
        %v668 = vunpack.c.l.b16 %v329
        %v669 = vunpack.c.l.b16 %v330
        %v670 = vunpack.c.l.b16 %v331
        %v671 = vunpack.c.l.b16 %v332
        %v672 = vunpack.c.l.b16 %v333
        %v673 = vunpack.c.l.b16 %v334
        %v674 = vunpack.c.l.b16 %v335
        %v675 = vunpack.c.l.b16 %v336
        %v676 = vunpack.c.l.b16 %v337
        %v677 = vunpack.c.l.b16 %v338
        %v678 = vunpack.c.l.b16 %v339
        %v679 = vunpack.c.l.b16 %v340
        %v680 = vunpack.c.l.b16 %v341
        %v681 = vunpack.c.l.b16 %v342
        %v682 = vunpack.c.l.b16 %v343
        %v683 = vunpack.c.l.b16 %v344
        %v684 = vunpack.c.l.b16 %v345
        %v685 = vunpack.c.l.b16 %v346
        %v686 = vunpack.c.l.b16 %v347
        %v687 = vpack.c.b16 %v650, %v649
        %v688 = vpack.c.b16 %v652, %v651
        %v689 = vpack.c.b16 %v654, %v653
        %v690 = vpack.c.b16 %v656, %v655
        %v691 = vpack.c.b16 %v658, %v657
        %v692 = vpack.c.b16 %v660, %v659
        %v693 = vpack.c.b16 %v662, %v661
        %v694 = vpack.c.b16 %v664, %v663
        %v695 = vpack.c.b16 %v666, %v665
        %v696 = vpack.c.b16 %v668, %v667
        %v697 = vpack.c.b16 %v670, %v669
        %v698 = vpack.c.b16 %v672, %v671
        %v699 = vpack.c.b16 %v674, %v673
        %v700 = vpack.c.b16 %v676, %v675
        %v701 = vpack.c.b16 %v678, %v677
        %v702 = vpack.c.b16 %v680, %v679
        %v703 = vpack.c.b16 %v682, %v681
        %v704 = vpack.c.b16 %v684, %v683
        %v705 = vpack.c.b16 %v686, %v685
        %v741 = vunpack.c.l.b16 %v348
        %v742 = vunpack.c.h.b16 %v348
        %v743 = vunpack.c.l.b16 %v349
        %v744 = vunpack.c.h.b16 %v349
        %v745 = vunpack.c.l.b16 %v350
        %v746 = vunpack.c.h.b16 %v350
        %v747 = vunpack.c.l.b16 %v351
        %v748 = vunpack.c.h.b16 %v351
        %v749 = vunpack.c.l.b16 %v352
        %v750 = vunpack.c.l.b16 %v353
        %v751 = vunpack.c.h.b16 %v353
        %v752 = vunpack.c.l.b16 %v354
        %v753 = vunpack.c.h.b16 %v354
        %v754 = vunpack.c.l.b16 %v355
        %v755 = vunpack.c.h.b16 %v355
        %v756 = vunpack.c.l.b16 %v356
        %v757 = vunpack.c.h.b16 %v356
        %v758 = vunpack.c.l.b16 %v357
        %v759 = vunpack.c.l.b16 %v358
        %v760 = vunpack.c.h.b16 %v358
        %v761 = vunpack.c.l.b16 %v359
        %v762 = vunpack.c.h.b16 %v359
        %v763 = vunpack.c.l.b16 %v360
        %v764 = vunpack.c.h.b16 %v360
        %v765 = vunpack.c.l.b16 %v361
        %v766 = vunpack.c.h.b16 %v361
        %v767 = vunpack.c.l.b16 %v362
        %v768 = vunpack.c.l.b16 %v363
        %v769 = vunpack.c.h.b16 %v363
        %v770 = vunpack.c.l.b16 %v364
        %v771 = vunpack.c.h.b16 %v364
        %v772 = vunpack.c.l.b16 %v365
        %v773 = vunpack.c.h.b16 %v365
        %v774 = vunpack.c.l.b16 %v366
        %v775 = vunpack.c.h.b16 %v366
        %v776 = vunpack.c.l.b16 %v367
        %v777 = vunpack.c.l.b16 %v368
        %v778 = vunpack.c.h.b16 %v368
        %v779 = vunpack.c.l.b16 %v369
        %v780 = vunpack.c.h.b16 %v369
        %v781 = vunpack.c.l.b16 %v370
        %v782 = vunpack.c.h.b16 %v370
        %v783 = vunpack.c.l.b16 %v371
        %v784 = vunpack.c.h.b16 %v371
        %v785 = vunpack.c.l.b16 %v372
        %v786 = vunpack.c.l.b16 %v373
        %v787 = vunpack.c.h.b16 %v373
        %v788 = vunpack.c.l.b16 %v374
        %v789 = vunpack.c.h.b16 %v374
        %v790 = vunpack.c.l.b16 %v375
        %v791 = vunpack.c.h.b16 %v375
        %v792 = vunpack.c.l.b16 %v376
        %v793 = vunpack.c.h.b16 %v376
        %v794 = vunpack.c.l.b16 %v377
        %v795 = vunpack.c.l.b16 %v378
        %v796 = vunpack.c.h.b16 %v378
        %v797 = vunpack.c.l.b16 %v379
        %v798 = vunpack.c.h.b16 %v379
        %v799 = vunpack.c.l.b16 %v380
        %v800 = vunpack.c.h.b16 %v380
        %v801 = vunpack.c.l.b16 %v381
        %v802 = vunpack.c.h.b16 %v381
        %v803 = vunpack.c.l.b16 %v382
        %v804 = vpack.c.b16 %v750, %v741
        %v805 = vpack.c.b16 %v751, %v742
        %v806 = vpack.c.b16 %v752, %v743
        %v807 = vpack.c.b16 %v753, %v744
        %v808 = vpack.c.b16 %v754, %v745
        %v809 = vpack.c.b16 %v755, %v746
        %v810 = vpack.c.b16 %v756, %v747
        %v811 = vpack.c.b16 %v757, %v748
        %v812 = vpack.c.b16 %v758, %v749
        %v813 = vpack.c.b16 %v768, %v759
        %v814 = vpack.c.b16 %v769, %v760
        %v815 = vpack.c.b16 %v770, %v761
        %v816 = vpack.c.b16 %v771, %v762
        %v817 = vpack.c.b16 %v772, %v763
        %v818 = vpack.c.b16 %v773, %v764
        %v819 = vpack.c.b16 %v774, %v765
        %v820 = vpack.c.b16 %v775, %v766
        %v821 = vpack.c.b16 %v776, %v767
        %v822 = vpack.c.b16 %v786, %v777
        %v823 = vpack.c.b16 %v787, %v778
        %v824 = vpack.c.b16 %v788, %v779
        %v825 = vpack.c.b16 %v789, %v780
        %v826 = vpack.c.b16 %v790, %v781
        %v827 = vpack.c.b16 %v791, %v782
        %v828 = vpack.c.b16 %v792, %v783
        %v829 = vpack.c.b16 %v793, %v784
        %v830 = vpack.c.b16 %v794, %v785
        %v831 = vpack.c.b16 %v795, %v795
        %v832 = vpack.c.b16 %v796, %v796
        %v833 = vpack.c.b16 %v797, %v797
        %v834 = vpack.c.b16 %v798, %v798
        %v835 = vpack.c.b16 %v799, %v799
        %v836 = vpack.c.b16 %v800, %v800
        %v837 = vpack.c.b16 %v801, %v801
        %v838 = vpack.c.b16 %v802, %v802
        %v839 = vpack.c.b16 %v803, %v803
        %vm867 = vcmask 408576
        %v869 = vsel %vm867, %v687, 0
        %v872 = vsel %vm867, %v688, 0
        %v875 = vsel %vm867, %v689, 0
        %v878 = vsel %vm867, %v690, 0
        %v881 = vsel %vm867, %v691, 0
        %v884 = vsel %vm867, %v692, 0
        %v887 = vsel %vm867, %v693, 0
        %v890 = vsel %vm867, %v694, 0
        %v893 = vsel %vm867, %v695, 0
        %v896 = vsel %vm867, %v696, 0
        %v899 = vsel %vm867, %v697, 0
        %v902 = vsel %vm867, %v698, 0
        %v905 = vsel %vm867, %v699, 0
        %v908 = vsel %vm867, %v700, 0
        %v911 = vsel %vm867, %v701, 0
        %v914 = vsel %vm867, %v702, 0
        %v917 = vsel %vm867, %v703, 0
        %v920 = vsel %vm867, %v704, 0
        %v923 = vsel %vm867, %v705, 0
        %vm925 = vcmask 1040384
        %v927 = vsel %vm925, %v831, 0
        %v930 = vsel %vm925, %v832, 0
        %v933 = vsel %vm925, %v833, 0
        %v936 = vsel %vm925, %v834, 0
        %v939 = vsel %vm925, %v835, 0
        %v942 = vsel %vm925, %v836, 0
        %v945 = vsel %vm925, %v837, 0
        %v948 = vsel %vm925, %v838, 0
        %v951 = vsel %vm925, %v839, 0
        %953 = vmatpush.bf16.msra.mxu0 0
        %954 = vmatpush.bf16.msra.mxu0 0
        %955 = vmatpush.bf16.msra.mxu0 0
        %956 = vmatpush.bf16.msra.mxu0 0
        %957 = vmatpush.bf16.msra.mxu0 %v927
        %958 = vmatpush.bf16.msra.mxu0 %v822
        %959 = vmatpush.bf16.msra.mxu0 %v813
        %960 = vmatpush.bf16.msra.mxu0 %v804
        %961 = vmatmul.bf16.gmra.mxu0 %v869
        %v962 = vpop.f32.mrf.mxu0
        %v963 = vadd.f32 %v424, %v962
        %v964 = vpop.f32.mrf.mxu0
        %v965 = vadd.f32 %v429, %v964
        %966 = vmatmul.bf16.gmra.mxu0 %v872
        %v967 = vpop.f32.mrf.mxu0
        %v968 = vadd.f32 %v434, %v967
        %v969 = vpop.f32.mrf.mxu0
        %v970 = vadd.f32 %v439, %v969
        %971 = vmatmul.bf16.gmra.mxu0 %v875
        %v972 = vpop.f32.mrf.mxu0
        %v973 = vadd.f32 %v444, %v972
        %v974 = vpop.f32.mrf.mxu0
        %v975 = vadd.f32 %v449, %v974
        %976 = vmatmul.bf16.gmra.mxu0 %v878
        %v977 = vpop.f32.mrf.mxu0
        %v978 = vadd.f32 %v454, %v977
        %v979 = vpop.f32.mrf.mxu0
        %v980 = vadd.f32 %v459, %v979
        %981 = vmatmul.bf16.gmra.mxu0 %v881
        %v982 = vpop.f32.mrf.mxu0
        %v983 = vadd.f32 %v464, %v982
        %v984 = vpop.f32.mrf.mxu0
        %v985 = vadd.f32 %v469, %v984
        %986 = vmatmul.bf16.gmra.mxu0 %v884
        %v987 = vpop.f32.mrf.mxu0
        %v988 = vadd.f32 %v474, %v987
        %v989 = vpop.f32.mrf.mxu0
        %v990 = vadd.f32 %v479, %v989
        %991 = vmatmul.bf16.gmra.mxu0 %v887
        %v992 = vpop.f32.mrf.mxu0
        %v993 = vadd.f32 %v484, %v992
        %v994 = vpop.f32.mrf.mxu0
        %v995 = vadd.f32 %v489, %v994
        %996 = vmatmul.bf16.gmra.mxu0 %v890
        %v997 = vpop.f32.mrf.mxu0
        %v998 = vadd.f32 %v494, %v997
        %v999 = vpop.f32.mrf.mxu0
        %v1000 = vadd.f32 %v499, %v999
        %1001 = vmatmul.bf16.gmra.mxu0 %v893
        %v1002 = vpop.f32.mrf.mxu0
        %v1003 = vadd.f32 %v504, %v1002
        %v1004 = vpop.f32.mrf.mxu0
        %v1005 = vadd.f32 %v509, %v1004
        %1006 = vmatmul.bf16.gmra.mxu0 %v896
        %v1007 = vpop.f32.mrf.mxu0
        %v1008 = vadd.f32 %v514, %v1007
        %v1009 = vpop.f32.mrf.mxu0
        %v1010 = vadd.f32 %v519, %v1009
        %1011 = vmatmul.bf16.gmra.mxu0 %v899
        %v1012 = vpop.f32.mrf.mxu0
        %v1013 = vadd.f32 %v524, %v1012
        %v1014 = vpop.f32.mrf.mxu0
        %v1015 = vadd.f32 %v529, %v1014
        %1016 = vmatmul.bf16.gmra.mxu0 %v902
        %v1017 = vpop.f32.mrf.mxu0
        %v1018 = vadd.f32 %v534, %v1017
        %v1019 = vpop.f32.mrf.mxu0
        %v1020 = vadd.f32 %v539, %v1019
        %1021 = vmatmul.bf16.gmra.mxu0 %v905
        %v1022 = vpop.f32.mrf.mxu0
        %v1023 = vadd.f32 %v544, %v1022
        %v1024 = vpop.f32.mrf.mxu0
        %v1025 = vadd.f32 %v549, %v1024
        %1026 = vmatmul.bf16.gmra.mxu0 %v908
        %v1027 = vpop.f32.mrf.mxu0
        %v1028 = vadd.f32 %v554, %v1027
        %v1029 = vpop.f32.mrf.mxu0
        %v1030 = vadd.f32 %v559, %v1029
        %1031 = vmatmul.bf16.gmra.mxu0 %v911
        %v1032 = vpop.f32.mrf.mxu0
        %v1033 = vadd.f32 %v564, %v1032
        %v1034 = vpop.f32.mrf.mxu0
        %v1035 = vadd.f32 %v569, %v1034
        %1036 = vmatmul.bf16.gmra.mxu0 %v914
        %v1037 = vpop.f32.mrf.mxu0
        %v1038 = vadd.f32 %v574, %v1037
        %v1039 = vpop.f32.mrf.mxu0
        %v1040 = vadd.f32 %v579, %v1039
        %1041 = vmatmul.bf16.gmra.mxu0 %v917
        %v1042 = vpop.f32.mrf.mxu0
        %v1043 = vadd.f32 %v584, %v1042
        %v1044 = vpop.f32.mrf.mxu0
        %v1045 = vadd.f32 %v589, %v1044
        %1046 = vmatmul.bf16.gmra.mxu0 %v920
        %v1047 = vpop.f32.mrf.mxu0
        %v1048 = vadd.f32 %v594, %v1047
        %v1049 = vpop.f32.mrf.mxu0
        %v1050 = vadd.f32 %v599, %v1049
        %1051 = vmatmul.bf16.gmra.mxu0 %v923
        %v1052 = vpop.f32.mrf.mxu0
        %v1053 = vadd.f32 %v604, %v1052
        %v1054 = vpop.f32.mrf.mxu0
        %v1055 = vadd.f32 %v609, %v1054
        %1056 = vdwg.mxu0
        %1057 = vmatpush.bf16.msra.mxu0 0
        %1058 = vmatpush.bf16.msra.mxu0 0
        %1059 = vmatpush.bf16.msra.mxu0 0
        %1060 = vmatpush.bf16.msra.mxu0 0
        %1061 = vmatpush.bf16.msra.mxu0 %v930
        %1062 = vmatpush.bf16.msra.mxu0 %v823
        %1063 = vmatpush.bf16.msra.mxu0 %v814
        %1064 = vmatpush.bf16.msra.mxu0 %v805
        %1065 = vmatmul.bf16.gmra.mxu0 %v869
        %v1066 = vpop.f32.mrf.mxu0
        %v1067 = vadd.f32 %v424, %v1066
        %v1068 = vpop.f32.mrf.mxu0
        %v1069 = vadd.f32 %v429, %v1068
        %1070 = vmatmul.bf16.gmra.mxu0 %v872
        %v1071 = vpop.f32.mrf.mxu0
        %v1072 = vadd.f32 %v434, %v1071
        %v1073 = vpop.f32.mrf.mxu0
        %v1074 = vadd.f32 %v439, %v1073
        %1075 = vmatmul.bf16.gmra.mxu0 %v875
        %v1076 = vpop.f32.mrf.mxu0
        %v1077 = vadd.f32 %v444, %v1076
        %v1078 = vpop.f32.mrf.mxu0
        %v1079 = vadd.f32 %v449, %v1078
        %1080 = vmatmul.bf16.gmra.mxu0 %v878
        %v1081 = vpop.f32.mrf.mxu0
        %v1082 = vadd.f32 %v454, %v1081
        %v1083 = vpop.f32.mrf.mxu0
        %v1084 = vadd.f32 %v459, %v1083
        %1085 = vmatmul.bf16.gmra.mxu0 %v881
        %v1086 = vpop.f32.mrf.mxu0
        %v1087 = vadd.f32 %v464, %v1086
        %v1088 = vpop.f32.mrf.mxu0
        %v1089 = vadd.f32 %v469, %v1088
        %1090 = vmatmul.bf16.gmra.mxu0 %v884
        %v1091 = vpop.f32.mrf.mxu0
        %v1092 = vadd.f32 %v474, %v1091
        %v1093 = vpop.f32.mrf.mxu0
        %v1094 = vadd.f32 %v479, %v1093
        %1095 = vmatmul.bf16.gmra.mxu0 %v887
        %v1096 = vpop.f32.mrf.mxu0
        %v1097 = vadd.f32 %v484, %v1096
        %v1098 = vpop.f32.mrf.mxu0
        %v1099 = vadd.f32 %v489, %v1098
        %1100 = vmatmul.bf16.gmra.mxu0 %v890
        %v1101 = vpop.f32.mrf.mxu0
        %v1102 = vadd.f32 %v494, %v1101
        %v1103 = vpop.f32.mrf.mxu0
        %v1104 = vadd.f32 %v499, %v1103
        %1105 = vmatmul.bf16.gmra.mxu0 %v893
        %v1106 = vpop.f32.mrf.mxu0
        %v1107 = vadd.f32 %v504, %v1106
        %v1108 = vpop.f32.mrf.mxu0
        %v1109 = vadd.f32 %v509, %v1108
        %1110 = vmatmul.bf16.gmra.mxu0 %v896
        %v1111 = vpop.f32.mrf.mxu0
        %v1112 = vadd.f32 %v514, %v1111
        %v1113 = vpop.f32.mrf.mxu0
        %v1114 = vadd.f32 %v519, %v1113
        %1115 = vmatmul.bf16.gmra.mxu0 %v899
        %v1116 = vpop.f32.mrf.mxu0
        %v1117 = vadd.f32 %v524, %v1116
        %v1118 = vpop.f32.mrf.mxu0
        %v1119 = vadd.f32 %v529, %v1118
        %1120 = vmatmul.bf16.gmra.mxu0 %v902
        %v1121 = vpop.f32.mrf.mxu0
        %v1122 = vadd.f32 %v534, %v1121
        %v1123 = vpop.f32.mrf.mxu0
        %v1124 = vadd.f32 %v539, %v1123
        %1125 = vmatmul.bf16.gmra.mxu0 %v905
        %v1126 = vpop.f32.mrf.mxu0
        %v1127 = vadd.f32 %v544, %v1126
        %v1128 = vpop.f32.mrf.mxu0
        %v1129 = vadd.f32 %v549, %v1128
        %1130 = vmatmul.bf16.gmra.mxu0 %v908
        %v1131 = vpop.f32.mrf.mxu0
        %v1132 = vadd.f32 %v554, %v1131
        %v1133 = vpop.f32.mrf.mxu0
        %v1134 = vadd.f32 %v559, %v1133
        %1135 = vmatmul.bf16.gmra.mxu0 %v911
        %v1136 = vpop.f32.mrf.mxu0
        %v1137 = vadd.f32 %v564, %v1136
        %v1138 = vpop.f32.mrf.mxu0
        %v1139 = vadd.f32 %v569, %v1138
        %1140 = vmatmul.bf16.gmra.mxu0 %v914
        %v1141 = vpop.f32.mrf.mxu0
        %v1142 = vadd.f32 %v574, %v1141
        %v1143 = vpop.f32.mrf.mxu0
        %v1144 = vadd.f32 %v579, %v1143
        %1145 = vmatmul.bf16.gmra.mxu0 %v917
        %v1146 = vpop.f32.mrf.mxu0
        %v1147 = vadd.f32 %v584, %v1146
        %v1148 = vpop.f32.mrf.mxu0
        %v1149 = vadd.f32 %v589, %v1148
        %1150 = vmatmul.bf16.gmra.mxu0 %v920
        %v1151 = vpop.f32.mrf.mxu0
        %v1152 = vadd.f32 %v594, %v1151
        %v1153 = vpop.f32.mrf.mxu0
        %v1154 = vadd.f32 %v599, %v1153
        %1155 = vmatmul.bf16.gmra.mxu0 %v923
        %v1156 = vpop.f32.mrf.mxu0
        %v1157 = vadd.f32 %v604, %v1156
        %v1158 = vpop.f32.mrf.mxu0
        %v1159 = vadd.f32 %v609, %v1158
        %1160 = vdwg.mxu0
        %1161 = vmatpush.bf16.msra.mxu0 0
        %1162 = vmatpush.bf16.msra.mxu0 0
        %1163 = vmatpush.bf16.msra.mxu0 0
        %1164 = vmatpush.bf16.msra.mxu0 0
        %1165 = vmatpush.bf16.msra.mxu0 %v933
        %1166 = vmatpush.bf16.msra.mxu0 %v824
        %1167 = vmatpush.bf16.msra.mxu0 %v815
        %1168 = vmatpush.bf16.msra.mxu0 %v806
        %1169 = vmatmul.bf16.gmra.mxu0 %v869
        %v1170 = vpop.f32.mrf.mxu0
        %v1171 = vadd.f32 %v424, %v1170
        %v1172 = vpop.f32.mrf.mxu0
        %v1173 = vadd.f32 %v429, %v1172
        %1174 = vmatmul.bf16.gmra.mxu0 %v872
        %v1175 = vpop.f32.mrf.mxu0
        %v1176 = vadd.f32 %v434, %v1175
        %v1177 = vpop.f32.mrf.mxu0
        %v1178 = vadd.f32 %v439, %v1177
        %1179 = vmatmul.bf16.gmra.mxu0 %v875
        %v1180 = vpop.f32.mrf.mxu0
        %v1181 = vadd.f32 %v444, %v1180
        %v1182 = vpop.f32.mrf.mxu0
        %v1183 = vadd.f32 %v449, %v1182
        %1184 = vmatmul.bf16.gmra.mxu0 %v878
        %v1185 = vpop.f32.mrf.mxu0
        %v1186 = vadd.f32 %v454, %v1185
        %v1187 = vpop.f32.mrf.mxu0
        %v1188 = vadd.f32 %v459, %v1187
        %1189 = vmatmul.bf16.gmra.mxu0 %v881
        %v1190 = vpop.f32.mrf.mxu0
        %v1191 = vadd.f32 %v464, %v1190
        %v1192 = vpop.f32.mrf.mxu0
        %v1193 = vadd.f32 %v469, %v1192
        %1194 = vmatmul.bf16.gmra.mxu0 %v884
        %v1195 = vpop.f32.mrf.mxu0
        %v1196 = vadd.f32 %v474, %v1195
        %v1197 = vpop.f32.mrf.mxu0
        %v1198 = vadd.f32 %v479, %v1197
        %1199 = vmatmul.bf16.gmra.mxu0 %v887
        %v1200 = vpop.f32.mrf.mxu0
        %v1201 = vadd.f32 %v484, %v1200
        %v1202 = vpop.f32.mrf.mxu0
        %v1203 = vadd.f32 %v489, %v1202
        %1204 = vmatmul.bf16.gmra.mxu0 %v890
        %v1205 = vpop.f32.mrf.mxu0
        %v1206 = vadd.f32 %v494, %v1205
        %v1207 = vpop.f32.mrf.mxu0
        %v1208 = vadd.f32 %v499, %v1207
        %1209 = vmatmul.bf16.gmra.mxu0 %v893
        %v1210 = vpop.f32.mrf.mxu0
        %v1211 = vadd.f32 %v504, %v1210
        %v1212 = vpop.f32.mrf.mxu0
        %v1213 = vadd.f32 %v509, %v1212
        %1214 = vmatmul.bf16.gmra.mxu0 %v896
        %v1215 = vpop.f32.mrf.mxu0
        %v1216 = vadd.f32 %v514, %v1215
        %v1217 = vpop.f32.mrf.mxu0
        %v1218 = vadd.f32 %v519, %v1217
        %1219 = vmatmul.bf16.gmra.mxu0 %v899
        %v1220 = vpop.f32.mrf.mxu0
        %v1221 = vadd.f32 %v524, %v1220
        %v1222 = vpop.f32.mrf.mxu0
        %v1223 = vadd.f32 %v529, %v1222
        %1224 = vmatmul.bf16.gmra.mxu0 %v902
        %v1225 = vpop.f32.mrf.mxu0
        %v1226 = vadd.f32 %v534, %v1225
        %v1227 = vpop.f32.mrf.mxu0
        %v1228 = vadd.f32 %v539, %v1227
        %1229 = vmatmul.bf16.gmra.mxu0 %v905
        %v1230 = vpop.f32.mrf.mxu0
        %v1231 = vadd.f32 %v544, %v1230
        %v1232 = vpop.f32.mrf.mxu0
        %v1233 = vadd.f32 %v549, %v1232
        %1234 = vmatmul.bf16.gmra.mxu0 %v908
        %v1235 = vpop.f32.mrf.mxu0
        %v1236 = vadd.f32 %v554, %v1235
        %v1237 = vpop.f32.mrf.mxu0
        %v1238 = vadd.f32 %v559, %v1237
        %1239 = vmatmul.bf16.gmra.mxu0 %v911
        %v1240 = vpop.f32.mrf.mxu0
        %v1241 = vadd.f32 %v564, %v1240
        %v1242 = vpop.f32.mrf.mxu0
        %v1243 = vadd.f32 %v569, %v1242
        %1244 = vmatmul.bf16.gmra.mxu0 %v914
        %v1245 = vpop.f32.mrf.mxu0
        %v1246 = vadd.f32 %v574, %v1245
        %v1247 = vpop.f32.mrf.mxu0
        %v1248 = vadd.f32 %v579, %v1247
        %1249 = vmatmul.bf16.gmra.mxu0 %v917
        %v1250 = vpop.f32.mrf.mxu0
        %v1251 = vadd.f32 %v584, %v1250
        %v1252 = vpop.f32.mrf.mxu0
        %v1253 = vadd.f32 %v589, %v1252
        %1254 = vmatmul.bf16.gmra.mxu0 %v920
        %v1255 = vpop.f32.mrf.mxu0
        %v1256 = vadd.f32 %v594, %v1255
        %v1257 = vpop.f32.mrf.mxu0
        %v1258 = vadd.f32 %v599, %v1257
        %1259 = vmatmul.bf16.gmra.mxu0 %v923
        %v1260 = vpop.f32.mrf.mxu0
        %v1261 = vadd.f32 %v604, %v1260
        %v1262 = vpop.f32.mrf.mxu0
        %v1263 = vadd.f32 %v609, %v1262
        %1264 = vdwg.mxu0
        %1265 = vmatpush.bf16.msra.mxu0 0
        %1266 = vmatpush.bf16.msra.mxu0 0
        %1267 = vmatpush.bf16.msra.mxu0 0
        %1268 = vmatpush.bf16.msra.mxu0 0
        %1269 = vmatpush.bf16.msra.mxu0 %v936
        %1270 = vmatpush.bf16.msra.mxu0 %v825
        %1271 = vmatpush.bf16.msra.mxu0 %v816
        %1272 = vmatpush.bf16.msra.mxu0 %v807
        %1273 = vmatmul.bf16.gmra.mxu0 %v869
        %v1274 = vpop.f32.mrf.mxu0
        %v1275 = vadd.f32 %v424, %v1274
        %v1276 = vpop.f32.mrf.mxu0
        %v1277 = vadd.f32 %v429, %v1276
        %1278 = vmatmul.bf16.gmra.mxu0 %v872
        %v1279 = vpop.f32.mrf.mxu0
        %v1280 = vadd.f32 %v434, %v1279
        %v1281 = vpop.f32.mrf.mxu0
        %v1282 = vadd.f32 %v439, %v1281
        %1283 = vmatmul.bf16.gmra.mxu0 %v875
        %v1284 = vpop.f32.mrf.mxu0
        %v1285 = vadd.f32 %v444, %v1284
        %v1286 = vpop.f32.mrf.mxu0
        %v1287 = vadd.f32 %v449, %v1286
        %1288 = vmatmul.bf16.gmra.mxu0 %v878
        %v1289 = vpop.f32.mrf.mxu0
        %v1290 = vadd.f32 %v454, %v1289
        %v1291 = vpop.f32.mrf.mxu0
        %v1292 = vadd.f32 %v459, %v1291
        %1293 = vmatmul.bf16.gmra.mxu0 %v881
        %v1294 = vpop.f32.mrf.mxu0
        %v1295 = vadd.f32 %v464, %v1294
        %v1296 = vpop.f32.mrf.mxu0
        %v1297 = vadd.f32 %v469, %v1296
        %1298 = vmatmul.bf16.gmra.mxu0 %v884
        %v1299 = vpop.f32.mrf.mxu0
        %v1300 = vadd.f32 %v474, %v1299
        %v1301 = vpop.f32.mrf.mxu0
        %v1302 = vadd.f32 %v479, %v1301
        %1303 = vmatmul.bf16.gmra.mxu0 %v887
        %v1304 = vpop.f32.mrf.mxu0
        %v1305 = vadd.f32 %v484, %v1304
        %v1306 = vpop.f32.mrf.mxu0
        %v1307 = vadd.f32 %v489, %v1306
        %1308 = vmatmul.bf16.gmra.mxu0 %v890
        %v1309 = vpop.f32.mrf.mxu0
        %v1310 = vadd.f32 %v494, %v1309
        %v1311 = vpop.f32.mrf.mxu0
        %v1312 = vadd.f32 %v499, %v1311
        %1313 = vmatmul.bf16.gmra.mxu0 %v893
        %v1314 = vpop.f32.mrf.mxu0
        %v1315 = vadd.f32 %v504, %v1314
        %v1316 = vpop.f32.mrf.mxu0
        %v1317 = vadd.f32 %v509, %v1316
        %1318 = vmatmul.bf16.gmra.mxu0 %v896
        %v1319 = vpop.f32.mrf.mxu0
        %v1320 = vadd.f32 %v514, %v1319
        %v1321 = vpop.f32.mrf.mxu0
        %v1322 = vadd.f32 %v519, %v1321
        %1323 = vmatmul.bf16.gmra.mxu0 %v899
        %v1324 = vpop.f32.mrf.mxu0
        %v1325 = vadd.f32 %v524, %v1324
        %v1326 = vpop.f32.mrf.mxu0
        %v1327 = vadd.f32 %v529, %v1326
        %1328 = vmatmul.bf16.gmra.mxu0 %v902
        %v1329 = vpop.f32.mrf.mxu0
        %v1330 = vadd.f32 %v534, %v1329
        %v1331 = vpop.f32.mrf.mxu0
        %v1332 = vadd.f32 %v539, %v1331
        %1333 = vmatmul.bf16.gmra.mxu0 %v905
        %v1334 = vpop.f32.mrf.mxu0
        %v1335 = vadd.f32 %v544, %v1334
        %v1336 = vpop.f32.mrf.mxu0
        %v1337 = vadd.f32 %v549, %v1336
        %1338 = vmatmul.bf16.gmra.mxu0 %v908
        %v1339 = vpop.f32.mrf.mxu0
        %v1340 = vadd.f32 %v554, %v1339
        %v1341 = vpop.f32.mrf.mxu0
        %v1342 = vadd.f32 %v559, %v1341
        %1343 = vmatmul.bf16.gmra.mxu0 %v911
        %v1344 = vpop.f32.mrf.mxu0
        %v1345 = vadd.f32 %v564, %v1344
        %v1346 = vpop.f32.mrf.mxu0
        %v1347 = vadd.f32 %v569, %v1346
        %1348 = vmatmul.bf16.gmra.mxu0 %v914
        %v1349 = vpop.f32.mrf.mxu0
        %v1350 = vadd.f32 %v574, %v1349
        %v1351 = vpop.f32.mrf.mxu0
        %v1352 = vadd.f32 %v579, %v1351
        %1353 = vmatmul.bf16.gmra.mxu0 %v917
        %v1354 = vpop.f32.mrf.mxu0
        %v1355 = vadd.f32 %v584, %v1354
        %v1356 = vpop.f32.mrf.mxu0
        %v1357 = vadd.f32 %v589, %v1356
        %1358 = vmatmul.bf16.gmra.mxu0 %v920
        %v1359 = vpop.f32.mrf.mxu0
        %v1360 = vadd.f32 %v594, %v1359
        %v1361 = vpop.f32.mrf.mxu0
        %v1362 = vadd.f32 %v599, %v1361
        %1363 = vmatmul.bf16.gmra.mxu0 %v923
        %v1364 = vpop.f32.mrf.mxu0
        %v1365 = vadd.f32 %v604, %v1364
        %v1366 = vpop.f32.mrf.mxu0
        %v1367 = vadd.f32 %v609, %v1366
        %1368 = vdwg.mxu0
        %1369 = vmatpush.bf16.msra.mxu0 0
        %1370 = vmatpush.bf16.msra.mxu0 0
        %1371 = vmatpush.bf16.msra.mxu0 0
        %1372 = vmatpush.bf16.msra.mxu0 0
        %1373 = vmatpush.bf16.msra.mxu0 %v939
        %1374 = vmatpush.bf16.msra.mxu0 %v826
        %1375 = vmatpush.bf16.msra.mxu0 %v817
        %1376 = vmatpush.bf16.msra.mxu0 %v808
        %1377 = vmatmul.bf16.gmra.mxu0 %v869
        %v1378 = vpop.f32.mrf.mxu0
        %v1379 = vadd.f32 %v424, %v1378
        %v1380 = vpop.f32.mrf.mxu0
        %v1381 = vadd.f32 %v429, %v1380
        %1382 = vmatmul.bf16.gmra.mxu0 %v872
        %v1383 = vpop.f32.mrf.mxu0
        %v1384 = vadd.f32 %v434, %v1383
        %v1385 = vpop.f32.mrf.mxu0
        %v1386 = vadd.f32 %v439, %v1385
        %1387 = vmatmul.bf16.gmra.mxu0 %v875
        %v1388 = vpop.f32.mrf.mxu0
        %v1389 = vadd.f32 %v444, %v1388
        %v1390 = vpop.f32.mrf.mxu0
        %v1391 = vadd.f32 %v449, %v1390
        %1392 = vmatmul.bf16.gmra.mxu0 %v878
        %v1393 = vpop.f32.mrf.mxu0
        %v1394 = vadd.f32 %v454, %v1393
        %v1395 = vpop.f32.mrf.mxu0
        %v1396 = vadd.f32 %v459, %v1395
        %1397 = vmatmul.bf16.gmra.mxu0 %v881
        %v1398 = vpop.f32.mrf.mxu0
        %v1399 = vadd.f32 %v464, %v1398
        %v1400 = vpop.f32.mrf.mxu0
        %v1401 = vadd.f32 %v469, %v1400
        %1402 = vmatmul.bf16.gmra.mxu0 %v884
        %v1403 = vpop.f32.mrf.mxu0
        %v1404 = vadd.f32 %v474, %v1403
        %v1405 = vpop.f32.mrf.mxu0
        %v1406 = vadd.f32 %v479, %v1405
        %1407 = vmatmul.bf16.gmra.mxu0 %v887
        %v1408 = vpop.f32.mrf.mxu0
        %v1409 = vadd.f32 %v484, %v1408
        %v1410 = vpop.f32.mrf.mxu0
        %v1411 = vadd.f32 %v489, %v1410
        %1412 = vmatmul.bf16.gmra.mxu0 %v890
        %v1413 = vpop.f32.mrf.mxu0
        %v1414 = vadd.f32 %v494, %v1413
        %v1415 = vpop.f32.mrf.mxu0
        %v1416 = vadd.f32 %v499, %v1415
        %1417 = vmatmul.bf16.gmra.mxu0 %v893
        %v1418 = vpop.f32.mrf.mxu0
        %v1419 = vadd.f32 %v504, %v1418
        %v1420 = vpop.f32.mrf.mxu0
        %v1421 = vadd.f32 %v509, %v1420
        %1422 = vmatmul.bf16.gmra.mxu0 %v896
        %v1423 = vpop.f32.mrf.mxu0
        %v1424 = vadd.f32 %v514, %v1423
        %v1425 = vpop.f32.mrf.mxu0
        %v1426 = vadd.f32 %v519, %v1425
        %1427 = vmatmul.bf16.gmra.mxu0 %v899
        %v1428 = vpop.f32.mrf.mxu0
        %v1429 = vadd.f32 %v524, %v1428
        %v1430 = vpop.f32.mrf.mxu0
        %v1431 = vadd.f32 %v529, %v1430
        %1432 = vmatmul.bf16.gmra.mxu0 %v902
        %v1433 = vpop.f32.mrf.mxu0
        %v1434 = vadd.f32 %v534, %v1433
        %v1435 = vpop.f32.mrf.mxu0
        %v1436 = vadd.f32 %v539, %v1435
        %1437 = vmatmul.bf16.gmra.mxu0 %v905
        %v1438 = vpop.f32.mrf.mxu0
        %v1439 = vadd.f32 %v544, %v1438
        %v1440 = vpop.f32.mrf.mxu0
        %v1441 = vadd.f32 %v549, %v1440
        %1442 = vmatmul.bf16.gmra.mxu0 %v908
        %v1443 = vpop.f32.mrf.mxu0
        %v1444 = vadd.f32 %v554, %v1443
        %v1445 = vpop.f32.mrf.mxu0
        %v1446 = vadd.f32 %v559, %v1445
        %1447 = vmatmul.bf16.gmra.mxu0 %v911
        %v1448 = vpop.f32.mrf.mxu0
        %v1449 = vadd.f32 %v564, %v1448
        %v1450 = vpop.f32.mrf.mxu0
        %v1451 = vadd.f32 %v569, %v1450
        %1452 = vmatmul.bf16.gmra.mxu0 %v914
        %v1453 = vpop.f32.mrf.mxu0
        %v1454 = vadd.f32 %v574, %v1453
        %v1455 = vpop.f32.mrf.mxu0
        %v1456 = vadd.f32 %v579, %v1455
        %1457 = vmatmul.bf16.gmra.mxu0 %v917
        %v1458 = vpop.f32.mrf.mxu0
        %v1459 = vadd.f32 %v584, %v1458
        %v1460 = vpop.f32.mrf.mxu0
        %v1461 = vadd.f32 %v589, %v1460
        %1462 = vmatmul.bf16.gmra.mxu0 %v920
        %v1463 = vpop.f32.mrf.mxu0
        %v1464 = vadd.f32 %v594, %v1463
        %v1465 = vpop.f32.mrf.mxu0
        %v1466 = vadd.f32 %v599, %v1465
        %1467 = vmatmul.bf16.gmra.mxu0 %v923
        %v1468 = vpop.f32.mrf.mxu0
        %v1469 = vadd.f32 %v604, %v1468
        %v1470 = vpop.f32.mrf.mxu0
        %v1471 = vadd.f32 %v609, %v1470
        %1472 = vdwg.mxu0
        %1473 = vmatpush.bf16.msra.mxu0 0
        %1474 = vmatpush.bf16.msra.mxu0 0
        %1475 = vmatpush.bf16.msra.mxu0 0
        %1476 = vmatpush.bf16.msra.mxu0 0
        %1477 = vmatpush.bf16.msra.mxu0 %v942
        %1478 = vmatpush.bf16.msra.mxu0 %v827
        %1479 = vmatpush.bf16.msra.mxu0 %v818
        %1480 = vmatpush.bf16.msra.mxu0 %v809
        %1481 = vmatmul.bf16.gmra.mxu0 %v869
        %v1482 = vpop.f32.mrf.mxu0
        %v1483 = vadd.f32 %v424, %v1482
        %v1484 = vpop.f32.mrf.mxu0
        %v1485 = vadd.f32 %v429, %v1484
        %1486 = vmatmul.bf16.gmra.mxu0 %v872
        %v1487 = vpop.f32.mrf.mxu0
        %v1488 = vadd.f32 %v434, %v1487
        %v1489 = vpop.f32.mrf.mxu0
        %v1490 = vadd.f32 %v439, %v1489
        %1491 = vmatmul.bf16.gmra.mxu0 %v875
        %v1492 = vpop.f32.mrf.mxu0
        %v1493 = vadd.f32 %v444, %v1492
        %v1494 = vpop.f32.mrf.mxu0
        %v1495 = vadd.f32 %v449, %v1494
        %1496 = vmatmul.bf16.gmra.mxu0 %v878
        %v1497 = vpop.f32.mrf.mxu0
        %v1498 = vadd.f32 %v454, %v1497
        %v1499 = vpop.f32.mrf.mxu0
        %v1500 = vadd.f32 %v459, %v1499
        %1501 = vmatmul.bf16.gmra.mxu0 %v881
        %v1502 = vpop.f32.mrf.mxu0
        %v1503 = vadd.f32 %v464, %v1502
        %v1504 = vpop.f32.mrf.mxu0
        %v1505 = vadd.f32 %v469, %v1504
        %1506 = vmatmul.bf16.gmra.mxu0 %v884
        %v1507 = vpop.f32.mrf.mxu0
        %v1508 = vadd.f32 %v474, %v1507
        %v1509 = vpop.f32.mrf.mxu0
        %v1510 = vadd.f32 %v479, %v1509
        %1511 = vmatmul.bf16.gmra.mxu0 %v887
        %v1512 = vpop.f32.mrf.mxu0
        %v1513 = vadd.f32 %v484, %v1512
        %v1514 = vpop.f32.mrf.mxu0
        %v1515 = vadd.f32 %v489, %v1514
        %1516 = vmatmul.bf16.gmra.mxu0 %v890
        %v1517 = vpop.f32.mrf.mxu0
        %v1518 = vadd.f32 %v494, %v1517
        %v1519 = vpop.f32.mrf.mxu0
        %v1520 = vadd.f32 %v499, %v1519
        %1521 = vmatmul.bf16.gmra.mxu0 %v893
        %v1522 = vpop.f32.mrf.mxu0
        %v1523 = vadd.f32 %v504, %v1522
        %v1524 = vpop.f32.mrf.mxu0
        %v1525 = vadd.f32 %v509, %v1524
        %1526 = vmatmul.bf16.gmra.mxu0 %v896
        %v1527 = vpop.f32.mrf.mxu0
        %v1528 = vadd.f32 %v514, %v1527
        %v1529 = vpop.f32.mrf.mxu0
        %v1530 = vadd.f32 %v519, %v1529
        %1531 = vmatmul.bf16.gmra.mxu0 %v899
        %v1532 = vpop.f32.mrf.mxu0
        %v1533 = vadd.f32 %v524, %v1532
        %v1534 = vpop.f32.mrf.mxu0
        %v1535 = vadd.f32 %v529, %v1534
        %1536 = vmatmul.bf16.gmra.mxu0 %v902
        %v1537 = vpop.f32.mrf.mxu0
        %v1538 = vadd.f32 %v534, %v1537
        %v1539 = vpop.f32.mrf.mxu0
        %v1540 = vadd.f32 %v539, %v1539
        %1541 = vmatmul.bf16.gmra.mxu0 %v905
        %v1542 = vpop.f32.mrf.mxu0
        %v1543 = vadd.f32 %v544, %v1542
        %v1544 = vpop.f32.mrf.mxu0
        %v1545 = vadd.f32 %v549, %v1544
        %1546 = vmatmul.bf16.gmra.mxu0 %v908
        %v1547 = vpop.f32.mrf.mxu0
        %v1548 = vadd.f32 %v554, %v1547
        %v1549 = vpop.f32.mrf.mxu0
        %v1550 = vadd.f32 %v559, %v1549
        %1551 = vmatmul.bf16.gmra.mxu0 %v911
        %v1552 = vpop.f32.mrf.mxu0
        %v1553 = vadd.f32 %v564, %v1552
        %v1554 = vpop.f32.mrf.mxu0
        %v1555 = vadd.f32 %v569, %v1554
        %1556 = vmatmul.bf16.gmra.mxu0 %v914
        %v1557 = vpop.f32.mrf.mxu0
        %v1558 = vadd.f32 %v574, %v1557
        %v1559 = vpop.f32.mrf.mxu0
        %v1560 = vadd.f32 %v579, %v1559
        %1561 = vmatmul.bf16.gmra.mxu0 %v917
        %v1562 = vpop.f32.mrf.mxu0
        %v1563 = vadd.f32 %v584, %v1562
        %v1564 = vpop.f32.mrf.mxu0
        %v1565 = vadd.f32 %v589, %v1564
        %1566 = vmatmul.bf16.gmra.mxu0 %v920
        %v1567 = vpop.f32.mrf.mxu0
        %v1568 = vadd.f32 %v594, %v1567
        %v1569 = vpop.f32.mrf.mxu0
        %v1570 = vadd.f32 %v599, %v1569
        %1571 = vmatmul.bf16.gmra.mxu0 %v923
        %v1572 = vpop.f32.mrf.mxu0
        %v1573 = vadd.f32 %v604, %v1572
        %v1574 = vpop.f32.mrf.mxu0
        %v1575 = vadd.f32 %v609, %v1574
        %1576 = vdwg.mxu0
        %1577 = vmatpush.bf16.msra.mxu0 0
        %1578 = vmatpush.bf16.msra.mxu0 0
        %1579 = vmatpush.bf16.msra.mxu0 0
        %1580 = vmatpush.bf16.msra.mxu0 0
        %1581 = vmatpush.bf16.msra.mxu0 %v945
        %1582 = vmatpush.bf16.msra.mxu0 %v828
        %1583 = vmatpush.bf16.msra.mxu0 %v819
        %1584 = vmatpush.bf16.msra.mxu0 %v810
        %1585 = vmatmul.bf16.gmra.mxu0 %v869
        %v1586 = vpop.f32.mrf.mxu0
        %v1587 = vadd.f32 %v424, %v1586
        %v1588 = vpop.f32.mrf.mxu0
        %v1589 = vadd.f32 %v429, %v1588
        %1590 = vmatmul.bf16.gmra.mxu0 %v872
        %v1591 = vpop.f32.mrf.mxu0
        %v1592 = vadd.f32 %v434, %v1591
        %v1593 = vpop.f32.mrf.mxu0
        %v1594 = vadd.f32 %v439, %v1593
        %1595 = vmatmul.bf16.gmra.mxu0 %v875
        %v1596 = vpop.f32.mrf.mxu0
        %v1597 = vadd.f32 %v444, %v1596
        %v1598 = vpop.f32.mrf.mxu0
        %v1599 = vadd.f32 %v449, %v1598
        %1600 = vmatmul.bf16.gmra.mxu0 %v878
        %v1601 = vpop.f32.mrf.mxu0
        %v1602 = vadd.f32 %v454, %v1601
        %v1603 = vpop.f32.mrf.mxu0
        %v1604 = vadd.f32 %v459, %v1603
        %1605 = vmatmul.bf16.gmra.mxu0 %v881
        %v1606 = vpop.f32.mrf.mxu0
        %v1607 = vadd.f32 %v464, %v1606
        %v1608 = vpop.f32.mrf.mxu0
        %v1609 = vadd.f32 %v469, %v1608
        %1610 = vmatmul.bf16.gmra.mxu0 %v884
        %v1611 = vpop.f32.mrf.mxu0
        %v1612 = vadd.f32 %v474, %v1611
        %v1613 = vpop.f32.mrf.mxu0
        %v1614 = vadd.f32 %v479, %v1613
        %1615 = vmatmul.bf16.gmra.mxu0 %v887
        %v1616 = vpop.f32.mrf.mxu0
        %v1617 = vadd.f32 %v484, %v1616
        %v1618 = vpop.f32.mrf.mxu0
        %v1619 = vadd.f32 %v489, %v1618
        %1620 = vmatmul.bf16.gmra.mxu0 %v890
        %v1621 = vpop.f32.mrf.mxu0
        %v1622 = vadd.f32 %v494, %v1621
        %v1623 = vpop.f32.mrf.mxu0
        %v1624 = vadd.f32 %v499, %v1623
        %1625 = vmatmul.bf16.gmra.mxu0 %v893
        %v1626 = vpop.f32.mrf.mxu0
        %v1627 = vadd.f32 %v504, %v1626
        %v1628 = vpop.f32.mrf.mxu0
        %v1629 = vadd.f32 %v509, %v1628
        %1630 = vmatmul.bf16.gmra.mxu0 %v896
        %v1631 = vpop.f32.mrf.mxu0
        %v1632 = vadd.f32 %v514, %v1631
        %v1633 = vpop.f32.mrf.mxu0
        %v1634 = vadd.f32 %v519, %v1633
        %1635 = vmatmul.bf16.gmra.mxu0 %v899
        %v1636 = vpop.f32.mrf.mxu0
        %v1637 = vadd.f32 %v524, %v1636
        %v1638 = vpop.f32.mrf.mxu0
        %v1639 = vadd.f32 %v529, %v1638
        %1640 = vmatmul.bf16.gmra.mxu0 %v902
        %v1641 = vpop.f32.mrf.mxu0
        %v1642 = vadd.f32 %v534, %v1641
        %v1643 = vpop.f32.mrf.mxu0
        %v1644 = vadd.f32 %v539, %v1643
        %1645 = vmatmul.bf16.gmra.mxu0 %v905
        %v1646 = vpop.f32.mrf.mxu0
        %v1647 = vadd.f32 %v544, %v1646
        %v1648 = vpop.f32.mrf.mxu0
        %v1649 = vadd.f32 %v549, %v1648
        %1650 = vmatmul.bf16.gmra.mxu0 %v908
        %v1651 = vpop.f32.mrf.mxu0
        %v1652 = vadd.f32 %v554, %v1651
        %v1653 = vpop.f32.mrf.mxu0
        %v1654 = vadd.f32 %v559, %v1653
        %1655 = vmatmul.bf16.gmra.mxu0 %v911
        %v1656 = vpop.f32.mrf.mxu0
        %v1657 = vadd.f32 %v564, %v1656
        %v1658 = vpop.f32.mrf.mxu0
        %v1659 = vadd.f32 %v569, %v1658
        %1660 = vmatmul.bf16.gmra.mxu0 %v914
        %v1661 = vpop.f32.mrf.mxu0
        %v1662 = vadd.f32 %v574, %v1661
        %v1663 = vpop.f32.mrf.mxu0
        %v1664 = vadd.f32 %v579, %v1663
        %1665 = vmatmul.bf16.gmra.mxu0 %v917
        %v1666 = vpop.f32.mrf.mxu0
        %v1667 = vadd.f32 %v584, %v1666
        %v1668 = vpop.f32.mrf.mxu0
        %v1669 = vadd.f32 %v589, %v1668
        %1670 = vmatmul.bf16.gmra.mxu0 %v920
        %v1671 = vpop.f32.mrf.mxu0
        %v1672 = vadd.f32 %v594, %v1671
        %v1673 = vpop.f32.mrf.mxu0
        %v1674 = vadd.f32 %v599, %v1673
        %1675 = vmatmul.bf16.gmra.mxu0 %v923
        %v1676 = vpop.f32.mrf.mxu0
        %v1677 = vadd.f32 %v604, %v1676
        %v1678 = vpop.f32.mrf.mxu0
        %v1679 = vadd.f32 %v609, %v1678
        %1680 = vdwg.mxu0
        %1681 = vmatpush.bf16.msra.mxu0 0
        %1682 = vmatpush.bf16.msra.mxu0 0
        %1683 = vmatpush.bf16.msra.mxu0 0
        %1684 = vmatpush.bf16.msra.mxu0 0
        %1685 = vmatpush.bf16.msra.mxu0 %v948
        %1686 = vmatpush.bf16.msra.mxu0 %v829
        %1687 = vmatpush.bf16.msra.mxu0 %v820
        %1688 = vmatpush.bf16.msra.mxu0 %v811
        %1689 = vmatmul.bf16.gmra.mxu0 %v869
        %v1690 = vpop.f32.mrf.mxu0
        %v1691 = vadd.f32 %v424, %v1690
        %v1692 = vpop.f32.mrf.mxu0
        %v1693 = vadd.f32 %v429, %v1692
        %1694 = vmatmul.bf16.gmra.mxu0 %v872
        %v1695 = vpop.f32.mrf.mxu0
        %v1696 = vadd.f32 %v434, %v1695
        %v1697 = vpop.f32.mrf.mxu0
        %v1698 = vadd.f32 %v439, %v1697
        %1699 = vmatmul.bf16.gmra.mxu0 %v875
        %v1700 = vpop.f32.mrf.mxu0
        %v1701 = vadd.f32 %v444, %v1700
        %v1702 = vpop.f32.mrf.mxu0
        %v1703 = vadd.f32 %v449, %v1702
        %1704 = vmatmul.bf16.gmra.mxu0 %v878
        %v1705 = vpop.f32.mrf.mxu0
        %v1706 = vadd.f32 %v454, %v1705
        %v1707 = vpop.f32.mrf.mxu0
        %v1708 = vadd.f32 %v459, %v1707
        %1709 = vmatmul.bf16.gmra.mxu0 %v881
        %v1710 = vpop.f32.mrf.mxu0
        %v1711 = vadd.f32 %v464, %v1710
        %v1712 = vpop.f32.mrf.mxu0
        %v1713 = vadd.f32 %v469, %v1712
        %1714 = vmatmul.bf16.gmra.mxu0 %v884
        %v1715 = vpop.f32.mrf.mxu0
        %v1716 = vadd.f32 %v474, %v1715
        %v1717 = vpop.f32.mrf.mxu0
        %v1718 = vadd.f32 %v479, %v1717
        %1719 = vmatmul.bf16.gmra.mxu0 %v887
        %v1720 = vpop.f32.mrf.mxu0
        %v1721 = vadd.f32 %v484, %v1720
        %v1722 = vpop.f32.mrf.mxu0
        %v1723 = vadd.f32 %v489, %v1722
        %1724 = vmatmul.bf16.gmra.mxu0 %v890
        %v1725 = vpop.f32.mrf.mxu0
        %v1726 = vadd.f32 %v494, %v1725
        %v1727 = vpop.f32.mrf.mxu0
        %v1728 = vadd.f32 %v499, %v1727
        %1729 = vmatmul.bf16.gmra.mxu0 %v893
        %v1730 = vpop.f32.mrf.mxu0
        %v1731 = vadd.f32 %v504, %v1730
        %v1732 = vpop.f32.mrf.mxu0
        %v1733 = vadd.f32 %v509, %v1732
        %1734 = vmatmul.bf16.gmra.mxu0 %v896
        %v1735 = vpop.f32.mrf.mxu0
        %v1736 = vadd.f32 %v514, %v1735
        %v1737 = vpop.f32.mrf.mxu0
        %v1738 = vadd.f32 %v519, %v1737
        %1739 = vmatmul.bf16.gmra.mxu0 %v899
        %v1740 = vpop.f32.mrf.mxu0
        %v1741 = vadd.f32 %v524, %v1740
        %v1742 = vpop.f32.mrf.mxu0
        %v1743 = vadd.f32 %v529, %v1742
        %1744 = vmatmul.bf16.gmra.mxu0 %v902
        %v1745 = vpop.f32.mrf.mxu0
        %v1746 = vadd.f32 %v534, %v1745
        %v1747 = vpop.f32.mrf.mxu0
        %v1748 = vadd.f32 %v539, %v1747
        %1749 = vmatmul.bf16.gmra.mxu0 %v905
        %v1750 = vpop.f32.mrf.mxu0
        %v1751 = vadd.f32 %v544, %v1750
        %v1752 = vpop.f32.mrf.mxu0
        %v1753 = vadd.f32 %v549, %v1752
        %1754 = vmatmul.bf16.gmra.mxu0 %v908
        %v1755 = vpop.f32.mrf.mxu0
        %v1756 = vadd.f32 %v554, %v1755
        %v1757 = vpop.f32.mrf.mxu0
        %v1758 = vadd.f32 %v559, %v1757
        %1759 = vmatmul.bf16.gmra.mxu0 %v911
        %v1760 = vpop.f32.mrf.mxu0
        %v1761 = vadd.f32 %v564, %v1760
        %v1762 = vpop.f32.mrf.mxu0
        %v1763 = vadd.f32 %v569, %v1762
        %1764 = vmatmul.bf16.gmra.mxu0 %v914
        %v1765 = vpop.f32.mrf.mxu0
        %v1766 = vadd.f32 %v574, %v1765
        %v1767 = vpop.f32.mrf.mxu0
        %v1768 = vadd.f32 %v579, %v1767
        %1769 = vmatmul.bf16.gmra.mxu0 %v917
        %v1770 = vpop.f32.mrf.mxu0
        %v1771 = vadd.f32 %v584, %v1770
        %v1772 = vpop.f32.mrf.mxu0
        %v1773 = vadd.f32 %v589, %v1772
        %1774 = vmatmul.bf16.gmra.mxu0 %v920
        %v1775 = vpop.f32.mrf.mxu0
        %v1776 = vadd.f32 %v594, %v1775
        %v1777 = vpop.f32.mrf.mxu0
        %v1778 = vadd.f32 %v599, %v1777
        %1779 = vmatmul.bf16.gmra.mxu0 %v923
        %v1780 = vpop.f32.mrf.mxu0
        %v1781 = vadd.f32 %v604, %v1780
        %v1782 = vpop.f32.mrf.mxu0
        %v1783 = vadd.f32 %v609, %v1782
        %1784 = vdwg.mxu0
        %1785 = vmatpush.bf16.msra.mxu0 0
        %1786 = vmatpush.bf16.msra.mxu0 0
        %1787 = vmatpush.bf16.msra.mxu0 0
        %1788 = vmatpush.bf16.msra.mxu0 0
        %1789 = vmatpush.bf16.msra.mxu0 %v951
        %1790 = vmatpush.bf16.msra.mxu0 %v830
        %1791 = vmatpush.bf16.msra.mxu0 %v821
        %1792 = vmatpush.bf16.msra.mxu0 %v812
        %1793 = vmatmul.bf16.gmra.mxu0 %v869
        %v1794 = vpop.f32.mrf.mxu0
        %v1795 = vadd.f32 %v424, %v1794
        %v1796 = vpop.f32.mrf.mxu0
        %v1797 = vadd.f32 %v429, %v1796
        %1798 = vmatmul.bf16.gmra.mxu0 %v872
        %v1799 = vpop.f32.mrf.mxu0
        %v1800 = vadd.f32 %v434, %v1799
        %v1801 = vpop.f32.mrf.mxu0
        %v1802 = vadd.f32 %v439, %v1801
        %1803 = vmatmul.bf16.gmra.mxu0 %v875
        %v1804 = vpop.f32.mrf.mxu0
        %v1805 = vadd.f32 %v444, %v1804
        %v1806 = vpop.f32.mrf.mxu0
        %v1807 = vadd.f32 %v449, %v1806
        %1808 = vmatmul.bf16.gmra.mxu0 %v878
        %v1809 = vpop.f32.mrf.mxu0
        %v1810 = vadd.f32 %v454, %v1809
        %v1811 = vpop.f32.mrf.mxu0
        %v1812 = vadd.f32 %v459, %v1811
        %1813 = vmatmul.bf16.gmra.mxu0 %v881
        %v1814 = vpop.f32.mrf.mxu0
        %v1815 = vadd.f32 %v464, %v1814
        %v1816 = vpop.f32.mrf.mxu0
        %v1817 = vadd.f32 %v469, %v1816
        %1818 = vmatmul.bf16.gmra.mxu0 %v884
        %v1819 = vpop.f32.mrf.mxu0
        %v1820 = vadd.f32 %v474, %v1819
        %v1821 = vpop.f32.mrf.mxu0
        %v1822 = vadd.f32 %v479, %v1821
        %1823 = vmatmul.bf16.gmra.mxu0 %v887
        %v1824 = vpop.f32.mrf.mxu0
        %v1825 = vadd.f32 %v484, %v1824
        %v1826 = vpop.f32.mrf.mxu0
        %v1827 = vadd.f32 %v489, %v1826
        %1828 = vmatmul.bf16.gmra.mxu0 %v890
        %v1829 = vpop.f32.mrf.mxu0
        %v1830 = vadd.f32 %v494, %v1829
        %v1831 = vpop.f32.mrf.mxu0
        %v1832 = vadd.f32 %v499, %v1831
        %1833 = vmatmul.bf16.gmra.mxu0 %v893
        %v1834 = vpop.f32.mrf.mxu0
        %v1835 = vadd.f32 %v504, %v1834
        %v1836 = vpop.f32.mrf.mxu0
        %v1837 = vadd.f32 %v509, %v1836
        %1838 = vmatmul.bf16.gmra.mxu0 %v896
        %v1839 = vpop.f32.mrf.mxu0
        %v1840 = vadd.f32 %v514, %v1839
        %v1841 = vpop.f32.mrf.mxu0
        %v1842 = vadd.f32 %v519, %v1841
        %1843 = vmatmul.bf16.gmra.mxu0 %v899
        %v1844 = vpop.f32.mrf.mxu0
        %v1845 = vadd.f32 %v524, %v1844
        %v1846 = vpop.f32.mrf.mxu0
        %v1847 = vadd.f32 %v529, %v1846
        %1848 = vmatmul.bf16.gmra.mxu0 %v902
        %v1849 = vpop.f32.mrf.mxu0
        %v1850 = vadd.f32 %v534, %v1849
        %v1851 = vpop.f32.mrf.mxu0
        %v1852 = vadd.f32 %v539, %v1851
        %1853 = vmatmul.bf16.gmra.mxu0 %v905
        %v1854 = vpop.f32.mrf.mxu0
        %v1855 = vadd.f32 %v544, %v1854
        %v1856 = vpop.f32.mrf.mxu0
        %v1857 = vadd.f32 %v549, %v1856
        %1858 = vmatmul.bf16.gmra.mxu0 %v908
        %v1859 = vpop.f32.mrf.mxu0
        %v1860 = vadd.f32 %v554, %v1859
        %v1861 = vpop.f32.mrf.mxu0
        %v1862 = vadd.f32 %v559, %v1861
        %1863 = vmatmul.bf16.gmra.mxu0 %v911
        %v1864 = vpop.f32.mrf.mxu0
        %v1865 = vadd.f32 %v564, %v1864
        %v1866 = vpop.f32.mrf.mxu0
        %v1867 = vadd.f32 %v569, %v1866
        %1868 = vmatmul.bf16.gmra.mxu0 %v914
        %v1869 = vpop.f32.mrf.mxu0
        %v1870 = vadd.f32 %v574, %v1869
        %v1871 = vpop.f32.mrf.mxu0
        %v1872 = vadd.f32 %v579, %v1871
        %1873 = vmatmul.bf16.gmra.mxu0 %v917
        %v1874 = vpop.f32.mrf.mxu0
        %v1875 = vadd.f32 %v584, %v1874
        %v1876 = vpop.f32.mrf.mxu0
        %v1877 = vadd.f32 %v589, %v1876
        %1878 = vmatmul.bf16.gmra.mxu0 %v920
        %v1879 = vpop.f32.mrf.mxu0
        %v1880 = vadd.f32 %v594, %v1879
        %v1881 = vpop.f32.mrf.mxu0
        %v1882 = vadd.f32 %v599, %v1881
        %1883 = vmatmul.bf16.gmra.mxu0 %v923
        %v1884 = vpop.f32.mrf.mxu0
        %v1885 = vadd.f32 %v604, %v1884
        %v1886 = vpop.f32.mrf.mxu0
        %v1887 = vadd.f32 %v609, %v1886
        %1888 = vdwg.mxu0
        %vm1889 = vcmp.ge.f32.partialorder %v963, 0.0
        %vm1890 = vcmp.ge.f32.partialorder %v1067, 0.0
        %vm1891 = vcmp.ge.f32.partialorder %v1171, 0.0
        %vm1892 = vcmp.ge.f32.partialorder %v1275, 0.0
        %vm1893 = vcmp.ge.f32.partialorder %v1379, 0.0
        %vm1894 = vcmp.ge.f32.partialorder %v1483, 0.0
        %vm1895 = vcmp.ge.f32.partialorder %v1587, 0.0
        %vm1896 = vcmp.ge.f32.partialorder %v1691, 0.0
        %vm1897 = vcmp.ge.f32.partialorder %v1795, 0.0
        %vm1898 = vcmp.ge.f32.partialorder %v965, 0.0
        %vm1899 = vcmp.ge.f32.partialorder %v1069, 0.0
        %vm1900 = vcmp.ge.f32.partialorder %v1173, 0.0
        %vm1901 = vcmp.ge.f32.partialorder %v1277, 0.0
        %vm1902 = vcmp.ge.f32.partialorder %v1381, 0.0
        %vm1903 = vcmp.ge.f32.partialorder %v1485, 0.0
        %vm1904 = vcmp.ge.f32.partialorder %v1589, 0.0
        %vm1905 = vcmp.ge.f32.partialorder %v1693, 0.0
        %vm1906 = vcmp.ge.f32.partialorder %v1797, 0.0
        %vm1907 = vcmp.ge.f32.partialorder %v968, 0.0
        %vm1908 = vcmp.ge.f32.partialorder %v1072, 0.0
        %vm1909 = vcmp.ge.f32.partialorder %v1176, 0.0
        %vm1910 = vcmp.ge.f32.partialorder %v1280, 0.0
        %vm1911 = vcmp.ge.f32.partialorder %v1384, 0.0
        %vm1912 = vcmp.ge.f32.partialorder %v1488, 0.0
        %vm1913 = vcmp.ge.f32.partialorder %v1592, 0.0
        %vm1914 = vcmp.ge.f32.partialorder %v1696, 0.0
        %vm1915 = vcmp.ge.f32.partialorder %v1800, 0.0
        %vm1916 = vcmp.ge.f32.partialorder %v970, 0.0
        %vm1917 = vcmp.ge.f32.partialorder %v1074, 0.0
        %vm1918 = vcmp.ge.f32.partialorder %v1178, 0.0
        %vm1919 = vcmp.ge.f32.partialorder %v1282, 0.0
        %vm1920 = vcmp.ge.f32.partialorder %v1386, 0.0
        %vm1921 = vcmp.ge.f32.partialorder %v1490, 0.0
        %vm1922 = vcmp.ge.f32.partialorder %v1594, 0.0
        %vm1923 = vcmp.ge.f32.partialorder %v1698, 0.0
        %vm1924 = vcmp.ge.f32.partialorder %v1802, 0.0
        %vm1925 = vcmp.ge.f32.partialorder %v973, 0.0
        %vm1926 = vcmp.ge.f32.partialorder %v1077, 0.0
        %vm1927 = vcmp.ge.f32.partialorder %v1181, 0.0
        %vm1928 = vcmp.ge.f32.partialorder %v1285, 0.0
        %vm1929 = vcmp.ge.f32.partialorder %v1389, 0.0
        %vm1930 = vcmp.ge.f32.partialorder %v1493, 0.0
        %vm1931 = vcmp.ge.f32.partialorder %v1597, 0.0
        %vm1932 = vcmp.ge.f32.partialorder %v1701, 0.0
        %vm1933 = vcmp.ge.f32.partialorder %v1805, 0.0
        %vm1934 = vcmp.ge.f32.partialorder %v975, 0.0
        %vm1935 = vcmp.ge.f32.partialorder %v1079, 0.0
        %vm1936 = vcmp.ge.f32.partialorder %v1183, 0.0
        %vm1937 = vcmp.ge.f32.partialorder %v1287, 0.0
        %vm1938 = vcmp.ge.f32.partialorder %v1391, 0.0
        %vm1939 = vcmp.ge.f32.partialorder %v1495, 0.0
        %vm1940 = vcmp.ge.f32.partialorder %v1599, 0.0
        %vm1941 = vcmp.ge.f32.partialorder %v1703, 0.0
        %vm1942 = vcmp.ge.f32.partialorder %v1807, 0.0
        %vm1943 = vcmp.ge.f32.partialorder %v978, 0.0
        %vm1944 = vcmp.ge.f32.partialorder %v1082, 0.0
        %vm1945 = vcmp.ge.f32.partialorder %v1186, 0.0
        %vm1946 = vcmp.ge.f32.partialorder %v1290, 0.0
        %vm1947 = vcmp.ge.f32.partialorder %v1394, 0.0
        %vm1948 = vcmp.ge.f32.partialorder %v1498, 0.0
        %vm1949 = vcmp.ge.f32.partialorder %v1602, 0.0
        %vm1950 = vcmp.ge.f32.partialorder %v1706, 0.0
        %vm1951 = vcmp.ge.f32.partialorder %v1810, 0.0
        %vm1952 = vcmp.ge.f32.partialorder %v980, 0.0
        %vm1953 = vcmp.ge.f32.partialorder %v1084, 0.0
        %vm1954 = vcmp.ge.f32.partialorder %v1188, 0.0
        %vm1955 = vcmp.ge.f32.partialorder %v1292, 0.0
        %vm1956 = vcmp.ge.f32.partialorder %v1396, 0.0
        %vm1957 = vcmp.ge.f32.partialorder %v1500, 0.0
        %vm1958 = vcmp.ge.f32.partialorder %v1604, 0.0
        %vm1959 = vcmp.ge.f32.partialorder %v1708, 0.0
        %vm1960 = vcmp.ge.f32.partialorder %v1812, 0.0
        %vm1961 = vcmp.ge.f32.partialorder %v983, 0.0
        %vm1962 = vcmp.ge.f32.partialorder %v1087, 0.0
        %vm1963 = vcmp.ge.f32.partialorder %v1191, 0.0
        %vm1964 = vcmp.ge.f32.partialorder %v1295, 0.0
        %vm1965 = vcmp.ge.f32.partialorder %v1399, 0.0
        %vm1966 = vcmp.ge.f32.partialorder %v1503, 0.0
        %vm1967 = vcmp.ge.f32.partialorder %v1607, 0.0
        %vm1968 = vcmp.ge.f32.partialorder %v1711, 0.0
        %vm1969 = vcmp.ge.f32.partialorder %v1815, 0.0
        %vm1970 = vcmp.ge.f32.partialorder %v985, 0.0
        %vm1971 = vcmp.ge.f32.partialorder %v1089, 0.0
        %vm1972 = vcmp.ge.f32.partialorder %v1193, 0.0
        %vm1973 = vcmp.ge.f32.partialorder %v1297, 0.0
        %vm1974 = vcmp.ge.f32.partialorder %v1401, 0.0
        %vm1975 = vcmp.ge.f32.partialorder %v1505, 0.0
        %vm1976 = vcmp.ge.f32.partialorder %v1609, 0.0
        %vm1977 = vcmp.ge.f32.partialorder %v1713, 0.0
        %vm1978 = vcmp.ge.f32.partialorder %v1817, 0.0
        %vm1979 = vcmp.ge.f32.partialorder %v988, 0.0
        %vm1980 = vcmp.ge.f32.partialorder %v1092, 0.0
        %vm1981 = vcmp.ge.f32.partialorder %v1196, 0.0
        %vm1982 = vcmp.ge.f32.partialorder %v1300, 0.0
        %vm1983 = vcmp.ge.f32.partialorder %v1404, 0.0
        %vm1984 = vcmp.ge.f32.partialorder %v1508, 0.0
        %vm1985 = vcmp.ge.f32.partialorder %v1612, 0.0
        %vm1986 = vcmp.ge.f32.partialorder %v1716, 0.0
        %vm1987 = vcmp.ge.f32.partialorder %v1820, 0.0
        %vm1988 = vcmp.ge.f32.partialorder %v990, 0.0
        %vm1989 = vcmp.ge.f32.partialorder %v1094, 0.0
        %vm1990 = vcmp.ge.f32.partialorder %v1198, 0.0
        %vm1991 = vcmp.ge.f32.partialorder %v1302, 0.0
        %vm1992 = vcmp.ge.f32.partialorder %v1406, 0.0
        %vm1993 = vcmp.ge.f32.partialorder %v1510, 0.0
        %vm1994 = vcmp.ge.f32.partialorder %v1614, 0.0
        %vm1995 = vcmp.ge.f32.partialorder %v1718, 0.0
        %vm1996 = vcmp.ge.f32.partialorder %v1822, 0.0
        %vm1997 = vcmp.ge.f32.partialorder %v993, 0.0
        %vm1998 = vcmp.ge.f32.partialorder %v1097, 0.0
        %vm1999 = vcmp.ge.f32.partialorder %v1201, 0.0
        %vm2000 = vcmp.ge.f32.partialorder %v1305, 0.0
        %vm2001 = vcmp.ge.f32.partialorder %v1409, 0.0
        %vm2002 = vcmp.ge.f32.partialorder %v1513, 0.0
        %vm2003 = vcmp.ge.f32.partialorder %v1617, 0.0
        %vm2004 = vcmp.ge.f32.partialorder %v1721, 0.0
        %vm2005 = vcmp.ge.f32.partialorder %v1825, 0.0
        %vm2006 = vcmp.ge.f32.partialorder %v995, 0.0
        %vm2007 = vcmp.ge.f32.partialorder %v1099, 0.0
        %vm2008 = vcmp.ge.f32.partialorder %v1203, 0.0
        %vm2009 = vcmp.ge.f32.partialorder %v1307, 0.0
        %vm2010 = vcmp.ge.f32.partialorder %v1411, 0.0
        %vm2011 = vcmp.ge.f32.partialorder %v1515, 0.0
        %vm2012 = vcmp.ge.f32.partialorder %v1619, 0.0
        %vm2013 = vcmp.ge.f32.partialorder %v1723, 0.0
        %vm2014 = vcmp.ge.f32.partialorder %v1827, 0.0
        %vm2015 = vcmp.ge.f32.partialorder %v998, 0.0
        %vm2016 = vcmp.ge.f32.partialorder %v1102, 0.0
        %vm2017 = vcmp.ge.f32.partialorder %v1206, 0.0
        %vm2018 = vcmp.ge.f32.partialorder %v1310, 0.0
        %vm2019 = vcmp.ge.f32.partialorder %v1414, 0.0
        %vm2020 = vcmp.ge.f32.partialorder %v1518, 0.0
        %vm2021 = vcmp.ge.f32.partialorder %v1622, 0.0
        %vm2022 = vcmp.ge.f32.partialorder %v1726, 0.0
        %vm2023 = vcmp.ge.f32.partialorder %v1830, 0.0
        %vm2024 = vcmp.ge.f32.partialorder %v1000, 0.0
        %vm2025 = vcmp.ge.f32.partialorder %v1104, 0.0
        %vm2026 = vcmp.ge.f32.partialorder %v1208, 0.0
        %vm2027 = vcmp.ge.f32.partialorder %v1312, 0.0
        %vm2028 = vcmp.ge.f32.partialorder %v1416, 0.0
        %vm2029 = vcmp.ge.f32.partialorder %v1520, 0.0
        %vm2030 = vcmp.ge.f32.partialorder %v1624, 0.0
        %vm2031 = vcmp.ge.f32.partialorder %v1728, 0.0
        %vm2032 = vcmp.ge.f32.partialorder %v1832, 0.0
        %vm2033 = vcmp.ge.f32.partialorder %v1003, 0.0
        %vm2034 = vcmp.ge.f32.partialorder %v1107, 0.0
        %vm2035 = vcmp.ge.f32.partialorder %v1211, 0.0
        %vm2036 = vcmp.ge.f32.partialorder %v1315, 0.0
        %vm2037 = vcmp.ge.f32.partialorder %v1419, 0.0
        %vm2038 = vcmp.ge.f32.partialorder %v1523, 0.0
        %vm2039 = vcmp.ge.f32.partialorder %v1627, 0.0
        %vm2040 = vcmp.ge.f32.partialorder %v1731, 0.0
        %vm2041 = vcmp.ge.f32.partialorder %v1835, 0.0
        %vm2042 = vcmp.ge.f32.partialorder %v1005, 0.0
        %vm2043 = vcmp.ge.f32.partialorder %v1109, 0.0
        %vm2044 = vcmp.ge.f32.partialorder %v1213, 0.0
        %vm2045 = vcmp.ge.f32.partialorder %v1317, 0.0
        %vm2046 = vcmp.ge.f32.partialorder %v1421, 0.0
        %vm2047 = vcmp.ge.f32.partialorder %v1525, 0.0
        %vm2048 = vcmp.ge.f32.partialorder %v1629, 0.0
        %vm2049 = vcmp.ge.f32.partialorder %v1733, 0.0
        %vm2050 = vcmp.ge.f32.partialorder %v1837, 0.0
        %vm2051 = vcmp.ge.f32.partialorder %v1008, 0.0
        %vm2052 = vcmp.ge.f32.partialorder %v1112, 0.0
        %vm2053 = vcmp.ge.f32.partialorder %v1216, 0.0
        %vm2054 = vcmp.ge.f32.partialorder %v1320, 0.0
        %vm2055 = vcmp.ge.f32.partialorder %v1424, 0.0
        %vm2056 = vcmp.ge.f32.partialorder %v1528, 0.0
        %vm2057 = vcmp.ge.f32.partialorder %v1632, 0.0
        %vm2058 = vcmp.ge.f32.partialorder %v1736, 0.0
        %vm2059 = vcmp.ge.f32.partialorder %v1840, 0.0
        %vm2060 = vcmp.ge.f32.partialorder %v1010, 0.0
        %vm2061 = vcmp.ge.f32.partialorder %v1114, 0.0
        %vm2062 = vcmp.ge.f32.partialorder %v1218, 0.0
        %vm2063 = vcmp.ge.f32.partialorder %v1322, 0.0
        %vm2064 = vcmp.ge.f32.partialorder %v1426, 0.0
        %vm2065 = vcmp.ge.f32.partialorder %v1530, 0.0
        %vm2066 = vcmp.ge.f32.partialorder %v1634, 0.0
        %vm2067 = vcmp.ge.f32.partialorder %v1738, 0.0
        %vm2068 = vcmp.ge.f32.partialorder %v1842, 0.0
        %vm2069 = vcmp.ge.f32.partialorder %v1013, 0.0
        %vm2070 = vcmp.ge.f32.partialorder %v1117, 0.0
        %vm2071 = vcmp.ge.f32.partialorder %v1221, 0.0
        %vm2072 = vcmp.ge.f32.partialorder %v1325, 0.0
        %vm2073 = vcmp.ge.f32.partialorder %v1429, 0.0
        %vm2074 = vcmp.ge.f32.partialorder %v1533, 0.0
        %vm2075 = vcmp.ge.f32.partialorder %v1637, 0.0
        %vm2076 = vcmp.ge.f32.partialorder %v1741, 0.0
        %vm2077 = vcmp.ge.f32.partialorder %v1845, 0.0
        %vm2078 = vcmp.ge.f32.partialorder %v1015, 0.0
        %vm2079 = vcmp.ge.f32.partialorder %v1119, 0.0
        %vm2080 = vcmp.ge.f32.partialorder %v1223, 0.0
        %vm2081 = vcmp.ge.f32.partialorder %v1327, 0.0
        %vm2082 = vcmp.ge.f32.partialorder %v1431, 0.0
        %vm2083 = vcmp.ge.f32.partialorder %v1535, 0.0
        %vm2084 = vcmp.ge.f32.partialorder %v1639, 0.0
        %vm2085 = vcmp.ge.f32.partialorder %v1743, 0.0
        %vm2086 = vcmp.ge.f32.partialorder %v1847, 0.0
        %vm2087 = vcmp.ge.f32.partialorder %v1018, 0.0
        %vm2088 = vcmp.ge.f32.partialorder %v1122, 0.0
        %vm2089 = vcmp.ge.f32.partialorder %v1226, 0.0
        %vm2090 = vcmp.ge.f32.partialorder %v1330, 0.0
        %vm2091 = vcmp.ge.f32.partialorder %v1434, 0.0
        %vm2092 = vcmp.ge.f32.partialorder %v1538, 0.0
        %vm2093 = vcmp.ge.f32.partialorder %v1642, 0.0
        %vm2094 = vcmp.ge.f32.partialorder %v1746, 0.0
        %vm2095 = vcmp.ge.f32.partialorder %v1850, 0.0
        %vm2096 = vcmp.ge.f32.partialorder %v1020, 0.0
        %vm2097 = vcmp.ge.f32.partialorder %v1124, 0.0
        %vm2098 = vcmp.ge.f32.partialorder %v1228, 0.0
        %vm2099 = vcmp.ge.f32.partialorder %v1332, 0.0
        %vm2100 = vcmp.ge.f32.partialorder %v1436, 0.0
        %vm2101 = vcmp.ge.f32.partialorder %v1540, 0.0
        %vm2102 = vcmp.ge.f32.partialorder %v1644, 0.0
        %vm2103 = vcmp.ge.f32.partialorder %v1748, 0.0
        %vm2104 = vcmp.ge.f32.partialorder %v1852, 0.0
        %vm2105 = vcmp.ge.f32.partialorder %v1023, 0.0
        %vm2106 = vcmp.ge.f32.partialorder %v1127, 0.0
        %vm2107 = vcmp.ge.f32.partialorder %v1231, 0.0
        %vm2108 = vcmp.ge.f32.partialorder %v1335, 0.0
        %vm2109 = vcmp.ge.f32.partialorder %v1439, 0.0
        %vm2110 = vcmp.ge.f32.partialorder %v1543, 0.0
        %vm2111 = vcmp.ge.f32.partialorder %v1647, 0.0
        %vm2112 = vcmp.ge.f32.partialorder %v1751, 0.0
        %vm2113 = vcmp.ge.f32.partialorder %v1855, 0.0
        %vm2114 = vcmp.ge.f32.partialorder %v1025, 0.0
        %vm2115 = vcmp.ge.f32.partialorder %v1129, 0.0
        %vm2116 = vcmp.ge.f32.partialorder %v1233, 0.0
        %vm2117 = vcmp.ge.f32.partialorder %v1337, 0.0
        %vm2118 = vcmp.ge.f32.partialorder %v1441, 0.0
        %vm2119 = vcmp.ge.f32.partialorder %v1545, 0.0
        %vm2120 = vcmp.ge.f32.partialorder %v1649, 0.0
        %vm2121 = vcmp.ge.f32.partialorder %v1753, 0.0
        %vm2122 = vcmp.ge.f32.partialorder %v1857, 0.0
        %vm2123 = vcmp.ge.f32.partialorder %v1028, 0.0
        %vm2124 = vcmp.ge.f32.partialorder %v1132, 0.0
        %vm2125 = vcmp.ge.f32.partialorder %v1236, 0.0
        %vm2126 = vcmp.ge.f32.partialorder %v1340, 0.0
        %vm2127 = vcmp.ge.f32.partialorder %v1444, 0.0
        %vm2128 = vcmp.ge.f32.partialorder %v1548, 0.0
        %vm2129 = vcmp.ge.f32.partialorder %v1652, 0.0
        %vm2130 = vcmp.ge.f32.partialorder %v1756, 0.0
        %vm2131 = vcmp.ge.f32.partialorder %v1860, 0.0
        %vm2132 = vcmp.ge.f32.partialorder %v1030, 0.0
        %vm2133 = vcmp.ge.f32.partialorder %v1134, 0.0
        %vm2134 = vcmp.ge.f32.partialorder %v1238, 0.0
        %vm2135 = vcmp.ge.f32.partialorder %v1342, 0.0
        %vm2136 = vcmp.ge.f32.partialorder %v1446, 0.0
        %vm2137 = vcmp.ge.f32.partialorder %v1550, 0.0
        %vm2138 = vcmp.ge.f32.partialorder %v1654, 0.0
        %vm2139 = vcmp.ge.f32.partialorder %v1758, 0.0
        %vm2140 = vcmp.ge.f32.partialorder %v1862, 0.0
        %vm2141 = vcmp.ge.f32.partialorder %v1033, 0.0
        %vm2142 = vcmp.ge.f32.partialorder %v1137, 0.0
        %vm2143 = vcmp.ge.f32.partialorder %v1241, 0.0
        %vm2144 = vcmp.ge.f32.partialorder %v1345, 0.0
        %vm2145 = vcmp.ge.f32.partialorder %v1449, 0.0
        %vm2146 = vcmp.ge.f32.partialorder %v1553, 0.0
        %vm2147 = vcmp.ge.f32.partialorder %v1657, 0.0
        %vm2148 = vcmp.ge.f32.partialorder %v1761, 0.0
        %vm2149 = vcmp.ge.f32.partialorder %v1865, 0.0
        %vm2150 = vcmp.ge.f32.partialorder %v1035, 0.0
        %vm2151 = vcmp.ge.f32.partialorder %v1139, 0.0
        %vm2152 = vcmp.ge.f32.partialorder %v1243, 0.0
        %vm2153 = vcmp.ge.f32.partialorder %v1347, 0.0
        %vm2154 = vcmp.ge.f32.partialorder %v1451, 0.0
        %vm2155 = vcmp.ge.f32.partialorder %v1555, 0.0
        %vm2156 = vcmp.ge.f32.partialorder %v1659, 0.0
        %vm2157 = vcmp.ge.f32.partialorder %v1763, 0.0
        %vm2158 = vcmp.ge.f32.partialorder %v1867, 0.0
        %vm2159 = vcmp.ge.f32.partialorder %v1038, 0.0
        %vm2160 = vcmp.ge.f32.partialorder %v1142, 0.0
        %vm2161 = vcmp.ge.f32.partialorder %v1246, 0.0
        %vm2162 = vcmp.ge.f32.partialorder %v1350, 0.0
        %vm2163 = vcmp.ge.f32.partialorder %v1454, 0.0
        %vm2164 = vcmp.ge.f32.partialorder %v1558, 0.0
        %vm2165 = vcmp.ge.f32.partialorder %v1662, 0.0
        %vm2166 = vcmp.ge.f32.partialorder %v1766, 0.0
        %vm2167 = vcmp.ge.f32.partialorder %v1870, 0.0
        %vm2168 = vcmp.ge.f32.partialorder %v1040, 0.0
        %vm2169 = vcmp.ge.f32.partialorder %v1144, 0.0
        %vm2170 = vcmp.ge.f32.partialorder %v1248, 0.0
        %vm2171 = vcmp.ge.f32.partialorder %v1352, 0.0
        %vm2172 = vcmp.ge.f32.partialorder %v1456, 0.0
        %vm2173 = vcmp.ge.f32.partialorder %v1560, 0.0
        %vm2174 = vcmp.ge.f32.partialorder %v1664, 0.0
        %vm2175 = vcmp.ge.f32.partialorder %v1768, 0.0
        %vm2176 = vcmp.ge.f32.partialorder %v1872, 0.0
        %vm2177 = vcmp.ge.f32.partialorder %v1043, 0.0
        %vm2178 = vcmp.ge.f32.partialorder %v1147, 0.0
        %vm2179 = vcmp.ge.f32.partialorder %v1251, 0.0
        %vm2180 = vcmp.ge.f32.partialorder %v1355, 0.0
        %vm2181 = vcmp.ge.f32.partialorder %v1459, 0.0
        %vm2182 = vcmp.ge.f32.partialorder %v1563, 0.0
        %vm2183 = vcmp.ge.f32.partialorder %v1667, 0.0
        %vm2184 = vcmp.ge.f32.partialorder %v1771, 0.0
        %vm2185 = vcmp.ge.f32.partialorder %v1875, 0.0
        %vm2186 = vcmp.ge.f32.partialorder %v1045, 0.0
        %vm2187 = vcmp.ge.f32.partialorder %v1149, 0.0
        %vm2188 = vcmp.ge.f32.partialorder %v1253, 0.0
        %vm2189 = vcmp.ge.f32.partialorder %v1357, 0.0
        %vm2190 = vcmp.ge.f32.partialorder %v1461, 0.0
        %vm2191 = vcmp.ge.f32.partialorder %v1565, 0.0
        %vm2192 = vcmp.ge.f32.partialorder %v1669, 0.0
        %vm2193 = vcmp.ge.f32.partialorder %v1773, 0.0
        %vm2194 = vcmp.ge.f32.partialorder %v1877, 0.0
        %vm2195 = vcmp.ge.f32.partialorder %v1048, 0.0
        %vm2196 = vcmp.ge.f32.partialorder %v1152, 0.0
        %vm2197 = vcmp.ge.f32.partialorder %v1256, 0.0
        %vm2198 = vcmp.ge.f32.partialorder %v1360, 0.0
        %vm2199 = vcmp.ge.f32.partialorder %v1464, 0.0
        %vm2200 = vcmp.ge.f32.partialorder %v1568, 0.0
        %vm2201 = vcmp.ge.f32.partialorder %v1672, 0.0
        %vm2202 = vcmp.ge.f32.partialorder %v1776, 0.0
        %vm2203 = vcmp.ge.f32.partialorder %v1880, 0.0
        %vm2204 = vcmp.ge.f32.partialorder %v1050, 0.0
        %vm2205 = vcmp.ge.f32.partialorder %v1154, 0.0
        %vm2206 = vcmp.ge.f32.partialorder %v1258, 0.0
        %vm2207 = vcmp.ge.f32.partialorder %v1362, 0.0
        %vm2208 = vcmp.ge.f32.partialorder %v1466, 0.0
        %vm2209 = vcmp.ge.f32.partialorder %v1570, 0.0
        %vm2210 = vcmp.ge.f32.partialorder %v1674, 0.0
        %vm2211 = vcmp.ge.f32.partialorder %v1778, 0.0
        %vm2212 = vcmp.ge.f32.partialorder %v1882, 0.0
        %vm2213 = vcmp.ge.f32.partialorder %v1053, 0.0
        %vm2214 = vcmp.ge.f32.partialorder %v1157, 0.0
        %vm2215 = vcmp.ge.f32.partialorder %v1261, 0.0
        %vm2216 = vcmp.ge.f32.partialorder %v1365, 0.0
        %vm2217 = vcmp.ge.f32.partialorder %v1469, 0.0
        %vm2218 = vcmp.ge.f32.partialorder %v1573, 0.0
        %vm2219 = vcmp.ge.f32.partialorder %v1677, 0.0
        %vm2220 = vcmp.ge.f32.partialorder %v1781, 0.0
        %vm2221 = vcmp.ge.f32.partialorder %v1885, 0.0
        %vm2222 = vcmp.ge.f32.partialorder %v1055, 0.0
        %vm2223 = vcmp.ge.f32.partialorder %v1159, 0.0
        %vm2224 = vcmp.ge.f32.partialorder %v1263, 0.0
        %vm2225 = vcmp.ge.f32.partialorder %v1367, 0.0
        %vm2226 = vcmp.ge.f32.partialorder %v1471, 0.0
        %vm2227 = vcmp.ge.f32.partialorder %v1575, 0.0
        %vm2228 = vcmp.ge.f32.partialorder %v1679, 0.0
        %vm2229 = vcmp.ge.f32.partialorder %v1783, 0.0
        %vm2230 = vcmp.ge.f32.partialorder %v1887, 0.0
        %v2231 = vmul.f32 %v963, 0.1
        %v2232 = vmul.f32 %v1067, 0.1
        %v2233 = vmul.f32 %v1171, 0.1
        %v2234 = vmul.f32 %v1275, 0.1
        %v2235 = vmul.f32 %v1379, 0.1
        %v2236 = vmul.f32 %v1483, 0.1
        %v2237 = vmul.f32 %v1587, 0.1
        %v2238 = vmul.f32 %v1691, 0.1
        %v2239 = vmul.f32 %v1795, 0.1
        %v2240 = vmul.f32 %v965, 0.1
        %v2241 = vmul.f32 %v1069, 0.1
        %v2242 = vmul.f32 %v1173, 0.1
        %v2243 = vmul.f32 %v1277, 0.1
        %v2244 = vmul.f32 %v1381, 0.1
        %v2245 = vmul.f32 %v1485, 0.1
        %v2246 = vmul.f32 %v1589, 0.1
        %v2247 = vmul.f32 %v1693, 0.1
        %v2248 = vmul.f32 %v1797, 0.1
        %v2249 = vmul.f32 %v968, 0.1
        %v2250 = vmul.f32 %v1072, 0.1
        %v2251 = vmul.f32 %v1176, 0.1
        %v2252 = vmul.f32 %v1280, 0.1
        %v2253 = vmul.f32 %v1384, 0.1
        %v2254 = vmul.f32 %v1488, 0.1
        %v2255 = vmul.f32 %v1592, 0.1
        %v2256 = vmul.f32 %v1696, 0.1
        %v2257 = vmul.f32 %v1800, 0.1
        %v2258 = vmul.f32 %v970, 0.1
        %v2259 = vmul.f32 %v1074, 0.1
        %v2260 = vmul.f32 %v1178, 0.1
        %v2261 = vmul.f32 %v1282, 0.1
        %v2262 = vmul.f32 %v1386, 0.1
        %v2263 = vmul.f32 %v1490, 0.1
        %v2264 = vmul.f32 %v1594, 0.1
        %v2265 = vmul.f32 %v1698, 0.1
        %v2266 = vmul.f32 %v1802, 0.1
        %v2267 = vmul.f32 %v973, 0.1
        %v2268 = vmul.f32 %v1077, 0.1
        %v2269 = vmul.f32 %v1181, 0.1
        %v2270 = vmul.f32 %v1285, 0.1
        %v2271 = vmul.f32 %v1389, 0.1
        %v2272 = vmul.f32 %v1493, 0.1
        %v2273 = vmul.f32 %v1597, 0.1
        %v2274 = vmul.f32 %v1701, 0.1
        %v2275 = vmul.f32 %v1805, 0.1
        %v2276 = vmul.f32 %v975, 0.1
        %v2277 = vmul.f32 %v1079, 0.1
        %v2278 = vmul.f32 %v1183, 0.1
        %v2279 = vmul.f32 %v1287, 0.1
        %v2280 = vmul.f32 %v1391, 0.1
        %v2281 = vmul.f32 %v1495, 0.1
        %v2282 = vmul.f32 %v1599, 0.1
        %v2283 = vmul.f32 %v1703, 0.1
        %v2284 = vmul.f32 %v1807, 0.1
        %v2285 = vmul.f32 %v978, 0.1
        %v2286 = vmul.f32 %v1082, 0.1
        %v2287 = vmul.f32 %v1186, 0.1
        %v2288 = vmul.f32 %v1290, 0.1
        %v2289 = vmul.f32 %v1394, 0.1
        %v2290 = vmul.f32 %v1498, 0.1
        %v2291 = vmul.f32 %v1602, 0.1
        %v2292 = vmul.f32 %v1706, 0.1
        %v2293 = vmul.f32 %v1810, 0.1
        %v2294 = vmul.f32 %v980, 0.1
        %v2295 = vmul.f32 %v1084, 0.1
        %v2296 = vmul.f32 %v1188, 0.1
        %v2297 = vmul.f32 %v1292, 0.1
        %v2298 = vmul.f32 %v1396, 0.1
        %v2299 = vmul.f32 %v1500, 0.1
        %v2300 = vmul.f32 %v1604, 0.1
        %v2301 = vmul.f32 %v1708, 0.1
        %v2302 = vmul.f32 %v1812, 0.1
        %v2303 = vmul.f32 %v983, 0.1
        %v2304 = vmul.f32 %v1087, 0.1
        %v2305 = vmul.f32 %v1191, 0.1
        %v2306 = vmul.f32 %v1295, 0.1
        %v2307 = vmul.f32 %v1399, 0.1
        %v2308 = vmul.f32 %v1503, 0.1
        %v2309 = vmul.f32 %v1607, 0.1
        %v2310 = vmul.f32 %v1711, 0.1
        %v2311 = vmul.f32 %v1815, 0.1
        %v2312 = vmul.f32 %v985, 0.1
        %v2313 = vmul.f32 %v1089, 0.1
        %v2314 = vmul.f32 %v1193, 0.1
        %v2315 = vmul.f32 %v1297, 0.1
        %v2316 = vmul.f32 %v1401, 0.1
        %v2317 = vmul.f32 %v1505, 0.1
        %v2318 = vmul.f32 %v1609, 0.1
        %v2319 = vmul.f32 %v1713, 0.1
        %v2320 = vmul.f32 %v1817, 0.1
        %v2321 = vmul.f32 %v988, 0.1
        %v2322 = vmul.f32 %v1092, 0.1
        %v2323 = vmul.f32 %v1196, 0.1
        %v2324 = vmul.f32 %v1300, 0.1
        %v2325 = vmul.f32 %v1404, 0.1
        %v2326 = vmul.f32 %v1508, 0.1
        %v2327 = vmul.f32 %v1612, 0.1
        %v2328 = vmul.f32 %v1716, 0.1
        %v2329 = vmul.f32 %v1820, 0.1
        %v2330 = vmul.f32 %v990, 0.1
        %v2331 = vmul.f32 %v1094, 0.1
        %v2332 = vmul.f32 %v1198, 0.1
        %v2333 = vmul.f32 %v1302, 0.1
        %v2334 = vmul.f32 %v1406, 0.1
        %v2335 = vmul.f32 %v1510, 0.1
        %v2336 = vmul.f32 %v1614, 0.1
        %v2337 = vmul.f32 %v1718, 0.1
        %v2338 = vmul.f32 %v1822, 0.1
        %v2339 = vmul.f32 %v993, 0.1
        %v2340 = vmul.f32 %v1097, 0.1
        %v2341 = vmul.f32 %v1201, 0.1
        %v2342 = vmul.f32 %v1305, 0.1
        %v2343 = vmul.f32 %v1409, 0.1
        %v2344 = vmul.f32 %v1513, 0.1
        %v2345 = vmul.f32 %v1617, 0.1
        %v2346 = vmul.f32 %v1721, 0.1
        %v2347 = vmul.f32 %v1825, 0.1
        %v2348 = vmul.f32 %v995, 0.1
        %v2349 = vmul.f32 %v1099, 0.1
        %v2350 = vmul.f32 %v1203, 0.1
        %v2351 = vmul.f32 %v1307, 0.1
        %v2352 = vmul.f32 %v1411, 0.1
        %v2353 = vmul.f32 %v1515, 0.1
        %v2354 = vmul.f32 %v1619, 0.1
        %v2355 = vmul.f32 %v1723, 0.1
        %v2356 = vmul.f32 %v1827, 0.1
        %v2357 = vmul.f32 %v998, 0.1
        %v2358 = vmul.f32 %v1102, 0.1
        %v2359 = vmul.f32 %v1206, 0.1
        %v2360 = vmul.f32 %v1310, 0.1
        %v2361 = vmul.f32 %v1414, 0.1
        %v2362 = vmul.f32 %v1518, 0.1
        %v2363 = vmul.f32 %v1622, 0.1
        %v2364 = vmul.f32 %v1726, 0.1
        %v2365 = vmul.f32 %v1830, 0.1
        %v2366 = vmul.f32 %v1000, 0.1
        %v2367 = vmul.f32 %v1104, 0.1
        %v2368 = vmul.f32 %v1208, 0.1
        %v2369 = vmul.f32 %v1312, 0.1
        %v2370 = vmul.f32 %v1416, 0.1
        %v2371 = vmul.f32 %v1520, 0.1
        %v2372 = vmul.f32 %v1624, 0.1
        %v2373 = vmul.f32 %v1728, 0.1
        %v2374 = vmul.f32 %v1832, 0.1
        %v2375 = vmul.f32 %v1003, 0.1
        %v2376 = vmul.f32 %v1107, 0.1
        %v2377 = vmul.f32 %v1211, 0.1
        %v2378 = vmul.f32 %v1315, 0.1
        %v2379 = vmul.f32 %v1419, 0.1
        %v2380 = vmul.f32 %v1523, 0.1
        %v2381 = vmul.f32 %v1627, 0.1
        %v2382 = vmul.f32 %v1731, 0.1
        %v2383 = vmul.f32 %v1835, 0.1
        %v2384 = vmul.f32 %v1005, 0.1
        %v2385 = vmul.f32 %v1109, 0.1
        %v2386 = vmul.f32 %v1213, 0.1
        %v2387 = vmul.f32 %v1317, 0.1
        %v2388 = vmul.f32 %v1421, 0.1
        %v2389 = vmul.f32 %v1525, 0.1
        %v2390 = vmul.f32 %v1629, 0.1
        %v2391 = vmul.f32 %v1733, 0.1
        %v2392 = vmul.f32 %v1837, 0.1
        %v2393 = vmul.f32 %v1008, 0.1
        %v2394 = vmul.f32 %v1112, 0.1
        %v2395 = vmul.f32 %v1216, 0.1
        %v2396 = vmul.f32 %v1320, 0.1
        %v2397 = vmul.f32 %v1424, 0.1
        %v2398 = vmul.f32 %v1528, 0.1
        %v2399 = vmul.f32 %v1632, 0.1
        %v2400 = vmul.f32 %v1736, 0.1
        %v2401 = vmul.f32 %v1840, 0.1
        %v2402 = vmul.f32 %v1010, 0.1
        %v2403 = vmul.f32 %v1114, 0.1
        %v2404 = vmul.f32 %v1218, 0.1
        %v2405 = vmul.f32 %v1322, 0.1
        %v2406 = vmul.f32 %v1426, 0.1
        %v2407 = vmul.f32 %v1530, 0.1
        %v2408 = vmul.f32 %v1634, 0.1
        %v2409 = vmul.f32 %v1738, 0.1
        %v2410 = vmul.f32 %v1842, 0.1
        %v2411 = vmul.f32 %v1013, 0.1
        %v2412 = vmul.f32 %v1117, 0.1
        %v2413 = vmul.f32 %v1221, 0.1
        %v2414 = vmul.f32 %v1325, 0.1
        %v2415 = vmul.f32 %v1429, 0.1
        %v2416 = vmul.f32 %v1533, 0.1
        %v2417 = vmul.f32 %v1637, 0.1
        %v2418 = vmul.f32 %v1741, 0.1
        %v2419 = vmul.f32 %v1845, 0.1
        %v2420 = vmul.f32 %v1015, 0.1
        %v2421 = vmul.f32 %v1119, 0.1
        %v2422 = vmul.f32 %v1223, 0.1
        %v2423 = vmul.f32 %v1327, 0.1
        %v2424 = vmul.f32 %v1431, 0.1
        %v2425 = vmul.f32 %v1535, 0.1
        %v2426 = vmul.f32 %v1639, 0.1
        %v2427 = vmul.f32 %v1743, 0.1
        %v2428 = vmul.f32 %v1847, 0.1
        %v2429 = vmul.f32 %v1018, 0.1
        %v2430 = vmul.f32 %v1122, 0.1
        %v2431 = vmul.f32 %v1226, 0.1
        %v2432 = vmul.f32 %v1330, 0.1
        %v2433 = vmul.f32 %v1434, 0.1
        %v2434 = vmul.f32 %v1538, 0.1
        %v2435 = vmul.f32 %v1642, 0.1
        %v2436 = vmul.f32 %v1746, 0.1
        %v2437 = vmul.f32 %v1850, 0.1
        %v2438 = vmul.f32 %v1020, 0.1
        %v2439 = vmul.f32 %v1124, 0.1
        %v2440 = vmul.f32 %v1228, 0.1
        %v2441 = vmul.f32 %v1332, 0.1
        %v2442 = vmul.f32 %v1436, 0.1
        %v2443 = vmul.f32 %v1540, 0.1
        %v2444 = vmul.f32 %v1644, 0.1
        %v2445 = vmul.f32 %v1748, 0.1
        %v2446 = vmul.f32 %v1852, 0.1
        %v2447 = vmul.f32 %v1023, 0.1
        %v2448 = vmul.f32 %v1127, 0.1
        %v2449 = vmul.f32 %v1231, 0.1
        %v2450 = vmul.f32 %v1335, 0.1
        %v2451 = vmul.f32 %v1439, 0.1
        %v2452 = vmul.f32 %v1543, 0.1
        %v2453 = vmul.f32 %v1647, 0.1
        %v2454 = vmul.f32 %v1751, 0.1
        %v2455 = vmul.f32 %v1855, 0.1
        %v2456 = vmul.f32 %v1025, 0.1
        %v2457 = vmul.f32 %v1129, 0.1
        %v2458 = vmul.f32 %v1233, 0.1
        %v2459 = vmul.f32 %v1337, 0.1
        %v2460 = vmul.f32 %v1441, 0.1
        %v2461 = vmul.f32 %v1545, 0.1
        %v2462 = vmul.f32 %v1649, 0.1
        %v2463 = vmul.f32 %v1753, 0.1
        %v2464 = vmul.f32 %v1857, 0.1
        %v2465 = vmul.f32 %v1028, 0.1
        %v2466 = vmul.f32 %v1132, 0.1
        %v2467 = vmul.f32 %v1236, 0.1
        %v2468 = vmul.f32 %v1340, 0.1
        %v2469 = vmul.f32 %v1444, 0.1
        %v2470 = vmul.f32 %v1548, 0.1
        %v2471 = vmul.f32 %v1652, 0.1
        %v2472 = vmul.f32 %v1756, 0.1
        %v2473 = vmul.f32 %v1860, 0.1
        %v2474 = vmul.f32 %v1030, 0.1
        %v2475 = vmul.f32 %v1134, 0.1
        %v2476 = vmul.f32 %v1238, 0.1
        %v2477 = vmul.f32 %v1342, 0.1
        %v2478 = vmul.f32 %v1446, 0.1
        %v2479 = vmul.f32 %v1550, 0.1
        %v2480 = vmul.f32 %v1654, 0.1
        %v2481 = vmul.f32 %v1758, 0.1
        %v2482 = vmul.f32 %v1862, 0.1
        %v2483 = vmul.f32 %v1033, 0.1
        %v2484 = vmul.f32 %v1137, 0.1
        %v2485 = vmul.f32 %v1241, 0.1
        %v2486 = vmul.f32 %v1345, 0.1
        %v2487 = vmul.f32 %v1449, 0.1
        %v2488 = vmul.f32 %v1553, 0.1
        %v2489 = vmul.f32 %v1657, 0.1
        %v2490 = vmul.f32 %v1761, 0.1
        %v2491 = vmul.f32 %v1865, 0.1
        %v2492 = vmul.f32 %v1035, 0.1
        %v2493 = vmul.f32 %v1139, 0.1
        %v2494 = vmul.f32 %v1243, 0.1
        %v2495 = vmul.f32 %v1347, 0.1
        %v2496 = vmul.f32 %v1451, 0.1
        %v2497 = vmul.f32 %v1555, 0.1
        %v2498 = vmul.f32 %v1659, 0.1
        %v2499 = vmul.f32 %v1763, 0.1
        %v2500 = vmul.f32 %v1867, 0.1
        %v2501 = vmul.f32 %v1038, 0.1
        %v2502 = vmul.f32 %v1142, 0.1
        %v2503 = vmul.f32 %v1246, 0.1
        %v2504 = vmul.f32 %v1350, 0.1
        %v2505 = vmul.f32 %v1454, 0.1
        %v2506 = vmul.f32 %v1558, 0.1
        %v2507 = vmul.f32 %v1662, 0.1
        %v2508 = vmul.f32 %v1766, 0.1
        %v2509 = vmul.f32 %v1870, 0.1
        %v2510 = vmul.f32 %v1040, 0.1
        %v2511 = vmul.f32 %v1144, 0.1
        %v2512 = vmul.f32 %v1248, 0.1
        %v2513 = vmul.f32 %v1352, 0.1
        %v2514 = vmul.f32 %v1456, 0.1
        %v2515 = vmul.f32 %v1560, 0.1
        %v2516 = vmul.f32 %v1664, 0.1
        %v2517 = vmul.f32 %v1768, 0.1
        %v2518 = vmul.f32 %v1872, 0.1
        %v2519 = vmul.f32 %v1043, 0.1
        %v2520 = vmul.f32 %v1147, 0.1
        %v2521 = vmul.f32 %v1251, 0.1
        %v2522 = vmul.f32 %v1355, 0.1
        %v2523 = vmul.f32 %v1459, 0.1
        %v2524 = vmul.f32 %v1563, 0.1
        %v2525 = vmul.f32 %v1667, 0.1
        %v2526 = vmul.f32 %v1771, 0.1
        %v2527 = vmul.f32 %v1875, 0.1
        %v2528 = vmul.f32 %v1045, 0.1
        %v2529 = vmul.f32 %v1149, 0.1
        %v2530 = vmul.f32 %v1253, 0.1
        %v2531 = vmul.f32 %v1357, 0.1
        %v2532 = vmul.f32 %v1461, 0.1
        %v2533 = vmul.f32 %v1565, 0.1
        %v2534 = vmul.f32 %v1669, 0.1
        %v2535 = vmul.f32 %v1773, 0.1
        %v2536 = vmul.f32 %v1877, 0.1
        %v2537 = vmul.f32 %v1048, 0.1
        %v2538 = vmul.f32 %v1152, 0.1
        %v2539 = vmul.f32 %v1256, 0.1
        %v2540 = vmul.f32 %v1360, 0.1
        %v2541 = vmul.f32 %v1464, 0.1
        %v2542 = vmul.f32 %v1568, 0.1
        %v2543 = vmul.f32 %v1672, 0.1
        %v2544 = vmul.f32 %v1776, 0.1
        %v2545 = vmul.f32 %v1880, 0.1
        %v2546 = vmul.f32 %v1050, 0.1
        %v2547 = vmul.f32 %v1154, 0.1
        %v2548 = vmul.f32 %v1258, 0.1
        %v2549 = vmul.f32 %v1362, 0.1
        %v2550 = vmul.f32 %v1466, 0.1
        %v2551 = vmul.f32 %v1570, 0.1
        %v2552 = vmul.f32 %v1674, 0.1
        %v2553 = vmul.f32 %v1778, 0.1
        %v2554 = vmul.f32 %v1882, 0.1
        %v2555 = vmul.f32 %v1053, 0.1
        %v2556 = vmul.f32 %v1157, 0.1
        %v2557 = vmul.f32 %v1261, 0.1
        %v2558 = vmul.f32 %v1365, 0.1
        %v2559 = vmul.f32 %v1469, 0.1
        %v2560 = vmul.f32 %v1573, 0.1
        %v2561 = vmul.f32 %v1677, 0.1
        %v2562 = vmul.f32 %v1781, 0.1
        %v2563 = vmul.f32 %v1885, 0.1
        %v2564 = vmul.f32 %v1055, 0.1
        %v2565 = vmul.f32 %v1159, 0.1
        %v2566 = vmul.f32 %v1263, 0.1
        %v2567 = vmul.f32 %v1367, 0.1
        %v2568 = vmul.f32 %v1471, 0.1
        %v2569 = vmul.f32 %v1575, 0.1
        %v2570 = vmul.f32 %v1679, 0.1
        %v2571 = vmul.f32 %v1783, 0.1
        %v2572 = vmul.f32 %v1887, 0.1
        %v2573 = vsel %vm1889, %v963, %v2231
        %v2574 = vsel %vm1890, %v1067, %v2232
        %v2575 = vsel %vm1891, %v1171, %v2233
        %v2576 = vsel %vm1892, %v1275, %v2234
        %v2577 = vsel %vm1893, %v1379, %v2235
        %v2578 = vsel %vm1894, %v1483, %v2236
        %v2579 = vsel %vm1895, %v1587, %v2237
        %v2580 = vsel %vm1896, %v1691, %v2238
        %v2581 = vsel %vm1897, %v1795, %v2239
        %v2582 = vsel %vm1898, %v965, %v2240
        %v2583 = vsel %vm1899, %v1069, %v2241
        %v2584 = vsel %vm1900, %v1173, %v2242
        %v2585 = vsel %vm1901, %v1277, %v2243
        %v2586 = vsel %vm1902, %v1381, %v2244
        %v2587 = vsel %vm1903, %v1485, %v2245
        %v2588 = vsel %vm1904, %v1589, %v2246
        %v2589 = vsel %vm1905, %v1693, %v2247
        %v2590 = vsel %vm1906, %v1797, %v2248
        %v2591 = vsel %vm1907, %v968, %v2249
        %v2592 = vsel %vm1908, %v1072, %v2250
        %v2593 = vsel %vm1909, %v1176, %v2251
        %v2594 = vsel %vm1910, %v1280, %v2252
        %v2595 = vsel %vm1911, %v1384, %v2253
        %v2596 = vsel %vm1912, %v1488, %v2254
        %v2597 = vsel %vm1913, %v1592, %v2255
        %v2598 = vsel %vm1914, %v1696, %v2256
        %v2599 = vsel %vm1915, %v1800, %v2257
        %v2600 = vsel %vm1916, %v970, %v2258
        %v2601 = vsel %vm1917, %v1074, %v2259
        %v2602 = vsel %vm1918, %v1178, %v2260
        %v2603 = vsel %vm1919, %v1282, %v2261
        %v2604 = vsel %vm1920, %v1386, %v2262
        %v2605 = vsel %vm1921, %v1490, %v2263
        %v2606 = vsel %vm1922, %v1594, %v2264
        %v2607 = vsel %vm1923, %v1698, %v2265
        %v2608 = vsel %vm1924, %v1802, %v2266
        %v2609 = vsel %vm1925, %v973, %v2267
        %v2610 = vsel %vm1926, %v1077, %v2268
        %v2611 = vsel %vm1927, %v1181, %v2269
        %v2612 = vsel %vm1928, %v1285, %v2270
        %v2613 = vsel %vm1929, %v1389, %v2271
        %v2614 = vsel %vm1930, %v1493, %v2272
        %v2615 = vsel %vm1931, %v1597, %v2273
        %v2616 = vsel %vm1932, %v1701, %v2274
        %v2617 = vsel %vm1933, %v1805, %v2275
        %v2618 = vsel %vm1934, %v975, %v2276
        %v2619 = vsel %vm1935, %v1079, %v2277
        %v2620 = vsel %vm1936, %v1183, %v2278
        %v2621 = vsel %vm1937, %v1287, %v2279
        %v2622 = vsel %vm1938, %v1391, %v2280
        %v2623 = vsel %vm1939, %v1495, %v2281
        %v2624 = vsel %vm1940, %v1599, %v2282
        %v2625 = vsel %vm1941, %v1703, %v2283
        %v2626 = vsel %vm1942, %v1807, %v2284
        %v2627 = vsel %vm1943, %v978, %v2285
        %v2628 = vsel %vm1944, %v1082, %v2286
        %v2629 = vsel %vm1945, %v1186, %v2287
        %v2630 = vsel %vm1946, %v1290, %v2288
        %v2631 = vsel %vm1947, %v1394, %v2289
        %v2632 = vsel %vm1948, %v1498, %v2290
        %v2633 = vsel %vm1949, %v1602, %v2291
        %v2634 = vsel %vm1950, %v1706, %v2292
        %v2635 = vsel %vm1951, %v1810, %v2293
        %v2636 = vsel %vm1952, %v980, %v2294
        %v2637 = vsel %vm1953, %v1084, %v2295
        %v2638 = vsel %vm1954, %v1188, %v2296
        %v2639 = vsel %vm1955, %v1292, %v2297
        %v2640 = vsel %vm1956, %v1396, %v2298
        %v2641 = vsel %vm1957, %v1500, %v2299
        %v2642 = vsel %vm1958, %v1604, %v2300
        %v2643 = vsel %vm1959, %v1708, %v2301
        %v2644 = vsel %vm1960, %v1812, %v2302
        %v2645 = vsel %vm1961, %v983, %v2303
        %v2646 = vsel %vm1962, %v1087, %v2304
        %v2647 = vsel %vm1963, %v1191, %v2305
        %v2648 = vsel %vm1964, %v1295, %v2306
        %v2649 = vsel %vm1965, %v1399, %v2307
        %v2650 = vsel %vm1966, %v1503, %v2308
        %v2651 = vsel %vm1967, %v1607, %v2309
        %v2652 = vsel %vm1968, %v1711, %v2310
        %v2653 = vsel %vm1969, %v1815, %v2311
        %v2654 = vsel %vm1970, %v985, %v2312
        %v2655 = vsel %vm1971, %v1089, %v2313
        %v2656 = vsel %vm1972, %v1193, %v2314
        %v2657 = vsel %vm1973, %v1297, %v2315
        %v2658 = vsel %vm1974, %v1401, %v2316
        %v2659 = vsel %vm1975, %v1505, %v2317
        %v2660 = vsel %vm1976, %v1609, %v2318
        %v2661 = vsel %vm1977, %v1713, %v2319
        %v2662 = vsel %vm1978, %v1817, %v2320
        %v2663 = vsel %vm1979, %v988, %v2321
        %v2664 = vsel %vm1980, %v1092, %v2322
        %v2665 = vsel %vm1981, %v1196, %v2323
        %v2666 = vsel %vm1982, %v1300, %v2324
        %v2667 = vsel %vm1983, %v1404, %v2325
        %v2668 = vsel %vm1984, %v1508, %v2326
        %v2669 = vsel %vm1985, %v1612, %v2327
        %v2670 = vsel %vm1986, %v1716, %v2328
        %v2671 = vsel %vm1987, %v1820, %v2329
        %v2672 = vsel %vm1988, %v990, %v2330
        %v2673 = vsel %vm1989, %v1094, %v2331
        %v2674 = vsel %vm1990, %v1198, %v2332
        %v2675 = vsel %vm1991, %v1302, %v2333
        %v2676 = vsel %vm1992, %v1406, %v2334
        %v2677 = vsel %vm1993, %v1510, %v2335
        %v2678 = vsel %vm1994, %v1614, %v2336
        %v2679 = vsel %vm1995, %v1718, %v2337
        %v2680 = vsel %vm1996, %v1822, %v2338
        %v2681 = vsel %vm1997, %v993, %v2339
        %v2682 = vsel %vm1998, %v1097, %v2340
        %v2683 = vsel %vm1999, %v1201, %v2341
        %v2684 = vsel %vm2000, %v1305, %v2342
        %v2685 = vsel %vm2001, %v1409, %v2343
        %v2686 = vsel %vm2002, %v1513, %v2344
        %v2687 = vsel %vm2003, %v1617, %v2345
        %v2688 = vsel %vm2004, %v1721, %v2346
        %v2689 = vsel %vm2005, %v1825, %v2347
        %v2690 = vsel %vm2006, %v995, %v2348
        %v2691 = vsel %vm2007, %v1099, %v2349
        %v2692 = vsel %vm2008, %v1203, %v2350
        %v2693 = vsel %vm2009, %v1307, %v2351
        %v2694 = vsel %vm2010, %v1411, %v2352
        %v2695 = vsel %vm2011, %v1515, %v2353
        %v2696 = vsel %vm2012, %v1619, %v2354
        %v2697 = vsel %vm2013, %v1723, %v2355
        %v2698 = vsel %vm2014, %v1827, %v2356
        %v2699 = vsel %vm2015, %v998, %v2357
        %v2700 = vsel %vm2016, %v1102, %v2358
        %v2701 = vsel %vm2017, %v1206, %v2359
        %v2702 = vsel %vm2018, %v1310, %v2360
        %v2703 = vsel %vm2019, %v1414, %v2361
        %v2704 = vsel %vm2020, %v1518, %v2362
        %v2705 = vsel %vm2021, %v1622, %v2363
        %v2706 = vsel %vm2022, %v1726, %v2364
        %v2707 = vsel %vm2023, %v1830, %v2365
        %v2708 = vsel %vm2024, %v1000, %v2366
        %v2709 = vsel %vm2025, %v1104, %v2367
        %v2710 = vsel %vm2026, %v1208, %v2368
        %v2711 = vsel %vm2027, %v1312, %v2369
        %v2712 = vsel %vm2028, %v1416, %v2370
        %v2713 = vsel %vm2029, %v1520, %v2371
        %v2714 = vsel %vm2030, %v1624, %v2372
        %v2715 = vsel %vm2031, %v1728, %v2373
        %v2716 = vsel %vm2032, %v1832, %v2374
        %v2717 = vsel %vm2033, %v1003, %v2375
        %v2718 = vsel %vm2034, %v1107, %v2376
        %v2719 = vsel %vm2035, %v1211, %v2377
        %v2720 = vsel %vm2036, %v1315, %v2378
        %v2721 = vsel %vm2037, %v1419, %v2379
        %v2722 = vsel %vm2038, %v1523, %v2380
        %v2723 = vsel %vm2039, %v1627, %v2381
        %v2724 = vsel %vm2040, %v1731, %v2382
        %v2725 = vsel %vm2041, %v1835, %v2383
        %v2726 = vsel %vm2042, %v1005, %v2384
        %v2727 = vsel %vm2043, %v1109, %v2385
        %v2728 = vsel %vm2044, %v1213, %v2386
        %v2729 = vsel %vm2045, %v1317, %v2387
        %v2730 = vsel %vm2046, %v1421, %v2388
        %v2731 = vsel %vm2047, %v1525, %v2389
        %v2732 = vsel %vm2048, %v1629, %v2390
        %v2733 = vsel %vm2049, %v1733, %v2391
        %v2734 = vsel %vm2050, %v1837, %v2392
        %v2735 = vsel %vm2051, %v1008, %v2393
        %v2736 = vsel %vm2052, %v1112, %v2394
        %v2737 = vsel %vm2053, %v1216, %v2395
        %v2738 = vsel %vm2054, %v1320, %v2396
        %v2739 = vsel %vm2055, %v1424, %v2397
        %v2740 = vsel %vm2056, %v1528, %v2398
        %v2741 = vsel %vm2057, %v1632, %v2399
        %v2742 = vsel %vm2058, %v1736, %v2400
        %v2743 = vsel %vm2059, %v1840, %v2401
        %v2744 = vsel %vm2060, %v1010, %v2402
        %v2745 = vsel %vm2061, %v1114, %v2403
        %v2746 = vsel %vm2062, %v1218, %v2404
        %v2747 = vsel %vm2063, %v1322, %v2405
        %v2748 = vsel %vm2064, %v1426, %v2406
        %v2749 = vsel %vm2065, %v1530, %v2407
        %v2750 = vsel %vm2066, %v1634, %v2408
        %v2751 = vsel %vm2067, %v1738, %v2409
        %v2752 = vsel %vm2068, %v1842, %v2410
        %v2753 = vsel %vm2069, %v1013, %v2411
        %v2754 = vsel %vm2070, %v1117, %v2412
        %v2755 = vsel %vm2071, %v1221, %v2413
        %v2756 = vsel %vm2072, %v1325, %v2414
        %v2757 = vsel %vm2073, %v1429, %v2415
        %v2758 = vsel %vm2074, %v1533, %v2416
        %v2759 = vsel %vm2075, %v1637, %v2417
        %v2760 = vsel %vm2076, %v1741, %v2418
        %v2761 = vsel %vm2077, %v1845, %v2419
        %v2762 = vsel %vm2078, %v1015, %v2420
        %v2763 = vsel %vm2079, %v1119, %v2421
        %v2764 = vsel %vm2080, %v1223, %v2422
        %v2765 = vsel %vm2081, %v1327, %v2423
        %v2766 = vsel %vm2082, %v1431, %v2424
        %v2767 = vsel %vm2083, %v1535, %v2425
        %v2768 = vsel %vm2084, %v1639, %v2426
        %v2769 = vsel %vm2085, %v1743, %v2427
        %v2770 = vsel %vm2086, %v1847, %v2428
        %v2771 = vsel %vm2087, %v1018, %v2429
        %v2772 = vsel %vm2088, %v1122, %v2430
        %v2773 = vsel %vm2089, %v1226, %v2431
        %v2774 = vsel %vm2090, %v1330, %v2432
        %v2775 = vsel %vm2091, %v1434, %v2433
        %v2776 = vsel %vm2092, %v1538, %v2434
        %v2777 = vsel %vm2093, %v1642, %v2435
        %v2778 = vsel %vm2094, %v1746, %v2436
        %v2779 = vsel %vm2095, %v1850, %v2437
        %v2780 = vsel %vm2096, %v1020, %v2438
        %v2781 = vsel %vm2097, %v1124, %v2439
        %v2782 = vsel %vm2098, %v1228, %v2440
        %v2783 = vsel %vm2099, %v1332, %v2441
        %v2784 = vsel %vm2100, %v1436, %v2442
        %v2785 = vsel %vm2101, %v1540, %v2443
        %v2786 = vsel %vm2102, %v1644, %v2444
        %v2787 = vsel %vm2103, %v1748, %v2445
        %v2788 = vsel %vm2104, %v1852, %v2446
        %v2789 = vsel %vm2105, %v1023, %v2447
        %v2790 = vsel %vm2106, %v1127, %v2448
        %v2791 = vsel %vm2107, %v1231, %v2449
        %v2792 = vsel %vm2108, %v1335, %v2450
        %v2793 = vsel %vm2109, %v1439, %v2451
        %v2794 = vsel %vm2110, %v1543, %v2452
        %v2795 = vsel %vm2111, %v1647, %v2453
        %v2796 = vsel %vm2112, %v1751, %v2454
        %v2797 = vsel %vm2113, %v1855, %v2455
        %v2798 = vsel %vm2114, %v1025, %v2456
        %v2799 = vsel %vm2115, %v1129, %v2457
        %v2800 = vsel %vm2116, %v1233, %v2458
        %v2801 = vsel %vm2117, %v1337, %v2459
        %v2802 = vsel %vm2118, %v1441, %v2460
        %v2803 = vsel %vm2119, %v1545, %v2461
        %v2804 = vsel %vm2120, %v1649, %v2462
        %v2805 = vsel %vm2121, %v1753, %v2463
        %v2806 = vsel %vm2122, %v1857, %v2464
        %v2807 = vsel %vm2123, %v1028, %v2465
        %v2808 = vsel %vm2124, %v1132, %v2466
        %v2809 = vsel %vm2125, %v1236, %v2467
        %v2810 = vsel %vm2126, %v1340, %v2468
        %v2811 = vsel %vm2127, %v1444, %v2469
        %v2812 = vsel %vm2128, %v1548, %v2470
        %v2813 = vsel %vm2129, %v1652, %v2471
        %v2814 = vsel %vm2130, %v1756, %v2472
        %v2815 = vsel %vm2131, %v1860, %v2473
        %v2816 = vsel %vm2132, %v1030, %v2474
        %v2817 = vsel %vm2133, %v1134, %v2475
        %v2818 = vsel %vm2134, %v1238, %v2476
        %v2819 = vsel %vm2135, %v1342, %v2477
        %v2820 = vsel %vm2136, %v1446, %v2478
        %v2821 = vsel %vm2137, %v1550, %v2479
        %v2822 = vsel %vm2138, %v1654, %v2480
        %v2823 = vsel %vm2139, %v1758, %v2481
        %v2824 = vsel %vm2140, %v1862, %v2482
        %v2825 = vsel %vm2141, %v1033, %v2483
        %v2826 = vsel %vm2142, %v1137, %v2484
        %v2827 = vsel %vm2143, %v1241, %v2485
        %v2828 = vsel %vm2144, %v1345, %v2486
        %v2829 = vsel %vm2145, %v1449, %v2487
        %v2830 = vsel %vm2146, %v1553, %v2488
        %v2831 = vsel %vm2147, %v1657, %v2489
        %v2832 = vsel %vm2148, %v1761, %v2490
        %v2833 = vsel %vm2149, %v1865, %v2491
        %v2834 = vsel %vm2150, %v1035, %v2492
        %v2835 = vsel %vm2151, %v1139, %v2493
        %v2836 = vsel %vm2152, %v1243, %v2494
        %v2837 = vsel %vm2153, %v1347, %v2495
        %v2838 = vsel %vm2154, %v1451, %v2496
        %v2839 = vsel %vm2155, %v1555, %v2497
        %v2840 = vsel %vm2156, %v1659, %v2498
        %v2841 = vsel %vm2157, %v1763, %v2499
        %v2842 = vsel %vm2158, %v1867, %v2500
        %v2843 = vsel %vm2159, %v1038, %v2501
        %v2844 = vsel %vm2160, %v1142, %v2502
        %v2845 = vsel %vm2161, %v1246, %v2503
        %v2846 = vsel %vm2162, %v1350, %v2504
        %v2847 = vsel %vm2163, %v1454, %v2505
        %v2848 = vsel %vm2164, %v1558, %v2506
        %v2849 = vsel %vm2165, %v1662, %v2507
        %v2850 = vsel %vm2166, %v1766, %v2508
        %v2851 = vsel %vm2167, %v1870, %v2509
        %v2852 = vsel %vm2168, %v1040, %v2510
        %v2853 = vsel %vm2169, %v1144, %v2511
        %v2854 = vsel %vm2170, %v1248, %v2512
        %v2855 = vsel %vm2171, %v1352, %v2513
        %v2856 = vsel %vm2172, %v1456, %v2514
        %v2857 = vsel %vm2173, %v1560, %v2515
        %v2858 = vsel %vm2174, %v1664, %v2516
        %v2859 = vsel %vm2175, %v1768, %v2517
        %v2860 = vsel %vm2176, %v1872, %v2518
        %v2861 = vsel %vm2177, %v1043, %v2519
        %v2862 = vsel %vm2178, %v1147, %v2520
        %v2863 = vsel %vm2179, %v1251, %v2521
        %v2864 = vsel %vm2180, %v1355, %v2522
        %v2865 = vsel %vm2181, %v1459, %v2523
        %v2866 = vsel %vm2182, %v1563, %v2524
        %v2867 = vsel %vm2183, %v1667, %v2525
        %v2868 = vsel %vm2184, %v1771, %v2526
        %v2869 = vsel %vm2185, %v1875, %v2527
        %v2870 = vsel %vm2186, %v1045, %v2528
        %v2871 = vsel %vm2187, %v1149, %v2529
        %v2872 = vsel %vm2188, %v1253, %v2530
        %v2873 = vsel %vm2189, %v1357, %v2531
        %v2874 = vsel %vm2190, %v1461, %v2532
        %v2875 = vsel %vm2191, %v1565, %v2533
        %v2876 = vsel %vm2192, %v1669, %v2534
        %v2877 = vsel %vm2193, %v1773, %v2535
        %v2878 = vsel %vm2194, %v1877, %v2536
        %v2879 = vsel %vm2195, %v1048, %v2537
        %v2880 = vsel %vm2196, %v1152, %v2538
        %v2881 = vsel %vm2197, %v1256, %v2539
        %v2882 = vsel %vm2198, %v1360, %v2540
        %v2883 = vsel %vm2199, %v1464, %v2541
        %v2884 = vsel %vm2200, %v1568, %v2542
        %v2885 = vsel %vm2201, %v1672, %v2543
        %v2886 = vsel %vm2202, %v1776, %v2544
        %v2887 = vsel %vm2203, %v1880, %v2545
        %v2888 = vsel %vm2204, %v1050, %v2546
        %v2889 = vsel %vm2205, %v1154, %v2547
        %v2890 = vsel %vm2206, %v1258, %v2548
        %v2891 = vsel %vm2207, %v1362, %v2549
        %v2892 = vsel %vm2208, %v1466, %v2550
        %v2893 = vsel %vm2209, %v1570, %v2551
        %v2894 = vsel %vm2210, %v1674, %v2552
        %v2895 = vsel %vm2211, %v1778, %v2553
        %v2896 = vsel %vm2212, %v1882, %v2554
        %v2897 = vsel %vm2213, %v1053, %v2555
        %v2898 = vsel %vm2214, %v1157, %v2556
        %v2899 = vsel %vm2215, %v1261, %v2557
        %v2900 = vsel %vm2216, %v1365, %v2558
        %v2901 = vsel %vm2217, %v1469, %v2559
        %v2902 = vsel %vm2218, %v1573, %v2560
        %v2903 = vsel %vm2219, %v1677, %v2561
        %v2904 = vsel %vm2220, %v1781, %v2562
        %v2905 = vsel %vm2221, %v1885, %v2563
        %v2906 = vsel %vm2222, %v1055, %v2564
        %v2907 = vsel %vm2223, %v1159, %v2565
        %v2908 = vsel %vm2224, %v1263, %v2566
        %v2909 = vsel %vm2225, %v1367, %v2567
        %v2910 = vsel %vm2226, %v1471, %v2568
        %v2911 = vsel %vm2227, %v1575, %v2569
        %v2912 = vsel %vm2228, %v1679, %v2570
        %v2913 = vsel %vm2229, %v1783, %v2571
        %v2914 = vsel %vm2230, %v1887, %v2572
        %v2915 = vpack.c.bf16 %v2582, %v2573
        %v2916 = vpack.c.bf16 %v2583, %v2574
        %v2917 = vpack.c.bf16 %v2584, %v2575
        %v2918 = vpack.c.bf16 %v2585, %v2576
        %v2919 = vpack.c.bf16 %v2586, %v2577
        %v2920 = vpack.c.bf16 %v2587, %v2578
        %v2921 = vpack.c.bf16 %v2588, %v2579
        %v2922 = vpack.c.bf16 %v2589, %v2580
        %v2923 = vpack.c.bf16 %v2590, %v2581
        %v2924 = vpack.c.bf16 %v2600, %v2591
        %v2925 = vpack.c.bf16 %v2601, %v2592
        %v2926 = vpack.c.bf16 %v2602, %v2593
        %v2927 = vpack.c.bf16 %v2603, %v2594
        %v2928 = vpack.c.bf16 %v2604, %v2595
        %v2929 = vpack.c.bf16 %v2605, %v2596
        %v2930 = vpack.c.bf16 %v2606, %v2597
        %v2931 = vpack.c.bf16 %v2607, %v2598
        %v2932 = vpack.c.bf16 %v2608, %v2599
        %v2933 = vpack.c.bf16 %v2618, %v2609
        %v2934 = vpack.c.bf16 %v2619, %v2610
        %v2935 = vpack.c.bf16 %v2620, %v2611
        %v2936 = vpack.c.bf16 %v2621, %v2612
        %v2937 = vpack.c.bf16 %v2622, %v2613
        %v2938 = vpack.c.bf16 %v2623, %v2614
        %v2939 = vpack.c.bf16 %v2624, %v2615
        %v2940 = vpack.c.bf16 %v2625, %v2616
        %v2941 = vpack.c.bf16 %v2626, %v2617
        %v2942 = vpack.c.bf16 %v2636, %v2627
        %v2943 = vpack.c.bf16 %v2637, %v2628
        %v2944 = vpack.c.bf16 %v2638, %v2629
        %v2945 = vpack.c.bf16 %v2639, %v2630
        %v2946 = vpack.c.bf16 %v2640, %v2631
        %v2947 = vpack.c.bf16 %v2641, %v2632
        %v2948 = vpack.c.bf16 %v2642, %v2633
        %v2949 = vpack.c.bf16 %v2643, %v2634
        %v2950 = vpack.c.bf16 %v2644, %v2635
        %v2951 = vpack.c.bf16 %v2654, %v2645
        %v2952 = vpack.c.bf16 %v2655, %v2646
        %v2953 = vpack.c.bf16 %v2656, %v2647
        %v2954 = vpack.c.bf16 %v2657, %v2648
        %v2955 = vpack.c.bf16 %v2658, %v2649
        %v2956 = vpack.c.bf16 %v2659, %v2650
        %v2957 = vpack.c.bf16 %v2660, %v2651
        %v2958 = vpack.c.bf16 %v2661, %v2652
        %v2959 = vpack.c.bf16 %v2662, %v2653
        %v2960 = vpack.c.bf16 %v2672, %v2663
        %v2961 = vpack.c.bf16 %v2673, %v2664
        %v2962 = vpack.c.bf16 %v2674, %v2665
        %v2963 = vpack.c.bf16 %v2675, %v2666
        %v2964 = vpack.c.bf16 %v2676, %v2667
        %v2965 = vpack.c.bf16 %v2677, %v2668
        %v2966 = vpack.c.bf16 %v2678, %v2669
        %v2967 = vpack.c.bf16 %v2679, %v2670
        %v2968 = vpack.c.bf16 %v2680, %v2671
        %v2969 = vpack.c.bf16 %v2690, %v2681
        %v2970 = vpack.c.bf16 %v2691, %v2682
        %v2971 = vpack.c.bf16 %v2692, %v2683
        %v2972 = vpack.c.bf16 %v2693, %v2684
        %v2973 = vpack.c.bf16 %v2694, %v2685
        %v2974 = vpack.c.bf16 %v2695, %v2686
        %v2975 = vpack.c.bf16 %v2696, %v2687
        %v2976 = vpack.c.bf16 %v2697, %v2688
        %v2977 = vpack.c.bf16 %v2698, %v2689
        %v2978 = vpack.c.bf16 %v2708, %v2699
        %v2979 = vpack.c.bf16 %v2709, %v2700
        %v2980 = vpack.c.bf16 %v2710, %v2701
        %v2981 = vpack.c.bf16 %v2711, %v2702
        %v2982 = vpack.c.bf16 %v2712, %v2703
        %v2983 = vpack.c.bf16 %v2713, %v2704
        %v2984 = vpack.c.bf16 %v2714, %v2705
        %v2985 = vpack.c.bf16 %v2715, %v2706
        %v2986 = vpack.c.bf16 %v2716, %v2707
        %v2987 = vpack.c.bf16 %v2726, %v2717
        %v2988 = vpack.c.bf16 %v2727, %v2718
        %v2989 = vpack.c.bf16 %v2728, %v2719
        %v2990 = vpack.c.bf16 %v2729, %v2720
        %v2991 = vpack.c.bf16 %v2730, %v2721
        %v2992 = vpack.c.bf16 %v2731, %v2722
        %v2993 = vpack.c.bf16 %v2732, %v2723
        %v2994 = vpack.c.bf16 %v2733, %v2724
        %v2995 = vpack.c.bf16 %v2734, %v2725
        %v2996 = vpack.c.bf16 %v2744, %v2735
        %v2997 = vpack.c.bf16 %v2745, %v2736
        %v2998 = vpack.c.bf16 %v2746, %v2737
        %v2999 = vpack.c.bf16 %v2747, %v2738
        %v3000 = vpack.c.bf16 %v2748, %v2739
        %v3001 = vpack.c.bf16 %v2749, %v2740
        %v3002 = vpack.c.bf16 %v2750, %v2741
        %v3003 = vpack.c.bf16 %v2751, %v2742
        %v3004 = vpack.c.bf16 %v2752, %v2743
        %v3005 = vpack.c.bf16 %v2762, %v2753
        %v3006 = vpack.c.bf16 %v2763, %v2754
        %v3007 = vpack.c.bf16 %v2764, %v2755
        %v3008 = vpack.c.bf16 %v2765, %v2756
        %v3009 = vpack.c.bf16 %v2766, %v2757
        %v3010 = vpack.c.bf16 %v2767, %v2758
        %v3011 = vpack.c.bf16 %v2768, %v2759
        %v3012 = vpack.c.bf16 %v2769, %v2760
        %v3013 = vpack.c.bf16 %v2770, %v2761
        %v3014 = vpack.c.bf16 %v2780, %v2771
        %v3015 = vpack.c.bf16 %v2781, %v2772
        %v3016 = vpack.c.bf16 %v2782, %v2773
        %v3017 = vpack.c.bf16 %v2783, %v2774
        %v3018 = vpack.c.bf16 %v2784, %v2775
        %v3019 = vpack.c.bf16 %v2785, %v2776
        %v3020 = vpack.c.bf16 %v2786, %v2777
        %v3021 = vpack.c.bf16 %v2787, %v2778
        %v3022 = vpack.c.bf16 %v2788, %v2779
        %v3023 = vpack.c.bf16 %v2798, %v2789
        %v3024 = vpack.c.bf16 %v2799, %v2790
        %v3025 = vpack.c.bf16 %v2800, %v2791
        %v3026 = vpack.c.bf16 %v2801, %v2792
        %v3027 = vpack.c.bf16 %v2802, %v2793
        %v3028 = vpack.c.bf16 %v2803, %v2794
        %v3029 = vpack.c.bf16 %v2804, %v2795
        %v3030 = vpack.c.bf16 %v2805, %v2796
        %v3031 = vpack.c.bf16 %v2806, %v2797
        %v3032 = vpack.c.bf16 %v2816, %v2807
        %v3033 = vpack.c.bf16 %v2817, %v2808
        %v3034 = vpack.c.bf16 %v2818, %v2809
        %v3035 = vpack.c.bf16 %v2819, %v2810
        %v3036 = vpack.c.bf16 %v2820, %v2811
        %v3037 = vpack.c.bf16 %v2821, %v2812
        %v3038 = vpack.c.bf16 %v2822, %v2813
        %v3039 = vpack.c.bf16 %v2823, %v2814
        %v3040 = vpack.c.bf16 %v2824, %v2815
        %v3041 = vpack.c.bf16 %v2834, %v2825
        %v3042 = vpack.c.bf16 %v2835, %v2826
        %v3043 = vpack.c.bf16 %v2836, %v2827
        %v3044 = vpack.c.bf16 %v2837, %v2828
        %v3045 = vpack.c.bf16 %v2838, %v2829
        %v3046 = vpack.c.bf16 %v2839, %v2830
        %v3047 = vpack.c.bf16 %v2840, %v2831
        %v3048 = vpack.c.bf16 %v2841, %v2832
        %v3049 = vpack.c.bf16 %v2842, %v2833
        %v3050 = vpack.c.bf16 %v2852, %v2843
        %v3051 = vpack.c.bf16 %v2853, %v2844
        %v3052 = vpack.c.bf16 %v2854, %v2845
        %v3053 = vpack.c.bf16 %v2855, %v2846
        %v3054 = vpack.c.bf16 %v2856, %v2847
        %v3055 = vpack.c.bf16 %v2857, %v2848
        %v3056 = vpack.c.bf16 %v2858, %v2849
        %v3057 = vpack.c.bf16 %v2859, %v2850
        %v3058 = vpack.c.bf16 %v2860, %v2851
        %v3059 = vpack.c.bf16 %v2870, %v2861
        %v3060 = vpack.c.bf16 %v2871, %v2862
        %v3061 = vpack.c.bf16 %v2872, %v2863
        %v3062 = vpack.c.bf16 %v2873, %v2864
        %v3063 = vpack.c.bf16 %v2874, %v2865
        %v3064 = vpack.c.bf16 %v2875, %v2866
        %v3065 = vpack.c.bf16 %v2876, %v2867
        %v3066 = vpack.c.bf16 %v2877, %v2868
        %v3067 = vpack.c.bf16 %v2878, %v2869
        %v3068 = vpack.c.bf16 %v2888, %v2879
        %v3069 = vpack.c.bf16 %v2889, %v2880
        %v3070 = vpack.c.bf16 %v2890, %v2881
        %v3071 = vpack.c.bf16 %v2891, %v2882
        %v3072 = vpack.c.bf16 %v2892, %v2883
        %v3073 = vpack.c.bf16 %v2893, %v2884
        %v3074 = vpack.c.bf16 %v2894, %v2885
        %v3075 = vpack.c.bf16 %v2895, %v2886
        %v3076 = vpack.c.bf16 %v2896, %v2887
        %v3077 = vpack.c.bf16 %v2906, %v2897
        %v3078 = vpack.c.bf16 %v2907, %v2898
        %v3079 = vpack.c.bf16 %v2908, %v2899
        %v3080 = vpack.c.bf16 %v2909, %v2900
        %v3081 = vpack.c.bf16 %v2910, %v2901
        %v3082 = vpack.c.bf16 %v2911, %v2902
        %v3083 = vpack.c.bf16 %v2912, %v2903
        %v3084 = vpack.c.bf16 %v2913, %v2904
        %v3085 = vpack.c.bf16 %v2914, %v2905
        %v3086 = vld [vmem:[%s3] sm:$0xf]
        %v3087 = vld [vmem:[%s3 + $0x4] sm:$0xf]
        %v3088 = vld [vmem:[%s3 + $0x8] sm:$0xf]
        %v3089 = vld [vmem:[%s3 + $0xc] sm:$0xf]
        %v3090 = vld [vmem:[%s3 + $0x10] sm:$0xf]
        %v3091 = vld [vmem:[%s3 + $0x14] sm:$0xf]
        %v3092 = vld [vmem:[%s3 + $0x18] sm:$0xf]
        %v3093 = vld [vmem:[%s3 + $0x1c] sm:$0xf]
        %v3094 = vld [vmem:[%s3 + $0x20] sm:$0xf]
        %v3095 = vld [vmem:[%s3 + $0x24] sm:$0xf]
        %v3096 = vld [vmem:[%s3 + $0x28] sm:$0xf]
        %v3097 = vld [vmem:[%s3 + $0x2c] sm:$0xf]
        %v3098 = vld [vmem:[%s3 + $0x30] sm:$0xf]
        %v3099 = vld [vmem:[%s3 + $0x34] sm:$0xf]
        %v3100 = vld [vmem:[%s3 + $0x38] sm:$0xf]
        %v3101 = vld [vmem:[%s3 + $0x3c] sm:$0xf]
        %v3102 = vld [vmem:[%s3 + $0x40] sm:$0xf]
        %v3103 = vld [vmem:[%s3 + $0x44] sm:$0xf]
        %v3104 = vld [vmem:[%s3 + $0x48] sm:$0xf]
        %v3105 = vld [vmem:[%s3 + $0x4c] sm:$0xf]
        %v3106 = vld [vmem:[%s3 + $0x50] sm:$0xf]
        %v3107 = vld [vmem:[%s3 + $0x54] sm:$0xf]
        %v3108 = vld [vmem:[%s3 + $0x58] sm:$0xf]
        %v3109 = vld [vmem:[%s3 + $0x5c] sm:$0xf]
        %v3110 = vld [vmem:[%s3 + $0x60] sm:$0xf]
        %v3111 = vld [vmem:[%s3 + $0x64] sm:$0xf]
        %v3112 = vld [vmem:[%s3 + $0x68] sm:$0xf]
        %v3113 = vld [vmem:[%s3 + $0x6c] sm:$0xf]
        %v3114 = vld [vmem:[%s3 + $0x70] sm:$0xf]
        %v3115 = vld [vmem:[%s3 + $0x74] sm:$0xf]
        %v3116 = vld [vmem:[%s3 + $0x78] sm:$0xf]
        %v3117 = vld [vmem:[%s3 + $0x7c] sm:$0xf]
        %v3118 = vld [vmem:[%s3 + $0x80] sm:$0xf]
        %v3119 = vld [vmem:[%s3 + $0x84] sm:$0xf]
        %v3120 = vld [vmem:[%s3 + $0x88] sm:$0xf]
        %v3121 = vld [vmem:[%s3 + $0x8c] sm:$0xf]
        %v3122 = vld [vmem:[%s3 + $0x90] sm:$0xf]
        %v3123 = vld [vmem:[%s3 + $0x94] sm:$0xf]
        %v3124 = vld [vmem:[%s3 + $0x98] sm:$0xf]
        %v3125 = vld [vmem:[%s3 + $0x9c] sm:$0xf]
        %v3126 = vld [vmem:[%s3 + $0xa0] sm:$0xf]
        %v3127 = vld [vmem:[%s3 + $0xa4] sm:$0xf]
        %v3128 = vld [vmem:[%s3 + $0xa8] sm:$0xf]
        %v3129 = vld [vmem:[%s3 + $0xac] sm:$0xf]
        %v3130 = vld [vmem:[%s3 + $0xb0] sm:$0xf]
        %v3131 = vld [vmem:[%s3 + $0xb4] sm:$0xf]
        %v3132 = vld [vmem:[%s3 + $0xb8] sm:$0xf]
        %v3133 = vld [vmem:[%s3 + $0xbc] sm:$0xf]
        %v3134 = vld [vmem:[%s3 + $0xc0] sm:$0xf]
        %v3135 = vld [vmem:[%s3 + $0xc4] sm:$0xf]
        %v3136 = vld [vmem:[%s3 + $0xc8] sm:$0xf]
        %v3137 = vld [vmem:[%s3 + $0xcc] sm:$0xf]
        %v3138 = vld [vmem:[%s3 + $0xd0] sm:$0xf]
        %v3139 = vld [vmem:[%s3 + $0xd4] sm:$0xf]
        %v3140 = vld [vmem:[%s3 + $0xd8] sm:$0xf]
        %v3141 = vld [vmem:[%s3 + $0xdc] sm:$0xf]
        %v3142 = vld [vmem:[%s3 + $0xe0] sm:$0xf]
        %v3143 = vld [vmem:[%s3 + $0xe4] sm:$0xf]
        %v3144 = vld [vmem:[%s3 + $0xe8] sm:$0xf]
        %v3145 = vld [vmem:[%s3 + $0xec] sm:$0xf]
        %v3146 = vld [vmem:[%s3 + $0xf0] sm:$0xf]
        %v3147 = vld [vmem:[%s3 + $0xf4] sm:$0xf]
        %v3148 = vld [vmem:[%s3 + $0xf8] sm:$0xf]
        %v3149 = vld [vmem:[%s3 + $0xfc] sm:$0xf]
        %v3150 = vld [vmem:[%s3 + $0x100] sm:$0xf]
        %v3151 = vld [vmem:[%s3 + $0x104] sm:$0xf]
        %v3152 = vld [vmem:[%s3 + $0x108] sm:$0xf]
        %v3153 = vld [vmem:[%s3 + $0x10c] sm:$0xf]
        %v3154 = vld [vmem:[%s3 + $0x110] sm:$0xf]
        %v3155 = vld [vmem:[%s3 + $0x114] sm:$0xf]
        %v3156 = vld [vmem:[%s3 + $0x118] sm:$0xf]
        %v3157 = vld [vmem:[%s3 + $0x11c] sm:$0xf]
        %v3158 = vld [vmem:[%s3 + $0x120] sm:$0xf]
        %v3159 = vld [vmem:[%s3 + $0x124] sm:$0xf]
        %v3160 = vld [vmem:[%s3 + $0x128] sm:$0xf]
        %v3161 = vld [vmem:[%s3 + $0x12c] sm:$0xf]
        %v3162 = vld [vmem:[%s3 + $0x130] sm:$0xf]
        %v3163 = vld [vmem:[%s3 + $0x134] sm:$0xf]
        %v3164 = vld [vmem:[%s3 + $0x138] sm:$0xf]
        %v3165 = vld [vmem:[%s3 + $0x13c] sm:$0xf]
        %v3166 = vld [vmem:[%s3 + $0x140] sm:$0xf]
        %v3167 = vld [vmem:[%s3 + $0x144] sm:$0xf]
        %v3168 = vld [vmem:[%s3 + $0x148] sm:$0xf]
        %v3169 = vld [vmem:[%s3 + $0x14c] sm:$0xf]
        %v3170 = vld [vmem:[%s3 + $0x150] sm:$0xf]
        %v3171 = vld [vmem:[%s3 + $0x154] sm:$0xf]
        %v3172 = vld [vmem:[%s3 + $0x158] sm:$0xf]
        %v3173 = vld [vmem:[%s3 + $0x15c] sm:$0xf]
        %v3174 = vld [vmem:[%s3 + $0x160] sm:$0xf]
        %v3175 = vld [vmem:[%s3 + $0x164] sm:$0xf]
        %v3176 = vld [vmem:[%s3 + $0x168] sm:$0xf]
        %v3177 = vld [vmem:[%s3 + $0x16c] sm:$0xf]
        %v3178 = vld [vmem:[%s3 + $0x170] sm:$0xf]
        %v3179 = vld [vmem:[%s3 + $0x174] sm:$0xf]
        %v3180 = vld [vmem:[%s3 + $0x178] sm:$0xf]
        %v3181 = vld [vmem:[%s3 + $0x17c] sm:$0xf]
        %v3182 = vld [vmem:[%s3 + $0x180] sm:$0xf]
        %v3183 = vld [vmem:[%s3 + $0x184] sm:$0xf]
        %v3184 = vld [vmem:[%s3 + $0x188] sm:$0xf]
        %v3185 = vld [vmem:[%s3 + $0x18c] sm:$0xf]
        %v3186 = vld [vmem:[%s3 + $0x190] sm:$0xf]
        %v3187 = vld [vmem:[%s3 + $0x194] sm:$0xf]
        %v3188 = vld [vmem:[%s3 + $0x198] sm:$0xf]
        %v3189 = vld [vmem:[%s3 + $0x19c] sm:$0xf]
        %v3190 = vld [vmem:[%s3 + $0x1a0] sm:$0xf]
        %v3191 = vld [vmem:[%s3 + $0x1a4] sm:$0xf]
        %v3192 = vld [vmem:[%s3 + $0x1a8] sm:$0xf]
        %v3193 = vld [vmem:[%s3 + $0x1ac] sm:$0xf]
        %v3194 = vld [vmem:[%s3 + $0x1b0] sm:$0xf]
        %v3195 = vld [vmem:[%s3 + $0x1b4] sm:$0xf]
        %v3196 = vld [vmem:[%s3 + $0x1b8] sm:$0xf]
        %v3197 = vld [vmem:[%s3 + $0x1bc] sm:$0xf]
        %v3198 = vld [vmem:[%s3 + $0x1c0] sm:$0xf]
        %v3199 = vld [vmem:[%s3 + $0x1c4] sm:$0xf]
        %v3200 = vld [vmem:[%s3 + $0x1c8] sm:$0xf]
        %v3201 = vld [vmem:[%s3 + $0x1cc] sm:$0xf]
        %v3202 = vld [vmem:[%s3 + $0x1d0] sm:$0xf]
        %v3203 = vld [vmem:[%s3 + $0x1d4] sm:$0xf]
        %v3204 = vld [vmem:[%s3 + $0x1d8] sm:$0xf]
        %v3205 = vld [vmem:[%s3 + $0x1dc] sm:$0xf]
        %v3206 = vld [vmem:[%s3 + $0x1e0] sm:$0xf]
        %v3207 = vld [vmem:[%s3 + $0x1e4] sm:$0xf]
        %v3208 = vld [vmem:[%s3 + $0x1e8] sm:$0xf]
        %v3209 = vld [vmem:[%s3 + $0x1ec] sm:$0xf]
        %v3210 = vld [vmem:[%s3 + $0x1f0] sm:$0xf]
        %v3211 = vld [vmem:[%s3 + $0x1f4] sm:$0xf]
        %v3212 = vld [vmem:[%s3 + $0x1f8] sm:$0xf]
        %v3213 = vld [vmem:[%s3 + $0x1fc] sm:$0xf]
        %v3214 = vld [vmem:[%s3 + $0x200] sm:$0xf]
        %v3215 = vld [vmem:[%s3 + $0x204] sm:$0xf]
        %v3216 = vld [vmem:[%s3 + $0x208] sm:$0xf]
        %v3217 = vld [vmem:[%s3 + $0x20c] sm:$0xf]
        %v3218 = vld [vmem:[%s3 + $0x210] sm:$0xf]
        %v3219 = vld [vmem:[%s3 + $0x214] sm:$0xf]
        %v3220 = vld [vmem:[%s3 + $0x218] sm:$0xf]
        %v3221 = vld [vmem:[%s3 + $0x21c] sm:$0xf]
        %v3222 = vld [vmem:[%s3 + $0x220] sm:$0xf]
        %v3223 = vld [vmem:[%s3 + $0x224] sm:$0xf]
        %v3224 = vld [vmem:[%s3 + $0x228] sm:$0xf]
        %v3225 = vld [vmem:[%s3 + $0x22c] sm:$0xf]
        %v3226 = vld [vmem:[%s3 + $0x230] sm:$0xf]
        %v3227 = vld [vmem:[%s3 + $0x234] sm:$0xf]
        %v3228 = vld [vmem:[%s3 + $0x238] sm:$0xf]
        %v3229 = vld [vmem:[%s3 + $0x23c] sm:$0xf]
        %v3374 = vunpack.c.l.b16 %v3086
        %v3375 = vunpack.c.l.b16 %v3087
        %v3376 = vunpack.c.l.b16 %v3088
        %v3377 = vunpack.c.l.b16 %v3089
        %v3378 = vunpack.c.l.b16 %v3090
        %v3379 = vunpack.c.l.b16 %v3091
        %v3380 = vunpack.c.l.b16 %v3092
        %v3381 = vunpack.c.l.b16 %v3093
        %v3382 = vunpack.c.l.b16 %v3094
        %v3383 = vunpack.c.l.b16 %v3095
        %v3384 = vunpack.c.l.b16 %v3096
        %v3385 = vunpack.c.l.b16 %v3097
        %v3386 = vunpack.c.l.b16 %v3098
        %v3387 = vunpack.c.l.b16 %v3099
        %v3388 = vunpack.c.l.b16 %v3100
        %v3389 = vunpack.c.l.b16 %v3101
        %v3390 = vunpack.c.l.b16 %v3102
        %v3391 = vunpack.c.l.b16 %v3103
        %v3392 = vunpack.c.l.b16 %v3104
        %v3393 = vunpack.c.l.b16 %v3105
        %v3394 = vunpack.c.l.b16 %v3106
        %v3395 = vunpack.c.l.b16 %v3107
        %v3396 = vunpack.c.l.b16 %v3108
        %v3397 = vunpack.c.l.b16 %v3109
        %v3398 = vunpack.c.l.b16 %v3110
        %v3399 = vunpack.c.l.b16 %v3111
        %v3400 = vunpack.c.l.b16 %v3112
        %v3401 = vunpack.c.l.b16 %v3113
        %v3402 = vunpack.c.l.b16 %v3114
        %v3403 = vunpack.c.l.b16 %v3115
        %v3404 = vunpack.c.l.b16 %v3116
        %v3405 = vunpack.c.l.b16 %v3117
        %v3406 = vunpack.c.l.b16 %v3118
        %v3407 = vunpack.c.l.b16 %v3119
        %v3408 = vunpack.c.l.b16 %v3120
        %v3409 = vunpack.c.l.b16 %v3121
        %v3410 = vunpack.c.l.b16 %v3122
        %v3411 = vunpack.c.l.b16 %v3123
        %v3412 = vunpack.c.l.b16 %v3124
        %v3413 = vunpack.c.l.b16 %v3125
        %v3414 = vunpack.c.l.b16 %v3126
        %v3415 = vunpack.c.l.b16 %v3127
        %v3416 = vunpack.c.l.b16 %v3128
        %v3417 = vunpack.c.l.b16 %v3129
        %v3418 = vunpack.c.l.b16 %v3130
        %v3419 = vunpack.c.l.b16 %v3131
        %v3420 = vunpack.c.l.b16 %v3132
        %v3421 = vunpack.c.l.b16 %v3133
        %v3422 = vunpack.c.l.b16 %v3134
        %v3423 = vunpack.c.l.b16 %v3135
        %v3424 = vunpack.c.l.b16 %v3136
        %v3425 = vunpack.c.l.b16 %v3137
        %v3426 = vunpack.c.l.b16 %v3138
        %v3427 = vunpack.c.l.b16 %v3139
        %v3428 = vunpack.c.l.b16 %v3140
        %v3429 = vunpack.c.l.b16 %v3141
        %v3430 = vunpack.c.l.b16 %v3142
        %v3431 = vunpack.c.l.b16 %v3143
        %v3432 = vunpack.c.l.b16 %v3144
        %v3433 = vunpack.c.l.b16 %v3145
        %v3434 = vunpack.c.l.b16 %v3146
        %v3435 = vunpack.c.l.b16 %v3147
        %v3436 = vunpack.c.l.b16 %v3148
        %v3437 = vunpack.c.l.b16 %v3149
        %v3438 = vunpack.c.l.b16 %v3150
        %v3439 = vunpack.c.l.b16 %v3151
        %v3440 = vunpack.c.l.b16 %v3152
        %v3441 = vunpack.c.l.b16 %v3153
        %v3442 = vunpack.c.l.b16 %v3154
        %v3443 = vunpack.c.l.b16 %v3155
        %v3444 = vunpack.c.l.b16 %v3156
        %v3445 = vunpack.c.l.b16 %v3157
        %v3446 = vunpack.c.l.b16 %v3158
        %v3447 = vunpack.c.l.b16 %v3159
        %v3448 = vunpack.c.l.b16 %v3160
        %v3449 = vunpack.c.l.b16 %v3161
        %v3450 = vunpack.c.l.b16 %v3162
        %v3451 = vunpack.c.l.b16 %v3163
        %v3452 = vunpack.c.l.b16 %v3164
        %v3453 = vunpack.c.l.b16 %v3165
        %v3454 = vunpack.c.l.b16 %v3166
        %v3455 = vunpack.c.l.b16 %v3167
        %v3456 = vunpack.c.l.b16 %v3168
        %v3457 = vunpack.c.l.b16 %v3169
        %v3458 = vunpack.c.l.b16 %v3170
        %v3459 = vunpack.c.l.b16 %v3171
        %v3460 = vunpack.c.l.b16 %v3172
        %v3461 = vunpack.c.l.b16 %v3173
        %v3462 = vunpack.c.l.b16 %v3174
        %v3463 = vunpack.c.l.b16 %v3175
        %v3464 = vunpack.c.l.b16 %v3176
        %v3465 = vunpack.c.l.b16 %v3177
        %v3466 = vunpack.c.l.b16 %v3178
        %v3467 = vunpack.c.l.b16 %v3179
        %v3468 = vunpack.c.l.b16 %v3180
        %v3469 = vunpack.c.l.b16 %v3181
        %v3470 = vunpack.c.l.b16 %v3182
        %v3471 = vunpack.c.l.b16 %v3183
        %v3472 = vunpack.c.l.b16 %v3184
        %v3473 = vunpack.c.l.b16 %v3185
        %v3474 = vunpack.c.l.b16 %v3186
        %v3475 = vunpack.c.l.b16 %v3187
        %v3476 = vunpack.c.l.b16 %v3188
        %v3477 = vunpack.c.l.b16 %v3189
        %v3478 = vunpack.c.l.b16 %v3190
        %v3479 = vunpack.c.l.b16 %v3191
        %v3480 = vunpack.c.l.b16 %v3192
        %v3481 = vunpack.c.l.b16 %v3193
        %v3482 = vunpack.c.l.b16 %v3194
        %v3483 = vunpack.c.l.b16 %v3195
        %v3484 = vunpack.c.l.b16 %v3196
        %v3485 = vunpack.c.l.b16 %v3197
        %v3486 = vunpack.c.l.b16 %v3198
        %v3487 = vunpack.c.l.b16 %v3199
        %v3488 = vunpack.c.l.b16 %v3200
        %v3489 = vunpack.c.l.b16 %v3201
        %v3490 = vunpack.c.l.b16 %v3202
        %v3491 = vunpack.c.l.b16 %v3203
        %v3492 = vunpack.c.l.b16 %v3204
        %v3493 = vunpack.c.l.b16 %v3205
        %v3494 = vunpack.c.l.b16 %v3206
        %v3495 = vunpack.c.l.b16 %v3207
        %v3496 = vunpack.c.l.b16 %v3208
        %v3497 = vunpack.c.l.b16 %v3209
        %v3498 = vunpack.c.l.b16 %v3210
        %v3499 = vunpack.c.l.b16 %v3211
        %v3500 = vunpack.c.l.b16 %v3212
        %v3501 = vunpack.c.l.b16 %v3213
        %v3502 = vunpack.c.l.b16 %v3214
        %v3503 = vunpack.c.l.b16 %v3215
        %v3504 = vunpack.c.l.b16 %v3216
        %v3505 = vunpack.c.l.b16 %v3217
        %v3506 = vunpack.c.l.b16 %v3218
        %v3507 = vunpack.c.l.b16 %v3219
        %v3508 = vunpack.c.l.b16 %v3220
        %v3509 = vunpack.c.l.b16 %v3221
        %v3510 = vunpack.c.l.b16 %v3222
        %v3511 = vunpack.c.l.b16 %v3223
        %v3512 = vunpack.c.l.b16 %v3224
        %v3513 = vunpack.c.l.b16 %v3225
        %v3514 = vunpack.c.l.b16 %v3226
        %v3515 = vunpack.c.l.b16 %v3227
        %v3516 = vunpack.c.l.b16 %v3228
        %v3517 = vunpack.c.l.b16 %v3229
        %v3518 = vpack.c.b16 %v3375, %v3374
        %v3519 = vpack.c.b16 %v3377, %v3376
        %v3520 = vpack.c.b16 %v3379, %v3378
        %v3521 = vpack.c.b16 %v3381, %v3380
        %v3522 = vpack.c.b16 %v3383, %v3382
        %v3523 = vpack.c.b16 %v3385, %v3384
        %v3524 = vpack.c.b16 %v3387, %v3386
        %v3525 = vpack.c.b16 %v3389, %v3388
        %v3526 = vpack.c.b16 %v3391, %v3390
        %v3527 = vpack.c.b16 %v3393, %v3392
        %v3528 = vpack.c.b16 %v3395, %v3394
        %v3529 = vpack.c.b16 %v3397, %v3396
        %v3530 = vpack.c.b16 %v3399, %v3398
        %v3531 = vpack.c.b16 %v3401, %v3400
        %v3532 = vpack.c.b16 %v3403, %v3402
        %v3533 = vpack.c.b16 %v3405, %v3404
        %v3534 = vpack.c.b16 %v3407, %v3406
        %v3535 = vpack.c.b16 %v3409, %v3408
        %v3536 = vpack.c.b16 %v3411, %v3410
        %v3537 = vpack.c.b16 %v3413, %v3412
        %v3538 = vpack.c.b16 %v3415, %v3414
        %v3539 = vpack.c.b16 %v3417, %v3416
        %v3540 = vpack.c.b16 %v3419, %v3418
        %v3541 = vpack.c.b16 %v3421, %v3420
        %v3542 = vpack.c.b16 %v3423, %v3422
        %v3543 = vpack.c.b16 %v3425, %v3424
        %v3544 = vpack.c.b16 %v3427, %v3426
        %v3545 = vpack.c.b16 %v3429, %v3428
        %v3546 = vpack.c.b16 %v3431, %v3430
        %v3547 = vpack.c.b16 %v3433, %v3432
        %v3548 = vpack.c.b16 %v3435, %v3434
        %v3549 = vpack.c.b16 %v3437, %v3436
        %v3550 = vpack.c.b16 %v3439, %v3438
        %v3551 = vpack.c.b16 %v3441, %v3440
        %v3552 = vpack.c.b16 %v3443, %v3442
        %v3553 = vpack.c.b16 %v3445, %v3444
        %v3554 = vpack.c.b16 %v3447, %v3446
        %v3555 = vpack.c.b16 %v3449, %v3448
        %v3556 = vpack.c.b16 %v3451, %v3450
        %v3557 = vpack.c.b16 %v3453, %v3452
        %v3558 = vpack.c.b16 %v3455, %v3454
        %v3559 = vpack.c.b16 %v3457, %v3456
        %v3560 = vpack.c.b16 %v3459, %v3458
        %v3561 = vpack.c.b16 %v3461, %v3460
        %v3562 = vpack.c.b16 %v3463, %v3462
        %v3563 = vpack.c.b16 %v3465, %v3464
        %v3564 = vpack.c.b16 %v3467, %v3466
        %v3565 = vpack.c.b16 %v3469, %v3468
        %v3566 = vpack.c.b16 %v3471, %v3470
        %v3567 = vpack.c.b16 %v3473, %v3472
        %v3568 = vpack.c.b16 %v3475, %v3474
        %v3569 = vpack.c.b16 %v3477, %v3476
        %v3570 = vpack.c.b16 %v3479, %v3478
        %v3571 = vpack.c.b16 %v3481, %v3480
        %v3572 = vpack.c.b16 %v3483, %v3482
        %v3573 = vpack.c.b16 %v3485, %v3484
        %v3574 = vpack.c.b16 %v3487, %v3486
        %v3575 = vpack.c.b16 %v3489, %v3488
        %v3576 = vpack.c.b16 %v3491, %v3490
        %v3577 = vpack.c.b16 %v3493, %v3492
        %v3578 = vpack.c.b16 %v3495, %v3494
        %v3579 = vpack.c.b16 %v3497, %v3496
        %v3580 = vpack.c.b16 %v3499, %v3498
        %v3581 = vpack.c.b16 %v3501, %v3500
        %v3582 = vpack.c.b16 %v3503, %v3502
        %v3583 = vpack.c.b16 %v3505, %v3504
        %v3584 = vpack.c.b16 %v3507, %v3506
        %v3585 = vpack.c.b16 %v3509, %v3508
        %v3586 = vpack.c.b16 %v3511, %v3510
        %v3587 = vpack.c.b16 %v3513, %v3512
        %v3588 = vpack.c.b16 %v3515, %v3514
        %v3589 = vpack.c.b16 %v3517, %v3516
        %3662 = vmatpush.bf16.msra.mxu0 %v3525
        %3663 = vmatpush.bf16.msra.mxu0 %v3524
        %3664 = vmatpush.bf16.msra.mxu0 %v3523
        %3665 = vmatpush.bf16.msra.mxu0 %v3522
        %3666 = vmatpush.bf16.msra.mxu0 %v3521
        %3667 = vmatpush.bf16.msra.mxu0 %v3520
        %3668 = vmatpush.bf16.msra.mxu0 %v3519
        %3669 = vmatpush.bf16.msra.mxu0 %v3518
        %3670 = vmatmul.bf16.gmra.mxu0 %v2915
        %v3671 = vpop.f32.mrf.mxu0
        %v3672 = vadd.f32 0.0, %v3671
        %v3673 = vpop.f32.mrf.mxu0
        %v3674 = vadd.f32 0.0, %v3673
        %3675 = vmatmul.bf16.gmra.mxu0 %v2924
        %v3676 = vpop.f32.mrf.mxu0
        %v3677 = vadd.f32 0.0, %v3676
        %v3678 = vpop.f32.mrf.mxu0
        %v3679 = vadd.f32 0.0, %v3678
        %3680 = vmatmul.bf16.gmra.mxu0 %v2933
        %v3681 = vpop.f32.mrf.mxu0
        %v3682 = vadd.f32 0.0, %v3681
        %v3683 = vpop.f32.mrf.mxu0
        %v3684 = vadd.f32 0.0, %v3683
        %3685 = vmatmul.bf16.gmra.mxu0 %v2942
        %v3686 = vpop.f32.mrf.mxu0
        %v3687 = vadd.f32 0.0, %v3686
        %v3688 = vpop.f32.mrf.mxu0
        %v3689 = vadd.f32 0.0, %v3688
        %3690 = vmatmul.bf16.gmra.mxu0 %v2951
        %v3691 = vpop.f32.mrf.mxu0
        %v3692 = vadd.f32 0.0, %v3691
        %v3693 = vpop.f32.mrf.mxu0
        %v3694 = vadd.f32 0.0, %v3693
        %3695 = vmatmul.bf16.gmra.mxu0 %v2960
        %v3696 = vpop.f32.mrf.mxu0
        %v3697 = vadd.f32 0.0, %v3696
        %v3698 = vpop.f32.mrf.mxu0
        %v3699 = vadd.f32 0.0, %v3698
        %3700 = vmatmul.bf16.gmra.mxu0 %v2969
        %v3701 = vpop.f32.mrf.mxu0
        %v3702 = vadd.f32 0.0, %v3701
        %v3703 = vpop.f32.mrf.mxu0
        %v3704 = vadd.f32 0.0, %v3703
        %3705 = vmatmul.bf16.gmra.mxu0 %v2978
        %v3706 = vpop.f32.mrf.mxu0
        %v3707 = vadd.f32 0.0, %v3706
        %v3708 = vpop.f32.mrf.mxu0
        %v3709 = vadd.f32 0.0, %v3708
        %3710 = vmatmul.bf16.gmra.mxu0 %v2987
        %v3711 = vpop.f32.mrf.mxu0
        %v3712 = vadd.f32 0.0, %v3711
        %v3713 = vpop.f32.mrf.mxu0
        %v3714 = vadd.f32 0.0, %v3713
        %3715 = vmatmul.bf16.gmra.mxu0 %v2996
        %v3716 = vpop.f32.mrf.mxu0
        %v3717 = vadd.f32 0.0, %v3716
        %v3718 = vpop.f32.mrf.mxu0
        %v3719 = vadd.f32 0.0, %v3718
        %3720 = vmatmul.bf16.gmra.mxu0 %v3005
        %v3721 = vpop.f32.mrf.mxu0
        %v3722 = vadd.f32 0.0, %v3721
        %v3723 = vpop.f32.mrf.mxu0
        %v3724 = vadd.f32 0.0, %v3723
        %3725 = vmatmul.bf16.gmra.mxu0 %v3014
        %v3726 = vpop.f32.mrf.mxu0
        %v3727 = vadd.f32 0.0, %v3726
        %v3728 = vpop.f32.mrf.mxu0
        %v3729 = vadd.f32 0.0, %v3728
        %3730 = vmatmul.bf16.gmra.mxu0 %v3023
        %v3731 = vpop.f32.mrf.mxu0
        %v3732 = vadd.f32 0.0, %v3731
        %v3733 = vpop.f32.mrf.mxu0
        %v3734 = vadd.f32 0.0, %v3733
        %3735 = vmatmul.bf16.gmra.mxu0 %v3032
        %v3736 = vpop.f32.mrf.mxu0
        %v3737 = vadd.f32 0.0, %v3736
        %v3738 = vpop.f32.mrf.mxu0
        %v3739 = vadd.f32 0.0, %v3738
        %3740 = vmatmul.bf16.gmra.mxu0 %v3041
        %v3741 = vpop.f32.mrf.mxu0
        %v3742 = vadd.f32 0.0, %v3741
        %v3743 = vpop.f32.mrf.mxu0
        %v3744 = vadd.f32 0.0, %v3743
        %3745 = vmatmul.bf16.gmra.mxu0 %v3050
        %v3746 = vpop.f32.mrf.mxu0
        %v3747 = vadd.f32 0.0, %v3746
        %v3748 = vpop.f32.mrf.mxu0
        %v3749 = vadd.f32 0.0, %v3748
        %3750 = vmatmul.bf16.gmra.mxu0 %v3059
        %v3751 = vpop.f32.mrf.mxu0
        %v3752 = vadd.f32 0.0, %v3751
        %v3753 = vpop.f32.mrf.mxu0
        %v3754 = vadd.f32 0.0, %v3753
        %3755 = vmatmul.bf16.gmra.mxu0 %v3068
        %v3756 = vpop.f32.mrf.mxu0
        %v3757 = vadd.f32 0.0, %v3756
        %v3758 = vpop.f32.mrf.mxu0
        %v3759 = vadd.f32 0.0, %v3758
        %3760 = vmatmul.bf16.gmra.mxu0 %v3077
        %v3761 = vpop.f32.mrf.mxu0
        %v3762 = vadd.f32 0.0, %v3761
        %v3763 = vpop.f32.mrf.mxu0
        %v3764 = vadd.f32 0.0, %v3763
        %3765 = vdwg.mxu0
        %3766 = vmatpush.bf16.msra.mxu0 %v3533
        %3767 = vmatpush.bf16.msra.mxu0 %v3532
        %3768 = vmatpush.bf16.msra.mxu0 %v3531
        %3769 = vmatpush.bf16.msra.mxu0 %v3530
        %3770 = vmatpush.bf16.msra.mxu0 %v3529
        %3771 = vmatpush.bf16.msra.mxu0 %v3528
        %3772 = vmatpush.bf16.msra.mxu0 %v3527
        %3773 = vmatpush.bf16.msra.mxu0 %v3526
        %3774 = vmatmul.bf16.gmra.mxu0 %v2916
        %v3775 = vpop.f32.mrf.mxu0
        %v3776 = vadd.f32 %v3672, %v3775
        %v3777 = vpop.f32.mrf.mxu0
        %v3778 = vadd.f32 %v3674, %v3777
        %3779 = vmatmul.bf16.gmra.mxu0 %v2925
        %v3780 = vpop.f32.mrf.mxu0
        %v3781 = vadd.f32 %v3677, %v3780
        %v3782 = vpop.f32.mrf.mxu0
        %v3783 = vadd.f32 %v3679, %v3782
        %3784 = vmatmul.bf16.gmra.mxu0 %v2934
        %v3785 = vpop.f32.mrf.mxu0
        %v3786 = vadd.f32 %v3682, %v3785
        %v3787 = vpop.f32.mrf.mxu0
        %v3788 = vadd.f32 %v3684, %v3787
        %3789 = vmatmul.bf16.gmra.mxu0 %v2943
        %v3790 = vpop.f32.mrf.mxu0
        %v3791 = vadd.f32 %v3687, %v3790
        %v3792 = vpop.f32.mrf.mxu0
        %v3793 = vadd.f32 %v3689, %v3792
        %3794 = vmatmul.bf16.gmra.mxu0 %v2952
        %v3795 = vpop.f32.mrf.mxu0
        %v3796 = vadd.f32 %v3692, %v3795
        %v3797 = vpop.f32.mrf.mxu0
        %v3798 = vadd.f32 %v3694, %v3797
        %3799 = vmatmul.bf16.gmra.mxu0 %v2961
        %v3800 = vpop.f32.mrf.mxu0
        %v3801 = vadd.f32 %v3697, %v3800
        %v3802 = vpop.f32.mrf.mxu0
        %v3803 = vadd.f32 %v3699, %v3802
        %3804 = vmatmul.bf16.gmra.mxu0 %v2970
        %v3805 = vpop.f32.mrf.mxu0
        %v3806 = vadd.f32 %v3702, %v3805
        %v3807 = vpop.f32.mrf.mxu0
        %v3808 = vadd.f32 %v3704, %v3807
        %3809 = vmatmul.bf16.gmra.mxu0 %v2979
        %v3810 = vpop.f32.mrf.mxu0
        %v3811 = vadd.f32 %v3707, %v3810
        %v3812 = vpop.f32.mrf.mxu0
        %v3813 = vadd.f32 %v3709, %v3812
        %3814 = vmatmul.bf16.gmra.mxu0 %v2988
        %v3815 = vpop.f32.mrf.mxu0
        %v3816 = vadd.f32 %v3712, %v3815
        %v3817 = vpop.f32.mrf.mxu0
        %v3818 = vadd.f32 %v3714, %v3817
        %3819 = vmatmul.bf16.gmra.mxu0 %v2997
        %v3820 = vpop.f32.mrf.mxu0
        %v3821 = vadd.f32 %v3717, %v3820
        %v3822 = vpop.f32.mrf.mxu0
        %v3823 = vadd.f32 %v3719, %v3822
        %3824 = vmatmul.bf16.gmra.mxu0 %v3006
        %v3825 = vpop.f32.mrf.mxu0
        %v3826 = vadd.f32 %v3722, %v3825
        %v3827 = vpop.f32.mrf.mxu0
        %v3828 = vadd.f32 %v3724, %v3827
        %3829 = vmatmul.bf16.gmra.mxu0 %v3015
        %v3830 = vpop.f32.mrf.mxu0
        %v3831 = vadd.f32 %v3727, %v3830
        %v3832 = vpop.f32.mrf.mxu0
        %v3833 = vadd.f32 %v3729, %v3832
        %3834 = vmatmul.bf16.gmra.mxu0 %v3024
        %v3835 = vpop.f32.mrf.mxu0
        %v3836 = vadd.f32 %v3732, %v3835
        %v3837 = vpop.f32.mrf.mxu0
        %v3838 = vadd.f32 %v3734, %v3837
        %3839 = vmatmul.bf16.gmra.mxu0 %v3033
        %v3840 = vpop.f32.mrf.mxu0
        %v3841 = vadd.f32 %v3737, %v3840
        %v3842 = vpop.f32.mrf.mxu0
        %v3843 = vadd.f32 %v3739, %v3842
        %3844 = vmatmul.bf16.gmra.mxu0 %v3042
        %v3845 = vpop.f32.mrf.mxu0
        %v3846 = vadd.f32 %v3742, %v3845
        %v3847 = vpop.f32.mrf.mxu0
        %v3848 = vadd.f32 %v3744, %v3847
        %3849 = vmatmul.bf16.gmra.mxu0 %v3051
        %v3850 = vpop.f32.mrf.mxu0
        %v3851 = vadd.f32 %v3747, %v3850
        %v3852 = vpop.f32.mrf.mxu0
        %v3853 = vadd.f32 %v3749, %v3852
        %3854 = vmatmul.bf16.gmra.mxu0 %v3060
        %v3855 = vpop.f32.mrf.mxu0
        %v3856 = vadd.f32 %v3752, %v3855
        %v3857 = vpop.f32.mrf.mxu0
        %v3858 = vadd.f32 %v3754, %v3857
        %3859 = vmatmul.bf16.gmra.mxu0 %v3069
        %v3860 = vpop.f32.mrf.mxu0
        %v3861 = vadd.f32 %v3757, %v3860
        %v3862 = vpop.f32.mrf.mxu0
        %v3863 = vadd.f32 %v3759, %v3862
        %3864 = vmatmul.bf16.gmra.mxu0 %v3078
        %v3865 = vpop.f32.mrf.mxu0
        %v3866 = vadd.f32 %v3762, %v3865
        %v3867 = vpop.f32.mrf.mxu0
        %v3868 = vadd.f32 %v3764, %v3867
        %3869 = vdwg.mxu0
        %3870 = vmatpush.bf16.msra.mxu0 %v3541
        %3871 = vmatpush.bf16.msra.mxu0 %v3540
        %3872 = vmatpush.bf16.msra.mxu0 %v3539
        %3873 = vmatpush.bf16.msra.mxu0 %v3538
        %3874 = vmatpush.bf16.msra.mxu0 %v3537
        %3875 = vmatpush.bf16.msra.mxu0 %v3536
        %3876 = vmatpush.bf16.msra.mxu0 %v3535
        %3877 = vmatpush.bf16.msra.mxu0 %v3534
        %3878 = vmatmul.bf16.gmra.mxu0 %v2917
        %v3879 = vpop.f32.mrf.mxu0
        %v3880 = vadd.f32 %v3776, %v3879
        %v3881 = vpop.f32.mrf.mxu0
        %v3882 = vadd.f32 %v3778, %v3881
        %3883 = vmatmul.bf16.gmra.mxu0 %v2926
        %v3884 = vpop.f32.mrf.mxu0
        %v3885 = vadd.f32 %v3781, %v3884
        %v3886 = vpop.f32.mrf.mxu0
        %v3887 = vadd.f32 %v3783, %v3886
        %3888 = vmatmul.bf16.gmra.mxu0 %v2935
        %v3889 = vpop.f32.mrf.mxu0
        %v3890 = vadd.f32 %v3786, %v3889
        %v3891 = vpop.f32.mrf.mxu0
        %v3892 = vadd.f32 %v3788, %v3891
        %3893 = vmatmul.bf16.gmra.mxu0 %v2944
        %v3894 = vpop.f32.mrf.mxu0
        %v3895 = vadd.f32 %v3791, %v3894
        %v3896 = vpop.f32.mrf.mxu0
        %v3897 = vadd.f32 %v3793, %v3896
        %3898 = vmatmul.bf16.gmra.mxu0 %v2953
        %v3899 = vpop.f32.mrf.mxu0
        %v3900 = vadd.f32 %v3796, %v3899
        %v3901 = vpop.f32.mrf.mxu0
        %v3902 = vadd.f32 %v3798, %v3901
        %3903 = vmatmul.bf16.gmra.mxu0 %v2962
        %v3904 = vpop.f32.mrf.mxu0
        %v3905 = vadd.f32 %v3801, %v3904
        %v3906 = vpop.f32.mrf.mxu0
        %v3907 = vadd.f32 %v3803, %v3906
        %3908 = vmatmul.bf16.gmra.mxu0 %v2971
        %v3909 = vpop.f32.mrf.mxu0
        %v3910 = vadd.f32 %v3806, %v3909
        %v3911 = vpop.f32.mrf.mxu0
        %v3912 = vadd.f32 %v3808, %v3911
        %3913 = vmatmul.bf16.gmra.mxu0 %v2980
        %v3914 = vpop.f32.mrf.mxu0
        %v3915 = vadd.f32 %v3811, %v3914
        %v3916 = vpop.f32.mrf.mxu0
        %v3917 = vadd.f32 %v3813, %v3916
        %3918 = vmatmul.bf16.gmra.mxu0 %v2989
        %v3919 = vpop.f32.mrf.mxu0
        %v3920 = vadd.f32 %v3816, %v3919
        %v3921 = vpop.f32.mrf.mxu0
        %v3922 = vadd.f32 %v3818, %v3921
        %3923 = vmatmul.bf16.gmra.mxu0 %v2998
        %v3924 = vpop.f32.mrf.mxu0
        %v3925 = vadd.f32 %v3821, %v3924
        %v3926 = vpop.f32.mrf.mxu0
        %v3927 = vadd.f32 %v3823, %v3926
        %3928 = vmatmul.bf16.gmra.mxu0 %v3007
        %v3929 = vpop.f32.mrf.mxu0
        %v3930 = vadd.f32 %v3826, %v3929
        %v3931 = vpop.f32.mrf.mxu0
        %v3932 = vadd.f32 %v3828, %v3931
        %3933 = vmatmul.bf16.gmra.mxu0 %v3016
        %v3934 = vpop.f32.mrf.mxu0
        %v3935 = vadd.f32 %v3831, %v3934
        %v3936 = vpop.f32.mrf.mxu0
        %v3937 = vadd.f32 %v3833, %v3936
        %3938 = vmatmul.bf16.gmra.mxu0 %v3025
        %v3939 = vpop.f32.mrf.mxu0
        %v3940 = vadd.f32 %v3836, %v3939
        %v3941 = vpop.f32.mrf.mxu0
        %v3942 = vadd.f32 %v3838, %v3941
        %3943 = vmatmul.bf16.gmra.mxu0 %v3034
        %v3944 = vpop.f32.mrf.mxu0
        %v3945 = vadd.f32 %v3841, %v3944
        %v3946 = vpop.f32.mrf.mxu0
        %v3947 = vadd.f32 %v3843, %v3946
        %3948 = vmatmul.bf16.gmra.mxu0 %v3043
        %v3949 = vpop.f32.mrf.mxu0
        %v3950 = vadd.f32 %v3846, %v3949
        %v3951 = vpop.f32.mrf.mxu0
        %v3952 = vadd.f32 %v3848, %v3951
        %3953 = vmatmul.bf16.gmra.mxu0 %v3052
        %v3954 = vpop.f32.mrf.mxu0
        %v3955 = vadd.f32 %v3851, %v3954
        %v3956 = vpop.f32.mrf.mxu0
        %v3957 = vadd.f32 %v3853, %v3956
        %3958 = vmatmul.bf16.gmra.mxu0 %v3061
        %v3959 = vpop.f32.mrf.mxu0
        %v3960 = vadd.f32 %v3856, %v3959
        %v3961 = vpop.f32.mrf.mxu0
        %v3962 = vadd.f32 %v3858, %v3961
        %3963 = vmatmul.bf16.gmra.mxu0 %v3070
        %v3964 = vpop.f32.mrf.mxu0
        %v3965 = vadd.f32 %v3861, %v3964
        %v3966 = vpop.f32.mrf.mxu0
        %v3967 = vadd.f32 %v3863, %v3966
        %3968 = vmatmul.bf16.gmra.mxu0 %v3079
        %v3969 = vpop.f32.mrf.mxu0
        %v3970 = vadd.f32 %v3866, %v3969
        %v3971 = vpop.f32.mrf.mxu0
        %v3972 = vadd.f32 %v3868, %v3971
        %3973 = vdwg.mxu0
        %3974 = vmatpush.bf16.msra.mxu0 %v3549
        %3975 = vmatpush.bf16.msra.mxu0 %v3548
        %3976 = vmatpush.bf16.msra.mxu0 %v3547
        %3977 = vmatpush.bf16.msra.mxu0 %v3546
        %3978 = vmatpush.bf16.msra.mxu0 %v3545
        %3979 = vmatpush.bf16.msra.mxu0 %v3544
        %3980 = vmatpush.bf16.msra.mxu0 %v3543
        %3981 = vmatpush.bf16.msra.mxu0 %v3542
        %3982 = vmatmul.bf16.gmra.mxu0 %v2918
        %v3983 = vpop.f32.mrf.mxu0
        %v3984 = vadd.f32 %v3880, %v3983
        %v3985 = vpop.f32.mrf.mxu0
        %v3986 = vadd.f32 %v3882, %v3985
        %3987 = vmatmul.bf16.gmra.mxu0 %v2927
        %v3988 = vpop.f32.mrf.mxu0
        %v3989 = vadd.f32 %v3885, %v3988
        %v3990 = vpop.f32.mrf.mxu0
        %v3991 = vadd.f32 %v3887, %v3990
        %3992 = vmatmul.bf16.gmra.mxu0 %v2936
        %v3993 = vpop.f32.mrf.mxu0
        %v3994 = vadd.f32 %v3890, %v3993
        %v3995 = vpop.f32.mrf.mxu0
        %v3996 = vadd.f32 %v3892, %v3995
        %3997 = vmatmul.bf16.gmra.mxu0 %v2945
        %v3998 = vpop.f32.mrf.mxu0
        %v3999 = vadd.f32 %v3895, %v3998
        %v4000 = vpop.f32.mrf.mxu0
        %v4001 = vadd.f32 %v3897, %v4000
        %4002 = vmatmul.bf16.gmra.mxu0 %v2954
        %v4003 = vpop.f32.mrf.mxu0
        %v4004 = vadd.f32 %v3900, %v4003
        %v4005 = vpop.f32.mrf.mxu0
        %v4006 = vadd.f32 %v3902, %v4005
        %4007 = vmatmul.bf16.gmra.mxu0 %v2963
        %v4008 = vpop.f32.mrf.mxu0
        %v4009 = vadd.f32 %v3905, %v4008
        %v4010 = vpop.f32.mrf.mxu0
        %v4011 = vadd.f32 %v3907, %v4010
        %4012 = vmatmul.bf16.gmra.mxu0 %v2972
        %v4013 = vpop.f32.mrf.mxu0
        %v4014 = vadd.f32 %v3910, %v4013
        %v4015 = vpop.f32.mrf.mxu0
        %v4016 = vadd.f32 %v3912, %v4015
        %4017 = vmatmul.bf16.gmra.mxu0 %v2981
        %v4018 = vpop.f32.mrf.mxu0
        %v4019 = vadd.f32 %v3915, %v4018
        %v4020 = vpop.f32.mrf.mxu0
        %v4021 = vadd.f32 %v3917, %v4020
        %4022 = vmatmul.bf16.gmra.mxu0 %v2990
        %v4023 = vpop.f32.mrf.mxu0
        %v4024 = vadd.f32 %v3920, %v4023
        %v4025 = vpop.f32.mrf.mxu0
        %v4026 = vadd.f32 %v3922, %v4025
        %4027 = vmatmul.bf16.gmra.mxu0 %v2999
        %v4028 = vpop.f32.mrf.mxu0
        %v4029 = vadd.f32 %v3925, %v4028
        %v4030 = vpop.f32.mrf.mxu0
        %v4031 = vadd.f32 %v3927, %v4030
        %4032 = vmatmul.bf16.gmra.mxu0 %v3008
        %v4033 = vpop.f32.mrf.mxu0
        %v4034 = vadd.f32 %v3930, %v4033
        %v4035 = vpop.f32.mrf.mxu0
        %v4036 = vadd.f32 %v3932, %v4035
        %4037 = vmatmul.bf16.gmra.mxu0 %v3017
        %v4038 = vpop.f32.mrf.mxu0
        %v4039 = vadd.f32 %v3935, %v4038
        %v4040 = vpop.f32.mrf.mxu0
        %v4041 = vadd.f32 %v3937, %v4040
        %4042 = vmatmul.bf16.gmra.mxu0 %v3026
        %v4043 = vpop.f32.mrf.mxu0
        %v4044 = vadd.f32 %v3940, %v4043
        %v4045 = vpop.f32.mrf.mxu0
        %v4046 = vadd.f32 %v3942, %v4045
        %4047 = vmatmul.bf16.gmra.mxu0 %v3035
        %v4048 = vpop.f32.mrf.mxu0
        %v4049 = vadd.f32 %v3945, %v4048
        %v4050 = vpop.f32.mrf.mxu0
        %v4051 = vadd.f32 %v3947, %v4050
        %4052 = vmatmul.bf16.gmra.mxu0 %v3044
        %v4053 = vpop.f32.mrf.mxu0
        %v4054 = vadd.f32 %v3950, %v4053
        %v4055 = vpop.f32.mrf.mxu0
        %v4056 = vadd.f32 %v3952, %v4055
        %4057 = vmatmul.bf16.gmra.mxu0 %v3053
        %v4058 = vpop.f32.mrf.mxu0
        %v4059 = vadd.f32 %v3955, %v4058
        %v4060 = vpop.f32.mrf.mxu0
        %v4061 = vadd.f32 %v3957, %v4060
        %4062 = vmatmul.bf16.gmra.mxu0 %v3062
        %v4063 = vpop.f32.mrf.mxu0
        %v4064 = vadd.f32 %v3960, %v4063
        %v4065 = vpop.f32.mrf.mxu0
        %v4066 = vadd.f32 %v3962, %v4065
        %4067 = vmatmul.bf16.gmra.mxu0 %v3071
        %v4068 = vpop.f32.mrf.mxu0
        %v4069 = vadd.f32 %v3965, %v4068
        %v4070 = vpop.f32.mrf.mxu0
        %v4071 = vadd.f32 %v3967, %v4070
        %4072 = vmatmul.bf16.gmra.mxu0 %v3080
        %v4073 = vpop.f32.mrf.mxu0
        %v4074 = vadd.f32 %v3970, %v4073
        %v4075 = vpop.f32.mrf.mxu0
        %v4076 = vadd.f32 %v3972, %v4075
        %4077 = vdwg.mxu0
        %4078 = vmatpush.bf16.msra.mxu0 %v3557
        %4079 = vmatpush.bf16.msra.mxu0 %v3556
        %4080 = vmatpush.bf16.msra.mxu0 %v3555
        %4081 = vmatpush.bf16.msra.mxu0 %v3554
        %4082 = vmatpush.bf16.msra.mxu0 %v3553
        %4083 = vmatpush.bf16.msra.mxu0 %v3552
        %4084 = vmatpush.bf16.msra.mxu0 %v3551
        %4085 = vmatpush.bf16.msra.mxu0 %v3550
        %4086 = vmatmul.bf16.gmra.mxu0 %v2919
        %v4087 = vpop.f32.mrf.mxu0
        %v4088 = vadd.f32 %v3984, %v4087
        %v4089 = vpop.f32.mrf.mxu0
        %v4090 = vadd.f32 %v3986, %v4089
        %4091 = vmatmul.bf16.gmra.mxu0 %v2928
        %v4092 = vpop.f32.mrf.mxu0
        %v4093 = vadd.f32 %v3989, %v4092
        %v4094 = vpop.f32.mrf.mxu0
        %v4095 = vadd.f32 %v3991, %v4094
        %4096 = vmatmul.bf16.gmra.mxu0 %v2937
        %v4097 = vpop.f32.mrf.mxu0
        %v4098 = vadd.f32 %v3994, %v4097
        %v4099 = vpop.f32.mrf.mxu0
        %v4100 = vadd.f32 %v3996, %v4099
        %4101 = vmatmul.bf16.gmra.mxu0 %v2946
        %v4102 = vpop.f32.mrf.mxu0
        %v4103 = vadd.f32 %v3999, %v4102
        %v4104 = vpop.f32.mrf.mxu0
        %v4105 = vadd.f32 %v4001, %v4104
        %4106 = vmatmul.bf16.gmra.mxu0 %v2955
        %v4107 = vpop.f32.mrf.mxu0
        %v4108 = vadd.f32 %v4004, %v4107
        %v4109 = vpop.f32.mrf.mxu0
        %v4110 = vadd.f32 %v4006, %v4109
        %4111 = vmatmul.bf16.gmra.mxu0 %v2964
        %v4112 = vpop.f32.mrf.mxu0
        %v4113 = vadd.f32 %v4009, %v4112
        %v4114 = vpop.f32.mrf.mxu0
        %v4115 = vadd.f32 %v4011, %v4114
        %4116 = vmatmul.bf16.gmra.mxu0 %v2973
        %v4117 = vpop.f32.mrf.mxu0
        %v4118 = vadd.f32 %v4014, %v4117
        %v4119 = vpop.f32.mrf.mxu0
        %v4120 = vadd.f32 %v4016, %v4119
        %4121 = vmatmul.bf16.gmra.mxu0 %v2982
        %v4122 = vpop.f32.mrf.mxu0
        %v4123 = vadd.f32 %v4019, %v4122
        %v4124 = vpop.f32.mrf.mxu0
        %v4125 = vadd.f32 %v4021, %v4124
        %4126 = vmatmul.bf16.gmra.mxu0 %v2991
        %v4127 = vpop.f32.mrf.mxu0
        %v4128 = vadd.f32 %v4024, %v4127
        %v4129 = vpop.f32.mrf.mxu0
        %v4130 = vadd.f32 %v4026, %v4129
        %4131 = vmatmul.bf16.gmra.mxu0 %v3000
        %v4132 = vpop.f32.mrf.mxu0
        %v4133 = vadd.f32 %v4029, %v4132
        %v4134 = vpop.f32.mrf.mxu0
        %v4135 = vadd.f32 %v4031, %v4134
        %4136 = vmatmul.bf16.gmra.mxu0 %v3009
        %v4137 = vpop.f32.mrf.mxu0
        %v4138 = vadd.f32 %v4034, %v4137
        %v4139 = vpop.f32.mrf.mxu0
        %v4140 = vadd.f32 %v4036, %v4139
        %4141 = vmatmul.bf16.gmra.mxu0 %v3018
        %v4142 = vpop.f32.mrf.mxu0
        %v4143 = vadd.f32 %v4039, %v4142
        %v4144 = vpop.f32.mrf.mxu0
        %v4145 = vadd.f32 %v4041, %v4144
        %4146 = vmatmul.bf16.gmra.mxu0 %v3027
        %v4147 = vpop.f32.mrf.mxu0
        %v4148 = vadd.f32 %v4044, %v4147
        %v4149 = vpop.f32.mrf.mxu0
        %v4150 = vadd.f32 %v4046, %v4149
        %4151 = vmatmul.bf16.gmra.mxu0 %v3036
        %v4152 = vpop.f32.mrf.mxu0
        %v4153 = vadd.f32 %v4049, %v4152
        %v4154 = vpop.f32.mrf.mxu0
        %v4155 = vadd.f32 %v4051, %v4154
        %4156 = vmatmul.bf16.gmra.mxu0 %v3045
        %v4157 = vpop.f32.mrf.mxu0
        %v4158 = vadd.f32 %v4054, %v4157
        %v4159 = vpop.f32.mrf.mxu0
        %v4160 = vadd.f32 %v4056, %v4159
        %4161 = vmatmul.bf16.gmra.mxu0 %v3054
        %v4162 = vpop.f32.mrf.mxu0
        %v4163 = vadd.f32 %v4059, %v4162
        %v4164 = vpop.f32.mrf.mxu0
        %v4165 = vadd.f32 %v4061, %v4164
        %4166 = vmatmul.bf16.gmra.mxu0 %v3063
        %v4167 = vpop.f32.mrf.mxu0
        %v4168 = vadd.f32 %v4064, %v4167
        %v4169 = vpop.f32.mrf.mxu0
        %v4170 = vadd.f32 %v4066, %v4169
        %4171 = vmatmul.bf16.gmra.mxu0 %v3072
        %v4172 = vpop.f32.mrf.mxu0
        %v4173 = vadd.f32 %v4069, %v4172
        %v4174 = vpop.f32.mrf.mxu0
        %v4175 = vadd.f32 %v4071, %v4174
        %4176 = vmatmul.bf16.gmra.mxu0 %v3081
        %v4177 = vpop.f32.mrf.mxu0
        %v4178 = vadd.f32 %v4074, %v4177
        %v4179 = vpop.f32.mrf.mxu0
        %v4180 = vadd.f32 %v4076, %v4179
        %4181 = vdwg.mxu0
        %4182 = vmatpush.bf16.msra.mxu0 %v3565
        %4183 = vmatpush.bf16.msra.mxu0 %v3564
        %4184 = vmatpush.bf16.msra.mxu0 %v3563
        %4185 = vmatpush.bf16.msra.mxu0 %v3562
        %4186 = vmatpush.bf16.msra.mxu0 %v3561
        %4187 = vmatpush.bf16.msra.mxu0 %v3560
        %4188 = vmatpush.bf16.msra.mxu0 %v3559
        %4189 = vmatpush.bf16.msra.mxu0 %v3558
        %4190 = vmatmul.bf16.gmra.mxu0 %v2920
        %v4191 = vpop.f32.mrf.mxu0
        %v4192 = vadd.f32 %v4088, %v4191
        %v4193 = vpop.f32.mrf.mxu0
        %v4194 = vadd.f32 %v4090, %v4193
        %4195 = vmatmul.bf16.gmra.mxu0 %v2929
        %v4196 = vpop.f32.mrf.mxu0
        %v4197 = vadd.f32 %v4093, %v4196
        %v4198 = vpop.f32.mrf.mxu0
        %v4199 = vadd.f32 %v4095, %v4198
        %4200 = vmatmul.bf16.gmra.mxu0 %v2938
        %v4201 = vpop.f32.mrf.mxu0
        %v4202 = vadd.f32 %v4098, %v4201
        %v4203 = vpop.f32.mrf.mxu0
        %v4204 = vadd.f32 %v4100, %v4203
        %4205 = vmatmul.bf16.gmra.mxu0 %v2947
        %v4206 = vpop.f32.mrf.mxu0
        %v4207 = vadd.f32 %v4103, %v4206
        %v4208 = vpop.f32.mrf.mxu0
        %v4209 = vadd.f32 %v4105, %v4208
        %4210 = vmatmul.bf16.gmra.mxu0 %v2956
        %v4211 = vpop.f32.mrf.mxu0
        %v4212 = vadd.f32 %v4108, %v4211
        %v4213 = vpop.f32.mrf.mxu0
        %v4214 = vadd.f32 %v4110, %v4213
        %4215 = vmatmul.bf16.gmra.mxu0 %v2965
        %v4216 = vpop.f32.mrf.mxu0
        %v4217 = vadd.f32 %v4113, %v4216
        %v4218 = vpop.f32.mrf.mxu0
        %v4219 = vadd.f32 %v4115, %v4218
        %4220 = vmatmul.bf16.gmra.mxu0 %v2974
        %v4221 = vpop.f32.mrf.mxu0
        %v4222 = vadd.f32 %v4118, %v4221
        %v4223 = vpop.f32.mrf.mxu0
        %v4224 = vadd.f32 %v4120, %v4223
        %4225 = vmatmul.bf16.gmra.mxu0 %v2983
        %v4226 = vpop.f32.mrf.mxu0
        %v4227 = vadd.f32 %v4123, %v4226
        %v4228 = vpop.f32.mrf.mxu0
        %v4229 = vadd.f32 %v4125, %v4228
        %4230 = vmatmul.bf16.gmra.mxu0 %v2992
        %v4231 = vpop.f32.mrf.mxu0
        %v4232 = vadd.f32 %v4128, %v4231
        %v4233 = vpop.f32.mrf.mxu0
        %v4234 = vadd.f32 %v4130, %v4233
        %4235 = vmatmul.bf16.gmra.mxu0 %v3001
        %v4236 = vpop.f32.mrf.mxu0
        %v4237 = vadd.f32 %v4133, %v4236
        %v4238 = vpop.f32.mrf.mxu0
        %v4239 = vadd.f32 %v4135, %v4238
        %4240 = vmatmul.bf16.gmra.mxu0 %v3010
        %v4241 = vpop.f32.mrf.mxu0
        %v4242 = vadd.f32 %v4138, %v4241
        %v4243 = vpop.f32.mrf.mxu0
        %v4244 = vadd.f32 %v4140, %v4243
        %4245 = vmatmul.bf16.gmra.mxu0 %v3019
        %v4246 = vpop.f32.mrf.mxu0
        %v4247 = vadd.f32 %v4143, %v4246
        %v4248 = vpop.f32.mrf.mxu0
        %v4249 = vadd.f32 %v4145, %v4248
        %4250 = vmatmul.bf16.gmra.mxu0 %v3028
        %v4251 = vpop.f32.mrf.mxu0
        %v4252 = vadd.f32 %v4148, %v4251
        %v4253 = vpop.f32.mrf.mxu0
        %v4254 = vadd.f32 %v4150, %v4253
        %4255 = vmatmul.bf16.gmra.mxu0 %v3037
        %v4256 = vpop.f32.mrf.mxu0
        %v4257 = vadd.f32 %v4153, %v4256
        %v4258 = vpop.f32.mrf.mxu0
        %v4259 = vadd.f32 %v4155, %v4258
        %4260 = vmatmul.bf16.gmra.mxu0 %v3046
        %v4261 = vpop.f32.mrf.mxu0
        %v4262 = vadd.f32 %v4158, %v4261
        %v4263 = vpop.f32.mrf.mxu0
        %v4264 = vadd.f32 %v4160, %v4263
        %4265 = vmatmul.bf16.gmra.mxu0 %v3055
        %v4266 = vpop.f32.mrf.mxu0
        %v4267 = vadd.f32 %v4163, %v4266
        %v4268 = vpop.f32.mrf.mxu0
        %v4269 = vadd.f32 %v4165, %v4268
        %4270 = vmatmul.bf16.gmra.mxu0 %v3064
        %v4271 = vpop.f32.mrf.mxu0
        %v4272 = vadd.f32 %v4168, %v4271
        %v4273 = vpop.f32.mrf.mxu0
        %v4274 = vadd.f32 %v4170, %v4273
        %4275 = vmatmul.bf16.gmra.mxu0 %v3073
        %v4276 = vpop.f32.mrf.mxu0
        %v4277 = vadd.f32 %v4173, %v4276
        %v4278 = vpop.f32.mrf.mxu0
        %v4279 = vadd.f32 %v4175, %v4278
        %4280 = vmatmul.bf16.gmra.mxu0 %v3082
        %v4281 = vpop.f32.mrf.mxu0
        %v4282 = vadd.f32 %v4178, %v4281
        %v4283 = vpop.f32.mrf.mxu0
        %v4284 = vadd.f32 %v4180, %v4283
        %4285 = vdwg.mxu0
        %4286 = vmatpush.bf16.msra.mxu0 %v3573
        %4287 = vmatpush.bf16.msra.mxu0 %v3572
        %4288 = vmatpush.bf16.msra.mxu0 %v3571
        %4289 = vmatpush.bf16.msra.mxu0 %v3570
        %4290 = vmatpush.bf16.msra.mxu0 %v3569
        %4291 = vmatpush.bf16.msra.mxu0 %v3568
        %4292 = vmatpush.bf16.msra.mxu0 %v3567
        %4293 = vmatpush.bf16.msra.mxu0 %v3566
        %4294 = vmatmul.bf16.gmra.mxu0 %v2921
        %v4295 = vpop.f32.mrf.mxu0
        %v4296 = vadd.f32 %v4192, %v4295
        %v4297 = vpop.f32.mrf.mxu0
        %v4298 = vadd.f32 %v4194, %v4297
        %4299 = vmatmul.bf16.gmra.mxu0 %v2930
        %v4300 = vpop.f32.mrf.mxu0
        %v4301 = vadd.f32 %v4197, %v4300
        %v4302 = vpop.f32.mrf.mxu0
        %v4303 = vadd.f32 %v4199, %v4302
        %4304 = vmatmul.bf16.gmra.mxu0 %v2939
        %v4305 = vpop.f32.mrf.mxu0
        %v4306 = vadd.f32 %v4202, %v4305
        %v4307 = vpop.f32.mrf.mxu0
        %v4308 = vadd.f32 %v4204, %v4307
        %4309 = vmatmul.bf16.gmra.mxu0 %v2948
        %v4310 = vpop.f32.mrf.mxu0
        %v4311 = vadd.f32 %v4207, %v4310
        %v4312 = vpop.f32.mrf.mxu0
        %v4313 = vadd.f32 %v4209, %v4312
        %4314 = vmatmul.bf16.gmra.mxu0 %v2957
        %v4315 = vpop.f32.mrf.mxu0
        %v4316 = vadd.f32 %v4212, %v4315
        %v4317 = vpop.f32.mrf.mxu0
        %v4318 = vadd.f32 %v4214, %v4317
        %4319 = vmatmul.bf16.gmra.mxu0 %v2966
        %v4320 = vpop.f32.mrf.mxu0
        %v4321 = vadd.f32 %v4217, %v4320
        %v4322 = vpop.f32.mrf.mxu0
        %v4323 = vadd.f32 %v4219, %v4322
        %4324 = vmatmul.bf16.gmra.mxu0 %v2975
        %v4325 = vpop.f32.mrf.mxu0
        %v4326 = vadd.f32 %v4222, %v4325
        %v4327 = vpop.f32.mrf.mxu0
        %v4328 = vadd.f32 %v4224, %v4327
        %4329 = vmatmul.bf16.gmra.mxu0 %v2984
        %v4330 = vpop.f32.mrf.mxu0
        %v4331 = vadd.f32 %v4227, %v4330
        %v4332 = vpop.f32.mrf.mxu0
        %v4333 = vadd.f32 %v4229, %v4332
        %4334 = vmatmul.bf16.gmra.mxu0 %v2993
        %v4335 = vpop.f32.mrf.mxu0
        %v4336 = vadd.f32 %v4232, %v4335
        %v4337 = vpop.f32.mrf.mxu0
        %v4338 = vadd.f32 %v4234, %v4337
        %4339 = vmatmul.bf16.gmra.mxu0 %v3002
        %v4340 = vpop.f32.mrf.mxu0
        %v4341 = vadd.f32 %v4237, %v4340
        %v4342 = vpop.f32.mrf.mxu0
        %v4343 = vadd.f32 %v4239, %v4342
        %4344 = vmatmul.bf16.gmra.mxu0 %v3011
        %v4345 = vpop.f32.mrf.mxu0
        %v4346 = vadd.f32 %v4242, %v4345
        %v4347 = vpop.f32.mrf.mxu0
        %v4348 = vadd.f32 %v4244, %v4347
        %4349 = vmatmul.bf16.gmra.mxu0 %v3020
        %v4350 = vpop.f32.mrf.mxu0
        %v4351 = vadd.f32 %v4247, %v4350
        %v4352 = vpop.f32.mrf.mxu0
        %v4353 = vadd.f32 %v4249, %v4352
        %4354 = vmatmul.bf16.gmra.mxu0 %v3029
        %v4355 = vpop.f32.mrf.mxu0
        %v4356 = vadd.f32 %v4252, %v4355
        %v4357 = vpop.f32.mrf.mxu0
        %v4358 = vadd.f32 %v4254, %v4357
        %4359 = vmatmul.bf16.gmra.mxu0 %v3038
        %v4360 = vpop.f32.mrf.mxu0
        %v4361 = vadd.f32 %v4257, %v4360
        %v4362 = vpop.f32.mrf.mxu0
        %v4363 = vadd.f32 %v4259, %v4362
        %4364 = vmatmul.bf16.gmra.mxu0 %v3047
        %v4365 = vpop.f32.mrf.mxu0
        %v4366 = vadd.f32 %v4262, %v4365
        %v4367 = vpop.f32.mrf.mxu0
        %v4368 = vadd.f32 %v4264, %v4367
        %4369 = vmatmul.bf16.gmra.mxu0 %v3056
        %v4370 = vpop.f32.mrf.mxu0
        %v4371 = vadd.f32 %v4267, %v4370
        %v4372 = vpop.f32.mrf.mxu0
        %v4373 = vadd.f32 %v4269, %v4372
        %4374 = vmatmul.bf16.gmra.mxu0 %v3065
        %v4375 = vpop.f32.mrf.mxu0
        %v4376 = vadd.f32 %v4272, %v4375
        %v4377 = vpop.f32.mrf.mxu0
        %v4378 = vadd.f32 %v4274, %v4377
        %4379 = vmatmul.bf16.gmra.mxu0 %v3074
        %v4380 = vpop.f32.mrf.mxu0
        %v4381 = vadd.f32 %v4277, %v4380
        %v4382 = vpop.f32.mrf.mxu0
        %v4383 = vadd.f32 %v4279, %v4382
        %4384 = vmatmul.bf16.gmra.mxu0 %v3083
        %v4385 = vpop.f32.mrf.mxu0
        %v4386 = vadd.f32 %v4282, %v4385
        %v4387 = vpop.f32.mrf.mxu0
        %v4388 = vadd.f32 %v4284, %v4387
        %4389 = vdwg.mxu0
        %4390 = vmatpush.bf16.msra.mxu0 %v3581
        %4391 = vmatpush.bf16.msra.mxu0 %v3580
        %4392 = vmatpush.bf16.msra.mxu0 %v3579
        %4393 = vmatpush.bf16.msra.mxu0 %v3578
        %4394 = vmatpush.bf16.msra.mxu0 %v3577
        %4395 = vmatpush.bf16.msra.mxu0 %v3576
        %4396 = vmatpush.bf16.msra.mxu0 %v3575
        %4397 = vmatpush.bf16.msra.mxu0 %v3574
        %4398 = vmatmul.bf16.gmra.mxu0 %v2922
        %v4399 = vpop.f32.mrf.mxu0
        %v4400 = vadd.f32 %v4296, %v4399
        %v4401 = vpop.f32.mrf.mxu0
        %v4402 = vadd.f32 %v4298, %v4401
        %4403 = vmatmul.bf16.gmra.mxu0 %v2931
        %v4404 = vpop.f32.mrf.mxu0
        %v4405 = vadd.f32 %v4301, %v4404
        %v4406 = vpop.f32.mrf.mxu0
        %v4407 = vadd.f32 %v4303, %v4406
        %4408 = vmatmul.bf16.gmra.mxu0 %v2940
        %v4409 = vpop.f32.mrf.mxu0
        %v4410 = vadd.f32 %v4306, %v4409
        %v4411 = vpop.f32.mrf.mxu0
        %v4412 = vadd.f32 %v4308, %v4411
        %4413 = vmatmul.bf16.gmra.mxu0 %v2949
        %v4414 = vpop.f32.mrf.mxu0
        %v4415 = vadd.f32 %v4311, %v4414
        %v4416 = vpop.f32.mrf.mxu0
        %v4417 = vadd.f32 %v4313, %v4416
        %4418 = vmatmul.bf16.gmra.mxu0 %v2958
        %v4419 = vpop.f32.mrf.mxu0
        %v4420 = vadd.f32 %v4316, %v4419
        %v4421 = vpop.f32.mrf.mxu0
        %v4422 = vadd.f32 %v4318, %v4421
        %4423 = vmatmul.bf16.gmra.mxu0 %v2967
        %v4424 = vpop.f32.mrf.mxu0
        %v4425 = vadd.f32 %v4321, %v4424
        %v4426 = vpop.f32.mrf.mxu0
        %v4427 = vadd.f32 %v4323, %v4426
        %4428 = vmatmul.bf16.gmra.mxu0 %v2976
        %v4429 = vpop.f32.mrf.mxu0
        %v4430 = vadd.f32 %v4326, %v4429
        %v4431 = vpop.f32.mrf.mxu0
        %v4432 = vadd.f32 %v4328, %v4431
        %4433 = vmatmul.bf16.gmra.mxu0 %v2985
        %v4434 = vpop.f32.mrf.mxu0
        %v4435 = vadd.f32 %v4331, %v4434
        %v4436 = vpop.f32.mrf.mxu0
        %v4437 = vadd.f32 %v4333, %v4436
        %4438 = vmatmul.bf16.gmra.mxu0 %v2994
        %v4439 = vpop.f32.mrf.mxu0
        %v4440 = vadd.f32 %v4336, %v4439
        %v4441 = vpop.f32.mrf.mxu0
        %v4442 = vadd.f32 %v4338, %v4441
        %4443 = vmatmul.bf16.gmra.mxu0 %v3003
        %v4444 = vpop.f32.mrf.mxu0
        %v4445 = vadd.f32 %v4341, %v4444
        %v4446 = vpop.f32.mrf.mxu0
        %v4447 = vadd.f32 %v4343, %v4446
        %4448 = vmatmul.bf16.gmra.mxu0 %v3012
        %v4449 = vpop.f32.mrf.mxu0
        %v4450 = vadd.f32 %v4346, %v4449
        %v4451 = vpop.f32.mrf.mxu0
        %v4452 = vadd.f32 %v4348, %v4451
        %4453 = vmatmul.bf16.gmra.mxu0 %v3021
        %v4454 = vpop.f32.mrf.mxu0
        %v4455 = vadd.f32 %v4351, %v4454
        %v4456 = vpop.f32.mrf.mxu0
        %v4457 = vadd.f32 %v4353, %v4456
        %4458 = vmatmul.bf16.gmra.mxu0 %v3030
        %v4459 = vpop.f32.mrf.mxu0
        %v4460 = vadd.f32 %v4356, %v4459
        %v4461 = vpop.f32.mrf.mxu0
        %v4462 = vadd.f32 %v4358, %v4461
        %4463 = vmatmul.bf16.gmra.mxu0 %v3039
        %v4464 = vpop.f32.mrf.mxu0
        %v4465 = vadd.f32 %v4361, %v4464
        %v4466 = vpop.f32.mrf.mxu0
        %v4467 = vadd.f32 %v4363, %v4466
        %4468 = vmatmul.bf16.gmra.mxu0 %v3048
        %v4469 = vpop.f32.mrf.mxu0
        %v4470 = vadd.f32 %v4366, %v4469
        %v4471 = vpop.f32.mrf.mxu0
        %v4472 = vadd.f32 %v4368, %v4471
        %4473 = vmatmul.bf16.gmra.mxu0 %v3057
        %v4474 = vpop.f32.mrf.mxu0
        %v4475 = vadd.f32 %v4371, %v4474
        %v4476 = vpop.f32.mrf.mxu0
        %v4477 = vadd.f32 %v4373, %v4476
        %4478 = vmatmul.bf16.gmra.mxu0 %v3066
        %v4479 = vpop.f32.mrf.mxu0
        %v4480 = vadd.f32 %v4376, %v4479
        %v4481 = vpop.f32.mrf.mxu0
        %v4482 = vadd.f32 %v4378, %v4481
        %4483 = vmatmul.bf16.gmra.mxu0 %v3075
        %v4484 = vpop.f32.mrf.mxu0
        %v4485 = vadd.f32 %v4381, %v4484
        %v4486 = vpop.f32.mrf.mxu0
        %v4487 = vadd.f32 %v4383, %v4486
        %4488 = vmatmul.bf16.gmra.mxu0 %v3084
        %v4489 = vpop.f32.mrf.mxu0
        %v4490 = vadd.f32 %v4386, %v4489
        %v4491 = vpop.f32.mrf.mxu0
        %v4492 = vadd.f32 %v4388, %v4491
        %4493 = vdwg.mxu0
        %4494 = vmatpush.bf16.msra.mxu0 %v3589
        %4495 = vmatpush.bf16.msra.mxu0 %v3588
        %4496 = vmatpush.bf16.msra.mxu0 %v3587
        %4497 = vmatpush.bf16.msra.mxu0 %v3586
        %4498 = vmatpush.bf16.msra.mxu0 %v3585
        %4499 = vmatpush.bf16.msra.mxu0 %v3584
        %4500 = vmatpush.bf16.msra.mxu0 %v3583
        %4501 = vmatpush.bf16.msra.mxu0 %v3582
        %4502 = vmatmul.bf16.gmra.mxu0 %v2923
        %v4503 = vpop.f32.mrf.mxu0
        %v4504 = vadd.f32 %v4400, %v4503
        %v4505 = vpop.f32.mrf.mxu0
        %v4506 = vadd.f32 %v4402, %v4505
        %4507 = vmatmul.bf16.gmra.mxu0 %v2932
        %v4508 = vpop.f32.mrf.mxu0
        %v4509 = vadd.f32 %v4405, %v4508
        %v4510 = vpop.f32.mrf.mxu0
        %v4511 = vadd.f32 %v4407, %v4510
        %4512 = vmatmul.bf16.gmra.mxu0 %v2941
        %v4513 = vpop.f32.mrf.mxu0
        %v4514 = vadd.f32 %v4410, %v4513
        %v4515 = vpop.f32.mrf.mxu0
        %v4516 = vadd.f32 %v4412, %v4515
        %4517 = vmatmul.bf16.gmra.mxu0 %v2950
        %v4518 = vpop.f32.mrf.mxu0
        %v4519 = vadd.f32 %v4415, %v4518
        %v4520 = vpop.f32.mrf.mxu0
        %v4521 = vadd.f32 %v4417, %v4520
        %4522 = vmatmul.bf16.gmra.mxu0 %v2959
        %v4523 = vpop.f32.mrf.mxu0
        %v4524 = vadd.f32 %v4420, %v4523
        %v4525 = vpop.f32.mrf.mxu0
        %v4526 = vadd.f32 %v4422, %v4525
        %4527 = vmatmul.bf16.gmra.mxu0 %v2968
        %v4528 = vpop.f32.mrf.mxu0
        %v4529 = vadd.f32 %v4425, %v4528
        %v4530 = vpop.f32.mrf.mxu0
        %v4531 = vadd.f32 %v4427, %v4530
        %4532 = vmatmul.bf16.gmra.mxu0 %v2977
        %v4533 = vpop.f32.mrf.mxu0
        %v4534 = vadd.f32 %v4430, %v4533
        %v4535 = vpop.f32.mrf.mxu0
        %v4536 = vadd.f32 %v4432, %v4535
        %4537 = vmatmul.bf16.gmra.mxu0 %v2986
        %v4538 = vpop.f32.mrf.mxu0
        %v4539 = vadd.f32 %v4435, %v4538
        %v4540 = vpop.f32.mrf.mxu0
        %v4541 = vadd.f32 %v4437, %v4540
        %4542 = vmatmul.bf16.gmra.mxu0 %v2995
        %v4543 = vpop.f32.mrf.mxu0
        %v4544 = vadd.f32 %v4440, %v4543
        %v4545 = vpop.f32.mrf.mxu0
        %v4546 = vadd.f32 %v4442, %v4545
        %4547 = vmatmul.bf16.gmra.mxu0 %v3004
        %v4548 = vpop.f32.mrf.mxu0
        %v4549 = vadd.f32 %v4445, %v4548
        %v4550 = vpop.f32.mrf.mxu0
        %v4551 = vadd.f32 %v4447, %v4550
        %4552 = vmatmul.bf16.gmra.mxu0 %v3013
        %v4553 = vpop.f32.mrf.mxu0
        %v4554 = vadd.f32 %v4450, %v4553
        %v4555 = vpop.f32.mrf.mxu0
        %v4556 = vadd.f32 %v4452, %v4555
        %4557 = vmatmul.bf16.gmra.mxu0 %v3022
        %v4558 = vpop.f32.mrf.mxu0
        %v4559 = vadd.f32 %v4455, %v4558
        %v4560 = vpop.f32.mrf.mxu0
        %v4561 = vadd.f32 %v4457, %v4560
        %4562 = vmatmul.bf16.gmra.mxu0 %v3031
        %v4563 = vpop.f32.mrf.mxu0
        %v4564 = vadd.f32 %v4460, %v4563
        %v4565 = vpop.f32.mrf.mxu0
        %v4566 = vadd.f32 %v4462, %v4565
        %4567 = vmatmul.bf16.gmra.mxu0 %v3040
        %v4568 = vpop.f32.mrf.mxu0
        %v4569 = vadd.f32 %v4465, %v4568
        %v4570 = vpop.f32.mrf.mxu0
        %v4571 = vadd.f32 %v4467, %v4570
        %4572 = vmatmul.bf16.gmra.mxu0 %v3049
        %v4573 = vpop.f32.mrf.mxu0
        %v4574 = vadd.f32 %v4470, %v4573
        %v4575 = vpop.f32.mrf.mxu0
        %v4576 = vadd.f32 %v4472, %v4575
        %4577 = vmatmul.bf16.gmra.mxu0 %v3058
        %v4578 = vpop.f32.mrf.mxu0
        %v4579 = vadd.f32 %v4475, %v4578
        %v4580 = vpop.f32.mrf.mxu0
        %v4581 = vadd.f32 %v4477, %v4580
        %4582 = vmatmul.bf16.gmra.mxu0 %v3067
        %v4583 = vpop.f32.mrf.mxu0
        %v4584 = vadd.f32 %v4480, %v4583
        %v4585 = vpop.f32.mrf.mxu0
        %v4586 = vadd.f32 %v4482, %v4585
        %4587 = vmatmul.bf16.gmra.mxu0 %v3076
        %v4588 = vpop.f32.mrf.mxu0
        %v4589 = vadd.f32 %v4485, %v4588
        %v4590 = vpop.f32.mrf.mxu0
        %v4591 = vadd.f32 %v4487, %v4590
        %4592 = vmatmul.bf16.gmra.mxu0 %v3085
        %v4593 = vpop.f32.mrf.mxu0
        %v4594 = vadd.f32 %v4490, %v4593
        %v4595 = vpop.f32.mrf.mxu0
        %v4596 = vadd.f32 %v4492, %v4595
        %4597 = vdwg.mxu0
        %v4598 = vmul.f32 %v4504, 0.11111111
        %v4599 = vmul.f32 %v4506, 0.11111111
        %v4600 = vmul.f32 %v4509, 0.11111111
        %v4601 = vmul.f32 %v4511, 0.11111111
        %v4602 = vmul.f32 %v4514, 0.11111111
        %v4603 = vmul.f32 %v4516, 0.11111111
        %v4604 = vmul.f32 %v4519, 0.11111111
        %v4605 = vmul.f32 %v4521, 0.11111111
        %v4606 = vmul.f32 %v4524, 0.11111111
        %v4607 = vmul.f32 %v4526, 0.11111111
        %v4608 = vmul.f32 %v4529, 0.11111111
        %v4609 = vmul.f32 %v4531, 0.11111111
        %v4610 = vmul.f32 %v4534, 0.11111111
        %v4611 = vmul.f32 %v4536, 0.11111111
        %v4612 = vmul.f32 %v4539, 0.11111111
        %v4613 = vmul.f32 %v4541, 0.11111111
        %v4614 = vmul.f32 %v4544, 0.11111111
        %v4615 = vmul.f32 %v4546, 0.11111111
        %v4616 = vmul.f32 %v4549, 0.11111111
        %v4617 = vmul.f32 %v4551, 0.11111111
        %v4618 = vmul.f32 %v4554, 0.11111111
        %v4619 = vmul.f32 %v4556, 0.11111111
        %v4620 = vmul.f32 %v4559, 0.11111111
        %v4621 = vmul.f32 %v4561, 0.11111111
        %v4622 = vmul.f32 %v4564, 0.11111111
        %v4623 = vmul.f32 %v4566, 0.11111111
        %v4624 = vmul.f32 %v4569, 0.11111111
        %v4625 = vmul.f32 %v4571, 0.11111111
        %v4626 = vmul.f32 %v4574, 0.11111111
        %v4627 = vmul.f32 %v4576, 0.11111111
        %v4628 = vmul.f32 %v4579, 0.11111111
        %v4629 = vmul.f32 %v4581, 0.11111111
        %v4630 = vmul.f32 %v4584, 0.11111111
        %v4631 = vmul.f32 %v4586, 0.11111111
        %v4632 = vmul.f32 %v4589, 0.11111111
        %v4633 = vmul.f32 %v4591, 0.11111111
        %v4634 = vmul.f32 %v4594, 0.11111111
        %v4635 = vmul.f32 %v4596, 0.11111111
        %v4636 = vpack.c.bf16 %v4598, %v4598
        %v4637 = vpack.c.bf16 %v4599, %v4599
        %v4638 = vpack.c.bf16 %v4600, %v4600
        %v4639 = vpack.c.bf16 %v4601, %v4601
        %v4640 = vpack.c.bf16 %v4602, %v4602
        %v4641 = vpack.c.bf16 %v4603, %v4603
        %v4642 = vpack.c.bf16 %v4604, %v4604
        %v4643 = vpack.c.bf16 %v4605, %v4605
        %v4644 = vpack.c.bf16 %v4606, %v4606
        %v4645 = vpack.c.bf16 %v4607, %v4607
        %v4646 = vpack.c.bf16 %v4608, %v4608
        %v4647 = vpack.c.bf16 %v4609, %v4609
        %v4648 = vpack.c.bf16 %v4610, %v4610
        %v4649 = vpack.c.bf16 %v4611, %v4611
        %v4650 = vpack.c.bf16 %v4612, %v4612
        %v4651 = vpack.c.bf16 %v4613, %v4613
        %v4652 = vpack.c.bf16 %v4614, %v4614
        %v4653 = vpack.c.bf16 %v4615, %v4615
        %v4654 = vpack.c.bf16 %v4616, %v4616
        %v4655 = vpack.c.bf16 %v4617, %v4617
        %v4656 = vpack.c.bf16 %v4618, %v4618
        %v4657 = vpack.c.bf16 %v4619, %v4619
        %v4658 = vpack.c.bf16 %v4620, %v4620
        %v4659 = vpack.c.bf16 %v4621, %v4621
        %v4660 = vpack.c.bf16 %v4622, %v4622
        %v4661 = vpack.c.bf16 %v4623, %v4623
        %v4662 = vpack.c.bf16 %v4624, %v4624
        %v4663 = vpack.c.bf16 %v4625, %v4625
        %v4664 = vpack.c.bf16 %v4626, %v4626
        %v4665 = vpack.c.bf16 %v4627, %v4627
        %v4666 = vpack.c.bf16 %v4628, %v4628
        %v4667 = vpack.c.bf16 %v4629, %v4629
        %v4668 = vpack.c.bf16 %v4630, %v4630
        %v4669 = vpack.c.bf16 %v4631, %v4631
        %v4670 = vpack.c.bf16 %v4632, %v4632
        %v4671 = vpack.c.bf16 %v4633, %v4633
        %v4672 = vpack.c.bf16 %v4634, %v4634
        %v4673 = vpack.c.bf16 %v4635, %v4635
        %4674 = vst [vmem:[%s307] sm:$0xf] %v4636
        %4675 = vst [vmem:[%s307 + $0x4] sm:$0xf] %v4637
        %4676 = vst [vmem:[%s307 + $0x8] sm:$0xf] %v4638
        %4677 = vst [vmem:[%s307 + $0xc] sm:$0xf] %v4639
        %4678 = vst [vmem:[%s307 + $0x10] sm:$0xf] %v4640
        %4679 = vst [vmem:[%s307 + $0x14] sm:$0xf] %v4641
        %4680 = vst [vmem:[%s307 + $0x18] sm:$0xf] %v4642
        %4681 = vst [vmem:[%s307 + $0x1c] sm:$0xf] %v4643
        %4682 = vst [vmem:[%s307 + $0x20] sm:$0xf] %v4644
        %4683 = vst [vmem:[%s307 + $0x24] sm:$0xf] %v4645
        %4684 = vst [vmem:[%s307 + $0x28] sm:$0xf] %v4646
        %4685 = vst [vmem:[%s307 + $0x2c] sm:$0xf] %v4647
        %4686 = vst [vmem:[%s307 + $0x30] sm:$0xf] %v4648
        %4687 = vst [vmem:[%s307 + $0x34] sm:$0xf] %v4649
        %4688 = vst [vmem:[%s307 + $0x38] sm:$0xf] %v4650
        %4689 = vst [vmem:[%s307 + $0x3c] sm:$0xf] %v4651
        %4690 = vst [vmem:[%s307 + $0x40] sm:$0xf] %v4652
        %4691 = vst [vmem:[%s307 + $0x44] sm:$0xf] %v4653
        %4692 = vst [vmem:[%s307 + $0x48] sm:$0xf] %v4654
        %4693 = vst [vmem:[%s307 + $0x4c] sm:$0xf] %v4655
        %4694 = vst [vmem:[%s307 + $0x50] sm:$0xf] %v4656
        %4695 = vst [vmem:[%s307 + $0x54] sm:$0xf] %v4657
        %4696 = vst [vmem:[%s307 + $0x58] sm:$0xf] %v4658
        %4697 = vst [vmem:[%s307 + $0x5c] sm:$0xf] %v4659
        %4698 = vst [vmem:[%s307 + $0x60] sm:$0xf] %v4660
        %4699 = vst [vmem:[%s307 + $0x64] sm:$0xf] %v4661
        %4700 = vst [vmem:[%s307 + $0x68] sm:$0xf] %v4662
        %4701 = vst [vmem:[%s307 + $0x6c] sm:$0xf] %v4663
        %4702 = vst [vmem:[%s307 + $0x70] sm:$0xf] %v4664
        %4703 = vst [vmem:[%s307 + $0x74] sm:$0xf] %v4665
        %4704 = vst [vmem:[%s307 + $0x78] sm:$0xf] %v4666
        %4705 = vst [vmem:[%s307 + $0x7c] sm:$0xf] %v4667
        %4706 = vst [vmem:[%s307 + $0x80] sm:$0xf] %v4668
        %4707 = vst [vmem:[%s307 + $0x84] sm:$0xf] %v4669
        %4708 = vst [vmem:[%s307 + $0x88] sm:$0xf] %v4670
        %4709 = vst [vmem:[%s307 + $0x8c] sm:$0xf] %v4671
        %4710 = vst [vmem:[%s307 + $0x90] sm:$0xf] %v4672
        %4711 = vst [vmem:[%s307 + $0x94] sm:$0x3] %v4673
        %s4712 = sand.u32 %s128, 1
        %s4713 = sand.u32 %s128, 1
        %s4714 = smul.addr %s4713, 152
        %s4715 = scalar_lea.vmem [#allocation3], %s4714
        // Predicated region
        $region63: #{net_forward.2} parent=57 // pred_check
          %p4716 = pneg %p138
        $region64: #{net_forward.2} parent=57 // pred_check_branch
          %4718 = sbr.rel (%p4716) target = $region66
        $region65: #{net_forward.2} parent=57 // pred_region
          %s4719 = smul.addr %s19, 76
          %s4720 = sadd.s32 %s20, %s4719
          %s4721 = smul.addr %s4720, 4
          %s4722 = scalar_lea.vmem %s4, %s4721
          // Predicated region
          $region67: #{net_forward.2} parent=65 // pred_check
            _
          $region68: #{net_forward.2} parent=65 // pred_check_branch
            %4724 = sbr.rel (0) target = $region70
          $region69: #{net_forward.2} parent=65 // pred_region
            // Predicated region
            $region71: #{net_forward.2} parent=69 // pred_check
              _
            $region72: #{net_forward.2} parent=69 // pred_check_branch
              %4726 = sbr.rel target = $region74
            $region73: #{net_forward.2} parent=69 // pred_region
              // Predicated region
              $region86: #{net_forward.2} parent=73 // pred_check
                _
              $region87: #{net_forward.2} parent=73 // pred_check_branch
                %4816 = sbr.rel (0) target = $region89
              $region88: #{net_forward.2} parent=73 // pred_region
                loop: start=0, step=1, limit=1
                $region90: #{net_forward.2} parent=88 // loop_pre_header
                  _
                $region91: #{net_forward.2} parent=88 // loop_header
                  %s4818 = sphi 0, %s4822
                  %p4819 = scmp.ge.s32.totalorder %s4818, 1
                  %s4823 = sphi %s4715, %s4715
                  %s4824 = sphi %s4722, %s4722
                $region92: #{net_forward.2} parent=88 // loop_header_branch
                  %4821 = sbr.rel (%p4819) target = $region96
                $region93: #{net_forward.2} parent=88 // loop_body
                  _
                $region94: #{net_forward.2} parent=88 // loop_footer
                  %s4822 = sadd.s32 1, %s4818
                $region95: #{net_forward.2} parent=88 // loop_footer_branch
                  %4817 = sbr.rel target = $region91
                $region96: #{net_forward.2} parent=88 // loop_exit
                  _
                %s4826 = ssub.s32 16, 1
                loop: start=0, step=1, limit=1
                $region97: #{net_forward.2} parent=88 // loop_pre_header
                  _
                $region98: #{net_forward.2} parent=88 // loop_header
                  %s4828 = sphi 0, %s4832
                  %p4829 = scmp.ge.s32.totalorder %s4828, 1
                  %s4833 = sphi %s4715, %s4715
                  %s4834 = sphi %s4722, %s4722
                $region99: #{net_forward.2} parent=88 // loop_header_branch
                  %4831 = sbr.rel (%p4829) target = $region103
                $region100: #{net_forward.2} parent=88 // loop_body
                  %v4835 = vld [vmem:[%s4833] sm:%s4826]
                  %4836 = vst [vmem:[%s4834] sm:%s4826] %v4835
                  %v4837 = vld [vmem:[%s4833 + $0x4] sm:%s4826]
                  %4838 = vst [vmem:[%s4834 + $0x8] sm:%s4826] %v4837
                  %v4839 = vld [vmem:[%s4833 + $0x8] sm:%s4826]
                  %4840 = vst [vmem:[%s4834 + $0x10] sm:%s4826] %v4839
                  %v4841 = vld [vmem:[%s4833 + $0xc] sm:%s4826]
                  %4842 = vst [vmem:[%s4834 + $0x18] sm:%s4826] %v4841
                  %v4843 = vld [vmem:[%s4833 + $0x10] sm:%s4826]
                  %4844 = vst [vmem:[%s4834 + $0x20] sm:%s4826] %v4843
                  %v4845 = vld [vmem:[%s4833 + $0x14] sm:%s4826]
                  %4846 = vst [vmem:[%s4834 + $0x28] sm:%s4826] %v4845
                  %v4847 = vld [vmem:[%s4833 + $0x18] sm:%s4826]
                  %4848 = vst [vmem:[%s4834 + $0x30] sm:%s4826] %v4847
                  %v4849 = vld [vmem:[%s4833 + $0x1c] sm:%s4826]
                  %4850 = vst [vmem:[%s4834 + $0x38] sm:%s4826] %v4849
                  %v4851 = vld [vmem:[%s4833 + $0x20] sm:%s4826]
                  %4852 = vst [vmem:[%s4834 + $0x40] sm:%s4826] %v4851
                  %v4853 = vld [vmem:[%s4833 + $0x24] sm:%s4826]
                  %4854 = vst [vmem:[%s4834 + $0x48] sm:%s4826] %v4853
                  %v4855 = vld [vmem:[%s4833 + $0x28] sm:%s4826]
                  %4856 = vst [vmem:[%s4834 + $0x50] sm:%s4826] %v4855
                  %v4857 = vld [vmem:[%s4833 + $0x2c] sm:%s4826]
                  %4858 = vst [vmem:[%s4834 + $0x58] sm:%s4826] %v4857
                  %v4859 = vld [vmem:[%s4833 + $0x30] sm:%s4826]
                  %4860 = vst [vmem:[%s4834 + $0x60] sm:%s4826] %v4859
                  %v4861 = vld [vmem:[%s4833 + $0x34] sm:%s4826]
                  %4862 = vst [vmem:[%s4834 + $0x68] sm:%s4826] %v4861
                  %v4863 = vld [vmem:[%s4833 + $0x38] sm:%s4826]
                  %4864 = vst [vmem:[%s4834 + $0x70] sm:%s4826] %v4863
                  %v4865 = vld [vmem:[%s4833 + $0x3c] sm:%s4826]
                  %4866 = vst [vmem:[%s4834 + $0x78] sm:%s4826] %v4865
                  %v4867 = vld [vmem:[%s4833 + $0x40] sm:%s4826]
                  %4868 = vst [vmem:[%s4834 + $0x80] sm:%s4826] %v4867
                  %v4869 = vld [vmem:[%s4833 + $0x44] sm:%s4826]
                  %4870 = vst [vmem:[%s4834 + $0x88] sm:%s4826] %v4869
                  %v4871 = vld [vmem:[%s4833 + $0x48] sm:%s4826]
                  %4872 = vst [vmem:[%s4834 + $0x90] sm:%s4826] %v4871
                  %v4873 = vld [vmem:[%s4833 + $0x4c] sm:%s4826]
                  %4874 = vst [vmem:[%s4834 + $0x98] sm:%s4826] %v4873
                  %v4875 = vld [vmem:[%s4833 + $0x50] sm:%s4826]
                  %4876 = vst [vmem:[%s4834 + $0xa0] sm:%s4826] %v4875
                  %v4877 = vld [vmem:[%s4833 + $0x54] sm:%s4826]
                  %4878 = vst [vmem:[%s4834 + $0xa8] sm:%s4826] %v4877
                  %v4879 = vld [vmem:[%s4833 + $0x58] sm:%s4826]
                  %4880 = vst [vmem:[%s4834 + $0xb0] sm:%s4826] %v4879
                  %v4881 = vld [vmem:[%s4833 + $0x5c] sm:%s4826]
                  %4882 = vst [vmem:[%s4834 + $0xb8] sm:%s4826] %v4881
                  %v4883 = vld [vmem:[%s4833 + $0x60] sm:%s4826]
                  %4884 = vst [vmem:[%s4834 + $0xc0] sm:%s4826] %v4883
                  %v4885 = vld [vmem:[%s4833 + $0x64] sm:%s4826]
                  %4886 = vst [vmem:[%s4834 + $0xc8] sm:%s4826] %v4885
                  %v4887 = vld [vmem:[%s4833 + $0x68] sm:%s4826]
                  %4888 = vst [vmem:[%s4834 + $0xd0] sm:%s4826] %v4887
                  %v4889 = vld [vmem:[%s4833 + $0x6c] sm:%s4826]
                  %4890 = vst [vmem:[%s4834 + $0xd8] sm:%s4826] %v4889
                  %v4891 = vld [vmem:[%s4833 + $0x70] sm:%s4826]
                  %4892 = vst [vmem:[%s4834 + $0xe0] sm:%s4826] %v4891
                  %v4893 = vld [vmem:[%s4833 + $0x74] sm:%s4826]
                  %4894 = vst [vmem:[%s4834 + $0xe8] sm:%s4826] %v4893
                  %v4895 = vld [vmem:[%s4833 + $0x78] sm:%s4826]
                  %4896 = vst [vmem:[%s4834 + $0xf0] sm:%s4826] %v4895
                  %v4897 = vld [vmem:[%s4833 + $0x7c] sm:%s4826]
                  %4898 = vst [vmem:[%s4834 + $0xf8] sm:%s4826] %v4897
                  %v4899 = vld [vmem:[%s4833 + $0x80] sm:%s4826]
                  %4900 = vst [vmem:[%s4834 + $0x100] sm:%s4826] %v4899
                  %v4901 = vld [vmem:[%s4833 + $0x84] sm:%s4826]
                  %4902 = vst [vmem:[%s4834 + $0x108] sm:%s4826] %v4901
                  %v4903 = vld [vmem:[%s4833 + $0x88] sm:%s4826]
                  %4904 = vst [vmem:[%s4834 + $0x110] sm:%s4826] %v4903
                  %v4905 = vld [vmem:[%s4833 + $0x8c] sm:%s4826]
                  %4906 = vst [vmem:[%s4834 + $0x118] sm:%s4826] %v4905
                  %v4907 = vld [vmem:[%s4833 + $0x90] sm:%s4826]
                  %4908 = vst [vmem:[%s4834 + $0x120] sm:%s4826] %v4907
                  %v4909 = vld [vmem:[%s4833 + $0x94] sm:%s4826]
                  %4910 = vst [vmem:[%s4834 + $0x128] sm:%s4826] %v4909
                $region101: #{net_forward.2} parent=88 // loop_footer
                  %s4832 = sadd.s32 1, %s4828
                $region102: #{net_forward.2} parent=88 // loop_footer_branch
                  %4827 = sbr.rel target = $region98
                $region103: #{net_forward.2} parent=88 // loop_exit
                  _
              $region89: #{net_forward.2} parent=73 // pred_fallthru
                _
            $region74: #{net_forward.2} parent=69 // pred_fallthru
              _
            // Predicated region
            $region75: #{net_forward.2} parent=69 // pred_check
              _
            $region76: #{net_forward.2} parent=69 // pred_check_branch
              %4728 = sbr.rel (0) target = $region78
            $region77: #{net_forward.2} parent=69 // pred_region
              %s4730 = ssub.s32 16, 1
              loop: start=0, step=1, limit=1
              $region79: #{net_forward.2} parent=77 // loop_pre_header
                _
              $region80: #{net_forward.2} parent=77 // loop_header
                %s4732 = sphi 0, %s4736
                %p4733 = scmp.ge.s32.totalorder %s4732, 1
                %s4737 = sphi %s4715, %s4715
                %s4738 = sphi %s4722, %s4722
              $region81: #{net_forward.2} parent=77 // loop_header_branch
                %4735 = sbr.rel (%p4733) target = $region85
              $region82: #{net_forward.2} parent=77 // loop_body
                %v4739 = vld [vmem:[%s4737] sm:%s4730]
                %4740 = vst [vmem:[%s4738] sm:%s4730] %v4739
                %v4741 = vld [vmem:[%s4737 + $0x4] sm:%s4730]
                %4742 = vst [vmem:[%s4738 + $0x8] sm:%s4730] %v4741
                %v4743 = vld [vmem:[%s4737 + $0x8] sm:%s4730]
                %4744 = vst [vmem:[%s4738 + $0x10] sm:%s4730] %v4743
                %v4745 = vld [vmem:[%s4737 + $0xc] sm:%s4730]
                %4746 = vst [vmem:[%s4738 + $0x18] sm:%s4730] %v4745
                %v4747 = vld [vmem:[%s4737 + $0x10] sm:%s4730]
                %4748 = vst [vmem:[%s4738 + $0x20] sm:%s4730] %v4747
                %v4749 = vld [vmem:[%s4737 + $0x14] sm:%s4730]
                %4750 = vst [vmem:[%s4738 + $0x28] sm:%s4730] %v4749
                %v4751 = vld [vmem:[%s4737 + $0x18] sm:%s4730]
                %4752 = vst [vmem:[%s4738 + $0x30] sm:%s4730] %v4751
                %v4753 = vld [vmem:[%s4737 + $0x1c] sm:%s4730]
                %4754 = vst [vmem:[%s4738 + $0x38] sm:%s4730] %v4753
                %v4755 = vld [vmem:[%s4737 + $0x20] sm:%s4730]
                %4756 = vst [vmem:[%s4738 + $0x40] sm:%s4730] %v4755
                %v4757 = vld [vmem:[%s4737 + $0x24] sm:%s4730]
                %4758 = vst [vmem:[%s4738 + $0x48] sm:%s4730] %v4757
                %v4759 = vld [vmem:[%s4737 + $0x28] sm:%s4730]
                %4760 = vst [vmem:[%s4738 + $0x50] sm:%s4730] %v4759
                %v4761 = vld [vmem:[%s4737 + $0x2c] sm:%s4730]
                %4762 = vst [vmem:[%s4738 + $0x58] sm:%s4730] %v4761
                %v4763 = vld [vmem:[%s4737 + $0x30] sm:%s4730]
                %4764 = vst [vmem:[%s4738 + $0x60] sm:%s4730] %v4763
                %v4765 = vld [vmem:[%s4737 + $0x34] sm:%s4730]
                %4766 = vst [vmem:[%s4738 + $0x68] sm:%s4730] %v4765
                %v4767 = vld [vmem:[%s4737 + $0x38] sm:%s4730]
                %4768 = vst [vmem:[%s4738 + $0x70] sm:%s4730] %v4767
                %v4769 = vld [vmem:[%s4737 + $0x3c] sm:%s4730]
                %4770 = vst [vmem:[%s4738 + $0x78] sm:%s4730] %v4769
                %v4771 = vld [vmem:[%s4737 + $0x40] sm:%s4730]
                %4772 = vst [vmem:[%s4738 + $0x80] sm:%s4730] %v4771
                %v4773 = vld [vmem:[%s4737 + $0x44] sm:%s4730]
                %4774 = vst [vmem:[%s4738 + $0x88] sm:%s4730] %v4773
                %v4775 = vld [vmem:[%s4737 + $0x48] sm:%s4730]
                %4776 = vst [vmem:[%s4738 + $0x90] sm:%s4730] %v4775
                %v4777 = vld [vmem:[%s4737 + $0x4c] sm:%s4730]
                %4778 = vst [vmem:[%s4738 + $0x98] sm:%s4730] %v4777
                %v4779 = vld [vmem:[%s4737 + $0x50] sm:%s4730]
                %4780 = vst [vmem:[%s4738 + $0xa0] sm:%s4730] %v4779
                %v4781 = vld [vmem:[%s4737 + $0x54] sm:%s4730]
                %4782 = vst [vmem:[%s4738 + $0xa8] sm:%s4730] %v4781
                %v4783 = vld [vmem:[%s4737 + $0x58] sm:%s4730]
                %4784 = vst [vmem:[%s4738 + $0xb0] sm:%s4730] %v4783
                %v4785 = vld [vmem:[%s4737 + $0x5c] sm:%s4730]
                %4786 = vst [vmem:[%s4738 + $0xb8] sm:%s4730] %v4785
                %v4787 = vld [vmem:[%s4737 + $0x60] sm:%s4730]
                %4788 = vst [vmem:[%s4738 + $0xc0] sm:%s4730] %v4787
                %v4789 = vld [vmem:[%s4737 + $0x64] sm:%s4730]
                %4790 = vst [vmem:[%s4738 + $0xc8] sm:%s4730] %v4789
                %v4791 = vld [vmem:[%s4737 + $0x68] sm:%s4730]
                %4792 = vst [vmem:[%s4738 + $0xd0] sm:%s4730] %v4791
                %v4793 = vld [vmem:[%s4737 + $0x6c] sm:%s4730]
                %4794 = vst [vmem:[%s4738 + $0xd8] sm:%s4730] %v4793
                %v4795 = vld [vmem:[%s4737 + $0x70] sm:%s4730]
                %4796 = vst [vmem:[%s4738 + $0xe0] sm:%s4730] %v4795
                %v4797 = vld [vmem:[%s4737 + $0x74] sm:%s4730]
                %4798 = vst [vmem:[%s4738 + $0xe8] sm:%s4730] %v4797
                %v4799 = vld [vmem:[%s4737 + $0x78] sm:%s4730]
                %4800 = vst [vmem:[%s4738 + $0xf0] sm:%s4730] %v4799
                %v4801 = vld [vmem:[%s4737 + $0x7c] sm:%s4730]
                %4802 = vst [vmem:[%s4738 + $0xf8] sm:%s4730] %v4801
                %v4803 = vld [vmem:[%s4737 + $0x80] sm:%s4730]
                %4804 = vst [vmem:[%s4738 + $0x100] sm:%s4730] %v4803
                %v4805 = vld [vmem:[%s4737 + $0x84] sm:%s4730]
                %4806 = vst [vmem:[%s4738 + $0x108] sm:%s4730] %v4805
                %v4807 = vld [vmem:[%s4737 + $0x88] sm:%s4730]
                %4808 = vst [vmem:[%s4738 + $0x110] sm:%s4730] %v4807
                %v4809 = vld [vmem:[%s4737 + $0x8c] sm:%s4730]
                %4810 = vst [vmem:[%s4738 + $0x118] sm:%s4730] %v4809
                %v4811 = vld [vmem:[%s4737 + $0x90] sm:%s4730]
                %4812 = vst [vmem:[%s4738 + $0x120] sm:%s4730] %v4811
                %v4813 = vld [vmem:[%s4737 + $0x94] sm:%s4730]
                %4814 = vst [vmem:[%s4738 + $0x128] sm:%s4730] %v4813
              $region83: #{net_forward.2} parent=77 // loop_footer
                %s4736 = sadd.s32 1, %s4732
              $region84: #{net_forward.2} parent=77 // loop_footer_branch
                %4731 = sbr.rel target = $region80
              $region85: #{net_forward.2} parent=77 // loop_exit
                _
            $region78: #{net_forward.2} parent=69 // pred_fallthru
              _
          $region70: #{net_forward.2} parent=65 // pred_fallthru
            _
          %4911 = vnop
        $region66: #{net_forward.2} parent=57 // pred_fallthru
          _
      $region58: #{net_forward.2} parent=5 // pred_fallthru
        _
      %p4912 = scmp.le.s32.totalorder 2, %s10
      // Predicated region
      $region104: #{net_forward.2} parent=5 // pred_check
        %p4913 = pneg %p4912
      $region105: #{net_forward.2} parent=5 // pred_check_branch
        %4915 = sbr.rel (%p4913) target = $region107
      $region106: #{net_forward.2} parent=5 // pred_region
        %s4916 = ssub.s32 %s10, 2
        // Predicated region
        $region108: #{net_forward.2} parent=106 // pred_check
          %p4917 = pneg %p144
        $region109: #{net_forward.2} parent=106 // pred_check_branch
          %4919 = sbr.rel (%p4917) target = $region111
        $region110: #{net_forward.2} parent=106 // pred_region
          %s4920 = sand.u32 %s129, 1
          %s4921 = sand.u32 %s129, 1
          %s4922 = smul.addr %s4921, 152
          %s4923 = scalar_lea.vmem [#allocation3], %s4922
        $region111: #{net_forward.2} parent=106 // pred_fallthru
          _
      $region107: #{net_forward.2} parent=5 // pred_fallthru
        _
    $region6: #{net_forward.2} parent=1 // loop_footer
      %s14 = sadd.s32 1, %s10
    $region7: #{net_forward.2} parent=1 // loop_footer_branch
      %9 = sbr.rel target = $region3
    $region8: #{net_forward.2} parent=1 // loop_exit
      _

</llo_original>
